<compile_context>
chip_gen: v7x
topology: tpu7x:2x2x1
jax: 0.10.0
libtpu: 0.0.40
codegen_flags: <defaults>
</compile_context>

<pallas_src>
import functools

import jax
import jax.numpy as jnp
from jax import lax
from jax.experimental import pallas as pl
from jax.experimental.pallas import tpu as pltpu


def mm_add_kernel(x1_ref, x2_ref, inp_ref, o_ref, *, precision):
    """One (i, j, k) grid step: o[i,j] (+)= x1[i,k] @ x2[k,j] (+ inp[i,j] @ k==0)."""
    k = pl.program_id(2)

    pdot = jnp.dot(
        x1_ref[...],
        x2_ref[...],
        preferred_element_type=jnp.float32,
        precision=precision,
    )

    # The f32 output block has a K-invariant index map, so it stays VMEM
    # resident across the K loop and acts as the accumulator.  The residual
    # add is folded into the first K step: no scratch, no epilogue pass.
    @pl.when(k == 0)
    def _first():
        o_ref[...] = inp_ref[...].astype(jnp.float32) + pdot

    @pl.when(k != 0)
    def _accumulate():
        o_ref[...] += pdot


def _round_up(x, m):
    return (x + m - 1) // m * m


@functools.partial(jax.jit, static_argnames=("tm", "tn", "tk", "precision"))
def mm_add(x1, x2, inp, *, tm=512, tn=512, tk=1024,
           precision=lax.Precision.HIGHEST):
    M, K = x1.shape
    K2, N = x2.shape
    assert K == K2, "inner dims must match for mm"
    assert inp.shape == (M, N), "inp must match mm output shape"

    # --- Tile selection ---------------------------------------------------
    # Sanitize user-supplied tiles to hardware alignment: M is a sublane dim
    # (multiple of 8); N and K are lane dims (multiple of 128).
    tm = max(8, (tm // 8) * 8)
    tn = max(128, (tn // 128) * 128)
    tk = max(128, (tk // 128) * 128)
    # Never pick a tile larger than the (aligned) problem dimension.
    tm = min(tm, _round_up(M, 8))
    tn = min(tn, _round_up(N, 128))
    tk = min(tk, _round_up(K, 128))

    # Megacore (v7x has 2 TensorCores): prefer >= 2 output tiles on the
    # "parallel" M/N axes.  Halving a tile keeps alignment and divisibility.
    def _n_out_tiles():
        return (_round_up(M, tm) // tm) * (_round_up(N, tn) // tn)

    while _n_out_tiles() < 2 and tn >= 256:
        tn //= 2
    while _n_out_tiles() < 2 and tm >= 16 and tm % 16 == 0:
        tm //= 2

    # --- Padding: every block evenly tiles its (padded) array and satisfies
    # the (8, 128) layout rule; at most one extra tile of padding per dim.
    # Zero K-padding contributes nothing to the dot; padded M/N rows/cols are
    # sliced off the result.
    Mp, Np, Kp = _round_up(M, tm), _round_up(N, tn), _round_up(K, tk)
    if (Mp, Kp) != (M, K):
        x1 = jnp.pad(x1, ((0, Mp - M), (0, Kp - K)))
    if (Kp, Np) != (K, N):
        x2 = jnp.pad(x2, ((0, Kp - K), (0, Np - N)))
    if (Mp, Np) != (M, N):
        inp = jnp.pad(inp, ((0, Mp - M), (0, Np - N)))

    grid = (Mp // tm, Np // tn, Kp // tk)

    cost = pl.CostEstimate(
        flops=2 * Mp * Np * Kp,
        transcendentals=0,
        bytes_accessed=4 * (Mp * Kp + Kp * Np + 2 * Mp * Np),
    )

    out = pl.pallas_call(
        functools.partial(mm_add_kernel, precision=precision),
        out_shape=jax.ShapeDtypeStruct((Mp, Np), jnp.float32),
        grid_spec=pltpu.PrefetchScalarGridSpec(
            num_scalar_prefetch=0,
            grid=grid,
            in_specs=[
                pl.BlockSpec((tm, tk), lambda i, j, k: (i, k)),   # x1
                pl.BlockSpec((tk, tn), lambda i, j, k: (k, j)),   # x2
                pl.BlockSpec((tm, tn), lambda i, j, k: (i, j)),   # inp (K-invariant)
            ],
            out_specs=pl.BlockSpec((tm, tn), lambda i, j, k: (i, j)),
        ),
        compiler_params=pltpu.CompilerParams(
            dimension_semantics=("parallel", "parallel", "arbitrary"),
            # Raises v5e's 16 MiB and v6e/v7x's 32 MiB scoped defaults; the
            # double-buffered footprint at tm=tn=512, tk=1024 f32 is ~13 MiB,
            # so this stays well below v7x's 64 MiB physical VMEM per core.
            vmem_limit_bytes=48 * 1024 * 1024,
        ),
        cost_estimate=cost,
    )(x1, x2, inp)

    if (Mp, Np) != (M, N):
        out = out[:M, :N]
    return out


if __name__ == "__main__":
    key = jax.random.PRNGKey(0)
    k1, k2, k3 = jax.random.split(key, 3)

    # Small, tile-aligned problem: single K step, >=2 parallel output tiles.
    M, K, N = 256, 512, 512
    x1 = jax.random.normal(k1, (M, K), dtype=jnp.float32)
    x2 = jax.random.normal(k2, (K, N), dtype=jnp.float32)
    inp = jax.random.normal(k3, (M, N), dtype=jnp.float32)

    out = jax.block_until_ready(mm_add(x1, x2, inp))
    ref = jnp.dot(x1, x2, precision=lax.Precision.HIGHEST) + inp
    assert out.shape == (M, N)
    assert jnp.allclose(out, ref, atol=1e-3, rtol=1e-3), float(
        jnp.max(jnp.abs(out - ref))
    )

    # Force the multi-step K-accumulation path with small tiles: grid (2,4,4).
    out_k = jax.block_until_ready(mm_add(x1, x2, inp, tm=128, tn=128, tk=128))
    assert jnp.allclose(out_k, ref, atol=1e-3, rtol=1e-3), float(
        jnp.max(jnp.abs(out_k - ref))
    )

    # Awkward, non-aligned shapes: exercises the zero-pad + slice path.
    m, kk, n = 50, 72, 130
    a = jax.random.normal(k1, (m, kk), dtype=jnp.float32)
    b = jax.random.normal(k2, (kk, n), dtype=jnp.float32)
    c = jax.random.normal(k3, (m, n), dtype=jnp.float32)
    out2 = jax.block_until_ready(mm_add(a, b, c))
    ref2 = jnp.dot(a, b, precision=lax.Precision.HIGHEST) + c
    assert out2.shape == (m, n)
    assert jnp.allclose(out2, ref2, atol=1e-3, rtol=1e-3), float(
        jnp.max(jnp.abs(out2 - ref2))
    )

    print("KERNEL_OK")
</pallas_src>

<mosaic_0001>
module attributes {stable_mosaic.version = 11 : i64} {
  func.func @mm_add_kernel(%arg0: i32, %arg1: i32, %arg2: i32, %arg3: memref<256x512xf32, #tpu.memory_space<vmem>>, %arg4: memref<512x256xf32, #tpu.memory_space<vmem>>, %arg5: memref<256x256xf32, #tpu.memory_space<vmem>>, %arg6: memref<256x256xf32, #tpu.memory_space<vmem>>) attributes {dimension_semantics = [#tpu.dimension_semantics<parallel>, #tpu.dimension_semantics<parallel>, #tpu.dimension_semantics<arbitrary>], iteration_bounds = array<i64: 1, 2, 1>, scalar_prefetch = 0 : i64, scratch_operands = 0 : i64, tpu.core_type = #tpu.core_type<tc>, window_params = [{transform_indices = @transform_0, window_bounds = array<i64: 256, 512>}, {transform_indices = @transform_1, window_bounds = array<i64: 512, 256>}, {transform_indices = @transform_2, window_bounds = array<i64: 256, 256>}, {transform_indices = @transform_3, window_bounds = array<i64: 256, 256>}]} {
    %c0 = arith.constant 0 : index
    %c0_0 = arith.constant 0 : index
    %0 = vector.load %arg3[%c0, %c0_0] : memref<256x512xf32, #tpu.memory_space<vmem>>, vector<256x512xf32>
    %c0_1 = arith.constant 0 : index
    %c0_2 = arith.constant 0 : index
    %1 = vector.load %arg4[%c0_1, %c0_2] : memref<512x256xf32, #tpu.memory_space<vmem>>, vector<512x256xf32>
    %cst = arith.constant dense<0.000000e+00> : vector<256x256xf32>
    %2 = tpu.matmul %0, %1, %cst {dimension_numbers = #tpu.dot_dimension_numbers<[1], [0], [0], [1], [0, 0, 1, 1], [], []>, precision = #tpu.contract_precision<fp32>} : vector<256x512xf32>, vector<512x256xf32>, vector<256x256xf32> -> vector<256x256xf32>
    %c0_i32 = arith.constant 0 : i32
    %3 = arith.cmpi eq, %arg2, %c0_i32 : i32
    %4 = arith.extui %3 : i1 to i32
    %c0_i32_3 = arith.constant 0 : i32
    %5 = arith.cmpi ne, %4, %c0_i32_3 : i32
    scf.if %5 {
      %c0_6 = arith.constant 0 : index
      %c0_7 = arith.constant 0 : index
      %9 = vector.load %arg5[%c0_6, %c0_7] : memref<256x256xf32, #tpu.memory_space<vmem>>, vector<256x256xf32>
      %10 = arith.addf %9, %2 : vector<256x256xf32>
      %c0_8 = arith.constant 0 : index
      %c0_9 = arith.constant 0 : index
      %11 = vector.load %arg6[%c0_8, %c0_9] : memref<256x256xf32, #tpu.memory_space<vmem>>, vector<256x256xf32>
      tpu.vector_store %arg6[%c0_8, %c0_9], %10 {strides = array<i32>} : memref<256x256xf32, #tpu.memory_space<vmem>>, vector<256x256xf32>,
    } else {
    }
    %c0_i32_4 = arith.constant 0 : i32
    %6 = arith.cmpi ne, %arg2, %c0_i32_4 : i32
    %7 = arith.extui %6 : i1 to i32
    %c0_i32_5 = arith.constant 0 : i32
    %8 = arith.cmpi ne, %7, %c0_i32_5 : i32
    scf.if %8 {
      %c0_6 = arith.constant 0 : index
      %c0_7 = arith.constant 0 : index
      %9 = vector.load %arg6[%c0_6, %c0_7] : memref<256x256xf32, #tpu.memory_space<vmem>>, vector<256x256xf32>
      %10 = arith.addf %9, %2 : vector<256x256xf32>
      %c0_8 = arith.constant 0 : index
      %c0_9 = arith.constant 0 : index
      %11 = vector.load %arg6[%c0_8, %c0_9] : memref<256x256xf32, #tpu.memory_space<vmem>>, vector<256x256xf32>
      tpu.vector_store %arg6[%c0_8, %c0_9], %10 {strides = array<i32>} : memref<256x256xf32, #tpu.memory_space<vmem>>, vector<256x256xf32>,
    } else {
    }
    return
  }
  func.func @transform_0(%arg0: i32, %arg1: i32, %arg2: i32) -> (i32, i32) {
    %c0_i32 = arith.constant 0 : i32
    return %arg0, %arg2 : i32, i32
  }
  func.func @transform_1(%arg0: i32, %arg1: i32, %arg2: i32) -> (i32, i32) {
    %c0_i32 = arith.constant 0 : i32
    return %arg2, %arg1 : i32, i32
  }
  func.func @transform_2(%arg0: i32, %arg1: i32, %arg2: i32) -> (i32, i32) {
    %c0_i32 = arith.constant 0 : i32
    return %arg0, %arg1 : i32, i32
  }
  func.func @transform_3(%arg0: i32, %arg1: i32, %arg2: i32) -> (i32, i32) {
    %c0_i32 = arith.constant 0 : i32
    return %arg0, %arg1 : i32, i32
  }
}

</mosaic_0001>

<llo_original>
// kernel: mm_add.1
$region0: #{mm_add.1}
  #allocation0 [shape = 'u32[]', space=smem, size = 0x4, offset = 0x4, fixed_abs, tag = 'smem constant byte address 0x4 - core index']
  #allocation1 [shape = 'u32[144,128]{1,0:T(1,128)}', space=vmem, size = 0x12000, scoped, tag = 'internal scratch']
  %s0 = inlined_call_operand.hbm [shape: f32[256,512], index: 0, kind: input, shape index: {}]
  %s1 = inlined_call_operand.hbm [shape: f32[512,512], index: 1, kind: input, shape index: {}]
  %s2 = inlined_call_operand.hbm [shape: f32[256,512], index: 2, kind: input, shape index: {}]
  %s3 = inlined_call_operand.hbm [shape: f32[256,512], index: 3, kind: output, shape index: {}]
  %s4 = sld [smem:[#allocation0]]
  $region65: #{mm_add.1} parent=0
    _
  %s6 = ssub.s32 1, %s4
  %s7 = scalar_select 0, %s6, %s4
  $region1: #{mm_add.1} parent=0
    #allocation2 [shape = 'u8[524288]{0}', space=vmem, size = 0x80000, scoped, tag = 'input window, operand 0, single buffered']
    #allocation3 [shape = 's32[2]{0}', space=sflag, size = 0x8, scoped, tag = 'scoped memory for mm_add.1']
    #allocation4 [shape = 's32[2]{0}', space=sflag, size = 0x8, scoped, tag = 'scoped memory for mm_add.1']
    #allocation5 [shape = 'u8[1048576]{0}', space=vmem, size = 0x100000, scoped, tag = 'input window, operand 1']
    #allocation6 [shape = 's32[2]{0}', space=sflag, size = 0x8, scoped, tag = 'scoped memory for mm_add.1']
    #allocation7 [shape = 'u8[524288]{0}', space=vmem, size = 0x80000, scoped, tag = 'input window, operand 2']
    #allocation8 [shape = 'u8[524288]{0}', space=vmem, size = 0x80000, scoped, tag = 'output window, operand 0']
    %8 = vsyncpa [#allocation3], 0
    %9 = vsyncpa [#allocation6], 0
    %s10 = scalar_lea.sflag [#allocation6], 1
    %11 = vsyncpa %s10, 0
    %12 = vsyncpa [#allocation4], 0
    %s13 = scalar_lea.sflag [#allocation4], 1
    %14 = vsyncpa %s13, 0
    loop: start=0, step=1, limit=4
    $region2: #{mm_add.1} parent=1 // loop_pre_header
      _
    $region3: #{mm_add.1} parent=1 // loop_header
      %s16 = sphi 0, %s20
      %p17 = scmp.ge.s32.totalorder %s16, 4
      %s23 = sphi 0, %s42
      %s24 = sphi 0, %s38
      %s25 = sphi 0, %s34
      %s26 = sphi 0, %s23
      %s27 = sphi 0, %s24
      %s28 = sphi 0, %s25
      %s29 = sphi 0, %s26
      %s30 = sphi 0, %s27
      %s31 = sphi 0, %s28
      %s47 = sphi 0, %s49
      %s50 = sphi 0, %s47
      %s51 = sphi 0, %s50
      %s67 = sphi 0, %s51
      %s75 = sphi 0, %s77
      %s78 = sphi 0, %s75
      %s79 = sphi 0, %s78
      %s95 = sphi 0, %s79
      %s103 = sphi 0, %s105
      %s106 = sphi 0, %s103
      %s107 = sphi 0, %s106
      %s123 = sphi 0, %s107
      %s131 = sphi 0, %s133
      %s134 = sphi 0, %s131
      %s135 = sphi 0, %s134
      %s151 = sphi 0, %s135
    $region4: #{mm_add.1} parent=1 // loop_header_branch
      %19 = sbr.rel (%p17) target = $region8
    $region5: #{mm_add.1} parent=1 // loop_body
      %s21 = ssub.s32 %s16, 1
      %s22 = ssub.s32 %s16, 2
      %s32 = sadd.s32 1, %s25
      %p33 = scmp.ge.s32.totalorder %s32, 1
      %s34 = scalar_select %p33, 0, %s32
      %s35 = sadd.s32 1, %s24
      %s36 = scalar_select %p33, %s35, %s24
      %p37 = scmp.ge.s32.totalorder %s36, 2
      %s38 = scalar_select %p37, 0, %s36
      %s39 = sadd.s32 1, %s23
      %s40 = scalar_select %p37, %s39, %s23
      %p41 = scmp.ge.s32.totalorder %s40, 1
      %s42 = scalar_select %p41, 0, %s40
      %s43 = ssub.s32 %s23, %s42
      %s44 = ssub.s32 %s25, %s34
      %s45 = sor.u32 %s43, %s44
      %p46 = scmp.eq.s32.totalorder %s45, 0
      %s48 = sadd.s32 %s47, 1
      %s49 = scalar_select %p46, %s47, %s48
      %p52 = pneg %p46
      %p53 = scmp.eq.s32.totalorder %s16, 1
      %p54 = por %p52, %p53
      %p55 = scmp.ne.s32.totalorder %s47, %s50
      %p56 = scmp.eq.s32.totalorder %s16, 0
      %p57 = por %p55, %p56
      %p58 = scmp.ne.s32.totalorder %s47, %s50
      %p59 = scmp.eq.s32.totalorder %s21, 1
      %p60 = por %p58, %p59
      %p61 = scmp.ne.s32.totalorder %s50, %s51
      %p62 = scmp.eq.s32.totalorder %s21, 0
      %p63 = por %p61, %p62
      %p64 = scmp.ne.s32.totalorder %s50, %s51
      %p65 = scmp.eq.s32.totalorder %s22, 1
      %p66 = por %p64, %p65
      %p68 = scmp.ne.s32.totalorder %s51, %s67
      %p69 = scmp.eq.s32.totalorder %s22, 0
      %p70 = por %p68, %p69
      %s71 = ssub.s32 %s25, %s34
      %s72 = ssub.s32 %s24, %s38
      %s73 = sor.u32 %s71, %s72
      %p74 = scmp.eq.s32.totalorder %s73, 0
      %s76 = sadd.s32 %s75, 1
      %s77 = scalar_select %p74, %s75, %s76
      %p80 = pneg %p74
      %p81 = scmp.eq.s32.totalorder %s16, 1
      %p82 = por %p80, %p81
      %p83 = scmp.ne.s32.totalorder %s75, %s78
      %p84 = scmp.eq.s32.totalorder %s16, 0
      %p85 = por %p83, %p84
      %p86 = scmp.ne.s32.totalorder %s75, %s78
      %p87 = scmp.eq.s32.totalorder %s21, 1
      %p88 = por %p86, %p87
      %p89 = scmp.ne.s32.totalorder %s78, %s79
      %p90 = scmp.eq.s32.totalorder %s21, 0
      %p91 = por %p89, %p90
      %p92 = scmp.ne.s32.totalorder %s78, %s79
      %p93 = scmp.eq.s32.totalorder %s22, 1
      %p94 = por %p92, %p93
      %p96 = scmp.ne.s32.totalorder %s79, %s95
      %p97 = scmp.eq.s32.totalorder %s22, 0
      %p98 = por %p96, %p97
      %s99 = ssub.s32 %s23, %s42
      %s100 = ssub.s32 %s24, %s38
      %s101 = sor.u32 %s99, %s100
      %p102 = scmp.eq.s32.totalorder %s101, 0
      %s104 = sadd.s32 %s103, 1
      %s105 = scalar_select %p102, %s103, %s104
      %p108 = pneg %p102
      %p109 = scmp.eq.s32.totalorder %s16, 1
      %p110 = por %p108, %p109
      %p111 = scmp.ne.s32.totalorder %s103, %s106
      %p112 = scmp.eq.s32.totalorder %s16, 0
      %p113 = por %p111, %p112
      %p114 = scmp.ne.s32.totalorder %s103, %s106
      %p115 = scmp.eq.s32.totalorder %s21, 1
      %p116 = por %p114, %p115
      %p117 = scmp.ne.s32.totalorder %s106, %s107
      %p118 = scmp.eq.s32.totalorder %s21, 0
      %p119 = por %p117, %p118
      %p120 = scmp.ne.s32.totalorder %s106, %s107
      %p121 = scmp.eq.s32.totalorder %s22, 1
      %p122 = por %p120, %p121
      %p124 = scmp.ne.s32.totalorder %s107, %s123
      %p125 = scmp.eq.s32.totalorder %s22, 0
      %p126 = por %p124, %p125
      %s127 = ssub.s32 %s23, %s42
      %s128 = ssub.s32 %s24, %s38
      %s129 = sor.u32 %s127, %s128
      %p130 = scmp.eq.s32.totalorder %s129, 0
      %s132 = sadd.s32 %s131, 1
      %s133 = scalar_select %p130, %s131, %s132
      %p136 = pneg %p130
      %p137 = scmp.eq.s32.totalorder %s16, 1
      %p138 = por %p136, %p137
      %p139 = scmp.ne.s32.totalorder %s131, %s134
      %p140 = scmp.eq.s32.totalorder %s16, 0
      %p141 = por %p139, %p140
      %p142 = scmp.ne.s32.totalorder %s131, %s134
      %p143 = scmp.eq.s32.totalorder %s21, 1
      %p144 = por %p142, %p143
      %p145 = scmp.ne.s32.totalorder %s134, %s135
      %p146 = scmp.eq.s32.totalorder %s21, 0
      %p147 = por %p145, %p146
      %p148 = scmp.ne.s32.totalorder %s134, %s135
      %p149 = scmp.eq.s32.totalorder %s22, 1
      %p150 = por %p148, %p149
      %p152 = scmp.ne.s32.totalorder %s135, %s151
      %p153 = scmp.eq.s32.totalorder %s22, 0
      %p154 = por %p152, %p153
      %p155 = scmp.le.s32.totalorder 1, %s16
      %p156 = scmp.lt.s32.totalorder %s16, 3
      %p157 = pnand %p155, %p156
      %p158 = pneg %p157
      // Predicated region
      $region9: #{mm_add.1} parent=5 // pred_check
        _
      $region10: #{mm_add.1} parent=5 // pred_check_branch
        %160 = sbr.rel (%p157) target = $region12
      $region11: #{mm_add.1} parent=5 // pred_region
        %s161 = ssub.s32 %s16, 1
        // Predicated region
        $region13: #{mm_add.1} parent=11 // pred_check
          %p162 = pneg %p63
        $region14: #{mm_add.1} parent=11 // pred_check_branch
          %164 = sbr.rel (%p162) target = $region16
        $region15: #{mm_add.1} parent=11 // pred_region
          %s165 = smul.u32 32, %s26
          %s166 = smul.u32 4, %s28
          %s168 = ssub.s32 16384, 16384
          %169 = vsyncadd [#allocation3], %s168
          %s170 = smul.addr %s165, 4
          %s171 = sadd.s32 %s166, %s170
          %s172 = smul.addr %s171, 128
          %s173 = scalar_lea.hbm %s0, %s172
          %s174 = sshll.u32 [#allocation2], 4
          %s175 = int_to_ptr.vmem [resolvable:$true] %s174
          %180 = dma.hbm_to_vmem [thread:$0]  %s173, 16384, %s175, [#allocation3], 512, 512, 32
        $region16: #{mm_add.1} parent=11 // pred_fallthru
          _
      $region12: #{mm_add.1} parent=5 // pred_fallthru
        _
      %p181 = scmp.lt.s32.totalorder %s16, 2
      // Predicated region
      $region17: #{mm_add.1} parent=5 // pred_check
        %p182 = pneg %p181
      $region18: #{mm_add.1} parent=5 // pred_check_branch
        %184 = sbr.rel (%p182) target = $region20
      $region19: #{mm_add.1} parent=5 // pred_region
        // Predicated region
        $region21: #{mm_add.1} parent=19 // pred_check
          %p185 = pneg %p85
        $region22: #{mm_add.1} parent=19 // pred_check_branch
          %187 = sbr.rel (%p185) target = $region24
        $region23: #{mm_add.1} parent=19 // pred_region
          %s188 = sand.u32 %s16, 1
          %s189 = scalar_lea.sflag [#allocation6], %s188
          %s190 = sand.u32 %s75, 1
          %s191 = smul.addr %s190, 1024
          %s192 = scalar_lea.vmem [#allocation5], %s191
          %s193 = smul.u32 64, %s25
          %s194 = smul.u32 2, %s24
          %s196 = ssub.s32 16384, 16384
          %197 = vsyncadd %s189, %s196
          %s198 = smul.addr %s193, 4
          %s199 = sadd.s32 %s194, %s198
          %s200 = smul.addr %s199, 128
          %s201 = scalar_lea.hbm %s1, %s200
          %s202 = sshll.u32 %s192, 4
          %s203 = int_to_ptr.vmem [resolvable:$true] %s202
          %208 = dma.hbm_to_vmem [thread:$0]  %s201, 16384, %s203, %s189, 512, 256, 16
        $region24: #{mm_add.1} parent=19 // pred_fallthru
          _
        // Predicated region
        $region25: #{mm_add.1} parent=19 // pred_check
          %p209 = pneg %p113
        $region26: #{mm_add.1} parent=19 // pred_check_branch
          %211 = sbr.rel (%p209) target = $region28
        $region27: #{mm_add.1} parent=19 // pred_region
          %s212 = sand.u32 %s16, 1
          %s213 = scalar_lea.sflag [#allocation6], %s212
          %s214 = sand.u32 %s103, 1
          %s215 = smul.addr %s214, 512
          %s216 = scalar_lea.vmem [#allocation7], %s215
          %s217 = smul.u32 32, %s23
          %s218 = smul.u32 2, %s24
          %s220 = ssub.s32 8192, 8192
          %221 = vsyncadd %s213, %s220
          %s222 = smul.addr %s217, 4
          %s223 = sadd.s32 %s218, %s222
          %s224 = smul.addr %s223, 128
          %s225 = scalar_lea.hbm %s2, %s224
          %s226 = sshll.u32 %s216, 4
          %s227 = int_to_ptr.vmem [resolvable:$true] %s226
          %232 = dma.hbm_to_vmem [thread:$0]  %s225, 8192, %s227, %s213, 512, 256, 16
        $region28: #{mm_add.1} parent=19 // pred_fallthru
          _
      $region20: #{mm_add.1} parent=5 // pred_fallthru
        _
      %p233 = scmp.le.s32.totalorder 1, %s16
      %p234 = scmp.lt.s32.totalorder %s16, 3
      %p235 = pnand %p233, %p234
      %p236 = pneg %p235
      // Predicated region
      $region29: #{mm_add.1} parent=5 // pred_check
        _
      $region30: #{mm_add.1} parent=5 // pred_check_branch
        %238 = sbr.rel (%p235) target = $region32
      $region31: #{mm_add.1} parent=5 // pred_region
        %s239 = ssub.s32 %s16, 1
        // Predicated region
        $region33: #{mm_add.1} parent=31 // pred_check
          %p240 = pneg %p63
        $region34: #{mm_add.1} parent=31 // pred_check_branch
          %242 = sbr.rel (%p240) target = $region36
        $region35: #{mm_add.1} parent=31 // pred_region
          %243 = dma.done [#allocation3], 16384
        $region36: #{mm_add.1} parent=31 // pred_fallthru
          _
        %s244 = sand.u32 %s21, 1
        %s245 = scalar_lea.sflag [#allocation6], %s244
        %s246 = sand.u32 %s78, 1
        %s247 = smul.addr %s246, 1024
        %s248 = scalar_lea.vmem [#allocation5], %s247
        // Predicated region
        $region37: #{mm_add.1} parent=31 // pred_check
          %p249 = pneg %p91
        $region38: #{mm_add.1} parent=31 // pred_check_branch
          %251 = sbr.rel (%p249) target = $region40
        $region39: #{mm_add.1} parent=31 // pred_region
          %252 = dma.done %s245, 16384
        $region40: #{mm_add.1} parent=31 // pred_fallthru
          _
        %s253 = sand.u32 %s21, 1
        %s254 = scalar_lea.sflag [#allocation6], %s253
        %s255 = sand.u32 %s106, 1
        %s256 = smul.addr %s255, 512
        %s257 = scalar_lea.vmem [#allocation7], %s256
        // Predicated region
        $region41: #{mm_add.1} parent=31 // pred_check
          %p258 = pneg %p119
        $region42: #{mm_add.1} parent=31 // pred_check_branch
          %260 = sbr.rel (%p258) target = $region44
        $region43: #{mm_add.1} parent=31 // pred_region
          %261 = dma.done %s254, 8192
        $region44: #{mm_add.1} parent=31 // pred_fallthru
          _
        %p262 = pneg %p63
        %p263 = pneg %p60
        %s264 = sand.u32 %s21, 1
        %s265 = scalar_lea.sflag [#allocation6], %s264
        %s266 = sand.u32 %s78, 1
        %s267 = smul.addr %s266, 1024
        %s268 = scalar_lea.vmem [#allocation5], %s267
        %p269 = pneg %p91
        %p270 = pneg %p88
        %s271 = sand.u32 %s21, 1
        %s272 = scalar_lea.sflag [#allocation6], %s271
        %s273 = sand.u32 %s106, 1
        %s274 = smul.addr %s273, 512
        %s275 = scalar_lea.vmem [#allocation7], %s274
        %p276 = pneg %p119
        %p277 = pneg %p116
        %p278 = pneg %p147
        %p279 = pneg %p144
        %s280 = sand.u32 %s134, 1
        %s281 = scalar_lea.sflag [#allocation4], %s280
        %s282 = sand.u32 %s134, 1
        %s283 = smul.addr %s282, 512
        %s284 = scalar_lea.vmem [#allocation8], %s283
        %s285 = smul.u32 32, %s26
        %s286 = smul.u32 4, %s28
        %s287 = smul.u32 64, %s28
        %s288 = smul.u32 2, %s27
        %s289 = smul.u32 32, %s26
        %s290 = smul.u32 2, %s27
        %s291 = smul.u32 32, %s26
        %s292 = smul.u32 2, %s27
        %v293 = vld [vmem:[#allocation2] sm:$0xff]
        %v294 = vld [vmem:[#allocation2 + $0x8] sm:$0xff]
        %v295 = vld [vmem:[#allocation2 + $0x10] sm:$0xff]
        %v296 = vld [vmem:[#allocation2 + $0x18] sm:$0xff]
        %v297 = vld [vmem:[#allocation2 + $0x20] sm:$0xff]
        %v298 = vld [vmem:[#allocation2 + $0x28] sm:$0xff]
        %v299 = vld [vmem:[#allocation2 + $0x30] sm:$0xff]
        %v300 = vld [vmem:[#allocation2 + $0x38] sm:$0xff]
        %v301 = vld [vmem:[#allocation2 + $0x40] sm:$0xff]
        %v302 = vld [vmem:[#allocation2 + $0x48] sm:$0xff]
        %v303 = vld [vmem:[#allocation2 + $0x50] sm:$0xff]
        %v304 = vld [vmem:[#allocation2 + $0x58] sm:$0xff]
        %v305 = vld [vmem:[#allocation2 + $0x60] sm:$0xff]
        %v306 = vld [vmem:[#allocation2 + $0x68] sm:$0xff]
        %v307 = vld [vmem:[#allocation2 + $0x70] sm:$0xff]
        %v308 = vld [vmem:[#allocation2 + $0x78] sm:$0xff]
        %v309 = vld [vmem:[#allocation2 + $0x80] sm:$0xff]
        %v310 = vld [vmem:[#allocation2 + $0x88] sm:$0xff]
        %v311 = vld [vmem:[#allocation2 + $0x90] sm:$0xff]
        %v312 = vld [vmem:[#allocation2 + $0x98] sm:$0xff]
        %v313 = vld [vmem:[#allocation2 + $0xa0] sm:$0xff]
        %v314 = vld [vmem:[#allocation2 + $0xa8] sm:$0xff]
        %v315 = vld [vmem:[#allocation2 + $0xb0] sm:$0xff]
        %v316 = vld [vmem:[#allocation2 + $0xb8] sm:$0xff]
        %v317 = vld [vmem:[#allocation2 + $0xc0] sm:$0xff]
        %v318 = vld [vmem:[#allocation2 + $0xc8] sm:$0xff]
        %v319 = vld [vmem:[#allocation2 + $0xd0] sm:$0xff]
        %v320 = vld [vmem:[#allocation2 + $0xd8] sm:$0xff]
        %v321 = vld [vmem:[#allocation2 + $0xe0] sm:$0xff]
        %v322 = vld [vmem:[#allocation2 + $0xe8] sm:$0xff]
        %v323 = vld [vmem:[#allocation2 + $0xf0] sm:$0xff]
        %v324 = vld [vmem:[#allocation2 + $0xf8] sm:$0xff]
        %v325 = vld [vmem:[#allocation2 + $0x100] sm:$0xff]
        %v326 = vld [vmem:[#allocation2 + $0x108] sm:$0xff]
        %v327 = vld [vmem:[#allocation2 + $0x110] sm:$0xff]
        %v328 = vld [vmem:[#allocation2 + $0x118] sm:$0xff]
        %v329 = vld [vmem:[#allocation2 + $0x120] sm:$0xff]
        %v330 = vld [vmem:[#allocation2 + $0x128] sm:$0xff]
        %v331 = vld [vmem:[#allocation2 + $0x130] sm:$0xff]
        %v332 = vld [vmem:[#allocation2 + $0x138] sm:$0xff]
        %v333 = vld [vmem:[#allocation2 + $0x140] sm:$0xff]
        %v334 = vld [vmem:[#allocation2 + $0x148] sm:$0xff]
        %v335 = vld [vmem:[#allocation2 + $0x150] sm:$0xff]
        %v336 = vld [vmem:[#allocation2 + $0x158] sm:$0xff]
        %v337 = vld [vmem:[#allocation2 + $0x160] sm:$0xff]
        %v338 = vld [vmem:[#allocation2 + $0x168] sm:$0xff]
        %v339 = vld [vmem:[#allocation2 + $0x170] sm:$0xff]
        %v340 = vld [vmem:[#allocation2 + $0x178] sm:$0xff]
        %v341 = vld [vmem:[#allocation2 + $0x180] sm:$0xff]
        %v342 = vld [vmem:[#allocation2 + $0x188] sm:$0xff]
        %v343 = vld [vmem:[#allocation2 + $0x190] sm:$0xff]
        %v344 = vld [vmem:[#allocation2 + $0x198] sm:$0xff]
        %v345 = vld [vmem:[#allocation2 + $0x1a0] sm:$0xff]
        %v346 = vld [vmem:[#allocation2 + $0x1a8] sm:$0xff]
        %v347 = vld [vmem:[#allocation2 + $0x1b0] sm:$0xff]
        %v348 = vld [vmem:[#allocation2 + $0x1b8] sm:$0xff]
        %v349 = vld [vmem:[#allocation2 + $0x1c0] sm:$0xff]
        %v350 = vld [vmem:[#allocation2 + $0x1c8] sm:$0xff]
        %v351 = vld [vmem:[#allocation2 + $0x1d0] sm:$0xff]
        %v352 = vld [vmem:[#allocation2 + $0x1d8] sm:$0xff]
        %v353 = vld [vmem:[#allocation2 + $0x1e0] sm:$0xff]
        %v354 = vld [vmem:[#allocation2 + $0x1e8] sm:$0xff]
        %v355 = vld [vmem:[#allocation2 + $0x1f0] sm:$0xff]
        %v356 = vld [vmem:[#allocation2 + $0x1f8] sm:$0xff]
        %v357 = vld [vmem:[#allocation2 + $0x200] sm:$0xff]
        %v358 = vld [vmem:[#allocation2 + $0x208] sm:$0xff]
        %v359 = vld [vmem:[#allocation2 + $0x210] sm:$0xff]
        %v360 = vld [vmem:[#allocation2 + $0x218] sm:$0xff]
        %v361 = vld [vmem:[#allocation2 + $0x220] sm:$0xff]
        %v362 = vld [vmem:[#allocation2 + $0x228] sm:$0xff]
        %v363 = vld [vmem:[#allocation2 + $0x230] sm:$0xff]
        %v364 = vld [vmem:[#allocation2 + $0x238] sm:$0xff]
        %v365 = vld [vmem:[#allocation2 + $0x240] sm:$0xff]
        %v366 = vld [vmem:[#allocation2 + $0x248] sm:$0xff]
        %v367 = vld [vmem:[#allocation2 + $0x250] sm:$0xff]
        %v368 = vld [vmem:[#allocation2 + $0x258] sm:$0xff]
        %v369 = vld [vmem:[#allocation2 + $0x260] sm:$0xff]
        %v370 = vld [vmem:[#allocation2 + $0x268] sm:$0xff]
        %v371 = vld [vmem:[#allocation2 + $0x270] sm:$0xff]
        %v372 = vld [vmem:[#allocation2 + $0x278] sm:$0xff]
        %v373 = vld [vmem:[#allocation2 + $0x280] sm:$0xff]
        %v374 = vld [vmem:[#allocation2 + $0x288] sm:$0xff]
        %v375 = vld [vmem:[#allocation2 + $0x290] sm:$0xff]
        %v376 = vld [vmem:[#allocation2 + $0x298] sm:$0xff]
        %v377 = vld [vmem:[#allocation2 + $0x2a0] sm:$0xff]
        %v378 = vld [vmem:[#allocation2 + $0x2a8] sm:$0xff]
        %v379 = vld [vmem:[#allocation2 + $0x2b0] sm:$0xff]
        %v380 = vld [vmem:[#allocation2 + $0x2b8] sm:$0xff]
        %v381 = vld [vmem:[#allocation2 + $0x2c0] sm:$0xff]
        %v382 = vld [vmem:[#allocation2 + $0x2c8] sm:$0xff]
        %v383 = vld [vmem:[#allocation2 + $0x2d0] sm:$0xff]
        %v384 = vld [vmem:[#allocation2 + $0x2d8] sm:$0xff]
        %v385 = vld [vmem:[#allocation2 + $0x2e0] sm:$0xff]
        %v386 = vld [vmem:[#allocation2 + $0x2e8] sm:$0xff]
        %v387 = vld [vmem:[#allocation2 + $0x2f0] sm:$0xff]
        %v388 = vld [vmem:[#allocation2 + $0x2f8] sm:$0xff]
        %v389 = vld [vmem:[#allocation2 + $0x300] sm:$0xff]
        %v390 = vld [vmem:[#allocation2 + $0x308] sm:$0xff]
        %v391 = vld [vmem:[#allocation2 + $0x310] sm:$0xff]
        %v392 = vld [vmem:[#allocation2 + $0x318] sm:$0xff]
        %v393 = vld [vmem:[#allocation2 + $0x320] sm:$0xff]
        %v394 = vld [vmem:[#allocation2 + $0x328] sm:$0xff]
        %v395 = vld [vmem:[#allocation2 + $0x330] sm:$0xff]
        %v396 = vld [vmem:[#allocation2 + $0x338] sm:$0xff]
        %v397 = vld [vmem:[#allocation2 + $0x340] sm:$0xff]
        %v398 = vld [vmem:[#allocation2 + $0x348] sm:$0xff]
        %v399 = vld [vmem:[#allocation2 + $0x350] sm:$0xff]
        %v400 = vld [vmem:[#allocation2 + $0x358] sm:$0xff]
        %v401 = vld [vmem:[#allocation2 + $0x360] sm:$0xff]
        %v402 = vld [vmem:[#allocation2 + $0x368] sm:$0xff]
        %v403 = vld [vmem:[#allocation2 + $0x370] sm:$0xff]
        %v404 = vld [vmem:[#allocation2 + $0x378] sm:$0xff]
        %v405 = vld [vmem:[#allocation2 + $0x380] sm:$0xff]
        %v406 = vld [vmem:[#allocation2 + $0x388] sm:$0xff]
        %v407 = vld [vmem:[#allocation2 + $0x390] sm:$0xff]
        %v408 = vld [vmem:[#allocation2 + $0x398] sm:$0xff]
        %v409 = vld [vmem:[#allocation2 + $0x3a0] sm:$0xff]
        %v410 = vld [vmem:[#allocation2 + $0x3a8] sm:$0xff]
        %v411 = vld [vmem:[#allocation2 + $0x3b0] sm:$0xff]
        %v412 = vld [vmem:[#allocation2 + $0x3b8] sm:$0xff]
        %v413 = vld [vmem:[#allocation2 + $0x3c0] sm:$0xff]
        %v414 = vld [vmem:[#allocation2 + $0x3c8] sm:$0xff]
        %v415 = vld [vmem:[#allocation2 + $0x3d0] sm:$0xff]
        %v416 = vld [vmem:[#allocation2 + $0x3d8] sm:$0xff]
        %v417 = vld [vmem:[#allocation2 + $0x3e0] sm:$0xff]
        %v418 = vld [vmem:[#allocation2 + $0x3e8] sm:$0xff]
        %v419 = vld [vmem:[#allocation2 + $0x3f0] sm:$0xff]
        %v420 = vld [vmem:[#allocation2 + $0x3f8] sm:$0xff]
        %v421 = vld [vmem:[%s248] sm:$0xff]
        %v422 = vld [vmem:[%s248 + $0x8] sm:$0xff]
        %v423 = vld [vmem:[%s248 + $0x10] sm:$0xff]
        %v424 = vld [vmem:[%s248 + $0x18] sm:$0xff]
        %v425 = vld [vmem:[%s248 + $0x20] sm:$0xff]
        %v426 = vld [vmem:[%s248 + $0x28] sm:$0xff]
        %v427 = vld [vmem:[%s248 + $0x30] sm:$0xff]
        %v428 = vld [vmem:[%s248 + $0x38] sm:$0xff]
        %v429 = vld [vmem:[%s248 + $0x40] sm:$0xff]
        %v430 = vld [vmem:[%s248 + $0x48] sm:$0xff]
        %v431 = vld [vmem:[%s248 + $0x50] sm:$0xff]
        %v432 = vld [vmem:[%s248 + $0x58] sm:$0xff]
        %v433 = vld [vmem:[%s248 + $0x60] sm:$0xff]
        %v434 = vld [vmem:[%s248 + $0x68] sm:$0xff]
        %v435 = vld [vmem:[%s248 + $0x70] sm:$0xff]
        %v436 = vld [vmem:[%s248 + $0x78] sm:$0xff]
        %v437 = vld [vmem:[%s248 + $0x80] sm:$0xff]
        %v438 = vld [vmem:[%s248 + $0x88] sm:$0xff]
        %v439 = vld [vmem:[%s248 + $0x90] sm:$0xff]
        %v440 = vld [vmem:[%s248 + $0x98] sm:$0xff]
        %v441 = vld [vmem:[%s248 + $0xa0] sm:$0xff]
        %v442 = vld [vmem:[%s248 + $0xa8] sm:$0xff]
        %v443 = vld [vmem:[%s248 + $0xb0] sm:$0xff]
        %v444 = vld [vmem:[%s248 + $0xb8] sm:$0xff]
        %v445 = vld [vmem:[%s248 + $0xc0] sm:$0xff]
        %v446 = vld [vmem:[%s248 + $0xc8] sm:$0xff]
        %v447 = vld [vmem:[%s248 + $0xd0] sm:$0xff]
        %v448 = vld [vmem:[%s248 + $0xd8] sm:$0xff]
        %v449 = vld [vmem:[%s248 + $0xe0] sm:$0xff]
        %v450 = vld [vmem:[%s248 + $0xe8] sm:$0xff]
        %v451 = vld [vmem:[%s248 + $0xf0] sm:$0xff]
        %v452 = vld [vmem:[%s248 + $0xf8] sm:$0xff]
        %v453 = vld [vmem:[%s248 + $0x100] sm:$0xff]
        %v454 = vld [vmem:[%s248 + $0x108] sm:$0xff]
        %v455 = vld [vmem:[%s248 + $0x110] sm:$0xff]
        %v456 = vld [vmem:[%s248 + $0x118] sm:$0xff]
        %v457 = vld [vmem:[%s248 + $0x120] sm:$0xff]
        %v458 = vld [vmem:[%s248 + $0x128] sm:$0xff]
        %v459 = vld [vmem:[%s248 + $0x130] sm:$0xff]
        %v460 = vld [vmem:[%s248 + $0x138] sm:$0xff]
        %v461 = vld [vmem:[%s248 + $0x140] sm:$0xff]
        %v462 = vld [vmem:[%s248 + $0x148] sm:$0xff]
        %v463 = vld [vmem:[%s248 + $0x150] sm:$0xff]
        %v464 = vld [vmem:[%s248 + $0x158] sm:$0xff]
        %v465 = vld [vmem:[%s248 + $0x160] sm:$0xff]
        %v466 = vld [vmem:[%s248 + $0x168] sm:$0xff]
        %v467 = vld [vmem:[%s248 + $0x170] sm:$0xff]
        %v468 = vld [vmem:[%s248 + $0x178] sm:$0xff]
        %v469 = vld [vmem:[%s248 + $0x180] sm:$0xff]
        %v470 = vld [vmem:[%s248 + $0x188] sm:$0xff]
        %v471 = vld [vmem:[%s248 + $0x190] sm:$0xff]
        %v472 = vld [vmem:[%s248 + $0x198] sm:$0xff]
        %v473 = vld [vmem:[%s248 + $0x1a0] sm:$0xff]
        %v474 = vld [vmem:[%s248 + $0x1a8] sm:$0xff]
        %v475 = vld [vmem:[%s248 + $0x1b0] sm:$0xff]
        %v476 = vld [vmem:[%s248 + $0x1b8] sm:$0xff]
        %v477 = vld [vmem:[%s248 + $0x1c0] sm:$0xff]
        %v478 = vld [vmem:[%s248 + $0x1c8] sm:$0xff]
        %v479 = vld [vmem:[%s248 + $0x1d0] sm:$0xff]
        %v480 = vld [vmem:[%s248 + $0x1d8] sm:$0xff]
        %v481 = vld [vmem:[%s248 + $0x1e0] sm:$0xff]
        %v482 = vld [vmem:[%s248 + $0x1e8] sm:$0xff]
        %v483 = vld [vmem:[%s248 + $0x1f0] sm:$0xff]
        %v484 = vld [vmem:[%s248 + $0x1f8] sm:$0xff]
        %v485 = vld [vmem:[%s248 + $0x200] sm:$0xff]
        %v486 = vld [vmem:[%s248 + $0x208] sm:$0xff]
        %v487 = vld [vmem:[%s248 + $0x210] sm:$0xff]
        %v488 = vld [vmem:[%s248 + $0x218] sm:$0xff]
        %v489 = vld [vmem:[%s248 + $0x220] sm:$0xff]
        %v490 = vld [vmem:[%s248 + $0x228] sm:$0xff]
        %v491 = vld [vmem:[%s248 + $0x230] sm:$0xff]
        %v492 = vld [vmem:[%s248 + $0x238] sm:$0xff]
        %v493 = vld [vmem:[%s248 + $0x240] sm:$0xff]
        %v494 = vld [vmem:[%s248 + $0x248] sm:$0xff]
        %v495 = vld [vmem:[%s248 + $0x250] sm:$0xff]
        %v496 = vld [vmem:[%s248 + $0x258] sm:$0xff]
        %v497 = vld [vmem:[%s248 + $0x260] sm:$0xff]
        %v498 = vld [vmem:[%s248 + $0x268] sm:$0xff]
        %v499 = vld [vmem:[%s248 + $0x270] sm:$0xff]
        %v500 = vld [vmem:[%s248 + $0x278] sm:$0xff]
        %v501 = vld [vmem:[%s248 + $0x280] sm:$0xff]
        %v502 = vld [vmem:[%s248 + $0x288] sm:$0xff]
        %v503 = vld [vmem:[%s248 + $0x290] sm:$0xff]
        %v504 = vld [vmem:[%s248 + $0x298] sm:$0xff]
        %v505 = vld [vmem:[%s248 + $0x2a0] sm:$0xff]
        %v506 = vld [vmem:[%s248 + $0x2a8] sm:$0xff]
        %v507 = vld [vmem:[%s248 + $0x2b0] sm:$0xff]
        %v508 = vld [vmem:[%s248 + $0x2b8] sm:$0xff]
        %v509 = vld [vmem:[%s248 + $0x2c0] sm:$0xff]
        %v510 = vld [vmem:[%s248 + $0x2c8] sm:$0xff]
        %v511 = vld [vmem:[%s248 + $0x2d0] sm:$0xff]
        %v512 = vld [vmem:[%s248 + $0x2d8] sm:$0xff]
        %v513 = vld [vmem:[%s248 + $0x2e0] sm:$0xff]
        %v514 = vld [vmem:[%s248 + $0x2e8] sm:$0xff]
        %v515 = vld [vmem:[%s248 + $0x2f0] sm:$0xff]
        %v516 = vld [vmem:[%s248 + $0x2f8] sm:$0xff]
        %v517 = vld [vmem:[%s248 + $0x300] sm:$0xff]
        %v518 = vld [vmem:[%s248 + $0x308] sm:$0xff]
        %v519 = vld [vmem:[%s248 + $0x310] sm:$0xff]
        %v520 = vld [vmem:[%s248 + $0x318] sm:$0xff]
        %v521 = vld [vmem:[%s248 + $0x320] sm:$0xff]
        %v522 = vld [vmem:[%s248 + $0x328] sm:$0xff]
        %v523 = vld [vmem:[%s248 + $0x330] sm:$0xff]
        %v524 = vld [vmem:[%s248 + $0x338] sm:$0xff]
        %v525 = vld [vmem:[%s248 + $0x340] sm:$0xff]
        %v526 = vld [vmem:[%s248 + $0x348] sm:$0xff]
        %v527 = vld [vmem:[%s248 + $0x350] sm:$0xff]
        %v528 = vld [vmem:[%s248 + $0x358] sm:$0xff]
        %v529 = vld [vmem:[%s248 + $0x360] sm:$0xff]
        %v530 = vld [vmem:[%s248 + $0x368] sm:$0xff]
        %v531 = vld [vmem:[%s248 + $0x370] sm:$0xff]
        %v532 = vld [vmem:[%s248 + $0x378] sm:$0xff]
        %v533 = vld [vmem:[%s248 + $0x380] sm:$0xff]
        %v534 = vld [vmem:[%s248 + $0x388] sm:$0xff]
        %v535 = vld [vmem:[%s248 + $0x390] sm:$0xff]
        %v536 = vld [vmem:[%s248 + $0x398] sm:$0xff]
        %v537 = vld [vmem:[%s248 + $0x3a0] sm:$0xff]
        %v538 = vld [vmem:[%s248 + $0x3a8] sm:$0xff]
        %v539 = vld [vmem:[%s248 + $0x3b0] sm:$0xff]
        %v540 = vld [vmem:[%s248 + $0x3b8] sm:$0xff]
        %v541 = vld [vmem:[%s248 + $0x3c0] sm:$0xff]
        %v542 = vld [vmem:[%s248 + $0x3c8] sm:$0xff]
        %v543 = vld [vmem:[%s248 + $0x3d0] sm:$0xff]
        %v544 = vld [vmem:[%s248 + $0x3d8] sm:$0xff]
        %v545 = vld [vmem:[%s248 + $0x3e0] sm:$0xff]
        %v546 = vld [vmem:[%s248 + $0x3e8] sm:$0xff]
        %v547 = vld [vmem:[%s248 + $0x3f0] sm:$0xff]
        %v548 = vld [vmem:[%s248 + $0x3f8] sm:$0xff]
        %v549 = vand.u32 %v422, 4294901760
        %550 = vmatprep.subr.mxu0 %v549
        %v551 = vand.u32 %v421, 4294901760
        %552 = vmatpush1.msra.mxu0 %v551
        %v553 = vand.u32 %v424, 4294901760
        %554 = vmatprep.subr.mxu0 %v553
        %v555 = vand.u32 %v423, 4294901760
        %556 = vmatpush1.msra.mxu0 %v555
        %v557 = vand.u32 %v426, 4294901760
        %558 = vmatprep.subr.mxu0 %v557
        %v559 = vand.u32 %v425, 4294901760
        %560 = vmatpush1.msra.mxu0 %v559
        %v561 = vand.u32 %v428, 4294901760
        %562 = vmatprep.subr.mxu0 %v561
        %v563 = vand.u32 %v427, 4294901760
        %564 = vmatpush1.msra.mxu0 %v563
        %v565 = vand.u32 %v430, 4294901760
        %566 = vmatprep.subr.mxu0 %v565
        %v567 = vand.u32 %v429, 4294901760
        %568 = vmatpush1.msra.mxu0 %v567
        %v569 = vand.u32 %v432, 4294901760
        %570 = vmatprep.subr.mxu0 %v569
        %v571 = vand.u32 %v431, 4294901760
        %572 = vmatpush1.msra.mxu0 %v571
        %v573 = vand.u32 %v434, 4294901760
        %574 = vmatprep.subr.mxu0 %v573
        %v575 = vand.u32 %v433, 4294901760
        %576 = vmatpush1.msra.mxu0 %v575
        %v577 = vand.u32 %v436, 4294901760
        %578 = vmatprep.subr.mxu0 %v577
        %v579 = vand.u32 %v435, 4294901760
        %580 = vmatpush1.msra.mxu0 %v579
        %v581 = vand.u32 %v438, 4294901760
        %582 = vmatprep.subr.mxu0 %v581
        %v583 = vand.u32 %v437, 4294901760
        %584 = vmatpush1.msra.mxu0 %v583
        %v585 = vand.u32 %v440, 4294901760
        %586 = vmatprep.subr.mxu0 %v585
        %v587 = vand.u32 %v439, 4294901760
        %588 = vmatpush1.msra.mxu0 %v587
        %v589 = vand.u32 %v442, 4294901760
        %590 = vmatprep.subr.mxu0 %v589
        %v591 = vand.u32 %v441, 4294901760
        %592 = vmatpush1.msra.mxu0 %v591
        %v593 = vand.u32 %v444, 4294901760
        %594 = vmatprep.subr.mxu0 %v593
        %v595 = vand.u32 %v443, 4294901760
        %596 = vmatpush1.msra.mxu0 %v595
        %v597 = vand.u32 %v446, 4294901760
        %598 = vmatprep.subr.mxu0 %v597
        %v599 = vand.u32 %v445, 4294901760
        %600 = vmatpush1.msra.mxu0 %v599
        %v601 = vand.u32 %v448, 4294901760
        %602 = vmatprep.subr.mxu0 %v601
        %v603 = vand.u32 %v447, 4294901760
        %604 = vmatpush1.msra.mxu0 %v603
        %v605 = vand.u32 %v450, 4294901760
        %606 = vmatprep.subr.mxu0 %v605
        %v607 = vand.u32 %v449, 4294901760
        %608 = vmatpush1.msra.mxu0 %v607
        %v609 = vand.u32 %v452, 4294901760
        %610 = vmatprep.subr.mxu0 %v609
        %v611 = vand.u32 %v451, 4294901760
        %612 = vmatpush1.msra.mxu0 %v611
        %v613 = vand.u32 %v454, 4294901760
        %614 = vmatprep.subr.mxu0 %v613
        %v615 = vand.u32 %v453, 4294901760
        %616 = vmatpush1.msra.mxu0 %v615
        %v617 = vand.u32 %v456, 4294901760
        %618 = vmatprep.subr.mxu0 %v617
        %v619 = vand.u32 %v455, 4294901760
        %620 = vmatpush1.msra.mxu0 %v619
        %v621 = vand.u32 %v458, 4294901760
        %622 = vmatprep.subr.mxu0 %v621
        %v623 = vand.u32 %v457, 4294901760
        %624 = vmatpush1.msra.mxu0 %v623
        %v625 = vand.u32 %v460, 4294901760
        %626 = vmatprep.subr.mxu0 %v625
        %v627 = vand.u32 %v459, 4294901760
        %628 = vmatpush1.msra.mxu0 %v627
        %v629 = vand.u32 %v462, 4294901760
        %630 = vmatprep.subr.mxu0 %v629
        %v631 = vand.u32 %v461, 4294901760
        %632 = vmatpush1.msra.mxu0 %v631
        %v633 = vand.u32 %v464, 4294901760
        %634 = vmatprep.subr.mxu0 %v633
        %v635 = vand.u32 %v463, 4294901760
        %636 = vmatpush1.msra.mxu0 %v635
        %v637 = vand.u32 %v466, 4294901760
        %638 = vmatprep.subr.mxu0 %v637
        %v639 = vand.u32 %v465, 4294901760
        %640 = vmatpush1.msra.mxu0 %v639
        %v641 = vand.u32 %v468, 4294901760
        %642 = vmatprep.subr.mxu0 %v641
        %v643 = vand.u32 %v467, 4294901760
        %644 = vmatpush1.msra.mxu0 %v643
        %v645 = vand.u32 %v470, 4294901760
        %646 = vmatprep.subr.mxu0 %v645
        %v647 = vand.u32 %v469, 4294901760
        %648 = vmatpush1.msra.mxu0 %v647
        %v649 = vand.u32 %v472, 4294901760
        %650 = vmatprep.subr.mxu0 %v649
        %v651 = vand.u32 %v471, 4294901760
        %652 = vmatpush1.msra.mxu0 %v651
        %v653 = vand.u32 %v474, 4294901760
        %654 = vmatprep.subr.mxu0 %v653
        %v655 = vand.u32 %v473, 4294901760
        %656 = vmatpush1.msra.mxu0 %v655
        %v657 = vand.u32 %v476, 4294901760
        %658 = vmatprep.subr.mxu0 %v657
        %v659 = vand.u32 %v475, 4294901760
        %660 = vmatpush1.msra.mxu0 %v659
        %v661 = vand.u32 %v478, 4294901760
        %662 = vmatprep.subr.mxu0 %v661
        %v663 = vand.u32 %v477, 4294901760
        %664 = vmatpush1.msra.mxu0 %v663
        %v665 = vand.u32 %v480, 4294901760
        %666 = vmatprep.subr.mxu0 %v665
        %v667 = vand.u32 %v479, 4294901760
        %668 = vmatpush1.msra.mxu0 %v667
        %v669 = vand.u32 %v482, 4294901760
        %670 = vmatprep.subr.mxu0 %v669
        %v671 = vand.u32 %v481, 4294901760
        %672 = vmatpush1.msra.mxu0 %v671
        %v673 = vand.u32 %v484, 4294901760
        %674 = vmatprep.subr.mxu0 %v673
        %v675 = vand.u32 %v483, 4294901760
        %676 = vmatpush1.msra.mxu0 %v675
        %v677 = vand.u32 %v294, 4294901760
        %v678 = vsub.f32 %v294, %v677
        %v679 = vand.u32 %v678, 4294901760
        %v680 = vsub.f32 %v678, %v679
        %v681 = vand.u32 %v680, 4294901760
        %682 = vmatprep.mubr.f32.mxu0 %v681
        %v683 = vand.u32 %v293, 4294901760
        %v684 = vsub.f32 %v293, %v683
        %v685 = vand.u32 %v684, 4294901760
        %v686 = vsub.f32 %v684, %v685
        %v687 = vand.u32 %v686, 4294901760
        %688 = vmatmul.mubr.f32.gmra.mrb[0].mxu0 %v687
        %v689 = vpop.f32.mrb[0].mxu0
        %v690 = vadd.f32 0.0, %v689
        %v691 = vpop.f32.mrb[0].mxu0
        %v692 = vadd.f32 0.0, %v691
        %v693 = vand.u32 %v298, 4294901760
        %v694 = vsub.f32 %v298, %v693
        %v695 = vand.u32 %v694, 4294901760
        %v696 = vsub.f32 %v694, %v695
        %v697 = vand.u32 %v696, 4294901760
        %698 = vmatprep.mubr.f32.mxu0 %v697
        %v699 = vand.u32 %v297, 4294901760
        %v700 = vsub.f32 %v297, %v699
        %v701 = vand.u32 %v700, 4294901760
        %v702 = vsub.f32 %v700, %v701
        %v703 = vand.u32 %v702, 4294901760
        %704 = vmatmul.mubr.f32.gmra.mrb[0].mxu0 %v703
        %v705 = vpop.f32.mrb[0].mxu0
        %v706 = vadd.f32 0.0, %v705
        %v707 = vpop.f32.mrb[0].mxu0
        %v708 = vadd.f32 0.0, %v707
        %v709 = vand.u32 %v302, 4294901760
        %v710 = vsub.f32 %v302, %v709
        %v711 = vand.u32 %v710, 4294901760
        %v712 = vsub.f32 %v710, %v711
        %v713 = vand.u32 %v712, 4294901760
        %714 = vmatprep.mubr.f32.mxu0 %v713
        %v715 = vand.u32 %v301, 4294901760
        %v716 = vsub.f32 %v301, %v715
        %v717 = vand.u32 %v716, 4294901760
        %v718 = vsub.f32 %v716, %v717
        %v719 = vand.u32 %v718, 4294901760
        %720 = vmatmul.mubr.f32.gmra.mrb[0].mxu0 %v719
        %v721 = vpop.f32.mrb[0].mxu0
        %v722 = vadd.f32 0.0, %v721
        %v723 = vpop.f32.mrb[0].mxu0
        %v724 = vadd.f32 0.0, %v723
        %v725 = vand.u32 %v306, 4294901760
        %v726 = vsub.f32 %v306, %v725
        %v727 = vand.u32 %v726, 4294901760
        %v728 = vsub.f32 %v726, %v727
        %v729 = vand.u32 %v728, 4294901760
        %730 = vmatprep.mubr.f32.mxu0 %v729
        %v731 = vand.u32 %v305, 4294901760
        %v732 = vsub.f32 %v305, %v731
        %v733 = vand.u32 %v732, 4294901760
        %v734 = vsub.f32 %v732, %v733
        %v735 = vand.u32 %v734, 4294901760
        %736 = vmatmul.mubr.f32.gmra.mrb[0].mxu0 %v735
        %v737 = vpop.f32.mrb[0].mxu0
        %v738 = vadd.f32 0.0, %v737
        %v739 = vpop.f32.mrb[0].mxu0
        %v740 = vadd.f32 0.0, %v739
        %v741 = vand.u32 %v310, 4294901760
        %v742 = vsub.f32 %v310, %v741
        %v743 = vand.u32 %v742, 4294901760
        %v744 = vsub.f32 %v742, %v743
        %v745 = vand.u32 %v744, 4294901760
        %746 = vmatprep.mubr.f32.mxu0 %v745
        %v747 = vand.u32 %v309, 4294901760
        %v748 = vsub.f32 %v309, %v747
        %v749 = vand.u32 %v748, 4294901760
        %v750 = vsub.f32 %v748, %v749
        %v751 = vand.u32 %v750, 4294901760
        %752 = vmatmul.mubr.f32.gmra.mrb[0].mxu0 %v751
        %v753 = vpop.f32.mrb[0].mxu0
        %v754 = vadd.f32 0.0, %v753
        %v755 = vpop.f32.mrb[0].mxu0
        %v756 = vadd.f32 0.0, %v755
        %v757 = vand.u32 %v314, 4294901760
        %v758 = vsub.f32 %v314, %v757
        %v759 = vand.u32 %v758, 4294901760
        %v760 = vsub.f32 %v758, %v759
        %v761 = vand.u32 %v760, 4294901760
        %762 = vmatprep.mubr.f32.mxu0 %v761
        %v763 = vand.u32 %v313, 4294901760
        %v764 = vsub.f32 %v313, %v763
        %v765 = vand.u32 %v764, 4294901760
        %v766 = vsub.f32 %v764, %v765
        %v767 = vand.u32 %v766, 4294901760
        %768 = vmatmul.mubr.f32.gmra.mrb[0].mxu0 %v767
        %v769 = vpop.f32.mrb[0].mxu0
        %v770 = vadd.f32 0.0, %v769
        %v771 = vpop.f32.mrb[0].mxu0
        %v772 = vadd.f32 0.0, %v771
        %v773 = vand.u32 %v318, 4294901760
        %v774 = vsub.f32 %v318, %v773
        %v775 = vand.u32 %v774, 4294901760
        %v776 = vsub.f32 %v774, %v775
        %v777 = vand.u32 %v776, 4294901760
        %778 = vmatprep.mubr.f32.mxu0 %v777
        %v779 = vand.u32 %v317, 4294901760
        %v780 = vsub.f32 %v317, %v779
        %v781 = vand.u32 %v780, 4294901760
        %v782 = vsub.f32 %v780, %v781
        %v783 = vand.u32 %v782, 4294901760
        %784 = vmatmul.mubr.f32.gmra.mrb[0].mxu0 %v783
        %v785 = vpop.f32.mrb[0].mxu0
        %v786 = vadd.f32 0.0, %v785
        %v787 = vpop.f32.mrb[0].mxu0
        %v788 = vadd.f32 0.0, %v787
        %v789 = vand.u32 %v322, 4294901760
        %v790 = vsub.f32 %v322, %v789
        %v791 = vand.u32 %v790, 4294901760
        %v792 = vsub.f32 %v790, %v791
        %v793 = vand.u32 %v792, 4294901760
        %794 = vmatprep.mubr.f32.mxu0 %v793
        %v795 = vand.u32 %v321, 4294901760
        %v796 = vsub.f32 %v321, %v795
        %v797 = vand.u32 %v796, 4294901760
        %v798 = vsub.f32 %v796, %v797
        %v799 = vand.u32 %v798, 4294901760
        %800 = vmatmul.mubr.f32.gmra.mrb[0].mxu0 %v799
        %v801 = vpop.f32.mrb[0].mxu0
        %v802 = vadd.f32 0.0, %v801
        %v803 = vpop.f32.mrb[0].mxu0
        %v804 = vadd.f32 0.0, %v803
        %v805 = vand.u32 %v326, 4294901760
        %v806 = vsub.f32 %v326, %v805
        %v807 = vand.u32 %v806, 4294901760
        %v808 = vsub.f32 %v806, %v807
        %v809 = vand.u32 %v808, 4294901760
        %810 = vmatprep.mubr.f32.mxu0 %v809
        %v811 = vand.u32 %v325, 4294901760
        %v812 = vsub.f32 %v325, %v811
        %v813 = vand.u32 %v812, 4294901760
        %v814 = vsub.f32 %v812, %v813
        %v815 = vand.u32 %v814, 4294901760
        %816 = vmatmul.mubr.f32.gmra.mrb[0].mxu0 %v815
        %v817 = vpop.f32.mrb[0].mxu0
        %v818 = vadd.f32 0.0, %v817
        %v819 = vpop.f32.mrb[0].mxu0
        %v820 = vadd.f32 0.0, %v819
        %v821 = vand.u32 %v330, 4294901760
        %v822 = vsub.f32 %v330, %v821
        %v823 = vand.u32 %v822, 4294901760
        %v824 = vsub.f32 %v822, %v823
        %v825 = vand.u32 %v824, 4294901760
        %826 = vmatprep.mubr.f32.mxu0 %v825
        %v827 = vand.u32 %v329, 4294901760
        %v828 = vsub.f32 %v329, %v827
        %v829 = vand.u32 %v828, 4294901760
        %v830 = vsub.f32 %v828, %v829
        %v831 = vand.u32 %v830, 4294901760
        %832 = vmatmul.mubr.f32.gmra.mrb[0].mxu0 %v831
        %v833 = vpop.f32.mrb[0].mxu0
        %v834 = vadd.f32 0.0, %v833
        %v835 = vpop.f32.mrb[0].mxu0
        %v836 = vadd.f32 0.0, %v835
        %v837 = vand.u32 %v334, 4294901760
        %v838 = vsub.f32 %v334, %v837
        %v839 = vand.u32 %v838, 4294901760
        %v840 = vsub.f32 %v838, %v839
        %v841 = vand.u32 %v840, 4294901760
        %842 = vmatprep.mubr.f32.mxu0 %v841
        %v843 = vand.u32 %v333, 4294901760
        %v844 = vsub.f32 %v333, %v843
        %v845 = vand.u32 %v844, 4294901760
        %v846 = vsub.f32 %v844, %v845
        %v847 = vand.u32 %v846, 4294901760
        %848 = vmatmul.mubr.f32.gmra.mrb[0].mxu0 %v847
        %v849 = vpop.f32.mrb[0].mxu0
        %v850 = vadd.f32 0.0, %v849
        %v851 = vpop.f32.mrb[0].mxu0
        %v852 = vadd.f32 0.0, %v851
        %v853 = vand.u32 %v338, 4294901760
        %v854 = vsub.f32 %v338, %v853
        %v855 = vand.u32 %v854, 4294901760
        %v856 = vsub.f32 %v854, %v855
        %v857 = vand.u32 %v856, 4294901760
        %858 = vmatprep.mubr.f32.mxu0 %v857
        %v859 = vand.u32 %v337, 4294901760
        %v860 = vsub.f32 %v337, %v859
        %v861 = vand.u32 %v860, 4294901760
        %v862 = vsub.f32 %v860, %v861
        %v863 = vand.u32 %v862, 4294901760
        %864 = vmatmul.mubr.f32.gmra.mrb[0].mxu0 %v863
        %v865 = vpop.f32.mrb[0].mxu0
        %v866 = vadd.f32 0.0, %v865
        %v867 = vpop.f32.mrb[0].mxu0
        %v868 = vadd.f32 0.0, %v867
        %v869 = vand.u32 %v342, 4294901760
        %v870 = vsub.f32 %v342, %v869
        %v871 = vand.u32 %v870, 4294901760
        %v872 = vsub.f32 %v870, %v871
        %v873 = vand.u32 %v872, 4294901760
        %874 = vmatprep.mubr.f32.mxu0 %v873
        %v875 = vand.u32 %v341, 4294901760
        %v876 = vsub.f32 %v341, %v875
        %v877 = vand.u32 %v876, 4294901760
        %v878 = vsub.f32 %v876, %v877
        %v879 = vand.u32 %v878, 4294901760
        %880 = vmatmul.mubr.f32.gmra.mrb[0].mxu0 %v879
        %v881 = vpop.f32.mrb[0].mxu0
        %v882 = vadd.f32 0.0, %v881
        %v883 = vpop.f32.mrb[0].mxu0
        %v884 = vadd.f32 0.0, %v883
        %v885 = vand.u32 %v346, 4294901760
        %v886 = vsub.f32 %v346, %v885
        %v887 = vand.u32 %v886, 4294901760
        %v888 = vsub.f32 %v886, %v887
        %v889 = vand.u32 %v888, 4294901760
        %890 = vmatprep.mubr.f32.mxu0 %v889
        %v891 = vand.u32 %v345, 4294901760
        %v892 = vsub.f32 %v345, %v891
        %v893 = vand.u32 %v892, 4294901760
        %v894 = vsub.f32 %v892, %v893
        %v895 = vand.u32 %v894, 4294901760
        %896 = vmatmul.mubr.f32.gmra.mrb[0].mxu0 %v895
        %v897 = vpop.f32.mrb[0].mxu0
        %v898 = vadd.f32 0.0, %v897
        %v899 = vpop.f32.mrb[0].mxu0
        %v900 = vadd.f32 0.0, %v899
        %v901 = vand.u32 %v350, 4294901760
        %v902 = vsub.f32 %v350, %v901
        %v903 = vand.u32 %v902, 4294901760
        %v904 = vsub.f32 %v902, %v903
        %v905 = vand.u32 %v904, 4294901760
        %906 = vmatprep.mubr.f32.mxu0 %v905
        %v907 = vand.u32 %v349, 4294901760
        %v908 = vsub.f32 %v349, %v907
        %v909 = vand.u32 %v908, 4294901760
        %v910 = vsub.f32 %v908, %v909
        %v911 = vand.u32 %v910, 4294901760
        %912 = vmatmul.mubr.f32.gmra.mrb[0].mxu0 %v911
        %v913 = vpop.f32.mrb[0].mxu0
        %v914 = vadd.f32 0.0, %v913
        %v915 = vpop.f32.mrb[0].mxu0
        %v916 = vadd.f32 0.0, %v915
        %v917 = vand.u32 %v354, 4294901760
        %v918 = vsub.f32 %v354, %v917
        %v919 = vand.u32 %v918, 4294901760
        %v920 = vsub.f32 %v918, %v919
        %v921 = vand.u32 %v920, 4294901760
        %922 = vmatprep.mubr.f32.mxu0 %v921
        %v923 = vand.u32 %v353, 4294901760
        %v924 = vsub.f32 %v353, %v923
        %v925 = vand.u32 %v924, 4294901760
        %v926 = vsub.f32 %v924, %v925
        %v927 = vand.u32 %v926, 4294901760
        %928 = vmatmul.mubr.f32.gmra.mrb[0].mxu0 %v927
        %v929 = vpop.f32.mrb[0].mxu0
        %v930 = vadd.f32 0.0, %v929
        %v931 = vpop.f32.mrb[0].mxu0
        %v932 = vadd.f32 0.0, %v931
        %v933 = vand.u32 %v358, 4294901760
        %v934 = vsub.f32 %v358, %v933
        %v935 = vand.u32 %v934, 4294901760
        %v936 = vsub.f32 %v934, %v935
        %v937 = vand.u32 %v936, 4294901760
        %938 = vmatprep.mubr.f32.mxu0 %v937
        %v939 = vand.u32 %v357, 4294901760
        %v940 = vsub.f32 %v357, %v939
        %v941 = vand.u32 %v940, 4294901760
        %v942 = vsub.f32 %v940, %v941
        %v943 = vand.u32 %v942, 4294901760
        %944 = vmatmul.mubr.f32.gmra.mrb[0].mxu0 %v943
        %v945 = vpop.f32.mrb[0].mxu0
        %v946 = vadd.f32 0.0, %v945
        %v947 = vpop.f32.mrb[0].mxu0
        %v948 = vadd.f32 0.0, %v947
        %v949 = vand.u32 %v362, 4294901760
        %v950 = vsub.f32 %v362, %v949
        %v951 = vand.u32 %v950, 4294901760
        %v952 = vsub.f32 %v950, %v951
        %v953 = vand.u32 %v952, 4294901760
        %954 = vmatprep.mubr.f32.mxu0 %v953
        %v955 = vand.u32 %v361, 4294901760
        %v956 = vsub.f32 %v361, %v955
        %v957 = vand.u32 %v956, 4294901760
        %v958 = vsub.f32 %v956, %v957
        %v959 = vand.u32 %v958, 4294901760
        %960 = vmatmul.mubr.f32.gmra.mrb[0].mxu0 %v959
        %v961 = vpop.f32.mrb[0].mxu0
        %v962 = vadd.f32 0.0, %v961
        %v963 = vpop.f32.mrb[0].mxu0
        %v964 = vadd.f32 0.0, %v963
        %v965 = vand.u32 %v366, 4294901760
        %v966 = vsub.f32 %v366, %v965
        %v967 = vand.u32 %v966, 4294901760
        %v968 = vsub.f32 %v966, %v967
        %v969 = vand.u32 %v968, 4294901760
        %970 = vmatprep.mubr.f32.mxu0 %v969
        %v971 = vand.u32 %v365, 4294901760
        %v972 = vsub.f32 %v365, %v971
        %v973 = vand.u32 %v972, 4294901760
        %v974 = vsub.f32 %v972, %v973
        %v975 = vand.u32 %v974, 4294901760
        %976 = vmatmul.mubr.f32.gmra.mrb[0].mxu0 %v975
        %v977 = vpop.f32.mrb[0].mxu0
        %v978 = vadd.f32 0.0, %v977
        %v979 = vpop.f32.mrb[0].mxu0
        %v980 = vadd.f32 0.0, %v979
        %v981 = vand.u32 %v370, 4294901760
        %v982 = vsub.f32 %v370, %v981
        %v983 = vand.u32 %v982, 4294901760
        %v984 = vsub.f32 %v982, %v983
        %v985 = vand.u32 %v984, 4294901760
        %986 = vmatprep.mubr.f32.mxu0 %v985
        %v987 = vand.u32 %v369, 4294901760
        %v988 = vsub.f32 %v369, %v987
        %v989 = vand.u32 %v988, 4294901760
        %v990 = vsub.f32 %v988, %v989
        %v991 = vand.u32 %v990, 4294901760
        %992 = vmatmul.mubr.f32.gmra.mrb[0].mxu0 %v991
        %v993 = vpop.f32.mrb[0].mxu0
        %v994 = vadd.f32 0.0, %v993
        %v995 = vpop.f32.mrb[0].mxu0
        %v996 = vadd.f32 0.0, %v995
        %v997 = vand.u32 %v374, 4294901760
        %v998 = vsub.f32 %v374, %v997
        %v999 = vand.u32 %v998, 4294901760
        %v1000 = vsub.f32 %v998, %v999
        %v1001 = vand.u32 %v1000, 4294901760
        %1002 = vmatprep.mubr.f32.mxu0 %v1001
        %v1003 = vand.u32 %v373, 4294901760
        %v1004 = vsub.f32 %v373, %v1003
        %v1005 = vand.u32 %v1004, 4294901760
        %v1006 = vsub.f32 %v1004, %v1005
        %v1007 = vand.u32 %v1006, 4294901760
        %1008 = vmatmul.mubr.f32.gmra.mrb[0].mxu0 %v1007
        %v1009 = vpop.f32.mrb[0].mxu0
        %v1010 = vadd.f32 0.0, %v1009
        %v1011 = vpop.f32.mrb[0].mxu0
        %v1012 = vadd.f32 0.0, %v1011
        %v1013 = vand.u32 %v378, 4294901760
        %v1014 = vsub.f32 %v378, %v1013
        %v1015 = vand.u32 %v1014, 4294901760
        %v1016 = vsub.f32 %v1014, %v1015
        %v1017 = vand.u32 %v1016, 4294901760
        %1018 = vmatprep.mubr.f32.mxu0 %v1017
        %v1019 = vand.u32 %v377, 4294901760
        %v1020 = vsub.f32 %v377, %v1019
        %v1021 = vand.u32 %v1020, 4294901760
        %v1022 = vsub.f32 %v1020, %v1021
        %v1023 = vand.u32 %v1022, 4294901760
        %1024 = vmatmul.mubr.f32.gmra.mrb[0].mxu0 %v1023
        %v1025 = vpop.f32.mrb[0].mxu0
        %v1026 = vadd.f32 0.0, %v1025
        %v1027 = vpop.f32.mrb[0].mxu0
        %v1028 = vadd.f32 0.0, %v1027
        %v1029 = vand.u32 %v382, 4294901760
        %v1030 = vsub.f32 %v382, %v1029
        %v1031 = vand.u32 %v1030, 4294901760
        %v1032 = vsub.f32 %v1030, %v1031
        %v1033 = vand.u32 %v1032, 4294901760
        %1034 = vmatprep.mubr.f32.mxu0 %v1033
        %v1035 = vand.u32 %v381, 4294901760
        %v1036 = vsub.f32 %v381, %v1035
        %v1037 = vand.u32 %v1036, 4294901760
        %v1038 = vsub.f32 %v1036, %v1037
        %v1039 = vand.u32 %v1038, 4294901760
        %1040 = vmatmul.mubr.f32.gmra.mrb[0].mxu0 %v1039
        %v1041 = vpop.f32.mrb[0].mxu0
        %v1042 = vadd.f32 0.0, %v1041
        %v1043 = vpop.f32.mrb[0].mxu0
        %v1044 = vadd.f32 0.0, %v1043
        %v1045 = vand.u32 %v386, 4294901760
        %v1046 = vsub.f32 %v386, %v1045
        %v1047 = vand.u32 %v1046, 4294901760
        %v1048 = vsub.f32 %v1046, %v1047
        %v1049 = vand.u32 %v1048, 4294901760
        %1050 = vmatprep.mubr.f32.mxu0 %v1049
        %v1051 = vand.u32 %v385, 4294901760
        %v1052 = vsub.f32 %v385, %v1051
        %v1053 = vand.u32 %v1052, 4294901760
        %v1054 = vsub.f32 %v1052, %v1053
        %v1055 = vand.u32 %v1054, 4294901760
        %1056 = vmatmul.mubr.f32.gmra.mrb[0].mxu0 %v1055
        %v1057 = vpop.f32.mrb[0].mxu0
        %v1058 = vadd.f32 0.0, %v1057
        %v1059 = vpop.f32.mrb[0].mxu0
        %v1060 = vadd.f32 0.0, %v1059
        %v1061 = vand.u32 %v390, 4294901760
        %v1062 = vsub.f32 %v390, %v1061
        %v1063 = vand.u32 %v1062, 4294901760
        %v1064 = vsub.f32 %v1062, %v1063
        %v1065 = vand.u32 %v1064, 4294901760
        %1066 = vmatprep.mubr.f32.mxu0 %v1065
        %v1067 = vand.u32 %v389, 4294901760
        %v1068 = vsub.f32 %v389, %v1067
        %v1069 = vand.u32 %v1068, 4294901760
        %v1070 = vsub.f32 %v1068, %v1069
        %v1071 = vand.u32 %v1070, 4294901760
        %1072 = vmatmul.mubr.f32.gmra.mrb[0].mxu0 %v1071
        %v1073 = vpop.f32.mrb[0].mxu0
        %v1074 = vadd.f32 0.0, %v1073
        %v1075 = vpop.f32.mrb[0].mxu0
        %v1076 = vadd.f32 0.0, %v1075
        %v1077 = vand.u32 %v394, 4294901760
        %v1078 = vsub.f32 %v394, %v1077
        %v1079 = vand.u32 %v1078, 4294901760
        %v1080 = vsub.f32 %v1078, %v1079
        %v1081 = vand.u32 %v1080, 4294901760
        %1082 = vmatprep.mubr.f32.mxu0 %v1081
        %v1083 = vand.u32 %v393, 4294901760
        %v1084 = vsub.f32 %v393, %v1083
        %v1085 = vand.u32 %v1084, 4294901760
        %v1086 = vsub.f32 %v1084, %v1085
        %v1087 = vand.u32 %v1086, 4294901760
        %1088 = vmatmul.mubr.f32.gmra.mrb[0].mxu0 %v1087
        %v1089 = vpop.f32.mrb[0].mxu0
        %v1090 = vadd.f32 0.0, %v1089
        %v1091 = vpop.f32.mrb[0].mxu0
        %v1092 = vadd.f32 0.0, %v1091
        %v1093 = vand.u32 %v398, 4294901760
        %v1094 = vsub.f32 %v398, %v1093
        %v1095 = vand.u32 %v1094, 4294901760
        %v1096 = vsub.f32 %v1094, %v1095
        %v1097 = vand.u32 %v1096, 4294901760
        %1098 = vmatprep.mubr.f32.mxu0 %v1097
        %v1099 = vand.u32 %v397, 4294901760
        %v1100 = vsub.f32 %v397, %v1099
        %v1101 = vand.u32 %v1100, 4294901760
        %v1102 = vsub.f32 %v1100, %v1101
        %v1103 = vand.u32 %v1102, 4294901760
        %1104 = vmatmul.mubr.f32.gmra.mrb[0].mxu0 %v1103
        %v1105 = vpop.f32.mrb[0].mxu0
        %v1106 = vadd.f32 0.0, %v1105
        %v1107 = vpop.f32.mrb[0].mxu0
        %v1108 = vadd.f32 0.0, %v1107
        %v1109 = vand.u32 %v402, 4294901760
        %v1110 = vsub.f32 %v402, %v1109
        %v1111 = vand.u32 %v1110, 4294901760
        %v1112 = vsub.f32 %v1110, %v1111
        %v1113 = vand.u32 %v1112, 4294901760
        %1114 = vmatprep.mubr.f32.mxu0 %v1113
        %v1115 = vand.u32 %v401, 4294901760
        %v1116 = vsub.f32 %v401, %v1115
        %v1117 = vand.u32 %v1116, 4294901760
        %v1118 = vsub.f32 %v1116, %v1117
        %v1119 = vand.u32 %v1118, 4294901760
        %1120 = vmatmul.mubr.f32.gmra.mrb[0].mxu0 %v1119
        %v1121 = vpop.f32.mrb[0].mxu0
        %v1122 = vadd.f32 0.0, %v1121
        %v1123 = vpop.f32.mrb[0].mxu0
        %v1124 = vadd.f32 0.0, %v1123
        %v1125 = vand.u32 %v406, 4294901760
        %v1126 = vsub.f32 %v406, %v1125
        %v1127 = vand.u32 %v1126, 4294901760
        %v1128 = vsub.f32 %v1126, %v1127
        %v1129 = vand.u32 %v1128, 4294901760
        %1130 = vmatprep.mubr.f32.mxu0 %v1129
        %v1131 = vand.u32 %v405, 4294901760
        %v1132 = vsub.f32 %v405, %v1131
        %v1133 = vand.u32 %v1132, 4294901760
        %v1134 = vsub.f32 %v1132, %v1133
        %v1135 = vand.u32 %v1134, 4294901760
        %1136 = vmatmul.mubr.f32.gmra.mrb[0].mxu0 %v1135
        %v1137 = vpop.f32.mrb[0].mxu0
        %v1138 = vadd.f32 0.0, %v1137
        %v1139 = vpop.f32.mrb[0].mxu0
        %v1140 = vadd.f32 0.0, %v1139
        %v1141 = vand.u32 %v410, 4294901760
        %v1142 = vsub.f32 %v410, %v1141
        %v1143 = vand.u32 %v1142, 4294901760
        %v1144 = vsub.f32 %v1142, %v1143
        %v1145 = vand.u32 %v1144, 4294901760
        %1146 = vmatprep.mubr.f32.mxu0 %v1145
        %v1147 = vand.u32 %v409, 4294901760
        %v1148 = vsub.f32 %v409, %v1147
        %v1149 = vand.u32 %v1148, 4294901760
        %v1150 = vsub.f32 %v1148, %v1149
        %v1151 = vand.u32 %v1150, 4294901760
        %1152 = vmatmul.mubr.f32.gmra.mrb[0].mxu0 %v1151
        %v1153 = vpop.f32.mrb[0].mxu0
        %v1154 = vadd.f32 0.0, %v1153
        %v1155 = vpop.f32.mrb[0].mxu0
        %v1156 = vadd.f32 0.0, %v1155
        %v1157 = vand.u32 %v414, 4294901760
        %v1158 = vsub.f32 %v414, %v1157
        %v1159 = vand.u32 %v1158, 4294901760
        %v1160 = vsub.f32 %v1158, %v1159
        %v1161 = vand.u32 %v1160, 4294901760
        %1162 = vmatprep.mubr.f32.mxu0 %v1161
        %v1163 = vand.u32 %v413, 4294901760
        %v1164 = vsub.f32 %v413, %v1163
        %v1165 = vand.u32 %v1164, 4294901760
        %v1166 = vsub.f32 %v1164, %v1165
        %v1167 = vand.u32 %v1166, 4294901760
        %1168 = vmatmul.mubr.f32.gmra.mrb[0].mxu0 %v1167
        %v1169 = vpop.f32.mrb[0].mxu0
        %v1170 = vadd.f32 0.0, %v1169
        %v1171 = vpop.f32.mrb[0].mxu0
        %v1172 = vadd.f32 0.0, %v1171
        %v1173 = vand.u32 %v418, 4294901760
        %v1174 = vsub.f32 %v418, %v1173
        %v1175 = vand.u32 %v1174, 4294901760
        %v1176 = vsub.f32 %v1174, %v1175
        %v1177 = vand.u32 %v1176, 4294901760
        %1178 = vmatprep.mubr.f32.mxu0 %v1177
        %v1179 = vand.u32 %v417, 4294901760
        %v1180 = vsub.f32 %v417, %v1179
        %v1181 = vand.u32 %v1180, 4294901760
        %v1182 = vsub.f32 %v1180, %v1181
        %v1183 = vand.u32 %v1182, 4294901760
        %1184 = vmatmul.mubr.f32.gmra.mrb[0].mxu0 %v1183
        %v1185 = vpop.f32.mrb[0].mxu0
        %v1186 = vadd.f32 0.0, %v1185
        %v1187 = vpop.f32.mrb[0].mxu0
        %v1188 = vadd.f32 0.0, %v1187
        %1189 = vdwg.mxu0
        %v1190 = vand.u32 %v422, 4294901760
        %v1191 = vsub.f32 %v422, %v1190
        %v1192 = vand.u32 %v1191, 4294901760
        %v1193 = vsub.f32 %v1191, %v1192
        %v1194 = vand.u32 %v1193, 4294901760
        %1195 = vmatprep.subr.mxu0 %v1194
        %v1196 = vand.u32 %v421, 4294901760
        %v1197 = vsub.f32 %v421, %v1196
        %v1198 = vand.u32 %v1197, 4294901760
        %v1199 = vsub.f32 %v1197, %v1198
        %v1200 = vand.u32 %v1199, 4294901760
        %1201 = vmatpush1.msra.mxu0 %v1200
        %v1202 = vand.u32 %v424, 4294901760
        %v1203 = vsub.f32 %v424, %v1202
        %v1204 = vand.u32 %v1203, 4294901760
        %v1205 = vsub.f32 %v1203, %v1204
        %v1206 = vand.u32 %v1205, 4294901760
        %1207 = vmatprep.subr.mxu0 %v1206
        %v1208 = vand.u32 %v423, 4294901760
        %v1209 = vsub.f32 %v423, %v1208
        %v1210 = vand.u32 %v1209, 4294901760
        %v1211 = vsub.f32 %v1209, %v1210
        %v1212 = vand.u32 %v1211, 4294901760
        %1213 = vmatpush1.msra.mxu0 %v1212
        %v1214 = vand.u32 %v426, 4294901760
        %v1215 = vsub.f32 %v426, %v1214
        %v1216 = vand.u32 %v1215, 4294901760
        %v1217 = vsub.f32 %v1215, %v1216
        %v1218 = vand.u32 %v1217, 4294901760
        %1219 = vmatprep.subr.mxu0 %v1218
        %v1220 = vand.u32 %v425, 4294901760
        %v1221 = vsub.f32 %v425, %v1220
        %v1222 = vand.u32 %v1221, 4294901760
        %v1223 = vsub.f32 %v1221, %v1222
        %v1224 = vand.u32 %v1223, 4294901760
        %1225 = vmatpush1.msra.mxu0 %v1224
        %v1226 = vand.u32 %v428, 4294901760
        %v1227 = vsub.f32 %v428, %v1226
        %v1228 = vand.u32 %v1227, 4294901760
        %v1229 = vsub.f32 %v1227, %v1228
        %v1230 = vand.u32 %v1229, 4294901760
        %1231 = vmatprep.subr.mxu0 %v1230
        %v1232 = vand.u32 %v427, 4294901760
        %v1233 = vsub.f32 %v427, %v1232
        %v1234 = vand.u32 %v1233, 4294901760
        %v1235 = vsub.f32 %v1233, %v1234
        %v1236 = vand.u32 %v1235, 4294901760
        %1237 = vmatpush1.msra.mxu0 %v1236
        %v1238 = vand.u32 %v430, 4294901760
        %v1239 = vsub.f32 %v430, %v1238
        %v1240 = vand.u32 %v1239, 4294901760
        %v1241 = vsub.f32 %v1239, %v1240
        %v1242 = vand.u32 %v1241, 4294901760
        %1243 = vmatprep.subr.mxu0 %v1242
        %v1244 = vand.u32 %v429, 4294901760
        %v1245 = vsub.f32 %v429, %v1244
        %v1246 = vand.u32 %v1245, 4294901760
        %v1247 = vsub.f32 %v1245, %v1246
        %v1248 = vand.u32 %v1247, 4294901760
        %1249 = vmatpush1.msra.mxu0 %v1248
        %v1250 = vand.u32 %v432, 4294901760
        %v1251 = vsub.f32 %v432, %v1250
        %v1252 = vand.u32 %v1251, 4294901760
        %v1253 = vsub.f32 %v1251, %v1252
        %v1254 = vand.u32 %v1253, 4294901760
        %1255 = vmatprep.subr.mxu0 %v1254
        %v1256 = vand.u32 %v431, 4294901760
        %v1257 = vsub.f32 %v431, %v1256
        %v1258 = vand.u32 %v1257, 4294901760
        %v1259 = vsub.f32 %v1257, %v1258
        %v1260 = vand.u32 %v1259, 4294901760
        %1261 = vmatpush1.msra.mxu0 %v1260
        %v1262 = vand.u32 %v434, 4294901760
        %v1263 = vsub.f32 %v434, %v1262
        %v1264 = vand.u32 %v1263, 4294901760
        %v1265 = vsub.f32 %v1263, %v1264
        %v1266 = vand.u32 %v1265, 4294901760
        %1267 = vmatprep.subr.mxu0 %v1266
        %v1268 = vand.u32 %v433, 4294901760
        %v1269 = vsub.f32 %v433, %v1268
        %v1270 = vand.u32 %v1269, 4294901760
        %v1271 = vsub.f32 %v1269, %v1270
        %v1272 = vand.u32 %v1271, 4294901760
        %1273 = vmatpush1.msra.mxu0 %v1272
        %v1274 = vand.u32 %v436, 4294901760
        %v1275 = vsub.f32 %v436, %v1274
        %v1276 = vand.u32 %v1275, 4294901760
        %v1277 = vsub.f32 %v1275, %v1276
        %v1278 = vand.u32 %v1277, 4294901760
        %1279 = vmatprep.subr.mxu0 %v1278
        %v1280 = vand.u32 %v435, 4294901760
        %v1281 = vsub.f32 %v435, %v1280
        %v1282 = vand.u32 %v1281, 4294901760
        %v1283 = vsub.f32 %v1281, %v1282
        %v1284 = vand.u32 %v1283, 4294901760
        %1285 = vmatpush1.msra.mxu0 %v1284
        %v1286 = vand.u32 %v438, 4294901760
        %v1287 = vsub.f32 %v438, %v1286
        %v1288 = vand.u32 %v1287, 4294901760
        %v1289 = vsub.f32 %v1287, %v1288
        %v1290 = vand.u32 %v1289, 4294901760
        %1291 = vmatprep.subr.mxu0 %v1290
        %v1292 = vand.u32 %v437, 4294901760
        %v1293 = vsub.f32 %v437, %v1292
        %v1294 = vand.u32 %v1293, 4294901760
        %v1295 = vsub.f32 %v1293, %v1294
        %v1296 = vand.u32 %v1295, 4294901760
        %1297 = vmatpush1.msra.mxu0 %v1296
        %v1298 = vand.u32 %v440, 4294901760
        %v1299 = vsub.f32 %v440, %v1298
        %v1300 = vand.u32 %v1299, 4294901760
        %v1301 = vsub.f32 %v1299, %v1300
        %v1302 = vand.u32 %v1301, 4294901760
        %1303 = vmatprep.subr.mxu0 %v1302
        %v1304 = vand.u32 %v439, 4294901760
        %v1305 = vsub.f32 %v439, %v1304
        %v1306 = vand.u32 %v1305, 4294901760
        %v1307 = vsub.f32 %v1305, %v1306
        %v1308 = vand.u32 %v1307, 4294901760
        %1309 = vmatpush1.msra.mxu0 %v1308
        %v1310 = vand.u32 %v442, 4294901760
        %v1311 = vsub.f32 %v442, %v1310
        %v1312 = vand.u32 %v1311, 4294901760
        %v1313 = vsub.f32 %v1311, %v1312
        %v1314 = vand.u32 %v1313, 4294901760
        %1315 = vmatprep.subr.mxu0 %v1314
        %v1316 = vand.u32 %v441, 4294901760
        %v1317 = vsub.f32 %v441, %v1316
        %v1318 = vand.u32 %v1317, 4294901760
        %v1319 = vsub.f32 %v1317, %v1318
        %v1320 = vand.u32 %v1319, 4294901760
        %1321 = vmatpush1.msra.mxu0 %v1320
        %v1322 = vand.u32 %v444, 4294901760
        %v1323 = vsub.f32 %v444, %v1322
        %v1324 = vand.u32 %v1323, 4294901760
        %v1325 = vsub.f32 %v1323, %v1324
        %v1326 = vand.u32 %v1325, 4294901760
        %1327 = vmatprep.subr.mxu0 %v1326
        %v1328 = vand.u32 %v443, 4294901760
        %v1329 = vsub.f32 %v443, %v1328
        %v1330 = vand.u32 %v1329, 4294901760
        %v1331 = vsub.f32 %v1329, %v1330
        %v1332 = vand.u32 %v1331, 4294901760
        %1333 = vmatpush1.msra.mxu0 %v1332
        %v1334 = vand.u32 %v446, 4294901760
        %v1335 = vsub.f32 %v446, %v1334
        %v1336 = vand.u32 %v1335, 4294901760
        %v1337 = vsub.f32 %v1335, %v1336
        %v1338 = vand.u32 %v1337, 4294901760
        %1339 = vmatprep.subr.mxu0 %v1338
        %v1340 = vand.u32 %v445, 4294901760
        %v1341 = vsub.f32 %v445, %v1340
        %v1342 = vand.u32 %v1341, 4294901760
        %v1343 = vsub.f32 %v1341, %v1342
        %v1344 = vand.u32 %v1343, 4294901760
        %1345 = vmatpush1.msra.mxu0 %v1344
        %v1346 = vand.u32 %v448, 4294901760
        %v1347 = vsub.f32 %v448, %v1346
        %v1348 = vand.u32 %v1347, 4294901760
        %v1349 = vsub.f32 %v1347, %v1348
        %v1350 = vand.u32 %v1349, 4294901760
        %1351 = vmatprep.subr.mxu0 %v1350
        %v1352 = vand.u32 %v447, 4294901760
        %v1353 = vsub.f32 %v447, %v1352
        %v1354 = vand.u32 %v1353, 4294901760
        %v1355 = vsub.f32 %v1353, %v1354
        %v1356 = vand.u32 %v1355, 4294901760
        %1357 = vmatpush1.msra.mxu0 %v1356
        %v1358 = vand.u32 %v450, 4294901760
        %v1359 = vsub.f32 %v450, %v1358
        %v1360 = vand.u32 %v1359, 4294901760
        %v1361 = vsub.f32 %v1359, %v1360
        %v1362 = vand.u32 %v1361, 4294901760
        %1363 = vmatprep.subr.mxu0 %v1362
        %v1364 = vand.u32 %v449, 4294901760
        %v1365 = vsub.f32 %v449, %v1364
        %v1366 = vand.u32 %v1365, 4294901760
        %v1367 = vsub.f32 %v1365, %v1366
        %v1368 = vand.u32 %v1367, 4294901760
        %1369 = vmatpush1.msra.mxu0 %v1368
        %v1370 = vand.u32 %v452, 4294901760
        %v1371 = vsub.f32 %v452, %v1370
        %v1372 = vand.u32 %v1371, 4294901760
        %v1373 = vsub.f32 %v1371, %v1372
        %v1374 = vand.u32 %v1373, 4294901760
        %1375 = vmatprep.subr.mxu0 %v1374
        %v1376 = vand.u32 %v451, 4294901760
        %v1377 = vsub.f32 %v451, %v1376
        %v1378 = vand.u32 %v1377, 4294901760
        %v1379 = vsub.f32 %v1377, %v1378
        %v1380 = vand.u32 %v1379, 4294901760
        %1381 = vmatpush1.msra.mxu0 %v1380
        %v1382 = vand.u32 %v454, 4294901760
        %v1383 = vsub.f32 %v454, %v1382
        %v1384 = vand.u32 %v1383, 4294901760
        %v1385 = vsub.f32 %v1383, %v1384
        %v1386 = vand.u32 %v1385, 4294901760
        %1387 = vmatprep.subr.mxu0 %v1386
        %v1388 = vand.u32 %v453, 4294901760
        %v1389 = vsub.f32 %v453, %v1388
        %v1390 = vand.u32 %v1389, 4294901760
        %v1391 = vsub.f32 %v1389, %v1390
        %v1392 = vand.u32 %v1391, 4294901760
        %1393 = vmatpush1.msra.mxu0 %v1392
        %v1394 = vand.u32 %v456, 4294901760
        %v1395 = vsub.f32 %v456, %v1394
        %v1396 = vand.u32 %v1395, 4294901760
        %v1397 = vsub.f32 %v1395, %v1396
        %v1398 = vand.u32 %v1397, 4294901760
        %1399 = vmatprep.subr.mxu0 %v1398
        %v1400 = vand.u32 %v455, 4294901760
        %v1401 = vsub.f32 %v455, %v1400
        %v1402 = vand.u32 %v1401, 4294901760
        %v1403 = vsub.f32 %v1401, %v1402
        %v1404 = vand.u32 %v1403, 4294901760
        %1405 = vmatpush1.msra.mxu0 %v1404
        %v1406 = vand.u32 %v458, 4294901760
        %v1407 = vsub.f32 %v458, %v1406
        %v1408 = vand.u32 %v1407, 4294901760
        %v1409 = vsub.f32 %v1407, %v1408
        %v1410 = vand.u32 %v1409, 4294901760
        %1411 = vmatprep.subr.mxu0 %v1410
        %v1412 = vand.u32 %v457, 4294901760
        %v1413 = vsub.f32 %v457, %v1412
        %v1414 = vand.u32 %v1413, 4294901760
        %v1415 = vsub.f32 %v1413, %v1414
        %v1416 = vand.u32 %v1415, 4294901760
        %1417 = vmatpush1.msra.mxu0 %v1416
        %v1418 = vand.u32 %v460, 4294901760
        %v1419 = vsub.f32 %v460, %v1418
        %v1420 = vand.u32 %v1419, 4294901760
        %v1421 = vsub.f32 %v1419, %v1420
        %v1422 = vand.u32 %v1421, 4294901760
        %1423 = vmatprep.subr.mxu0 %v1422
        %v1424 = vand.u32 %v459, 4294901760
        %v1425 = vsub.f32 %v459, %v1424
        %v1426 = vand.u32 %v1425, 4294901760
        %v1427 = vsub.f32 %v1425, %v1426
        %v1428 = vand.u32 %v1427, 4294901760
        %1429 = vmatpush1.msra.mxu0 %v1428
        %v1430 = vand.u32 %v462, 4294901760
        %v1431 = vsub.f32 %v462, %v1430
        %v1432 = vand.u32 %v1431, 4294901760
        %v1433 = vsub.f32 %v1431, %v1432
        %v1434 = vand.u32 %v1433, 4294901760
        %1435 = vmatprep.subr.mxu0 %v1434
        %v1436 = vand.u32 %v461, 4294901760
        %v1437 = vsub.f32 %v461, %v1436
        %v1438 = vand.u32 %v1437, 4294901760
        %v1439 = vsub.f32 %v1437, %v1438
        %v1440 = vand.u32 %v1439, 4294901760
        %1441 = vmatpush1.msra.mxu0 %v1440
        %v1442 = vand.u32 %v464, 4294901760
        %v1443 = vsub.f32 %v464, %v1442
        %v1444 = vand.u32 %v1443, 4294901760
        %v1445 = vsub.f32 %v1443, %v1444
        %v1446 = vand.u32 %v1445, 4294901760
        %1447 = vmatprep.subr.mxu0 %v1446
        %v1448 = vand.u32 %v463, 4294901760
        %v1449 = vsub.f32 %v463, %v1448
        %v1450 = vand.u32 %v1449, 4294901760
        %v1451 = vsub.f32 %v1449, %v1450
        %v1452 = vand.u32 %v1451, 4294901760
        %1453 = vmatpush1.msra.mxu0 %v1452
        %v1454 = vand.u32 %v466, 4294901760
        %v1455 = vsub.f32 %v466, %v1454
        %v1456 = vand.u32 %v1455, 4294901760
        %v1457 = vsub.f32 %v1455, %v1456
        %v1458 = vand.u32 %v1457, 4294901760
        %1459 = vmatprep.subr.mxu0 %v1458
        %v1460 = vand.u32 %v465, 4294901760
        %v1461 = vsub.f32 %v465, %v1460
        %v1462 = vand.u32 %v1461, 4294901760
        %v1463 = vsub.f32 %v1461, %v1462
        %v1464 = vand.u32 %v1463, 4294901760
        %1465 = vmatpush1.msra.mxu0 %v1464
        %v1466 = vand.u32 %v468, 4294901760
        %v1467 = vsub.f32 %v468, %v1466
        %v1468 = vand.u32 %v1467, 4294901760
        %v1469 = vsub.f32 %v1467, %v1468
        %v1470 = vand.u32 %v1469, 4294901760
        %1471 = vmatprep.subr.mxu0 %v1470
        %v1472 = vand.u32 %v467, 4294901760
        %v1473 = vsub.f32 %v467, %v1472
        %v1474 = vand.u32 %v1473, 4294901760
        %v1475 = vsub.f32 %v1473, %v1474
        %v1476 = vand.u32 %v1475, 4294901760
        %1477 = vmatpush1.msra.mxu0 %v1476
        %v1478 = vand.u32 %v470, 4294901760
        %v1479 = vsub.f32 %v470, %v1478
        %v1480 = vand.u32 %v1479, 4294901760
        %v1481 = vsub.f32 %v1479, %v1480
        %v1482 = vand.u32 %v1481, 4294901760
        %1483 = vmatprep.subr.mxu0 %v1482
        %v1484 = vand.u32 %v469, 4294901760
        %v1485 = vsub.f32 %v469, %v1484
        %v1486 = vand.u32 %v1485, 4294901760
        %v1487 = vsub.f32 %v1485, %v1486
        %v1488 = vand.u32 %v1487, 4294901760
        %1489 = vmatpush1.msra.mxu0 %v1488
        %v1490 = vand.u32 %v472, 4294901760
        %v1491 = vsub.f32 %v472, %v1490
        %v1492 = vand.u32 %v1491, 4294901760
        %v1493 = vsub.f32 %v1491, %v1492
        %v1494 = vand.u32 %v1493, 4294901760
        %1495 = vmatprep.subr.mxu0 %v1494
        %v1496 = vand.u32 %v471, 4294901760
        %v1497 = vsub.f32 %v471, %v1496
        %v1498 = vand.u32 %v1497, 4294901760
        %v1499 = vsub.f32 %v1497, %v1498
        %v1500 = vand.u32 %v1499, 4294901760
        %1501 = vmatpush1.msra.mxu0 %v1500
        %v1502 = vand.u32 %v474, 4294901760
        %v1503 = vsub.f32 %v474, %v1502
        %v1504 = vand.u32 %v1503, 4294901760
        %v1505 = vsub.f32 %v1503, %v1504
        %v1506 = vand.u32 %v1505, 4294901760
        %1507 = vmatprep.subr.mxu0 %v1506
        %v1508 = vand.u32 %v473, 4294901760
        %v1509 = vsub.f32 %v473, %v1508
        %v1510 = vand.u32 %v1509, 4294901760
        %v1511 = vsub.f32 %v1509, %v1510
        %v1512 = vand.u32 %v1511, 4294901760
        %1513 = vmatpush1.msra.mxu0 %v1512
        %v1514 = vand.u32 %v476, 4294901760
        %v1515 = vsub.f32 %v476, %v1514
        %v1516 = vand.u32 %v1515, 4294901760
        %v1517 = vsub.f32 %v1515, %v1516
        %v1518 = vand.u32 %v1517, 4294901760
        %1519 = vmatprep.subr.mxu0 %v1518
        %v1520 = vand.u32 %v475, 4294901760
        %v1521 = vsub.f32 %v475, %v1520
        %v1522 = vand.u32 %v1521, 4294901760
        %v1523 = vsub.f32 %v1521, %v1522
        %v1524 = vand.u32 %v1523, 4294901760
        %1525 = vmatpush1.msra.mxu0 %v1524
        %v1526 = vand.u32 %v478, 4294901760
        %v1527 = vsub.f32 %v478, %v1526
        %v1528 = vand.u32 %v1527, 4294901760
        %v1529 = vsub.f32 %v1527, %v1528
        %v1530 = vand.u32 %v1529, 4294901760
        %1531 = vmatprep.subr.mxu0 %v1530
        %v1532 = vand.u32 %v477, 4294901760
        %v1533 = vsub.f32 %v477, %v1532
        %v1534 = vand.u32 %v1533, 4294901760
        %v1535 = vsub.f32 %v1533, %v1534
        %v1536 = vand.u32 %v1535, 4294901760
        %1537 = vmatpush1.msra.mxu0 %v1536
        %v1538 = vand.u32 %v480, 4294901760
        %v1539 = vsub.f32 %v480, %v1538
        %v1540 = vand.u32 %v1539, 4294901760
        %v1541 = vsub.f32 %v1539, %v1540
        %v1542 = vand.u32 %v1541, 4294901760
        %1543 = vmatprep.subr.mxu0 %v1542
        %v1544 = vand.u32 %v479, 4294901760
        %v1545 = vsub.f32 %v479, %v1544
        %v1546 = vand.u32 %v1545, 4294901760
        %v1547 = vsub.f32 %v1545, %v1546
        %v1548 = vand.u32 %v1547, 4294901760
        %1549 = vmatpush1.msra.mxu0 %v1548
        %v1550 = vand.u32 %v482, 4294901760
        %v1551 = vsub.f32 %v482, %v1550
        %v1552 = vand.u32 %v1551, 4294901760
        %v1553 = vsub.f32 %v1551, %v1552
        %v1554 = vand.u32 %v1553, 4294901760
        %1555 = vmatprep.subr.mxu0 %v1554
        %v1556 = vand.u32 %v481, 4294901760
        %v1557 = vsub.f32 %v481, %v1556
        %v1558 = vand.u32 %v1557, 4294901760
        %v1559 = vsub.f32 %v1557, %v1558
        %v1560 = vand.u32 %v1559, 4294901760
        %1561 = vmatpush1.msra.mxu0 %v1560
        %v1562 = vand.u32 %v484, 4294901760
        %v1563 = vsub.f32 %v484, %v1562
        %v1564 = vand.u32 %v1563, 4294901760
        %v1565 = vsub.f32 %v1563, %v1564
        %v1566 = vand.u32 %v1565, 4294901760
        %1567 = vmatprep.subr.mxu0 %v1566
        %v1568 = vand.u32 %v483, 4294901760
        %v1569 = vsub.f32 %v483, %v1568
        %v1570 = vand.u32 %v1569, 4294901760
        %v1571 = vsub.f32 %v1569, %v1570
        %v1572 = vand.u32 %v1571, 4294901760
        %1573 = vmatpush1.msra.mxu0 %v1572
        %v1574 = vand.u32 %v294, 4294901760
        %1575 = vmatprep.mubr.f32.mxu0 %v1574
        %v1576 = vand.u32 %v293, 4294901760
        %1577 = vmatmul.mubr.f32.gmra.mrb[0].mxu0 %v1576
        %v1578 = vpop.f32.mrb[0].mxu0
        %v1579 = vadd.f32 %v690, %v1578
        %v1580 = vpop.f32.mrb[0].mxu0
        %v1581 = vadd.f32 %v692, %v1580
        %v1582 = vand.u32 %v298, 4294901760
        %1583 = vmatprep.mubr.f32.mxu0 %v1582
        %v1584 = vand.u32 %v297, 4294901760
        %1585 = vmatmul.mubr.f32.gmra.mrb[0].mxu0 %v1584
        %v1586 = vpop.f32.mrb[0].mxu0
        %v1587 = vadd.f32 %v706, %v1586
        %v1588 = vpop.f32.mrb[0].mxu0
        %v1589 = vadd.f32 %v708, %v1588
        %v1590 = vand.u32 %v302, 4294901760
        %1591 = vmatprep.mubr.f32.mxu0 %v1590
        %v1592 = vand.u32 %v301, 4294901760
        %1593 = vmatmul.mubr.f32.gmra.mrb[0].mxu0 %v1592
        %v1594 = vpop.f32.mrb[0].mxu0
        %v1595 = vadd.f32 %v722, %v1594
        %v1596 = vpop.f32.mrb[0].mxu0
        %v1597 = vadd.f32 %v724, %v1596
        %v1598 = vand.u32 %v306, 4294901760
        %1599 = vmatprep.mubr.f32.mxu0 %v1598
        %v1600 = vand.u32 %v305, 4294901760
        %1601 = vmatmul.mubr.f32.gmra.mrb[0].mxu0 %v1600
        %v1602 = vpop.f32.mrb[0].mxu0
        %v1603 = vadd.f32 %v738, %v1602
        %v1604 = vpop.f32.mrb[0].mxu0
        %v1605 = vadd.f32 %v740, %v1604
        %v1606 = vand.u32 %v310, 4294901760
        %1607 = vmatprep.mubr.f32.mxu0 %v1606
        %v1608 = vand.u32 %v309, 4294901760
        %1609 = vmatmul.mubr.f32.gmra.mrb[0].mxu0 %v1608
        %v1610 = vpop.f32.mrb[0].mxu0
        %v1611 = vadd.f32 %v754, %v1610
        %v1612 = vpop.f32.mrb[0].mxu0
        %v1613 = vadd.f32 %v756, %v1612
        %v1614 = vand.u32 %v314, 4294901760
        %1615 = vmatprep.mubr.f32.mxu0 %v1614
        %v1616 = vand.u32 %v313, 4294901760
        %1617 = vmatmul.mubr.f32.gmra.mrb[0].mxu0 %v1616
        %v1618 = vpop.f32.mrb[0].mxu0
        %v1619 = vadd.f32 %v770, %v1618
        %v1620 = vpop.f32.mrb[0].mxu0
        %v1621 = vadd.f32 %v772, %v1620
        %v1622 = vand.u32 %v318, 4294901760
        %1623 = vmatprep.mubr.f32.mxu0 %v1622
        %v1624 = vand.u32 %v317, 4294901760
        %1625 = vmatmul.mubr.f32.gmra.mrb[0].mxu0 %v1624
        %v1626 = vpop.f32.mrb[0].mxu0
        %v1627 = vadd.f32 %v786, %v1626
        %v1628 = vpop.f32.mrb[0].mxu0
        %v1629 = vadd.f32 %v788, %v1628
        %v1630 = vand.u32 %v322, 4294901760
        %1631 = vmatprep.mubr.f32.mxu0 %v1630
        %v1632 = vand.u32 %v321, 4294901760
        %1633 = vmatmul.mubr.f32.gmra.mrb[0].mxu0 %v1632
        %v1634 = vpop.f32.mrb[0].mxu0
        %v1635 = vadd.f32 %v802, %v1634
        %v1636 = vpop.f32.mrb[0].mxu0
        %v1637 = vadd.f32 %v804, %v1636
        %v1638 = vand.u32 %v326, 4294901760
        %1639 = vmatprep.mubr.f32.mxu0 %v1638
        %v1640 = vand.u32 %v325, 4294901760
        %1641 = vmatmul.mubr.f32.gmra.mrb[0].mxu0 %v1640
        %v1642 = vpop.f32.mrb[0].mxu0
        %v1643 = vadd.f32 %v818, %v1642
        %v1644 = vpop.f32.mrb[0].mxu0
        %v1645 = vadd.f32 %v820, %v1644
        %v1646 = vand.u32 %v330, 4294901760
        %1647 = vmatprep.mubr.f32.mxu0 %v1646
        %v1648 = vand.u32 %v329, 4294901760
        %1649 = vmatmul.mubr.f32.gmra.mrb[0].mxu0 %v1648
        %v1650 = vpop.f32.mrb[0].mxu0
        %v1651 = vadd.f32 %v834, %v1650
        %v1652 = vpop.f32.mrb[0].mxu0
        %v1653 = vadd.f32 %v836, %v1652
        %v1654 = vand.u32 %v334, 4294901760
        %1655 = vmatprep.mubr.f32.mxu0 %v1654
        %v1656 = vand.u32 %v333, 4294901760
        %1657 = vmatmul.mubr.f32.gmra.mrb[0].mxu0 %v1656
        %v1658 = vpop.f32.mrb[0].mxu0
        %v1659 = vadd.f32 %v850, %v1658
        %v1660 = vpop.f32.mrb[0].mxu0
        %v1661 = vadd.f32 %v852, %v1660
        %v1662 = vand.u32 %v338, 4294901760
        %1663 = vmatprep.mubr.f32.mxu0 %v1662
        %v1664 = vand.u32 %v337, 4294901760
        %1665 = vmatmul.mubr.f32.gmra.mrb[0].mxu0 %v1664
        %v1666 = vpop.f32.mrb[0].mxu0
        %v1667 = vadd.f32 %v866, %v1666
        %v1668 = vpop.f32.mrb[0].mxu0
        %v1669 = vadd.f32 %v868, %v1668
        %v1670 = vand.u32 %v342, 4294901760
        %1671 = vmatprep.mubr.f32.mxu0 %v1670
        %v1672 = vand.u32 %v341, 4294901760
        %1673 = vmatmul.mubr.f32.gmra.mrb[0].mxu0 %v1672
        %v1674 = vpop.f32.mrb[0].mxu0
        %v1675 = vadd.f32 %v882, %v1674
        %v1676 = vpop.f32.mrb[0].mxu0
        %v1677 = vadd.f32 %v884, %v1676
        %v1678 = vand.u32 %v346, 4294901760
        %1679 = vmatprep.mubr.f32.mxu0 %v1678
        %v1680 = vand.u32 %v345, 4294901760
        %1681 = vmatmul.mubr.f32.gmra.mrb[0].mxu0 %v1680
        %v1682 = vpop.f32.mrb[0].mxu0
        %v1683 = vadd.f32 %v898, %v1682
        %v1684 = vpop.f32.mrb[0].mxu0
        %v1685 = vadd.f32 %v900, %v1684
        %v1686 = vand.u32 %v350, 4294901760
        %1687 = vmatprep.mubr.f32.mxu0 %v1686
        %v1688 = vand.u32 %v349, 4294901760
        %1689 = vmatmul.mubr.f32.gmra.mrb[0].mxu0 %v1688
        %v1690 = vpop.f32.mrb[0].mxu0
        %v1691 = vadd.f32 %v914, %v1690
        %v1692 = vpop.f32.mrb[0].mxu0
        %v1693 = vadd.f32 %v916, %v1692
        %v1694 = vand.u32 %v354, 4294901760
        %1695 = vmatprep.mubr.f32.mxu0 %v1694
        %v1696 = vand.u32 %v353, 4294901760
        %1697 = vmatmul.mubr.f32.gmra.mrb[0].mxu0 %v1696
        %v1698 = vpop.f32.mrb[0].mxu0
        %v1699 = vadd.f32 %v930, %v1698
        %v1700 = vpop.f32.mrb[0].mxu0
        %v1701 = vadd.f32 %v932, %v1700
        %v1702 = vand.u32 %v358, 4294901760
        %1703 = vmatprep.mubr.f32.mxu0 %v1702
        %v1704 = vand.u32 %v357, 4294901760
        %1705 = vmatmul.mubr.f32.gmra.mrb[0].mxu0 %v1704
        %v1706 = vpop.f32.mrb[0].mxu0
        %v1707 = vadd.f32 %v946, %v1706
        %v1708 = vpop.f32.mrb[0].mxu0
        %v1709 = vadd.f32 %v948, %v1708
        %v1710 = vand.u32 %v362, 4294901760
        %1711 = vmatprep.mubr.f32.mxu0 %v1710
        %v1712 = vand.u32 %v361, 4294901760
        %1713 = vmatmul.mubr.f32.gmra.mrb[0].mxu0 %v1712
        %v1714 = vpop.f32.mrb[0].mxu0
        %v1715 = vadd.f32 %v962, %v1714
        %v1716 = vpop.f32.mrb[0].mxu0
        %v1717 = vadd.f32 %v964, %v1716
        %v1718 = vand.u32 %v366, 4294901760
        %1719 = vmatprep.mubr.f32.mxu0 %v1718
        %v1720 = vand.u32 %v365, 4294901760
        %1721 = vmatmul.mubr.f32.gmra.mrb[0].mxu0 %v1720
        %v1722 = vpop.f32.mrb[0].mxu0
        %v1723 = vadd.f32 %v978, %v1722
        %v1724 = vpop.f32.mrb[0].mxu0
        %v1725 = vadd.f32 %v980, %v1724
        %v1726 = vand.u32 %v370, 4294901760
        %1727 = vmatprep.mubr.f32.mxu0 %v1726
        %v1728 = vand.u32 %v369, 4294901760
        %1729 = vmatmul.mubr.f32.gmra.mrb[0].mxu0 %v1728
        %v1730 = vpop.f32.mrb[0].mxu0
        %v1731 = vadd.f32 %v994, %v1730
        %v1732 = vpop.f32.mrb[0].mxu0
        %v1733 = vadd.f32 %v996, %v1732
        %v1734 = vand.u32 %v374, 4294901760
        %1735 = vmatprep.mubr.f32.mxu0 %v1734
        %v1736 = vand.u32 %v373, 4294901760
        %1737 = vmatmul.mubr.f32.gmra.mrb[0].mxu0 %v1736
        %v1738 = vpop.f32.mrb[0].mxu0
        %v1739 = vadd.f32 %v1010, %v1738
        %v1740 = vpop.f32.mrb[0].mxu0
        %v1741 = vadd.f32 %v1012, %v1740
        %v1742 = vand.u32 %v378, 4294901760
        %1743 = vmatprep.mubr.f32.mxu0 %v1742
        %v1744 = vand.u32 %v377, 4294901760
        %1745 = vmatmul.mubr.f32.gmra.mrb[0].mxu0 %v1744
        %v1746 = vpop.f32.mrb[0].mxu0
        %v1747 = vadd.f32 %v1026, %v1746
        %v1748 = vpop.f32.mrb[0].mxu0
        %v1749 = vadd.f32 %v1028, %v1748
        %v1750 = vand.u32 %v382, 4294901760
        %1751 = vmatprep.mubr.f32.mxu0 %v1750
        %v1752 = vand.u32 %v381, 4294901760
        %1753 = vmatmul.mubr.f32.gmra.mrb[0].mxu0 %v1752
        %v1754 = vpop.f32.mrb[0].mxu0
        %v1755 = vadd.f32 %v1042, %v1754
        %v1756 = vpop.f32.mrb[0].mxu0
        %v1757 = vadd.f32 %v1044, %v1756
        %v1758 = vand.u32 %v386, 4294901760
        %1759 = vmatprep.mubr.f32.mxu0 %v1758
        %v1760 = vand.u32 %v385, 4294901760
        %1761 = vmatmul.mubr.f32.gmra.mrb[0].mxu0 %v1760
        %v1762 = vpop.f32.mrb[0].mxu0
        %v1763 = vadd.f32 %v1058, %v1762
        %v1764 = vpop.f32.mrb[0].mxu0
        %v1765 = vadd.f32 %v1060, %v1764
        %v1766 = vand.u32 %v390, 4294901760
        %1767 = vmatprep.mubr.f32.mxu0 %v1766
        %v1768 = vand.u32 %v389, 4294901760
        %1769 = vmatmul.mubr.f32.gmra.mrb[0].mxu0 %v1768
        %v1770 = vpop.f32.mrb[0].mxu0
        %v1771 = vadd.f32 %v1074, %v1770
        %v1772 = vpop.f32.mrb[0].mxu0
        %v1773 = vadd.f32 %v1076, %v1772
        %v1774 = vand.u32 %v394, 4294901760
        %1775 = vmatprep.mubr.f32.mxu0 %v1774
        %v1776 = vand.u32 %v393, 4294901760
        %1777 = vmatmul.mubr.f32.gmra.mrb[0].mxu0 %v1776
        %v1778 = vpop.f32.mrb[0].mxu0
        %v1779 = vadd.f32 %v1090, %v1778
        %v1780 = vpop.f32.mrb[0].mxu0
        %v1781 = vadd.f32 %v1092, %v1780
        %v1782 = vand.u32 %v398, 4294901760
        %1783 = vmatprep.mubr.f32.mxu0 %v1782
        %v1784 = vand.u32 %v397, 4294901760
        %1785 = vmatmul.mubr.f32.gmra.mrb[0].mxu0 %v1784
        %v1786 = vpop.f32.mrb[0].mxu0
        %v1787 = vadd.f32 %v1106, %v1786
        %v1788 = vpop.f32.mrb[0].mxu0
        %v1789 = vadd.f32 %v1108, %v1788
        %v1790 = vand.u32 %v402, 4294901760
        %1791 = vmatprep.mubr.f32.mxu0 %v1790
        %v1792 = vand.u32 %v401, 4294901760
        %1793 = vmatmul.mubr.f32.gmra.mrb[0].mxu0 %v1792
        %v1794 = vpop.f32.mrb[0].mxu0
        %v1795 = vadd.f32 %v1122, %v1794
        %v1796 = vpop.f32.mrb[0].mxu0
        %v1797 = vadd.f32 %v1124, %v1796
        %v1798 = vand.u32 %v406, 4294901760
        %1799 = vmatprep.mubr.f32.mxu0 %v1798
        %v1800 = vand.u32 %v405, 4294901760
        %1801 = vmatmul.mubr.f32.gmra.mrb[0].mxu0 %v1800
        %v1802 = vpop.f32.mrb[0].mxu0
        %v1803 = vadd.f32 %v1138, %v1802
        %v1804 = vpop.f32.mrb[0].mxu0
        %v1805 = vadd.f32 %v1140, %v1804
        %v1806 = vand.u32 %v410, 4294901760
        %1807 = vmatprep.mubr.f32.mxu0 %v1806
        %v1808 = vand.u32 %v409, 4294901760
        %1809 = vmatmul.mubr.f32.gmra.mrb[0].mxu0 %v1808
        %v1810 = vpop.f32.mrb[0].mxu0
        %v1811 = vadd.f32 %v1154, %v1810
        %v1812 = vpop.f32.mrb[0].mxu0
        %v1813 = vadd.f32 %v1156, %v1812
        %v1814 = vand.u32 %v414, 4294901760
        %1815 = vmatprep.mubr.f32.mxu0 %v1814
        %v1816 = vand.u32 %v413, 4294901760
        %1817 = vmatmul.mubr.f32.gmra.mrb[0].mxu0 %v1816
        %v1818 = vpop.f32.mrb[0].mxu0
        %v1819 = vadd.f32 %v1170, %v1818
        %v1820 = vpop.f32.mrb[0].mxu0
        %v1821 = vadd.f32 %v1172, %v1820
        %v1822 = vand.u32 %v418, 4294901760
        %1823 = vmatprep.mubr.f32.mxu0 %v1822
        %v1824 = vand.u32 %v417, 4294901760
        %1825 = vmatmul.mubr.f32.gmra.mrb[0].mxu0 %v1824
        %v1826 = vpop.f32.mrb[0].mxu0
        %v1827 = vadd.f32 %v1186, %v1826
        %v1828 = vpop.f32.mrb[0].mxu0
        %v1829 = vadd.f32 %v1188, %v1828
        %1830 = vdwg.mxu0
        %v1831 = vand.u32 %v422, 4294901760
        %v1832 = vsub.f32 %v422, %v1831
        %1833 = vmatprep.subr.mxu0 %v1832
        %v1834 = vand.u32 %v421, 4294901760
        %v1835 = vsub.f32 %v421, %v1834
        %1836 = vmatpush1.msra.mxu0 %v1835
        %v1837 = vand.u32 %v424, 4294901760
        %v1838 = vsub.f32 %v424, %v1837
        %1839 = vmatprep.subr.mxu0 %v1838
        %v1840 = vand.u32 %v423, 4294901760
        %v1841 = vsub.f32 %v423, %v1840
        %1842 = vmatpush1.msra.mxu0 %v1841
        %v1843 = vand.u32 %v426, 4294901760
        %v1844 = vsub.f32 %v426, %v1843
        %1845 = vmatprep.subr.mxu0 %v1844
        %v1846 = vand.u32 %v425, 4294901760
        %v1847 = vsub.f32 %v425, %v1846
        %1848 = vmatpush1.msra.mxu0 %v1847
        %v1849 = vand.u32 %v428, 4294901760
        %v1850 = vsub.f32 %v428, %v1849
        %1851 = vmatprep.subr.mxu0 %v1850
        %v1852 = vand.u32 %v427, 4294901760
        %v1853 = vsub.f32 %v427, %v1852
        %1854 = vmatpush1.msra.mxu0 %v1853
        %v1855 = vand.u32 %v430, 4294901760
        %v1856 = vsub.f32 %v430, %v1855
        %1857 = vmatprep.subr.mxu0 %v1856
        %v1858 = vand.u32 %v429, 4294901760
        %v1859 = vsub.f32 %v429, %v1858
        %1860 = vmatpush1.msra.mxu0 %v1859
        %v1861 = vand.u32 %v432, 4294901760
        %v1862 = vsub.f32 %v432, %v1861
        %1863 = vmatprep.subr.mxu0 %v1862
        %v1864 = vand.u32 %v431, 4294901760
        %v1865 = vsub.f32 %v431, %v1864
        %1866 = vmatpush1.msra.mxu0 %v1865
        %v1867 = vand.u32 %v434, 4294901760
        %v1868 = vsub.f32 %v434, %v1867
        %1869 = vmatprep.subr.mxu0 %v1868
        %v1870 = vand.u32 %v433, 4294901760
        %v1871 = vsub.f32 %v433, %v1870
        %1872 = vmatpush1.msra.mxu0 %v1871
        %v1873 = vand.u32 %v436, 4294901760
        %v1874 = vsub.f32 %v436, %v1873
        %1875 = vmatprep.subr.mxu0 %v1874
        %v1876 = vand.u32 %v435, 4294901760
        %v1877 = vsub.f32 %v435, %v1876
        %1878 = vmatpush1.msra.mxu0 %v1877
        %v1879 = vand.u32 %v438, 4294901760
        %v1880 = vsub.f32 %v438, %v1879
        %1881 = vmatprep.subr.mxu0 %v1880
        %v1882 = vand.u32 %v437, 4294901760
        %v1883 = vsub.f32 %v437, %v1882
        %1884 = vmatpush1.msra.mxu0 %v1883
        %v1885 = vand.u32 %v440, 4294901760
        %v1886 = vsub.f32 %v440, %v1885
        %1887 = vmatprep.subr.mxu0 %v1886
        %v1888 = vand.u32 %v439, 4294901760
        %v1889 = vsub.f32 %v439, %v1888
        %1890 = vmatpush1.msra.mxu0 %v1889
        %v1891 = vand.u32 %v442, 4294901760
        %v1892 = vsub.f32 %v442, %v1891
        %1893 = vmatprep.subr.mxu0 %v1892
        %v1894 = vand.u32 %v441, 4294901760
        %v1895 = vsub.f32 %v441, %v1894
        %1896 = vmatpush1.msra.mxu0 %v1895
        %v1897 = vand.u32 %v444, 4294901760
        %v1898 = vsub.f32 %v444, %v1897
        %1899 = vmatprep.subr.mxu0 %v1898
        %v1900 = vand.u32 %v443, 4294901760
        %v1901 = vsub.f32 %v443, %v1900
        %1902 = vmatpush1.msra.mxu0 %v1901
        %v1903 = vand.u32 %v446, 4294901760
        %v1904 = vsub.f32 %v446, %v1903
        %1905 = vmatprep.subr.mxu0 %v1904
        %v1906 = vand.u32 %v445, 4294901760
        %v1907 = vsub.f32 %v445, %v1906
        %1908 = vmatpush1.msra.mxu0 %v1907
        %v1909 = vand.u32 %v448, 4294901760
        %v1910 = vsub.f32 %v448, %v1909
        %1911 = vmatprep.subr.mxu0 %v1910
        %v1912 = vand.u32 %v447, 4294901760
        %v1913 = vsub.f32 %v447, %v1912
        %1914 = vmatpush1.msra.mxu0 %v1913
        %v1915 = vand.u32 %v450, 4294901760
        %v1916 = vsub.f32 %v450, %v1915
        %1917 = vmatprep.subr.mxu0 %v1916
        %v1918 = vand.u32 %v449, 4294901760
        %v1919 = vsub.f32 %v449, %v1918
        %1920 = vmatpush1.msra.mxu0 %v1919
        %v1921 = vand.u32 %v452, 4294901760
        %v1922 = vsub.f32 %v452, %v1921
        %1923 = vmatprep.subr.mxu0 %v1922
        %v1924 = vand.u32 %v451, 4294901760
        %v1925 = vsub.f32 %v451, %v1924
        %1926 = vmatpush1.msra.mxu0 %v1925
        %v1927 = vand.u32 %v454, 4294901760
        %v1928 = vsub.f32 %v454, %v1927
        %1929 = vmatprep.subr.mxu0 %v1928
        %v1930 = vand.u32 %v453, 4294901760
        %v1931 = vsub.f32 %v453, %v1930
        %1932 = vmatpush1.msra.mxu0 %v1931
        %v1933 = vand.u32 %v456, 4294901760
        %v1934 = vsub.f32 %v456, %v1933
        %1935 = vmatprep.subr.mxu0 %v1934
        %v1936 = vand.u32 %v455, 4294901760
        %v1937 = vsub.f32 %v455, %v1936
        %1938 = vmatpush1.msra.mxu0 %v1937
        %v1939 = vand.u32 %v458, 4294901760
        %v1940 = vsub.f32 %v458, %v1939
        %1941 = vmatprep.subr.mxu0 %v1940
        %v1942 = vand.u32 %v457, 4294901760
        %v1943 = vsub.f32 %v457, %v1942
        %1944 = vmatpush1.msra.mxu0 %v1943
        %v1945 = vand.u32 %v460, 4294901760
        %v1946 = vsub.f32 %v460, %v1945
        %1947 = vmatprep.subr.mxu0 %v1946
        %v1948 = vand.u32 %v459, 4294901760
        %v1949 = vsub.f32 %v459, %v1948
        %1950 = vmatpush1.msra.mxu0 %v1949
        %v1951 = vand.u32 %v462, 4294901760
        %v1952 = vsub.f32 %v462, %v1951
        %1953 = vmatprep.subr.mxu0 %v1952
        %v1954 = vand.u32 %v461, 4294901760
        %v1955 = vsub.f32 %v461, %v1954
        %1956 = vmatpush1.msra.mxu0 %v1955
        %v1957 = vand.u32 %v464, 4294901760
        %v1958 = vsub.f32 %v464, %v1957
        %1959 = vmatprep.subr.mxu0 %v1958
        %v1960 = vand.u32 %v463, 4294901760
        %v1961 = vsub.f32 %v463, %v1960
        %1962 = vmatpush1.msra.mxu0 %v1961
        %v1963 = vand.u32 %v466, 4294901760
        %v1964 = vsub.f32 %v466, %v1963
        %1965 = vmatprep.subr.mxu0 %v1964
        %v1966 = vand.u32 %v465, 4294901760
        %v1967 = vsub.f32 %v465, %v1966
        %1968 = vmatpush1.msra.mxu0 %v1967
        %v1969 = vand.u32 %v468, 4294901760
        %v1970 = vsub.f32 %v468, %v1969
        %1971 = vmatprep.subr.mxu0 %v1970
        %v1972 = vand.u32 %v467, 4294901760
        %v1973 = vsub.f32 %v467, %v1972
        %1974 = vmatpush1.msra.mxu0 %v1973
        %v1975 = vand.u32 %v470, 4294901760
        %v1976 = vsub.f32 %v470, %v1975
        %1977 = vmatprep.subr.mxu0 %v1976
        %v1978 = vand.u32 %v469, 4294901760
        %v1979 = vsub.f32 %v469, %v1978
        %1980 = vmatpush1.msra.mxu0 %v1979
        %v1981 = vand.u32 %v472, 4294901760
        %v1982 = vsub.f32 %v472, %v1981
        %1983 = vmatprep.subr.mxu0 %v1982
        %v1984 = vand.u32 %v471, 4294901760
        %v1985 = vsub.f32 %v471, %v1984
        %1986 = vmatpush1.msra.mxu0 %v1985
        %v1987 = vand.u32 %v474, 4294901760
        %v1988 = vsub.f32 %v474, %v1987
        %1989 = vmatprep.subr.mxu0 %v1988
        %v1990 = vand.u32 %v473, 4294901760
        %v1991 = vsub.f32 %v473, %v1990
        %1992 = vmatpush1.msra.mxu0 %v1991
        %v1993 = vand.u32 %v476, 4294901760
        %v1994 = vsub.f32 %v476, %v1993
        %1995 = vmatprep.subr.mxu0 %v1994
        %v1996 = vand.u32 %v475, 4294901760
        %v1997 = vsub.f32 %v475, %v1996
        %1998 = vmatpush1.msra.mxu0 %v1997
        %v1999 = vand.u32 %v478, 4294901760
        %v2000 = vsub.f32 %v478, %v1999
        %2001 = vmatprep.subr.mxu0 %v2000
        %v2002 = vand.u32 %v477, 4294901760
        %v2003 = vsub.f32 %v477, %v2002
        %2004 = vmatpush1.msra.mxu0 %v2003
        %v2005 = vand.u32 %v480, 4294901760
        %v2006 = vsub.f32 %v480, %v2005
        %2007 = vmatprep.subr.mxu0 %v2006
        %v2008 = vand.u32 %v479, 4294901760
        %v2009 = vsub.f32 %v479, %v2008
        %2010 = vmatpush1.msra.mxu0 %v2009
        %v2011 = vand.u32 %v482, 4294901760
        %v2012 = vsub.f32 %v482, %v2011
        %2013 = vmatprep.subr.mxu0 %v2012
        %v2014 = vand.u32 %v481, 4294901760
        %v2015 = vsub.f32 %v481, %v2014
        %2016 = vmatpush1.msra.mxu0 %v2015
        %v2017 = vand.u32 %v484, 4294901760
        %v2018 = vsub.f32 %v484, %v2017
        %2019 = vmatprep.subr.mxu0 %v2018
        %v2020 = vand.u32 %v483, 4294901760
        %v2021 = vsub.f32 %v483, %v2020
        %2022 = vmatpush1.msra.mxu0 %v2021
        %v2023 = vand.u32 %v294, 4294901760
        %v2024 = vsub.f32 %v294, %v2023
        %2025 = vmatprep.mubr.f32.mxu0 %v2024
        %v2026 = vand.u32 %v293, 4294901760
        %v2027 = vsub.f32 %v293, %v2026
        %2028 = vmatmul.mubr.f32.gmra.mrb[0].mxu0 %v2027
        %v2029 = vpop.f32.mrb[0].mxu0
        %v2030 = vadd.f32 %v1579, %v2029
        %v2031 = vpop.f32.mrb[0].mxu0
        %v2032 = vadd.f32 %v1581, %v2031
        %v2033 = vand.u32 %v298, 4294901760
        %v2034 = vsub.f32 %v298, %v2033
        %2035 = vmatprep.mubr.f32.mxu0 %v2034
        %v2036 = vand.u32 %v297, 4294901760
        %v2037 = vsub.f32 %v297, %v2036
        %2038 = vmatmul.mubr.f32.gmra.mrb[0].mxu0 %v2037
        %v2039 = vpop.f32.mrb[0].mxu0
        %v2040 = vadd.f32 %v1587, %v2039
        %v2041 = vpop.f32.mrb[0].mxu0
        %v2042 = vadd.f32 %v1589, %v2041
        %v2043 = vand.u32 %v302, 4294901760
        %v2044 = vsub.f32 %v302, %v2043
        %2045 = vmatprep.mubr.f32.mxu0 %v2044
        %v2046 = vand.u32 %v301, 4294901760
        %v2047 = vsub.f32 %v301, %v2046
        %2048 = vmatmul.mubr.f32.gmra.mrb[0].mxu0 %v2047
        %v2049 = vpop.f32.mrb[0].mxu0
        %v2050 = vadd.f32 %v1595, %v2049
        %v2051 = vpop.f32.mrb[0].mxu0
        %v2052 = vadd.f32 %v1597, %v2051
        %v2053 = vand.u32 %v306, 4294901760
        %v2054 = vsub.f32 %v306, %v2053
        %2055 = vmatprep.mubr.f32.mxu0 %v2054
        %v2056 = vand.u32 %v305, 4294901760
        %v2057 = vsub.f32 %v305, %v2056
        %2058 = vmatmul.mubr.f32.gmra.mrb[0].mxu0 %v2057
        %v2059 = vpop.f32.mrb[0].mxu0
        %v2060 = vadd.f32 %v1603, %v2059
        %v2061 = vpop.f32.mrb[0].mxu0
        %v2062 = vadd.f32 %v1605, %v2061
        %v2063 = vand.u32 %v310, 4294901760
        %v2064 = vsub.f32 %v310, %v2063
        %2065 = vmatprep.mubr.f32.mxu0 %v2064
        %v2066 = vand.u32 %v309, 4294901760
        %v2067 = vsub.f32 %v309, %v2066
        %2068 = vmatmul.mubr.f32.gmra.mrb[0].mxu0 %v2067
        %v2069 = vpop.f32.mrb[0].mxu0
        %v2070 = vadd.f32 %v1611, %v2069
        %v2071 = vpop.f32.mrb[0].mxu0
        %v2072 = vadd.f32 %v1613, %v2071
        %v2073 = vand.u32 %v314, 4294901760
        %v2074 = vsub.f32 %v314, %v2073
        %2075 = vmatprep.mubr.f32.mxu0 %v2074
        %v2076 = vand.u32 %v313, 4294901760
        %v2077 = vsub.f32 %v313, %v2076
        %2078 = vmatmul.mubr.f32.gmra.mrb[0].mxu0 %v2077
        %v2079 = vpop.f32.mrb[0].mxu0
        %v2080 = vadd.f32 %v1619, %v2079
        %v2081 = vpop.f32.mrb[0].mxu0
        %v2082 = vadd.f32 %v1621, %v2081
        %v2083 = vand.u32 %v318, 4294901760
        %v2084 = vsub.f32 %v318, %v2083
        %2085 = vmatprep.mubr.f32.mxu0 %v2084
        %v2086 = vand.u32 %v317, 4294901760
        %v2087 = vsub.f32 %v317, %v2086
        %2088 = vmatmul.mubr.f32.gmra.mrb[0].mxu0 %v2087
        %v2089 = vpop.f32.mrb[0].mxu0
        %v2090 = vadd.f32 %v1627, %v2089
        %v2091 = vpop.f32.mrb[0].mxu0
        %v2092 = vadd.f32 %v1629, %v2091
        %v2093 = vand.u32 %v322, 4294901760
        %v2094 = vsub.f32 %v322, %v2093
        %2095 = vmatprep.mubr.f32.mxu0 %v2094
        %v2096 = vand.u32 %v321, 4294901760
        %v2097 = vsub.f32 %v321, %v2096
        %2098 = vmatmul.mubr.f32.gmra.mrb[0].mxu0 %v2097
        %v2099 = vpop.f32.mrb[0].mxu0
        %v2100 = vadd.f32 %v1635, %v2099
        %v2101 = vpop.f32.mrb[0].mxu0
        %v2102 = vadd.f32 %v1637, %v2101
        %v2103 = vand.u32 %v326, 4294901760
        %v2104 = vsub.f32 %v326, %v2103
        %2105 = vmatprep.mubr.f32.mxu0 %v2104
        %v2106 = vand.u32 %v325, 4294901760
        %v2107 = vsub.f32 %v325, %v2106
        %2108 = vmatmul.mubr.f32.gmra.mrb[0].mxu0 %v2107
        %v2109 = vpop.f32.mrb[0].mxu0
        %v2110 = vadd.f32 %v1643, %v2109
        %v2111 = vpop.f32.mrb[0].mxu0
        %v2112 = vadd.f32 %v1645, %v2111
        %v2113 = vand.u32 %v330, 4294901760
        %v2114 = vsub.f32 %v330, %v2113
        %2115 = vmatprep.mubr.f32.mxu0 %v2114
        %v2116 = vand.u32 %v329, 4294901760
        %v2117 = vsub.f32 %v329, %v2116
        %2118 = vmatmul.mubr.f32.gmra.mrb[0].mxu0 %v2117
        %v2119 = vpop.f32.mrb[0].mxu0
        %v2120 = vadd.f32 %v1651, %v2119
        %v2121 = vpop.f32.mrb[0].mxu0
        %v2122 = vadd.f32 %v1653, %v2121
        %v2123 = vand.u32 %v334, 4294901760
        %v2124 = vsub.f32 %v334, %v2123
        %2125 = vmatprep.mubr.f32.mxu0 %v2124
        %v2126 = vand.u32 %v333, 4294901760
        %v2127 = vsub.f32 %v333, %v2126
        %2128 = vmatmul.mubr.f32.gmra.mrb[0].mxu0 %v2127
        %v2129 = vpop.f32.mrb[0].mxu0
        %v2130 = vadd.f32 %v1659, %v2129
        %v2131 = vpop.f32.mrb[0].mxu0
        %v2132 = vadd.f32 %v1661, %v2131
        %v2133 = vand.u32 %v338, 4294901760
        %v2134 = vsub.f32 %v338, %v2133
        %2135 = vmatprep.mubr.f32.mxu0 %v2134
        %v2136 = vand.u32 %v337, 4294901760
        %v2137 = vsub.f32 %v337, %v2136
        %2138 = vmatmul.mubr.f32.gmra.mrb[0].mxu0 %v2137
        %v2139 = vpop.f32.mrb[0].mxu0
        %v2140 = vadd.f32 %v1667, %v2139
        %v2141 = vpop.f32.mrb[0].mxu0
        %v2142 = vadd.f32 %v1669, %v2141
        %v2143 = vand.u32 %v342, 4294901760
        %v2144 = vsub.f32 %v342, %v2143
        %2145 = vmatprep.mubr.f32.mxu0 %v2144
        %v2146 = vand.u32 %v341, 4294901760
        %v2147 = vsub.f32 %v341, %v2146
        %2148 = vmatmul.mubr.f32.gmra.mrb[0].mxu0 %v2147
        %v2149 = vpop.f32.mrb[0].mxu0
        %v2150 = vadd.f32 %v1675, %v2149
        %v2151 = vpop.f32.mrb[0].mxu0
        %v2152 = vadd.f32 %v1677, %v2151
        %v2153 = vand.u32 %v346, 4294901760
        %v2154 = vsub.f32 %v346, %v2153
        %2155 = vmatprep.mubr.f32.mxu0 %v2154
        %v2156 = vand.u32 %v345, 4294901760
        %v2157 = vsub.f32 %v345, %v2156
        %2158 = vmatmul.mubr.f32.gmra.mrb[0].mxu0 %v2157
        %v2159 = vpop.f32.mrb[0].mxu0
        %v2160 = vadd.f32 %v1683, %v2159
        %v2161 = vpop.f32.mrb[0].mxu0
        %v2162 = vadd.f32 %v1685, %v2161
        %v2163 = vand.u32 %v350, 4294901760
        %v2164 = vsub.f32 %v350, %v2163
        %2165 = vmatprep.mubr.f32.mxu0 %v2164
        %v2166 = vand.u32 %v349, 4294901760
        %v2167 = vsub.f32 %v349, %v2166
        %2168 = vmatmul.mubr.f32.gmra.mrb[0].mxu0 %v2167
        %v2169 = vpop.f32.mrb[0].mxu0
        %v2170 = vadd.f32 %v1691, %v2169
        %v2171 = vpop.f32.mrb[0].mxu0
        %v2172 = vadd.f32 %v1693, %v2171
        %v2173 = vand.u32 %v354, 4294901760
        %v2174 = vsub.f32 %v354, %v2173
        %2175 = vmatprep.mubr.f32.mxu0 %v2174
        %v2176 = vand.u32 %v353, 4294901760
        %v2177 = vsub.f32 %v353, %v2176
        %2178 = vmatmul.mubr.f32.gmra.mrb[0].mxu0 %v2177
        %v2179 = vpop.f32.mrb[0].mxu0
        %v2180 = vadd.f32 %v1699, %v2179
        %v2181 = vpop.f32.mrb[0].mxu0
        %v2182 = vadd.f32 %v1701, %v2181
        %v2183 = vand.u32 %v358, 4294901760
        %v2184 = vsub.f32 %v358, %v2183
        %2185 = vmatprep.mubr.f32.mxu0 %v2184
        %v2186 = vand.u32 %v357, 4294901760
        %v2187 = vsub.f32 %v357, %v2186
        %2188 = vmatmul.mubr.f32.gmra.mrb[0].mxu0 %v2187
        %v2189 = vpop.f32.mrb[0].mxu0
        %v2190 = vadd.f32 %v1707, %v2189
        %v2191 = vpop.f32.mrb[0].mxu0
        %v2192 = vadd.f32 %v1709, %v2191
        %v2193 = vand.u32 %v362, 4294901760
        %v2194 = vsub.f32 %v362, %v2193
        %2195 = vmatprep.mubr.f32.mxu0 %v2194
        %v2196 = vand.u32 %v361, 4294901760
        %v2197 = vsub.f32 %v361, %v2196
        %2198 = vmatmul.mubr.f32.gmra.mrb[0].mxu0 %v2197
        %v2199 = vpop.f32.mrb[0].mxu0
        %v2200 = vadd.f32 %v1715, %v2199
        %v2201 = vpop.f32.mrb[0].mxu0
        %v2202 = vadd.f32 %v1717, %v2201
        %v2203 = vand.u32 %v366, 4294901760
        %v2204 = vsub.f32 %v366, %v2203
        %2205 = vmatprep.mubr.f32.mxu0 %v2204
        %v2206 = vand.u32 %v365, 4294901760
        %v2207 = vsub.f32 %v365, %v2206
        %2208 = vmatmul.mubr.f32.gmra.mrb[0].mxu0 %v2207
        %v2209 = vpop.f32.mrb[0].mxu0
        %v2210 = vadd.f32 %v1723, %v2209
        %v2211 = vpop.f32.mrb[0].mxu0
        %v2212 = vadd.f32 %v1725, %v2211
        %v2213 = vand.u32 %v370, 4294901760
        %v2214 = vsub.f32 %v370, %v2213
        %2215 = vmatprep.mubr.f32.mxu0 %v2214
        %v2216 = vand.u32 %v369, 4294901760
        %v2217 = vsub.f32 %v369, %v2216
        %2218 = vmatmul.mubr.f32.gmra.mrb[0].mxu0 %v2217
        %v2219 = vpop.f32.mrb[0].mxu0
        %v2220 = vadd.f32 %v1731, %v2219
        %v2221 = vpop.f32.mrb[0].mxu0
        %v2222 = vadd.f32 %v1733, %v2221
        %v2223 = vand.u32 %v374, 4294901760
        %v2224 = vsub.f32 %v374, %v2223
        %2225 = vmatprep.mubr.f32.mxu0 %v2224
        %v2226 = vand.u32 %v373, 4294901760
        %v2227 = vsub.f32 %v373, %v2226
        %2228 = vmatmul.mubr.f32.gmra.mrb[0].mxu0 %v2227
        %v2229 = vpop.f32.mrb[0].mxu0
        %v2230 = vadd.f32 %v1739, %v2229
        %v2231 = vpop.f32.mrb[0].mxu0
        %v2232 = vadd.f32 %v1741, %v2231
        %v2233 = vand.u32 %v378, 4294901760
        %v2234 = vsub.f32 %v378, %v2233
        %2235 = vmatprep.mubr.f32.mxu0 %v2234
        %v2236 = vand.u32 %v377, 4294901760
        %v2237 = vsub.f32 %v377, %v2236
        %2238 = vmatmul.mubr.f32.gmra.mrb[0].mxu0 %v2237
        %v2239 = vpop.f32.mrb[0].mxu0
        %v2240 = vadd.f32 %v1747, %v2239
        %v2241 = vpop.f32.mrb[0].mxu0
        %v2242 = vadd.f32 %v1749, %v2241
        %v2243 = vand.u32 %v382, 4294901760
        %v2244 = vsub.f32 %v382, %v2243
        %2245 = vmatprep.mubr.f32.mxu0 %v2244
        %v2246 = vand.u32 %v381, 4294901760
        %v2247 = vsub.f32 %v381, %v2246
        %2248 = vmatmul.mubr.f32.gmra.mrb[0].mxu0 %v2247
        %v2249 = vpop.f32.mrb[0].mxu0
        %v2250 = vadd.f32 %v1755, %v2249
        %v2251 = vpop.f32.mrb[0].mxu0
        %v2252 = vadd.f32 %v1757, %v2251
        %v2253 = vand.u32 %v386, 4294901760
        %v2254 = vsub.f32 %v386, %v2253
        %2255 = vmatprep.mubr.f32.mxu0 %v2254
        %v2256 = vand.u32 %v385, 4294901760
        %v2257 = vsub.f32 %v385, %v2256
        %2258 = vmatmul.mubr.f32.gmra.mrb[0].mxu0 %v2257
        %v2259 = vpop.f32.mrb[0].mxu0
        %v2260 = vadd.f32 %v1763, %v2259
        %v2261 = vpop.f32.mrb[0].mxu0
        %v2262 = vadd.f32 %v1765, %v2261
        %v2263 = vand.u32 %v390, 4294901760
        %v2264 = vsub.f32 %v390, %v2263
        %2265 = vmatprep.mubr.f32.mxu0 %v2264
        %v2266 = vand.u32 %v389, 4294901760
        %v2267 = vsub.f32 %v389, %v2266
        %2268 = vmatmul.mubr.f32.gmra.mrb[0].mxu0 %v2267
        %v2269 = vpop.f32.mrb[0].mxu0
        %v2270 = vadd.f32 %v1771, %v2269
        %v2271 = vpop.f32.mrb[0].mxu0
        %v2272 = vadd.f32 %v1773, %v2271
        %v2273 = vand.u32 %v394, 4294901760
        %v2274 = vsub.f32 %v394, %v2273
        %2275 = vmatprep.mubr.f32.mxu0 %v2274
        %v2276 = vand.u32 %v393, 4294901760
        %v2277 = vsub.f32 %v393, %v2276
        %2278 = vmatmul.mubr.f32.gmra.mrb[0].mxu0 %v2277
        %v2279 = vpop.f32.mrb[0].mxu0
        %v2280 = vadd.f32 %v1779, %v2279
        %v2281 = vpop.f32.mrb[0].mxu0
        %v2282 = vadd.f32 %v1781, %v2281
        %v2283 = vand.u32 %v398, 4294901760
        %v2284 = vsub.f32 %v398, %v2283
        %2285 = vmatprep.mubr.f32.mxu0 %v2284
        %v2286 = vand.u32 %v397, 4294901760
        %v2287 = vsub.f32 %v397, %v2286
        %2288 = vmatmul.mubr.f32.gmra.mrb[0].mxu0 %v2287
        %v2289 = vpop.f32.mrb[0].mxu0
        %v2290 = vadd.f32 %v1787, %v2289
        %v2291 = vpop.f32.mrb[0].mxu0
        %v2292 = vadd.f32 %v1789, %v2291
        %v2293 = vand.u32 %v402, 4294901760
        %v2294 = vsub.f32 %v402, %v2293
        %2295 = vmatprep.mubr.f32.mxu0 %v2294
        %v2296 = vand.u32 %v401, 4294901760
        %v2297 = vsub.f32 %v401, %v2296
        %2298 = vmatmul.mubr.f32.gmra.mrb[0].mxu0 %v2297
        %v2299 = vpop.f32.mrb[0].mxu0
        %v2300 = vadd.f32 %v1795, %v2299
        %v2301 = vpop.f32.mrb[0].mxu0
        %v2302 = vadd.f32 %v1797, %v2301
        %v2303 = vand.u32 %v406, 4294901760
        %v2304 = vsub.f32 %v406, %v2303
        %2305 = vmatprep.mubr.f32.mxu0 %v2304
        %v2306 = vand.u32 %v405, 4294901760
        %v2307 = vsub.f32 %v405, %v2306
        %2308 = vmatmul.mubr.f32.gmra.mrb[0].mxu0 %v2307
        %v2309 = vpop.f32.mrb[0].mxu0
        %v2310 = vadd.f32 %v1803, %v2309
        %v2311 = vpop.f32.mrb[0].mxu0
        %v2312 = vadd.f32 %v1805, %v2311
        %v2313 = vand.u32 %v410, 4294901760
        %v2314 = vsub.f32 %v410, %v2313
        %2315 = vmatprep.mubr.f32.mxu0 %v2314
        %v2316 = vand.u32 %v409, 4294901760
        %v2317 = vsub.f32 %v409, %v2316
        %2318 = vmatmul.mubr.f32.gmra.mrb[0].mxu0 %v2317
        %v2319 = vpop.f32.mrb[0].mxu0
        %v2320 = vadd.f32 %v1811, %v2319
        %v2321 = vpop.f32.mrb[0].mxu0
        %v2322 = vadd.f32 %v1813, %v2321
        %v2323 = vand.u32 %v414, 4294901760
        %v2324 = vsub.f32 %v414, %v2323
        %2325 = vmatprep.mubr.f32.mxu0 %v2324
        %v2326 = vand.u32 %v413, 4294901760
        %v2327 = vsub.f32 %v413, %v2326
        %2328 = vmatmul.mubr.f32.gmra.mrb[0].mxu0 %v2327
        %v2329 = vpop.f32.mrb[0].mxu0
        %v2330 = vadd.f32 %v1819, %v2329
        %v2331 = vpop.f32.mrb[0].mxu0
        %v2332 = vadd.f32 %v1821, %v2331
        %v2333 = vand.u32 %v418, 4294901760
        %v2334 = vsub.f32 %v418, %v2333
        %2335 = vmatprep.mubr.f32.mxu0 %v2334
        %v2336 = vand.u32 %v417, 4294901760
        %v2337 = vsub.f32 %v417, %v2336
        %2338 = vmatmul.mubr.f32.gmra.mrb[0].mxu0 %v2337
        %v2339 = vpop.f32.mrb[0].mxu0
        %v2340 = vadd.f32 %v1827, %v2339
        %v2341 = vpop.f32.mrb[0].mxu0
        %v2342 = vadd.f32 %v1829, %v2341
        %2343 = vdwg.mxu0
        %v2344 = vand.u32 %v422, 4294901760
        %2345 = vmatprep.subr.mxu0 %v2344
        %v2346 = vand.u32 %v421, 4294901760
        %2347 = vmatpush1.msra.mxu0 %v2346
        %v2348 = vand.u32 %v424, 4294901760
        %2349 = vmatprep.subr.mxu0 %v2348
        %v2350 = vand.u32 %v423, 4294901760
        %2351 = vmatpush1.msra.mxu0 %v2350
        %v2352 = vand.u32 %v426, 4294901760
        %2353 = vmatprep.subr.mxu0 %v2352
        %v2354 = vand.u32 %v425, 4294901760
        %2355 = vmatpush1.msra.mxu0 %v2354
        %v2356 = vand.u32 %v428, 4294901760
        %2357 = vmatprep.subr.mxu0 %v2356
        %v2358 = vand.u32 %v427, 4294901760
        %2359 = vmatpush1.msra.mxu0 %v2358
        %v2360 = vand.u32 %v430, 4294901760
        %2361 = vmatprep.subr.mxu0 %v2360
        %v2362 = vand.u32 %v429, 4294901760
        %2363 = vmatpush1.msra.mxu0 %v2362
        %v2364 = vand.u32 %v432, 4294901760
        %2365 = vmatprep.subr.mxu0 %v2364
        %v2366 = vand.u32 %v431, 4294901760
        %2367 = vmatpush1.msra.mxu0 %v2366
        %v2368 = vand.u32 %v434, 4294901760
        %2369 = vmatprep.subr.mxu0 %v2368
        %v2370 = vand.u32 %v433, 4294901760
        %2371 = vmatpush1.msra.mxu0 %v2370
        %v2372 = vand.u32 %v436, 4294901760
        %2373 = vmatprep.subr.mxu0 %v2372
        %v2374 = vand.u32 %v435, 4294901760
        %2375 = vmatpush1.msra.mxu0 %v2374
        %v2376 = vand.u32 %v438, 4294901760
        %2377 = vmatprep.subr.mxu0 %v2376
        %v2378 = vand.u32 %v437, 4294901760
        %2379 = vmatpush1.msra.mxu0 %v2378
        %v2380 = vand.u32 %v440, 4294901760
        %2381 = vmatprep.subr.mxu0 %v2380
        %v2382 = vand.u32 %v439, 4294901760
        %2383 = vmatpush1.msra.mxu0 %v2382
        %v2384 = vand.u32 %v442, 4294901760
        %2385 = vmatprep.subr.mxu0 %v2384
        %v2386 = vand.u32 %v441, 4294901760
        %2387 = vmatpush1.msra.mxu0 %v2386
        %v2388 = vand.u32 %v444, 4294901760
        %2389 = vmatprep.subr.mxu0 %v2388
        %v2390 = vand.u32 %v443, 4294901760
        %2391 = vmatpush1.msra.mxu0 %v2390
        %v2392 = vand.u32 %v446, 4294901760
        %2393 = vmatprep.subr.mxu0 %v2392
        %v2394 = vand.u32 %v445, 4294901760
        %2395 = vmatpush1.msra.mxu0 %v2394
        %v2396 = vand.u32 %v448, 4294901760
        %2397 = vmatprep.subr.mxu0 %v2396
        %v2398 = vand.u32 %v447, 4294901760
        %2399 = vmatpush1.msra.mxu0 %v2398
        %v2400 = vand.u32 %v450, 4294901760
        %2401 = vmatprep.subr.mxu0 %v2400
        %v2402 = vand.u32 %v449, 4294901760
        %2403 = vmatpush1.msra.mxu0 %v2402
        %v2404 = vand.u32 %v452, 4294901760
        %2405 = vmatprep.subr.mxu0 %v2404
        %v2406 = vand.u32 %v451, 4294901760
        %2407 = vmatpush1.msra.mxu0 %v2406
        %v2408 = vand.u32 %v454, 4294901760
        %2409 = vmatprep.subr.mxu0 %v2408
        %v2410 = vand.u32 %v453, 4294901760
        %2411 = vmatpush1.msra.mxu0 %v2410
        %v2412 = vand.u32 %v456, 4294901760
        %2413 = vmatprep.subr.mxu0 %v2412
        %v2414 = vand.u32 %v455, 4294901760
        %2415 = vmatpush1.msra.mxu0 %v2414
        %v2416 = vand.u32 %v458, 4294901760
        %2417 = vmatprep.subr.mxu0 %v2416
        %v2418 = vand.u32 %v457, 4294901760
        %2419 = vmatpush1.msra.mxu0 %v2418
        %v2420 = vand.u32 %v460, 4294901760
        %2421 = vmatprep.subr.mxu0 %v2420
        %v2422 = vand.u32 %v459, 4294901760
        %2423 = vmatpush1.msra.mxu0 %v2422
        %v2424 = vand.u32 %v462, 4294901760
        %2425 = vmatprep.subr.mxu0 %v2424
        %v2426 = vand.u32 %v461, 4294901760
        %2427 = vmatpush1.msra.mxu0 %v2426
        %v2428 = vand.u32 %v464, 4294901760
        %2429 = vmatprep.subr.mxu0 %v2428
        %v2430 = vand.u32 %v463, 4294901760
        %2431 = vmatpush1.msra.mxu0 %v2430
        %v2432 = vand.u32 %v466, 4294901760
        %2433 = vmatprep.subr.mxu0 %v2432
        %v2434 = vand.u32 %v465, 4294901760
        %2435 = vmatpush1.msra.mxu0 %v2434
        %v2436 = vand.u32 %v468, 4294901760
        %2437 = vmatprep.subr.mxu0 %v2436
        %v2438 = vand.u32 %v467, 4294901760
        %2439 = vmatpush1.msra.mxu0 %v2438
        %v2440 = vand.u32 %v470, 4294901760
        %2441 = vmatprep.subr.mxu0 %v2440
        %v2442 = vand.u32 %v469, 4294901760
        %2443 = vmatpush1.msra.mxu0 %v2442
        %v2444 = vand.u32 %v472, 4294901760
        %2445 = vmatprep.subr.mxu0 %v2444
        %v2446 = vand.u32 %v471, 4294901760
        %2447 = vmatpush1.msra.mxu0 %v2446
        %v2448 = vand.u32 %v474, 4294901760
        %2449 = vmatprep.subr.mxu0 %v2448
        %v2450 = vand.u32 %v473, 4294901760
        %2451 = vmatpush1.msra.mxu0 %v2450
        %v2452 = vand.u32 %v476, 4294901760
        %2453 = vmatprep.subr.mxu0 %v2452
        %v2454 = vand.u32 %v475, 4294901760
        %2455 = vmatpush1.msra.mxu0 %v2454
        %v2456 = vand.u32 %v478, 4294901760
        %2457 = vmatprep.subr.mxu0 %v2456
        %v2458 = vand.u32 %v477, 4294901760
        %2459 = vmatpush1.msra.mxu0 %v2458
        %v2460 = vand.u32 %v480, 4294901760
        %2461 = vmatprep.subr.mxu0 %v2460
        %v2462 = vand.u32 %v479, 4294901760
        %2463 = vmatpush1.msra.mxu0 %v2462
        %v2464 = vand.u32 %v482, 4294901760
        %2465 = vmatprep.subr.mxu0 %v2464
        %v2466 = vand.u32 %v481, 4294901760
        %2467 = vmatpush1.msra.mxu0 %v2466
        %v2468 = vand.u32 %v484, 4294901760
        %2469 = vmatprep.subr.mxu0 %v2468
        %v2470 = vand.u32 %v483, 4294901760
        %2471 = vmatpush1.msra.mxu0 %v2470
        %v2472 = vand.u32 %v294, 4294901760
        %v2473 = vsub.f32 %v294, %v2472
        %v2474 = vand.u32 %v2473, 4294901760
        %2475 = vmatprep.mubr.f32.mxu0 %v2474
        %v2476 = vand.u32 %v293, 4294901760
        %v2477 = vsub.f32 %v293, %v2476
        %v2478 = vand.u32 %v2477, 4294901760
        %2479 = vmatmul.mubr.f32.gmra.mrb[0].mxu0 %v2478
        %v2480 = vpop.f32.mrb[0].mxu0
        %v2481 = vadd.f32 %v2030, %v2480
        %v2482 = vpop.f32.mrb[0].mxu0
        %v2483 = vadd.f32 %v2032, %v2482
        %v2484 = vand.u32 %v298, 4294901760
        %v2485 = vsub.f32 %v298, %v2484
        %v2486 = vand.u32 %v2485, 4294901760
        %2487 = vmatprep.mubr.f32.mxu0 %v2486
        %v2488 = vand.u32 %v297, 4294901760
        %v2489 = vsub.f32 %v297, %v2488
        %v2490 = vand.u32 %v2489, 4294901760
        %2491 = vmatmul.mubr.f32.gmra.mrb[0].mxu0 %v2490
        %v2492 = vpop.f32.mrb[0].mxu0
        %v2493 = vadd.f32 %v2040, %v2492
        %v2494 = vpop.f32.mrb[0].mxu0
        %v2495 = vadd.f32 %v2042, %v2494
        %v2496 = vand.u32 %v302, 4294901760
        %v2497 = vsub.f32 %v302, %v2496
        %v2498 = vand.u32 %v2497, 4294901760
        %2499 = vmatprep.mubr.f32.mxu0 %v2498
        %v2500 = vand.u32 %v301, 4294901760
        %v2501 = vsub.f32 %v301, %v2500
        %v2502 = vand.u32 %v2501, 4294901760
        %2503 = vmatmul.mubr.f32.gmra.mrb[0].mxu0 %v2502
        %v2504 = vpop.f32.mrb[0].mxu0
        %v2505 = vadd.f32 %v2050, %v2504
        %v2506 = vpop.f32.mrb[0].mxu0
        %v2507 = vadd.f32 %v2052, %v2506
        %v2508 = vand.u32 %v306, 4294901760
        %v2509 = vsub.f32 %v306, %v2508
        %v2510 = vand.u32 %v2509, 4294901760
        %2511 = vmatprep.mubr.f32.mxu0 %v2510
        %v2512 = vand.u32 %v305, 4294901760
        %v2513 = vsub.f32 %v305, %v2512
        %v2514 = vand.u32 %v2513, 4294901760
        %2515 = vmatmul.mubr.f32.gmra.mrb[0].mxu0 %v2514
        %v2516 = vpop.f32.mrb[0].mxu0
        %v2517 = vadd.f32 %v2060, %v2516
        %v2518 = vpop.f32.mrb[0].mxu0
        %v2519 = vadd.f32 %v2062, %v2518
        %v2520 = vand.u32 %v310, 4294901760
        %v2521 = vsub.f32 %v310, %v2520
        %v2522 = vand.u32 %v2521, 4294901760
        %2523 = vmatprep.mubr.f32.mxu0 %v2522
        %v2524 = vand.u32 %v309, 4294901760
        %v2525 = vsub.f32 %v309, %v2524
        %v2526 = vand.u32 %v2525, 4294901760
        %2527 = vmatmul.mubr.f32.gmra.mrb[0].mxu0 %v2526
        %v2528 = vpop.f32.mrb[0].mxu0
        %v2529 = vadd.f32 %v2070, %v2528
        %v2530 = vpop.f32.mrb[0].mxu0
        %v2531 = vadd.f32 %v2072, %v2530
        %v2532 = vand.u32 %v314, 4294901760
        %v2533 = vsub.f32 %v314, %v2532
        %v2534 = vand.u32 %v2533, 4294901760
        %2535 = vmatprep.mubr.f32.mxu0 %v2534
        %v2536 = vand.u32 %v313, 4294901760
        %v2537 = vsub.f32 %v313, %v2536
        %v2538 = vand.u32 %v2537, 4294901760
        %2539 = vmatmul.mubr.f32.gmra.mrb[0].mxu0 %v2538
        %v2540 = vpop.f32.mrb[0].mxu0
        %v2541 = vadd.f32 %v2080, %v2540
        %v2542 = vpop.f32.mrb[0].mxu0
        %v2543 = vadd.f32 %v2082, %v2542
        %v2544 = vand.u32 %v318, 4294901760
        %v2545 = vsub.f32 %v318, %v2544
        %v2546 = vand.u32 %v2545, 4294901760
        %2547 = vmatprep.mubr.f32.mxu0 %v2546
        %v2548 = vand.u32 %v317, 4294901760
        %v2549 = vsub.f32 %v317, %v2548
        %v2550 = vand.u32 %v2549, 4294901760
        %2551 = vmatmul.mubr.f32.gmra.mrb[0].mxu0 %v2550
        %v2552 = vpop.f32.mrb[0].mxu0
        %v2553 = vadd.f32 %v2090, %v2552
        %v2554 = vpop.f32.mrb[0].mxu0
        %v2555 = vadd.f32 %v2092, %v2554
        %v2556 = vand.u32 %v322, 4294901760
        %v2557 = vsub.f32 %v322, %v2556
        %v2558 = vand.u32 %v2557, 4294901760
        %2559 = vmatprep.mubr.f32.mxu0 %v2558
        %v2560 = vand.u32 %v321, 4294901760
        %v2561 = vsub.f32 %v321, %v2560
        %v2562 = vand.u32 %v2561, 4294901760
        %2563 = vmatmul.mubr.f32.gmra.mrb[0].mxu0 %v2562
        %v2564 = vpop.f32.mrb[0].mxu0
        %v2565 = vadd.f32 %v2100, %v2564
        %v2566 = vpop.f32.mrb[0].mxu0
        %v2567 = vadd.f32 %v2102, %v2566
        %v2568 = vand.u32 %v326, 4294901760
        %v2569 = vsub.f32 %v326, %v2568
        %v2570 = vand.u32 %v2569, 4294901760
        %2571 = vmatprep.mubr.f32.mxu0 %v2570
        %v2572 = vand.u32 %v325, 4294901760
        %v2573 = vsub.f32 %v325, %v2572
        %v2574 = vand.u32 %v2573, 4294901760
        %2575 = vmatmul.mubr.f32.gmra.mrb[0].mxu0 %v2574
        %v2576 = vpop.f32.mrb[0].mxu0
        %v2577 = vadd.f32 %v2110, %v2576
        %v2578 = vpop.f32.mrb[0].mxu0
        %v2579 = vadd.f32 %v2112, %v2578
        %v2580 = vand.u32 %v330, 4294901760
        %v2581 = vsub.f32 %v330, %v2580
        %v2582 = vand.u32 %v2581, 4294901760
        %2583 = vmatprep.mubr.f32.mxu0 %v2582
        %v2584 = vand.u32 %v329, 4294901760
        %v2585 = vsub.f32 %v329, %v2584
        %v2586 = vand.u32 %v2585, 4294901760
        %2587 = vmatmul.mubr.f32.gmra.mrb[0].mxu0 %v2586
        %v2588 = vpop.f32.mrb[0].mxu0
        %v2589 = vadd.f32 %v2120, %v2588
        %v2590 = vpop.f32.mrb[0].mxu0
        %v2591 = vadd.f32 %v2122, %v2590
        %v2592 = vand.u32 %v334, 4294901760
        %v2593 = vsub.f32 %v334, %v2592
        %v2594 = vand.u32 %v2593, 4294901760
        %2595 = vmatprep.mubr.f32.mxu0 %v2594
        %v2596 = vand.u32 %v333, 4294901760
        %v2597 = vsub.f32 %v333, %v2596
        %v2598 = vand.u32 %v2597, 4294901760
        %2599 = vmatmul.mubr.f32.gmra.mrb[0].mxu0 %v2598
        %v2600 = vpop.f32.mrb[0].mxu0
        %v2601 = vadd.f32 %v2130, %v2600
        %v2602 = vpop.f32.mrb[0].mxu0
        %v2603 = vadd.f32 %v2132, %v2602
        %v2604 = vand.u32 %v338, 4294901760
        %v2605 = vsub.f32 %v338, %v2604
        %v2606 = vand.u32 %v2605, 4294901760
        %2607 = vmatprep.mubr.f32.mxu0 %v2606
        %v2608 = vand.u32 %v337, 4294901760
        %v2609 = vsub.f32 %v337, %v2608
        %v2610 = vand.u32 %v2609, 4294901760
        %2611 = vmatmul.mubr.f32.gmra.mrb[0].mxu0 %v2610
        %v2612 = vpop.f32.mrb[0].mxu0
        %v2613 = vadd.f32 %v2140, %v2612
        %v2614 = vpop.f32.mrb[0].mxu0
        %v2615 = vadd.f32 %v2142, %v2614
        %v2616 = vand.u32 %v342, 4294901760
        %v2617 = vsub.f32 %v342, %v2616
        %v2618 = vand.u32 %v2617, 4294901760
        %2619 = vmatprep.mubr.f32.mxu0 %v2618
        %v2620 = vand.u32 %v341, 4294901760
        %v2621 = vsub.f32 %v341, %v2620
        %v2622 = vand.u32 %v2621, 4294901760
        %2623 = vmatmul.mubr.f32.gmra.mrb[0].mxu0 %v2622
        %v2624 = vpop.f32.mrb[0].mxu0
        %v2625 = vadd.f32 %v2150, %v2624
        %v2626 = vpop.f32.mrb[0].mxu0
        %v2627 = vadd.f32 %v2152, %v2626
        %v2628 = vand.u32 %v346, 4294901760
        %v2629 = vsub.f32 %v346, %v2628
        %v2630 = vand.u32 %v2629, 4294901760
        %2631 = vmatprep.mubr.f32.mxu0 %v2630
        %v2632 = vand.u32 %v345, 4294901760
        %v2633 = vsub.f32 %v345, %v2632
        %v2634 = vand.u32 %v2633, 4294901760
        %2635 = vmatmul.mubr.f32.gmra.mrb[0].mxu0 %v2634
        %v2636 = vpop.f32.mrb[0].mxu0
        %v2637 = vadd.f32 %v2160, %v2636
        %v2638 = vpop.f32.mrb[0].mxu0
        %v2639 = vadd.f32 %v2162, %v2638
        %v2640 = vand.u32 %v350, 4294901760
        %v2641 = vsub.f32 %v350, %v2640
        %v2642 = vand.u32 %v2641, 4294901760
        %2643 = vmatprep.mubr.f32.mxu0 %v2642
        %v2644 = vand.u32 %v349, 4294901760
        %v2645 = vsub.f32 %v349, %v2644
        %v2646 = vand.u32 %v2645, 4294901760
        %2647 = vmatmul.mubr.f32.gmra.mrb[0].mxu0 %v2646
        %v2648 = vpop.f32.mrb[0].mxu0
        %v2649 = vadd.f32 %v2170, %v2648
        %v2650 = vpop.f32.mrb[0].mxu0
        %v2651 = vadd.f32 %v2172, %v2650
        %v2652 = vand.u32 %v354, 4294901760
        %v2653 = vsub.f32 %v354, %v2652
        %v2654 = vand.u32 %v2653, 4294901760
        %2655 = vmatprep.mubr.f32.mxu0 %v2654
        %v2656 = vand.u32 %v353, 4294901760
        %v2657 = vsub.f32 %v353, %v2656
        %v2658 = vand.u32 %v2657, 4294901760
        %2659 = vmatmul.mubr.f32.gmra.mrb[0].mxu0 %v2658
        %v2660 = vpop.f32.mrb[0].mxu0
        %v2661 = vadd.f32 %v2180, %v2660
        %v2662 = vpop.f32.mrb[0].mxu0
        %v2663 = vadd.f32 %v2182, %v2662
        %v2664 = vand.u32 %v358, 4294901760
        %v2665 = vsub.f32 %v358, %v2664
        %v2666 = vand.u32 %v2665, 4294901760
        %2667 = vmatprep.mubr.f32.mxu0 %v2666
        %v2668 = vand.u32 %v357, 4294901760
        %v2669 = vsub.f32 %v357, %v2668
        %v2670 = vand.u32 %v2669, 4294901760
        %2671 = vmatmul.mubr.f32.gmra.mrb[0].mxu0 %v2670
        %v2672 = vpop.f32.mrb[0].mxu0
        %v2673 = vadd.f32 %v2190, %v2672
        %v2674 = vpop.f32.mrb[0].mxu0
        %v2675 = vadd.f32 %v2192, %v2674
        %v2676 = vand.u32 %v362, 4294901760
        %v2677 = vsub.f32 %v362, %v2676
        %v2678 = vand.u32 %v2677, 4294901760
        %2679 = vmatprep.mubr.f32.mxu0 %v2678
        %v2680 = vand.u32 %v361, 4294901760
        %v2681 = vsub.f32 %v361, %v2680
        %v2682 = vand.u32 %v2681, 4294901760
        %2683 = vmatmul.mubr.f32.gmra.mrb[0].mxu0 %v2682
        %v2684 = vpop.f32.mrb[0].mxu0
        %v2685 = vadd.f32 %v2200, %v2684
        %v2686 = vpop.f32.mrb[0].mxu0
        %v2687 = vadd.f32 %v2202, %v2686
        %v2688 = vand.u32 %v366, 4294901760
        %v2689 = vsub.f32 %v366, %v2688
        %v2690 = vand.u32 %v2689, 4294901760
        %2691 = vmatprep.mubr.f32.mxu0 %v2690
        %v2692 = vand.u32 %v365, 4294901760
        %v2693 = vsub.f32 %v365, %v2692
        %v2694 = vand.u32 %v2693, 4294901760
        %2695 = vmatmul.mubr.f32.gmra.mrb[0].mxu0 %v2694
        %v2696 = vpop.f32.mrb[0].mxu0
        %v2697 = vadd.f32 %v2210, %v2696
        %v2698 = vpop.f32.mrb[0].mxu0
        %v2699 = vadd.f32 %v2212, %v2698
        %v2700 = vand.u32 %v370, 4294901760
        %v2701 = vsub.f32 %v370, %v2700
        %v2702 = vand.u32 %v2701, 4294901760
        %2703 = vmatprep.mubr.f32.mxu0 %v2702
        %v2704 = vand.u32 %v369, 4294901760
        %v2705 = vsub.f32 %v369, %v2704
        %v2706 = vand.u32 %v2705, 4294901760
        %2707 = vmatmul.mubr.f32.gmra.mrb[0].mxu0 %v2706
        %v2708 = vpop.f32.mrb[0].mxu0
        %v2709 = vadd.f32 %v2220, %v2708
        %v2710 = vpop.f32.mrb[0].mxu0
        %v2711 = vadd.f32 %v2222, %v2710
        %v2712 = vand.u32 %v374, 4294901760
        %v2713 = vsub.f32 %v374, %v2712
        %v2714 = vand.u32 %v2713, 4294901760
        %2715 = vmatprep.mubr.f32.mxu0 %v2714
        %v2716 = vand.u32 %v373, 4294901760
        %v2717 = vsub.f32 %v373, %v2716
        %v2718 = vand.u32 %v2717, 4294901760
        %2719 = vmatmul.mubr.f32.gmra.mrb[0].mxu0 %v2718
        %v2720 = vpop.f32.mrb[0].mxu0
        %v2721 = vadd.f32 %v2230, %v2720
        %v2722 = vpop.f32.mrb[0].mxu0
        %v2723 = vadd.f32 %v2232, %v2722
        %v2724 = vand.u32 %v378, 4294901760
        %v2725 = vsub.f32 %v378, %v2724
        %v2726 = vand.u32 %v2725, 4294901760
        %2727 = vmatprep.mubr.f32.mxu0 %v2726
        %v2728 = vand.u32 %v377, 4294901760
        %v2729 = vsub.f32 %v377, %v2728
        %v2730 = vand.u32 %v2729, 4294901760
        %2731 = vmatmul.mubr.f32.gmra.mrb[0].mxu0 %v2730
        %v2732 = vpop.f32.mrb[0].mxu0
        %v2733 = vadd.f32 %v2240, %v2732
        %v2734 = vpop.f32.mrb[0].mxu0
        %v2735 = vadd.f32 %v2242, %v2734
        %v2736 = vand.u32 %v382, 4294901760
        %v2737 = vsub.f32 %v382, %v2736
        %v2738 = vand.u32 %v2737, 4294901760
        %2739 = vmatprep.mubr.f32.mxu0 %v2738
        %v2740 = vand.u32 %v381, 4294901760
        %v2741 = vsub.f32 %v381, %v2740
        %v2742 = vand.u32 %v2741, 4294901760
        %2743 = vmatmul.mubr.f32.gmra.mrb[0].mxu0 %v2742
        %v2744 = vpop.f32.mrb[0].mxu0
        %v2745 = vadd.f32 %v2250, %v2744
        %v2746 = vpop.f32.mrb[0].mxu0
        %v2747 = vadd.f32 %v2252, %v2746
        %v2748 = vand.u32 %v386, 4294901760
        %v2749 = vsub.f32 %v386, %v2748
        %v2750 = vand.u32 %v2749, 4294901760
        %2751 = vmatprep.mubr.f32.mxu0 %v2750
        %v2752 = vand.u32 %v385, 4294901760
        %v2753 = vsub.f32 %v385, %v2752
        %v2754 = vand.u32 %v2753, 4294901760
        %2755 = vmatmul.mubr.f32.gmra.mrb[0].mxu0 %v2754
        %v2756 = vpop.f32.mrb[0].mxu0
        %v2757 = vadd.f32 %v2260, %v2756
        %v2758 = vpop.f32.mrb[0].mxu0
        %v2759 = vadd.f32 %v2262, %v2758
        %v2760 = vand.u32 %v390, 4294901760
        %v2761 = vsub.f32 %v390, %v2760
        %v2762 = vand.u32 %v2761, 4294901760
        %2763 = vmatprep.mubr.f32.mxu0 %v2762
        %v2764 = vand.u32 %v389, 4294901760
        %v2765 = vsub.f32 %v389, %v2764
        %v2766 = vand.u32 %v2765, 4294901760
        %2767 = vmatmul.mubr.f32.gmra.mrb[0].mxu0 %v2766
        %v2768 = vpop.f32.mrb[0].mxu0
        %v2769 = vadd.f32 %v2270, %v2768
        %v2770 = vpop.f32.mrb[0].mxu0
        %v2771 = vadd.f32 %v2272, %v2770
        %v2772 = vand.u32 %v394, 4294901760
        %v2773 = vsub.f32 %v394, %v2772
        %v2774 = vand.u32 %v2773, 4294901760
        %2775 = vmatprep.mubr.f32.mxu0 %v2774
        %v2776 = vand.u32 %v393, 4294901760
        %v2777 = vsub.f32 %v393, %v2776
        %v2778 = vand.u32 %v2777, 4294901760
        %2779 = vmatmul.mubr.f32.gmra.mrb[0].mxu0 %v2778
        %v2780 = vpop.f32.mrb[0].mxu0
        %v2781 = vadd.f32 %v2280, %v2780
        %v2782 = vpop.f32.mrb[0].mxu0
        %v2783 = vadd.f32 %v2282, %v2782
        %v2784 = vand.u32 %v398, 4294901760
        %v2785 = vsub.f32 %v398, %v2784
        %v2786 = vand.u32 %v2785, 4294901760
        %2787 = vmatprep.mubr.f32.mxu0 %v2786
        %v2788 = vand.u32 %v397, 4294901760
        %v2789 = vsub.f32 %v397, %v2788
        %v2790 = vand.u32 %v2789, 4294901760
        %2791 = vmatmul.mubr.f32.gmra.mrb[0].mxu0 %v2790
        %v2792 = vpop.f32.mrb[0].mxu0
        %v2793 = vadd.f32 %v2290, %v2792
        %v2794 = vpop.f32.mrb[0].mxu0
        %v2795 = vadd.f32 %v2292, %v2794
        %v2796 = vand.u32 %v402, 4294901760
        %v2797 = vsub.f32 %v402, %v2796
        %v2798 = vand.u32 %v2797, 4294901760
        %2799 = vmatprep.mubr.f32.mxu0 %v2798
        %v2800 = vand.u32 %v401, 4294901760
        %v2801 = vsub.f32 %v401, %v2800
        %v2802 = vand.u32 %v2801, 4294901760
        %2803 = vmatmul.mubr.f32.gmra.mrb[0].mxu0 %v2802
        %v2804 = vpop.f32.mrb[0].mxu0
        %v2805 = vadd.f32 %v2300, %v2804
        %v2806 = vpop.f32.mrb[0].mxu0
        %v2807 = vadd.f32 %v2302, %v2806
        %v2808 = vand.u32 %v406, 4294901760
        %v2809 = vsub.f32 %v406, %v2808
        %v2810 = vand.u32 %v2809, 4294901760
        %2811 = vmatprep.mubr.f32.mxu0 %v2810
        %v2812 = vand.u32 %v405, 4294901760
        %v2813 = vsub.f32 %v405, %v2812
        %v2814 = vand.u32 %v2813, 4294901760
        %2815 = vmatmul.mubr.f32.gmra.mrb[0].mxu0 %v2814
        %v2816 = vpop.f32.mrb[0].mxu0
        %v2817 = vadd.f32 %v2310, %v2816
        %v2818 = vpop.f32.mrb[0].mxu0
        %v2819 = vadd.f32 %v2312, %v2818
        %v2820 = vand.u32 %v410, 4294901760
        %v2821 = vsub.f32 %v410, %v2820
        %v2822 = vand.u32 %v2821, 4294901760
        %2823 = vmatprep.mubr.f32.mxu0 %v2822
        %v2824 = vand.u32 %v409, 4294901760
        %v2825 = vsub.f32 %v409, %v2824
        %v2826 = vand.u32 %v2825, 4294901760
        %2827 = vmatmul.mubr.f32.gmra.mrb[0].mxu0 %v2826
        %v2828 = vpop.f32.mrb[0].mxu0
        %v2829 = vadd.f32 %v2320, %v2828
        %v2830 = vpop.f32.mrb[0].mxu0
        %v2831 = vadd.f32 %v2322, %v2830
        %v2832 = vand.u32 %v414, 4294901760
        %v2833 = vsub.f32 %v414, %v2832
        %v2834 = vand.u32 %v2833, 4294901760
        %2835 = vmatprep.mubr.f32.mxu0 %v2834
        %v2836 = vand.u32 %v413, 4294901760
        %v2837 = vsub.f32 %v413, %v2836
        %v2838 = vand.u32 %v2837, 4294901760
        %2839 = vmatmul.mubr.f32.gmra.mrb[0].mxu0 %v2838
        %v2840 = vpop.f32.mrb[0].mxu0
        %v2841 = vadd.f32 %v2330, %v2840
        %v2842 = vpop.f32.mrb[0].mxu0
        %v2843 = vadd.f32 %v2332, %v2842
        %v2844 = vand.u32 %v418, 4294901760
        %v2845 = vsub.f32 %v418, %v2844
        %v2846 = vand.u32 %v2845, 4294901760
        %2847 = vmatprep.mubr.f32.mxu0 %v2846
        %v2848 = vand.u32 %v417, 4294901760
        %v2849 = vsub.f32 %v417, %v2848
        %v2850 = vand.u32 %v2849, 4294901760
        %2851 = vmatmul.mubr.f32.gmra.mrb[0].mxu0 %v2850
        %v2852 = vpop.f32.mrb[0].mxu0
        %v2853 = vadd.f32 %v2340, %v2852
        %v2854 = vpop.f32.mrb[0].mxu0
        %v2855 = vadd.f32 %v2342, %v2854
        %2856 = vdwg.mxu0
        %v2857 = vand.u32 %v422, 4294901760
        %v2858 = vsub.f32 %v422, %v2857
        %v2859 = vand.u32 %v2858, 4294901760
        %2860 = vmatprep.subr.mxu0 %v2859
        %v2861 = vand.u32 %v421, 4294901760
        %v2862 = vsub.f32 %v421, %v2861
        %v2863 = vand.u32 %v2862, 4294901760
        %2864 = vmatpush1.msra.mxu0 %v2863
        %v2865 = vand.u32 %v424, 4294901760
        %v2866 = vsub.f32 %v424, %v2865
        %v2867 = vand.u32 %v2866, 4294901760
        %2868 = vmatprep.subr.mxu0 %v2867
        %v2869 = vand.u32 %v423, 4294901760
        %v2870 = vsub.f32 %v423, %v2869
        %v2871 = vand.u32 %v2870, 4294901760
        %2872 = vmatpush1.msra.mxu0 %v2871
        %v2873 = vand.u32 %v426, 4294901760
        %v2874 = vsub.f32 %v426, %v2873
        %v2875 = vand.u32 %v2874, 4294901760
        %2876 = vmatprep.subr.mxu0 %v2875
        %v2877 = vand.u32 %v425, 4294901760
        %v2878 = vsub.f32 %v425, %v2877
        %v2879 = vand.u32 %v2878, 4294901760
        %2880 = vmatpush1.msra.mxu0 %v2879
        %v2881 = vand.u32 %v428, 4294901760
        %v2882 = vsub.f32 %v428, %v2881
        %v2883 = vand.u32 %v2882, 4294901760
        %2884 = vmatprep.subr.mxu0 %v2883
        %v2885 = vand.u32 %v427, 4294901760
        %v2886 = vsub.f32 %v427, %v2885
        %v2887 = vand.u32 %v2886, 4294901760
        %2888 = vmatpush1.msra.mxu0 %v2887
        %v2889 = vand.u32 %v430, 4294901760
        %v2890 = vsub.f32 %v430, %v2889
        %v2891 = vand.u32 %v2890, 4294901760
        %2892 = vmatprep.subr.mxu0 %v2891
        %v2893 = vand.u32 %v429, 4294901760
        %v2894 = vsub.f32 %v429, %v2893
        %v2895 = vand.u32 %v2894, 4294901760
        %2896 = vmatpush1.msra.mxu0 %v2895
        %v2897 = vand.u32 %v432, 4294901760
        %v2898 = vsub.f32 %v432, %v2897
        %v2899 = vand.u32 %v2898, 4294901760
        %2900 = vmatprep.subr.mxu0 %v2899
        %v2901 = vand.u32 %v431, 4294901760
        %v2902 = vsub.f32 %v431, %v2901
        %v2903 = vand.u32 %v2902, 4294901760
        %2904 = vmatpush1.msra.mxu0 %v2903
        %v2905 = vand.u32 %v434, 4294901760
        %v2906 = vsub.f32 %v434, %v2905
        %v2907 = vand.u32 %v2906, 4294901760
        %2908 = vmatprep.subr.mxu0 %v2907
        %v2909 = vand.u32 %v433, 4294901760
        %v2910 = vsub.f32 %v433, %v2909
        %v2911 = vand.u32 %v2910, 4294901760
        %2912 = vmatpush1.msra.mxu0 %v2911
        %v2913 = vand.u32 %v436, 4294901760
        %v2914 = vsub.f32 %v436, %v2913
        %v2915 = vand.u32 %v2914, 4294901760
        %2916 = vmatprep.subr.mxu0 %v2915
        %v2917 = vand.u32 %v435, 4294901760
        %v2918 = vsub.f32 %v435, %v2917
        %v2919 = vand.u32 %v2918, 4294901760
        %2920 = vmatpush1.msra.mxu0 %v2919
        %v2921 = vand.u32 %v438, 4294901760
        %v2922 = vsub.f32 %v438, %v2921
        %v2923 = vand.u32 %v2922, 4294901760
        %2924 = vmatprep.subr.mxu0 %v2923
        %v2925 = vand.u32 %v437, 4294901760
        %v2926 = vsub.f32 %v437, %v2925
        %v2927 = vand.u32 %v2926, 4294901760
        %2928 = vmatpush1.msra.mxu0 %v2927
        %v2929 = vand.u32 %v440, 4294901760
        %v2930 = vsub.f32 %v440, %v2929
        %v2931 = vand.u32 %v2930, 4294901760
        %2932 = vmatprep.subr.mxu0 %v2931
        %v2933 = vand.u32 %v439, 4294901760
        %v2934 = vsub.f32 %v439, %v2933
        %v2935 = vand.u32 %v2934, 4294901760
        %2936 = vmatpush1.msra.mxu0 %v2935
        %v2937 = vand.u32 %v442, 4294901760
        %v2938 = vsub.f32 %v442, %v2937
        %v2939 = vand.u32 %v2938, 4294901760
        %2940 = vmatprep.subr.mxu0 %v2939
        %v2941 = vand.u32 %v441, 4294901760
        %v2942 = vsub.f32 %v441, %v2941
        %v2943 = vand.u32 %v2942, 4294901760
        %2944 = vmatpush1.msra.mxu0 %v2943
        %v2945 = vand.u32 %v444, 4294901760
        %v2946 = vsub.f32 %v444, %v2945
        %v2947 = vand.u32 %v2946, 4294901760
        %2948 = vmatprep.subr.mxu0 %v2947
        %v2949 = vand.u32 %v443, 4294901760
        %v2950 = vsub.f32 %v443, %v2949
        %v2951 = vand.u32 %v2950, 4294901760
        %2952 = vmatpush1.msra.mxu0 %v2951
        %v2953 = vand.u32 %v446, 4294901760
        %v2954 = vsub.f32 %v446, %v2953
        %v2955 = vand.u32 %v2954, 4294901760
        %2956 = vmatprep.subr.mxu0 %v2955
        %v2957 = vand.u32 %v445, 4294901760
        %v2958 = vsub.f32 %v445, %v2957
        %v2959 = vand.u32 %v2958, 4294901760
        %2960 = vmatpush1.msra.mxu0 %v2959
        %v2961 = vand.u32 %v448, 4294901760
        %v2962 = vsub.f32 %v448, %v2961
        %v2963 = vand.u32 %v2962, 4294901760
        %2964 = vmatprep.subr.mxu0 %v2963
        %v2965 = vand.u32 %v447, 4294901760
        %v2966 = vsub.f32 %v447, %v2965
        %v2967 = vand.u32 %v2966, 4294901760
        %2968 = vmatpush1.msra.mxu0 %v2967
        %v2969 = vand.u32 %v450, 4294901760
        %v2970 = vsub.f32 %v450, %v2969
        %v2971 = vand.u32 %v2970, 4294901760
        %2972 = vmatprep.subr.mxu0 %v2971
        %v2973 = vand.u32 %v449, 4294901760
        %v2974 = vsub.f32 %v449, %v2973
        %v2975 = vand.u32 %v2974, 4294901760
        %2976 = vmatpush1.msra.mxu0 %v2975
        %v2977 = vand.u32 %v452, 4294901760
        %v2978 = vsub.f32 %v452, %v2977
        %v2979 = vand.u32 %v2978, 4294901760
        %2980 = vmatprep.subr.mxu0 %v2979
        %v2981 = vand.u32 %v451, 4294901760
        %v2982 = vsub.f32 %v451, %v2981
        %v2983 = vand.u32 %v2982, 4294901760
        %2984 = vmatpush1.msra.mxu0 %v2983
        %v2985 = vand.u32 %v454, 4294901760
        %v2986 = vsub.f32 %v454, %v2985
        %v2987 = vand.u32 %v2986, 4294901760
        %2988 = vmatprep.subr.mxu0 %v2987
        %v2989 = vand.u32 %v453, 4294901760
        %v2990 = vsub.f32 %v453, %v2989
        %v2991 = vand.u32 %v2990, 4294901760
        %2992 = vmatpush1.msra.mxu0 %v2991
        %v2993 = vand.u32 %v456, 4294901760
        %v2994 = vsub.f32 %v456, %v2993
        %v2995 = vand.u32 %v2994, 4294901760
        %2996 = vmatprep.subr.mxu0 %v2995
        %v2997 = vand.u32 %v455, 4294901760
        %v2998 = vsub.f32 %v455, %v2997
        %v2999 = vand.u32 %v2998, 4294901760
        %3000 = vmatpush1.msra.mxu0 %v2999
        %v3001 = vand.u32 %v458, 4294901760
        %v3002 = vsub.f32 %v458, %v3001
        %v3003 = vand.u32 %v3002, 4294901760
        %3004 = vmatprep.subr.mxu0 %v3003
        %v3005 = vand.u32 %v457, 4294901760
        %v3006 = vsub.f32 %v457, %v3005
        %v3007 = vand.u32 %v3006, 4294901760
        %3008 = vmatpush1.msra.mxu0 %v3007
        %v3009 = vand.u32 %v460, 4294901760
        %v3010 = vsub.f32 %v460, %v3009
        %v3011 = vand.u32 %v3010, 4294901760
        %3012 = vmatprep.subr.mxu0 %v3011
        %v3013 = vand.u32 %v459, 4294901760
        %v3014 = vsub.f32 %v459, %v3013
        %v3015 = vand.u32 %v3014, 4294901760
        %3016 = vmatpush1.msra.mxu0 %v3015
        %v3017 = vand.u32 %v462, 4294901760
        %v3018 = vsub.f32 %v462, %v3017
        %v3019 = vand.u32 %v3018, 4294901760
        %3020 = vmatprep.subr.mxu0 %v3019
        %v3021 = vand.u32 %v461, 4294901760
        %v3022 = vsub.f32 %v461, %v3021
        %v3023 = vand.u32 %v3022, 4294901760
        %3024 = vmatpush1.msra.mxu0 %v3023
        %v3025 = vand.u32 %v464, 4294901760
        %v3026 = vsub.f32 %v464, %v3025
        %v3027 = vand.u32 %v3026, 4294901760
        %3028 = vmatprep.subr.mxu0 %v3027
        %v3029 = vand.u32 %v463, 4294901760
        %v3030 = vsub.f32 %v463, %v3029
        %v3031 = vand.u32 %v3030, 4294901760
        %3032 = vmatpush1.msra.mxu0 %v3031
        %v3033 = vand.u32 %v466, 4294901760
        %v3034 = vsub.f32 %v466, %v3033
        %v3035 = vand.u32 %v3034, 4294901760
        %3036 = vmatprep.subr.mxu0 %v3035
        %v3037 = vand.u32 %v465, 4294901760
        %v3038 = vsub.f32 %v465, %v3037
        %v3039 = vand.u32 %v3038, 4294901760
        %3040 = vmatpush1.msra.mxu0 %v3039
        %v3041 = vand.u32 %v468, 4294901760
        %v3042 = vsub.f32 %v468, %v3041
        %v3043 = vand.u32 %v3042, 4294901760
        %3044 = vmatprep.subr.mxu0 %v3043
        %v3045 = vand.u32 %v467, 4294901760
        %v3046 = vsub.f32 %v467, %v3045
        %v3047 = vand.u32 %v3046, 4294901760
        %3048 = vmatpush1.msra.mxu0 %v3047
        %v3049 = vand.u32 %v470, 4294901760
        %v3050 = vsub.f32 %v470, %v3049
        %v3051 = vand.u32 %v3050, 4294901760
        %3052 = vmatprep.subr.mxu0 %v3051
        %v3053 = vand.u32 %v469, 4294901760
        %v3054 = vsub.f32 %v469, %v3053
        %v3055 = vand.u32 %v3054, 4294901760
        %3056 = vmatpush1.msra.mxu0 %v3055
        %v3057 = vand.u32 %v472, 4294901760
        %v3058 = vsub.f32 %v472, %v3057
        %v3059 = vand.u32 %v3058, 4294901760
        %3060 = vmatprep.subr.mxu0 %v3059
        %v3061 = vand.u32 %v471, 4294901760
        %v3062 = vsub.f32 %v471, %v3061
        %v3063 = vand.u32 %v3062, 4294901760
        %3064 = vmatpush1.msra.mxu0 %v3063
        %v3065 = vand.u32 %v474, 4294901760
        %v3066 = vsub.f32 %v474, %v3065
        %v3067 = vand.u32 %v3066, 4294901760
        %3068 = vmatprep.subr.mxu0 %v3067
        %v3069 = vand.u32 %v473, 4294901760
        %v3070 = vsub.f32 %v473, %v3069
        %v3071 = vand.u32 %v3070, 4294901760
        %3072 = vmatpush1.msra.mxu0 %v3071
        %v3073 = vand.u32 %v476, 4294901760
        %v3074 = vsub.f32 %v476, %v3073
        %v3075 = vand.u32 %v3074, 4294901760
        %3076 = vmatprep.subr.mxu0 %v3075
        %v3077 = vand.u32 %v475, 4294901760
        %v3078 = vsub.f32 %v475, %v3077
        %v3079 = vand.u32 %v3078, 4294901760
        %3080 = vmatpush1.msra.mxu0 %v3079
        %v3081 = vand.u32 %v478, 4294901760
        %v3082 = vsub.f32 %v478, %v3081
        %v3083 = vand.u32 %v3082, 4294901760
        %3084 = vmatprep.subr.mxu0 %v3083
        %v3085 = vand.u32 %v477, 4294901760
        %v3086 = vsub.f32 %v477, %v3085
        %v3087 = vand.u32 %v3086, 4294901760
        %3088 = vmatpush1.msra.mxu0 %v3087
        %v3089 = vand.u32 %v480, 4294901760
        %v3090 = vsub.f32 %v480, %v3089
        %v3091 = vand.u32 %v3090, 4294901760
        %3092 = vmatprep.subr.mxu0 %v3091
        %v3093 = vand.u32 %v479, 4294901760
        %v3094 = vsub.f32 %v479, %v3093
        %v3095 = vand.u32 %v3094, 4294901760
        %3096 = vmatpush1.msra.mxu0 %v3095
        %v3097 = vand.u32 %v482, 4294901760
        %v3098 = vsub.f32 %v482, %v3097
        %v3099 = vand.u32 %v3098, 4294901760
        %3100 = vmatprep.subr.mxu0 %v3099
        %v3101 = vand.u32 %v481, 4294901760
        %v3102 = vsub.f32 %v481, %v3101
        %v3103 = vand.u32 %v3102, 4294901760
        %3104 = vmatpush1.msra.mxu0 %v3103
        %v3105 = vand.u32 %v484, 4294901760
        %v3106 = vsub.f32 %v484, %v3105
        %v3107 = vand.u32 %v3106, 4294901760
        %3108 = vmatprep.subr.mxu0 %v3107
        %v3109 = vand.u32 %v483, 4294901760
        %v3110 = vsub.f32 %v483, %v3109
        %v3111 = vand.u32 %v3110, 4294901760
        %3112 = vmatpush1.msra.mxu0 %v3111
        %v3113 = vand.u32 %v294, 4294901760
        %3114 = vmatprep.mubr.f32.mxu0 %v3113
        %v3115 = vand.u32 %v293, 4294901760
        %3116 = vmatmul.mubr.f32.gmra.mrb[0].mxu0 %v3115
        %v3117 = vpop.f32.mrb[0].mxu0
        %v3118 = vadd.f32 %v2481, %v3117
        %v3119 = vpop.f32.mrb[0].mxu0
        %v3120 = vadd.f32 %v2483, %v3119
        %v3121 = vand.u32 %v298, 4294901760
        %3122 = vmatprep.mubr.f32.mxu0 %v3121
        %v3123 = vand.u32 %v297, 4294901760
        %3124 = vmatmul.mubr.f32.gmra.mrb[0].mxu0 %v3123
        %v3125 = vpop.f32.mrb[0].mxu0
        %v3126 = vadd.f32 %v2493, %v3125
        %v3127 = vpop.f32.mrb[0].mxu0
        %v3128 = vadd.f32 %v2495, %v3127
        %v3129 = vand.u32 %v302, 4294901760
        %3130 = vmatprep.mubr.f32.mxu0 %v3129
        %v3131 = vand.u32 %v301, 4294901760
        %3132 = vmatmul.mubr.f32.gmra.mrb[0].mxu0 %v3131
        %v3133 = vpop.f32.mrb[0].mxu0
        %v3134 = vadd.f32 %v2505, %v3133
        %v3135 = vpop.f32.mrb[0].mxu0
        %v3136 = vadd.f32 %v2507, %v3135
        %v3137 = vand.u32 %v306, 4294901760
        %3138 = vmatprep.mubr.f32.mxu0 %v3137
        %v3139 = vand.u32 %v305, 4294901760
        %3140 = vmatmul.mubr.f32.gmra.mrb[0].mxu0 %v3139
        %v3141 = vpop.f32.mrb[0].mxu0
        %v3142 = vadd.f32 %v2517, %v3141
        %v3143 = vpop.f32.mrb[0].mxu0
        %v3144 = vadd.f32 %v2519, %v3143
        %v3145 = vand.u32 %v310, 4294901760
        %3146 = vmatprep.mubr.f32.mxu0 %v3145
        %v3147 = vand.u32 %v309, 4294901760
        %3148 = vmatmul.mubr.f32.gmra.mrb[0].mxu0 %v3147
        %v3149 = vpop.f32.mrb[0].mxu0
        %v3150 = vadd.f32 %v2529, %v3149
        %v3151 = vpop.f32.mrb[0].mxu0
        %v3152 = vadd.f32 %v2531, %v3151
        %v3153 = vand.u32 %v314, 4294901760
        %3154 = vmatprep.mubr.f32.mxu0 %v3153
        %v3155 = vand.u32 %v313, 4294901760
        %3156 = vmatmul.mubr.f32.gmra.mrb[0].mxu0 %v3155
        %v3157 = vpop.f32.mrb[0].mxu0
        %v3158 = vadd.f32 %v2541, %v3157
        %v3159 = vpop.f32.mrb[0].mxu0
        %v3160 = vadd.f32 %v2543, %v3159
        %v3161 = vand.u32 %v318, 4294901760
        %3162 = vmatprep.mubr.f32.mxu0 %v3161
        %v3163 = vand.u32 %v317, 4294901760
        %3164 = vmatmul.mubr.f32.gmra.mrb[0].mxu0 %v3163
        %v3165 = vpop.f32.mrb[0].mxu0
        %v3166 = vadd.f32 %v2553, %v3165
        %v3167 = vpop.f32.mrb[0].mxu0
        %v3168 = vadd.f32 %v2555, %v3167
        %v3169 = vand.u32 %v322, 4294901760
        %3170 = vmatprep.mubr.f32.mxu0 %v3169
        %v3171 = vand.u32 %v321, 4294901760
        %3172 = vmatmul.mubr.f32.gmra.mrb[0].mxu0 %v3171
        %v3173 = vpop.f32.mrb[0].mxu0
        %v3174 = vadd.f32 %v2565, %v3173
        %v3175 = vpop.f32.mrb[0].mxu0
        %v3176 = vadd.f32 %v2567, %v3175
        %v3177 = vand.u32 %v326, 4294901760
        %3178 = vmatprep.mubr.f32.mxu0 %v3177
        %v3179 = vand.u32 %v325, 4294901760
        %3180 = vmatmul.mubr.f32.gmra.mrb[0].mxu0 %v3179
        %v3181 = vpop.f32.mrb[0].mxu0
        %v3182 = vadd.f32 %v2577, %v3181
        %v3183 = vpop.f32.mrb[0].mxu0
        %v3184 = vadd.f32 %v2579, %v3183
        %v3185 = vand.u32 %v330, 4294901760
        %3186 = vmatprep.mubr.f32.mxu0 %v3185
        %v3187 = vand.u32 %v329, 4294901760
        %3188 = vmatmul.mubr.f32.gmra.mrb[0].mxu0 %v3187
        %v3189 = vpop.f32.mrb[0].mxu0
        %v3190 = vadd.f32 %v2589, %v3189
        %v3191 = vpop.f32.mrb[0].mxu0
        %v3192 = vadd.f32 %v2591, %v3191
        %v3193 = vand.u32 %v334, 4294901760
        %3194 = vmatprep.mubr.f32.mxu0 %v3193
        %v3195 = vand.u32 %v333, 4294901760
        %3196 = vmatmul.mubr.f32.gmra.mrb[0].mxu0 %v3195
        %v3197 = vpop.f32.mrb[0].mxu0
        %v3198 = vadd.f32 %v2601, %v3197
        %v3199 = vpop.f32.mrb[0].mxu0
        %v3200 = vadd.f32 %v2603, %v3199
        %v3201 = vand.u32 %v338, 4294901760
        %3202 = vmatprep.mubr.f32.mxu0 %v3201
        %v3203 = vand.u32 %v337, 4294901760
        %3204 = vmatmul.mubr.f32.gmra.mrb[0].mxu0 %v3203
        %v3205 = vpop.f32.mrb[0].mxu0
        %v3206 = vadd.f32 %v2613, %v3205
        %v3207 = vpop.f32.mrb[0].mxu0
        %v3208 = vadd.f32 %v2615, %v3207
        %v3209 = vand.u32 %v342, 4294901760
        %3210 = vmatprep.mubr.f32.mxu0 %v3209
        %v3211 = vand.u32 %v341, 4294901760
        %3212 = vmatmul.mubr.f32.gmra.mrb[0].mxu0 %v3211
        %v3213 = vpop.f32.mrb[0].mxu0
        %v3214 = vadd.f32 %v2625, %v3213
        %v3215 = vpop.f32.mrb[0].mxu0
        %v3216 = vadd.f32 %v2627, %v3215
        %v3217 = vand.u32 %v346, 4294901760
        %3218 = vmatprep.mubr.f32.mxu0 %v3217
        %v3219 = vand.u32 %v345, 4294901760
        %3220 = vmatmul.mubr.f32.gmra.mrb[0].mxu0 %v3219
        %v3221 = vpop.f32.mrb[0].mxu0
        %v3222 = vadd.f32 %v2637, %v3221
        %v3223 = vpop.f32.mrb[0].mxu0
        %v3224 = vadd.f32 %v2639, %v3223
        %v3225 = vand.u32 %v350, 4294901760
        %3226 = vmatprep.mubr.f32.mxu0 %v3225
        %v3227 = vand.u32 %v349, 4294901760
        %3228 = vmatmul.mubr.f32.gmra.mrb[0].mxu0 %v3227
        %v3229 = vpop.f32.mrb[0].mxu0
        %v3230 = vadd.f32 %v2649, %v3229
        %v3231 = vpop.f32.mrb[0].mxu0
        %v3232 = vadd.f32 %v2651, %v3231
        %v3233 = vand.u32 %v354, 4294901760
        %3234 = vmatprep.mubr.f32.mxu0 %v3233
        %v3235 = vand.u32 %v353, 4294901760
        %3236 = vmatmul.mubr.f32.gmra.mrb[0].mxu0 %v3235
        %v3237 = vpop.f32.mrb[0].mxu0
        %v3238 = vadd.f32 %v2661, %v3237
        %v3239 = vpop.f32.mrb[0].mxu0
        %v3240 = vadd.f32 %v2663, %v3239
        %v3241 = vand.u32 %v358, 4294901760
        %3242 = vmatprep.mubr.f32.mxu0 %v3241
        %v3243 = vand.u32 %v357, 4294901760
        %3244 = vmatmul.mubr.f32.gmra.mrb[0].mxu0 %v3243
        %v3245 = vpop.f32.mrb[0].mxu0
        %v3246 = vadd.f32 %v2673, %v3245
        %v3247 = vpop.f32.mrb[0].mxu0
        %v3248 = vadd.f32 %v2675, %v3247
        %v3249 = vand.u32 %v362, 4294901760
        %3250 = vmatprep.mubr.f32.mxu0 %v3249
        %v3251 = vand.u32 %v361, 4294901760
        %3252 = vmatmul.mubr.f32.gmra.mrb[0].mxu0 %v3251
        %v3253 = vpop.f32.mrb[0].mxu0
        %v3254 = vadd.f32 %v2685, %v3253
        %v3255 = vpop.f32.mrb[0].mxu0
        %v3256 = vadd.f32 %v2687, %v3255
        %v3257 = vand.u32 %v366, 4294901760
        %3258 = vmatprep.mubr.f32.mxu0 %v3257
        %v3259 = vand.u32 %v365, 4294901760
        %3260 = vmatmul.mubr.f32.gmra.mrb[0].mxu0 %v3259
        %v3261 = vpop.f32.mrb[0].mxu0
        %v3262 = vadd.f32 %v2697, %v3261
        %v3263 = vpop.f32.mrb[0].mxu0
        %v3264 = vadd.f32 %v2699, %v3263
        %v3265 = vand.u32 %v370, 4294901760
        %3266 = vmatprep.mubr.f32.mxu0 %v3265
        %v3267 = vand.u32 %v369, 4294901760
        %3268 = vmatmul.mubr.f32.gmra.mrb[0].mxu0 %v3267
        %v3269 = vpop.f32.mrb[0].mxu0
        %v3270 = vadd.f32 %v2709, %v3269
        %v3271 = vpop.f32.mrb[0].mxu0
        %v3272 = vadd.f32 %v2711, %v3271
        %v3273 = vand.u32 %v374, 4294901760
        %3274 = vmatprep.mubr.f32.mxu0 %v3273
        %v3275 = vand.u32 %v373, 4294901760
        %3276 = vmatmul.mubr.f32.gmra.mrb[0].mxu0 %v3275
        %v3277 = vpop.f32.mrb[0].mxu0
        %v3278 = vadd.f32 %v2721, %v3277
        %v3279 = vpop.f32.mrb[0].mxu0
        %v3280 = vadd.f32 %v2723, %v3279
        %v3281 = vand.u32 %v378, 4294901760
        %3282 = vmatprep.mubr.f32.mxu0 %v3281
        %v3283 = vand.u32 %v377, 4294901760
        %3284 = vmatmul.mubr.f32.gmra.mrb[0].mxu0 %v3283
        %v3285 = vpop.f32.mrb[0].mxu0
        %v3286 = vadd.f32 %v2733, %v3285
        %v3287 = vpop.f32.mrb[0].mxu0
        %v3288 = vadd.f32 %v2735, %v3287
        %v3289 = vand.u32 %v382, 4294901760
        %3290 = vmatprep.mubr.f32.mxu0 %v3289
        %v3291 = vand.u32 %v381, 4294901760
        %3292 = vmatmul.mubr.f32.gmra.mrb[0].mxu0 %v3291
        %v3293 = vpop.f32.mrb[0].mxu0
        %v3294 = vadd.f32 %v2745, %v3293
        %v3295 = vpop.f32.mrb[0].mxu0
        %v3296 = vadd.f32 %v2747, %v3295
        %v3297 = vand.u32 %v386, 4294901760
        %3298 = vmatprep.mubr.f32.mxu0 %v3297
        %v3299 = vand.u32 %v385, 4294901760
        %3300 = vmatmul.mubr.f32.gmra.mrb[0].mxu0 %v3299
        %v3301 = vpop.f32.mrb[0].mxu0
        %v3302 = vadd.f32 %v2757, %v3301
        %v3303 = vpop.f32.mrb[0].mxu0
        %v3304 = vadd.f32 %v2759, %v3303
        %v3305 = vand.u32 %v390, 4294901760
        %3306 = vmatprep.mubr.f32.mxu0 %v3305
        %v3307 = vand.u32 %v389, 4294901760
        %3308 = vmatmul.mubr.f32.gmra.mrb[0].mxu0 %v3307
        %v3309 = vpop.f32.mrb[0].mxu0
        %v3310 = vadd.f32 %v2769, %v3309
        %v3311 = vpop.f32.mrb[0].mxu0
        %v3312 = vadd.f32 %v2771, %v3311
        %v3313 = vand.u32 %v394, 4294901760
        %3314 = vmatprep.mubr.f32.mxu0 %v3313
        %v3315 = vand.u32 %v393, 4294901760
        %3316 = vmatmul.mubr.f32.gmra.mrb[0].mxu0 %v3315
        %v3317 = vpop.f32.mrb[0].mxu0
        %v3318 = vadd.f32 %v2781, %v3317
        %v3319 = vpop.f32.mrb[0].mxu0
        %v3320 = vadd.f32 %v2783, %v3319
        %v3321 = vand.u32 %v398, 4294901760
        %3322 = vmatprep.mubr.f32.mxu0 %v3321
        %v3323 = vand.u32 %v397, 4294901760
        %3324 = vmatmul.mubr.f32.gmra.mrb[0].mxu0 %v3323
        %v3325 = vpop.f32.mrb[0].mxu0
        %v3326 = vadd.f32 %v2793, %v3325
        %v3327 = vpop.f32.mrb[0].mxu0
        %v3328 = vadd.f32 %v2795, %v3327
        %v3329 = vand.u32 %v402, 4294901760
        %3330 = vmatprep.mubr.f32.mxu0 %v3329
        %v3331 = vand.u32 %v401, 4294901760
        %3332 = vmatmul.mubr.f32.gmra.mrb[0].mxu0 %v3331
        %v3333 = vpop.f32.mrb[0].mxu0
        %v3334 = vadd.f32 %v2805, %v3333
        %v3335 = vpop.f32.mrb[0].mxu0
        %v3336 = vadd.f32 %v2807, %v3335
        %v3337 = vand.u32 %v406, 4294901760
        %3338 = vmatprep.mubr.f32.mxu0 %v3337
        %v3339 = vand.u32 %v405, 4294901760
        %3340 = vmatmul.mubr.f32.gmra.mrb[0].mxu0 %v3339
        %v3341 = vpop.f32.mrb[0].mxu0
        %v3342 = vadd.f32 %v2817, %v3341
        %v3343 = vpop.f32.mrb[0].mxu0
        %v3344 = vadd.f32 %v2819, %v3343
        %v3345 = vand.u32 %v410, 4294901760
        %3346 = vmatprep.mubr.f32.mxu0 %v3345
        %v3347 = vand.u32 %v409, 4294901760
        %3348 = vmatmul.mubr.f32.gmra.mrb[0].mxu0 %v3347
        %v3349 = vpop.f32.mrb[0].mxu0
        %v3350 = vadd.f32 %v2829, %v3349
        %v3351 = vpop.f32.mrb[0].mxu0
        %v3352 = vadd.f32 %v2831, %v3351
        %v3353 = vand.u32 %v414, 4294901760
        %3354 = vmatprep.mubr.f32.mxu0 %v3353
        %v3355 = vand.u32 %v413, 4294901760
        %3356 = vmatmul.mubr.f32.gmra.mrb[0].mxu0 %v3355
        %v3357 = vpop.f32.mrb[0].mxu0
        %v3358 = vadd.f32 %v2841, %v3357
        %v3359 = vpop.f32.mrb[0].mxu0
        %v3360 = vadd.f32 %v2843, %v3359
        %v3361 = vand.u32 %v418, 4294901760
        %3362 = vmatprep.mubr.f32.mxu0 %v3361
        %v3363 = vand.u32 %v417, 4294901760
        %3364 = vmatmul.mubr.f32.gmra.mrb[0].mxu0 %v3363
        %v3365 = vpop.f32.mrb[0].mxu0
        %v3366 = vadd.f32 %v2853, %v3365
        %v3367 = vpop.f32.mrb[0].mxu0
        %v3368 = vadd.f32 %v2855, %v3367
        %3369 = vdwg.mxu0
        %v3370 = vand.u32 %v422, 4294901760
        %3371 = vmatprep.subr.mxu0 %v3370
        %v3372 = vand.u32 %v421, 4294901760
        %3373 = vmatpush1.msra.mxu0 %v3372
        %v3374 = vand.u32 %v424, 4294901760
        %3375 = vmatprep.subr.mxu0 %v3374
        %v3376 = vand.u32 %v423, 4294901760
        %3377 = vmatpush1.msra.mxu0 %v3376
        %v3378 = vand.u32 %v426, 4294901760
        %3379 = vmatprep.subr.mxu0 %v3378
        %v3380 = vand.u32 %v425, 4294901760
        %3381 = vmatpush1.msra.mxu0 %v3380
        %v3382 = vand.u32 %v428, 4294901760
        %3383 = vmatprep.subr.mxu0 %v3382
        %v3384 = vand.u32 %v427, 4294901760
        %3385 = vmatpush1.msra.mxu0 %v3384
        %v3386 = vand.u32 %v430, 4294901760
        %3387 = vmatprep.subr.mxu0 %v3386
        %v3388 = vand.u32 %v429, 4294901760
        %3389 = vmatpush1.msra.mxu0 %v3388
        %v3390 = vand.u32 %v432, 4294901760
        %3391 = vmatprep.subr.mxu0 %v3390
        %v3392 = vand.u32 %v431, 4294901760
        %3393 = vmatpush1.msra.mxu0 %v3392
        %v3394 = vand.u32 %v434, 4294901760
        %3395 = vmatprep.subr.mxu0 %v3394
        %v3396 = vand.u32 %v433, 4294901760
        %3397 = vmatpush1.msra.mxu0 %v3396
        %v3398 = vand.u32 %v436, 4294901760
        %3399 = vmatprep.subr.mxu0 %v3398
        %v3400 = vand.u32 %v435, 4294901760
        %3401 = vmatpush1.msra.mxu0 %v3400
        %v3402 = vand.u32 %v438, 4294901760
        %3403 = vmatprep.subr.mxu0 %v3402
        %v3404 = vand.u32 %v437, 4294901760
        %3405 = vmatpush1.msra.mxu0 %v3404
        %v3406 = vand.u32 %v440, 4294901760
        %3407 = vmatprep.subr.mxu0 %v3406
        %v3408 = vand.u32 %v439, 4294901760
        %3409 = vmatpush1.msra.mxu0 %v3408
        %v3410 = vand.u32 %v442, 4294901760
        %3411 = vmatprep.subr.mxu0 %v3410
        %v3412 = vand.u32 %v441, 4294901760
        %3413 = vmatpush1.msra.mxu0 %v3412
        %v3414 = vand.u32 %v444, 4294901760
        %3415 = vmatprep.subr.mxu0 %v3414
        %v3416 = vand.u32 %v443, 4294901760
        %3417 = vmatpush1.msra.mxu0 %v3416
        %v3418 = vand.u32 %v446, 4294901760
        %3419 = vmatprep.subr.mxu0 %v3418
        %v3420 = vand.u32 %v445, 4294901760
        %3421 = vmatpush1.msra.mxu0 %v3420
        %v3422 = vand.u32 %v448, 4294901760
        %3423 = vmatprep.subr.mxu0 %v3422
        %v3424 = vand.u32 %v447, 4294901760
        %3425 = vmatpush1.msra.mxu0 %v3424
        %v3426 = vand.u32 %v450, 4294901760
        %3427 = vmatprep.subr.mxu0 %v3426
        %v3428 = vand.u32 %v449, 4294901760
        %3429 = vmatpush1.msra.mxu0 %v3428
        %v3430 = vand.u32 %v452, 4294901760
        %3431 = vmatprep.subr.mxu0 %v3430
        %v3432 = vand.u32 %v451, 4294901760
        %3433 = vmatpush1.msra.mxu0 %v3432
        %v3434 = vand.u32 %v454, 4294901760
        %3435 = vmatprep.subr.mxu0 %v3434
        %v3436 = vand.u32 %v453, 4294901760
        %3437 = vmatpush1.msra.mxu0 %v3436
        %v3438 = vand.u32 %v456, 4294901760
        %3439 = vmatprep.subr.mxu0 %v3438
        %v3440 = vand.u32 %v455, 4294901760
        %3441 = vmatpush1.msra.mxu0 %v3440
        %v3442 = vand.u32 %v458, 4294901760
        %3443 = vmatprep.subr.mxu0 %v3442
        %v3444 = vand.u32 %v457, 4294901760
        %3445 = vmatpush1.msra.mxu0 %v3444
        %v3446 = vand.u32 %v460, 4294901760
        %3447 = vmatprep.subr.mxu0 %v3446
        %v3448 = vand.u32 %v459, 4294901760
        %3449 = vmatpush1.msra.mxu0 %v3448
        %v3450 = vand.u32 %v462, 4294901760
        %3451 = vmatprep.subr.mxu0 %v3450
        %v3452 = vand.u32 %v461, 4294901760
        %3453 = vmatpush1.msra.mxu0 %v3452
        %v3454 = vand.u32 %v464, 4294901760
        %3455 = vmatprep.subr.mxu0 %v3454
        %v3456 = vand.u32 %v463, 4294901760
        %3457 = vmatpush1.msra.mxu0 %v3456
        %v3458 = vand.u32 %v466, 4294901760
        %3459 = vmatprep.subr.mxu0 %v3458
        %v3460 = vand.u32 %v465, 4294901760
        %3461 = vmatpush1.msra.mxu0 %v3460
        %v3462 = vand.u32 %v468, 4294901760
        %3463 = vmatprep.subr.mxu0 %v3462
        %v3464 = vand.u32 %v467, 4294901760
        %3465 = vmatpush1.msra.mxu0 %v3464
        %v3466 = vand.u32 %v470, 4294901760
        %3467 = vmatprep.subr.mxu0 %v3466
        %v3468 = vand.u32 %v469, 4294901760
        %3469 = vmatpush1.msra.mxu0 %v3468
        %v3470 = vand.u32 %v472, 4294901760
        %3471 = vmatprep.subr.mxu0 %v3470
        %v3472 = vand.u32 %v471, 4294901760
        %3473 = vmatpush1.msra.mxu0 %v3472
        %v3474 = vand.u32 %v474, 4294901760
        %3475 = vmatprep.subr.mxu0 %v3474
        %v3476 = vand.u32 %v473, 4294901760
        %3477 = vmatpush1.msra.mxu0 %v3476
        %v3478 = vand.u32 %v476, 4294901760
        %3479 = vmatprep.subr.mxu0 %v3478
        %v3480 = vand.u32 %v475, 4294901760
        %3481 = vmatpush1.msra.mxu0 %v3480
        %v3482 = vand.u32 %v478, 4294901760
        %3483 = vmatprep.subr.mxu0 %v3482
        %v3484 = vand.u32 %v477, 4294901760
        %3485 = vmatpush1.msra.mxu0 %v3484
        %v3486 = vand.u32 %v480, 4294901760
        %3487 = vmatprep.subr.mxu0 %v3486
        %v3488 = vand.u32 %v479, 4294901760
        %3489 = vmatpush1.msra.mxu0 %v3488
        %v3490 = vand.u32 %v482, 4294901760
        %3491 = vmatprep.subr.mxu0 %v3490
        %v3492 = vand.u32 %v481, 4294901760
        %3493 = vmatpush1.msra.mxu0 %v3492
        %v3494 = vand.u32 %v484, 4294901760
        %3495 = vmatprep.subr.mxu0 %v3494
        %v3496 = vand.u32 %v483, 4294901760
        %3497 = vmatpush1.msra.mxu0 %v3496
        %v3498 = vand.u32 %v294, 4294901760
        %3499 = vmatprep.mubr.f32.mxu0 %v3498
        %v3500 = vand.u32 %v293, 4294901760
        %3501 = vmatmul.mubr.f32.gmra.mrb[0].mxu0 %v3500
        %v3502 = vpop.f32.mrb[0].mxu0
        %v3503 = vadd.f32 %v3118, %v3502
        %v3504 = vpop.f32.mrb[0].mxu0
        %v3505 = vadd.f32 %v3120, %v3504
        %v3506 = vand.u32 %v298, 4294901760
        %3507 = vmatprep.mubr.f32.mxu0 %v3506
        %v3508 = vand.u32 %v297, 4294901760
        %3509 = vmatmul.mubr.f32.gmra.mrb[0].mxu0 %v3508
        %v3510 = vpop.f32.mrb[0].mxu0
        %v3511 = vadd.f32 %v3126, %v3510
        %v3512 = vpop.f32.mrb[0].mxu0
        %v3513 = vadd.f32 %v3128, %v3512
        %v3514 = vand.u32 %v302, 4294901760
        %3515 = vmatprep.mubr.f32.mxu0 %v3514
        %v3516 = vand.u32 %v301, 4294901760
        %3517 = vmatmul.mubr.f32.gmra.mrb[0].mxu0 %v3516
        %v3518 = vpop.f32.mrb[0].mxu0
        %v3519 = vadd.f32 %v3134, %v3518
        %v3520 = vpop.f32.mrb[0].mxu0
        %v3521 = vadd.f32 %v3136, %v3520
        %v3522 = vand.u32 %v306, 4294901760
        %3523 = vmatprep.mubr.f32.mxu0 %v3522
        %v3524 = vand.u32 %v305, 4294901760
        %3525 = vmatmul.mubr.f32.gmra.mrb[0].mxu0 %v3524
        %v3526 = vpop.f32.mrb[0].mxu0
        %v3527 = vadd.f32 %v3142, %v3526
        %v3528 = vpop.f32.mrb[0].mxu0
        %v3529 = vadd.f32 %v3144, %v3528
        %v3530 = vand.u32 %v310, 4294901760
        %3531 = vmatprep.mubr.f32.mxu0 %v3530
        %v3532 = vand.u32 %v309, 4294901760
        %3533 = vmatmul.mubr.f32.gmra.mrb[0].mxu0 %v3532
        %v3534 = vpop.f32.mrb[0].mxu0
        %v3535 = vadd.f32 %v3150, %v3534
        %v3536 = vpop.f32.mrb[0].mxu0
        %v3537 = vadd.f32 %v3152, %v3536
        %v3538 = vand.u32 %v314, 4294901760
        %3539 = vmatprep.mubr.f32.mxu0 %v3538
        %v3540 = vand.u32 %v313, 4294901760
        %3541 = vmatmul.mubr.f32.gmra.mrb[0].mxu0 %v3540
        %v3542 = vpop.f32.mrb[0].mxu0
        %v3543 = vadd.f32 %v3158, %v3542
        %v3544 = vpop.f32.mrb[0].mxu0
        %v3545 = vadd.f32 %v3160, %v3544
        %v3546 = vand.u32 %v318, 4294901760
        %3547 = vmatprep.mubr.f32.mxu0 %v3546
        %v3548 = vand.u32 %v317, 4294901760
        %3549 = vmatmul.mubr.f32.gmra.mrb[0].mxu0 %v3548
        %v3550 = vpop.f32.mrb[0].mxu0
        %v3551 = vadd.f32 %v3166, %v3550
        %v3552 = vpop.f32.mrb[0].mxu0
        %v3553 = vadd.f32 %v3168, %v3552
        %v3554 = vand.u32 %v322, 4294901760
        %3555 = vmatprep.mubr.f32.mxu0 %v3554
        %v3556 = vand.u32 %v321, 4294901760
        %3557 = vmatmul.mubr.f32.gmra.mrb[0].mxu0 %v3556
        %v3558 = vpop.f32.mrb[0].mxu0
        %v3559 = vadd.f32 %v3174, %v3558
        %v3560 = vpop.f32.mrb[0].mxu0
        %v3561 = vadd.f32 %v3176, %v3560
        %v3562 = vand.u32 %v326, 4294901760
        %3563 = vmatprep.mubr.f32.mxu0 %v3562
        %v3564 = vand.u32 %v325, 4294901760
        %3565 = vmatmul.mubr.f32.gmra.mrb[0].mxu0 %v3564
        %v3566 = vpop.f32.mrb[0].mxu0
        %v3567 = vadd.f32 %v3182, %v3566
        %v3568 = vpop.f32.mrb[0].mxu0
        %v3569 = vadd.f32 %v3184, %v3568
        %v3570 = vand.u32 %v330, 4294901760
        %3571 = vmatprep.mubr.f32.mxu0 %v3570
        %v3572 = vand.u32 %v329, 4294901760
        %3573 = vmatmul.mubr.f32.gmra.mrb[0].mxu0 %v3572
        %v3574 = vpop.f32.mrb[0].mxu0
        %v3575 = vadd.f32 %v3190, %v3574
        %v3576 = vpop.f32.mrb[0].mxu0
        %v3577 = vadd.f32 %v3192, %v3576
        %v3578 = vand.u32 %v334, 4294901760
        %3579 = vmatprep.mubr.f32.mxu0 %v3578
        %v3580 = vand.u32 %v333, 4294901760
        %3581 = vmatmul.mubr.f32.gmra.mrb[0].mxu0 %v3580
        %v3582 = vpop.f32.mrb[0].mxu0
        %v3583 = vadd.f32 %v3198, %v3582
        %v3584 = vpop.f32.mrb[0].mxu0
        %v3585 = vadd.f32 %v3200, %v3584
        %v3586 = vand.u32 %v338, 4294901760
        %3587 = vmatprep.mubr.f32.mxu0 %v3586
        %v3588 = vand.u32 %v337, 4294901760
        %3589 = vmatmul.mubr.f32.gmra.mrb[0].mxu0 %v3588
        %v3590 = vpop.f32.mrb[0].mxu0
        %v3591 = vadd.f32 %v3206, %v3590
        %v3592 = vpop.f32.mrb[0].mxu0
        %v3593 = vadd.f32 %v3208, %v3592
        %v3594 = vand.u32 %v342, 4294901760
        %3595 = vmatprep.mubr.f32.mxu0 %v3594
        %v3596 = vand.u32 %v341, 4294901760
        %3597 = vmatmul.mubr.f32.gmra.mrb[0].mxu0 %v3596
        %v3598 = vpop.f32.mrb[0].mxu0
        %v3599 = vadd.f32 %v3214, %v3598
        %v3600 = vpop.f32.mrb[0].mxu0
        %v3601 = vadd.f32 %v3216, %v3600
        %v3602 = vand.u32 %v346, 4294901760
        %3603 = vmatprep.mubr.f32.mxu0 %v3602
        %v3604 = vand.u32 %v345, 4294901760
        %3605 = vmatmul.mubr.f32.gmra.mrb[0].mxu0 %v3604
        %v3606 = vpop.f32.mrb[0].mxu0
        %v3607 = vadd.f32 %v3222, %v3606
        %v3608 = vpop.f32.mrb[0].mxu0
        %v3609 = vadd.f32 %v3224, %v3608
        %v3610 = vand.u32 %v350, 4294901760
        %3611 = vmatprep.mubr.f32.mxu0 %v3610
        %v3612 = vand.u32 %v349, 4294901760
        %3613 = vmatmul.mubr.f32.gmra.mrb[0].mxu0 %v3612
        %v3614 = vpop.f32.mrb[0].mxu0
        %v3615 = vadd.f32 %v3230, %v3614
        %v3616 = vpop.f32.mrb[0].mxu0
        %v3617 = vadd.f32 %v3232, %v3616
        %v3618 = vand.u32 %v354, 4294901760
        %3619 = vmatprep.mubr.f32.mxu0 %v3618
        %v3620 = vand.u32 %v353, 4294901760
        %3621 = vmatmul.mubr.f32.gmra.mrb[0].mxu0 %v3620
        %v3622 = vpop.f32.mrb[0].mxu0
        %v3623 = vadd.f32 %v3238, %v3622
        %v3624 = vpop.f32.mrb[0].mxu0
        %v3625 = vadd.f32 %v3240, %v3624
        %v3626 = vand.u32 %v358, 4294901760
        %3627 = vmatprep.mubr.f32.mxu0 %v3626
        %v3628 = vand.u32 %v357, 4294901760
        %3629 = vmatmul.mubr.f32.gmra.mrb[0].mxu0 %v3628
        %v3630 = vpop.f32.mrb[0].mxu0
        %v3631 = vadd.f32 %v3246, %v3630
        %v3632 = vpop.f32.mrb[0].mxu0
        %v3633 = vadd.f32 %v3248, %v3632
        %v3634 = vand.u32 %v362, 4294901760
        %3635 = vmatprep.mubr.f32.mxu0 %v3634
        %v3636 = vand.u32 %v361, 4294901760
        %3637 = vmatmul.mubr.f32.gmra.mrb[0].mxu0 %v3636
        %v3638 = vpop.f32.mrb[0].mxu0
        %v3639 = vadd.f32 %v3254, %v3638
        %v3640 = vpop.f32.mrb[0].mxu0
        %v3641 = vadd.f32 %v3256, %v3640
        %v3642 = vand.u32 %v366, 4294901760
        %3643 = vmatprep.mubr.f32.mxu0 %v3642
        %v3644 = vand.u32 %v365, 4294901760
        %3645 = vmatmul.mubr.f32.gmra.mrb[0].mxu0 %v3644
        %v3646 = vpop.f32.mrb[0].mxu0
        %v3647 = vadd.f32 %v3262, %v3646
        %v3648 = vpop.f32.mrb[0].mxu0
        %v3649 = vadd.f32 %v3264, %v3648
        %v3650 = vand.u32 %v370, 4294901760
        %3651 = vmatprep.mubr.f32.mxu0 %v3650
        %v3652 = vand.u32 %v369, 4294901760
        %3653 = vmatmul.mubr.f32.gmra.mrb[0].mxu0 %v3652
        %v3654 = vpop.f32.mrb[0].mxu0
        %v3655 = vadd.f32 %v3270, %v3654
        %v3656 = vpop.f32.mrb[0].mxu0
        %v3657 = vadd.f32 %v3272, %v3656
        %v3658 = vand.u32 %v374, 4294901760
        %3659 = vmatprep.mubr.f32.mxu0 %v3658
        %v3660 = vand.u32 %v373, 4294901760
        %3661 = vmatmul.mubr.f32.gmra.mrb[0].mxu0 %v3660
        %v3662 = vpop.f32.mrb[0].mxu0
        %v3663 = vadd.f32 %v3278, %v3662
        %v3664 = vpop.f32.mrb[0].mxu0
        %v3665 = vadd.f32 %v3280, %v3664
        %v3666 = vand.u32 %v378, 4294901760
        %3667 = vmatprep.mubr.f32.mxu0 %v3666
        %v3668 = vand.u32 %v377, 4294901760
        %3669 = vmatmul.mubr.f32.gmra.mrb[0].mxu0 %v3668
        %v3670 = vpop.f32.mrb[0].mxu0
        %v3671 = vadd.f32 %v3286, %v3670
        %v3672 = vpop.f32.mrb[0].mxu0
        %v3673 = vadd.f32 %v3288, %v3672
        %v3674 = vand.u32 %v382, 4294901760
        %3675 = vmatprep.mubr.f32.mxu0 %v3674
        %v3676 = vand.u32 %v381, 4294901760
        %3677 = vmatmul.mubr.f32.gmra.mrb[0].mxu0 %v3676
        %v3678 = vpop.f32.mrb[0].mxu0
        %v3679 = vadd.f32 %v3294, %v3678
        %v3680 = vpop.f32.mrb[0].mxu0
        %v3681 = vadd.f32 %v3296, %v3680
        %v3682 = vand.u32 %v386, 4294901760
        %3683 = vmatprep.mubr.f32.mxu0 %v3682
        %v3684 = vand.u32 %v385, 4294901760
        %3685 = vmatmul.mubr.f32.gmra.mrb[0].mxu0 %v3684
        %v3686 = vpop.f32.mrb[0].mxu0
        %v3687 = vadd.f32 %v3302, %v3686
        %v3688 = vpop.f32.mrb[0].mxu0
        %v3689 = vadd.f32 %v3304, %v3688
        %v3690 = vand.u32 %v390, 4294901760
        %3691 = vmatprep.mubr.f32.mxu0 %v3690
        %v3692 = vand.u32 %v389, 4294901760
        %3693 = vmatmul.mubr.f32.gmra.mrb[0].mxu0 %v3692
        %v3694 = vpop.f32.mrb[0].mxu0
        %v3695 = vadd.f32 %v3310, %v3694
        %v3696 = vpop.f32.mrb[0].mxu0
        %v3697 = vadd.f32 %v3312, %v3696
        %v3698 = vand.u32 %v394, 4294901760
        %3699 = vmatprep.mubr.f32.mxu0 %v3698
        %v3700 = vand.u32 %v393, 4294901760
        %3701 = vmatmul.mubr.f32.gmra.mrb[0].mxu0 %v3700
        %v3702 = vpop.f32.mrb[0].mxu0
        %v3703 = vadd.f32 %v3318, %v3702
        %v3704 = vpop.f32.mrb[0].mxu0
        %v3705 = vadd.f32 %v3320, %v3704
        %v3706 = vand.u32 %v398, 4294901760
        %3707 = vmatprep.mubr.f32.mxu0 %v3706
        %v3708 = vand.u32 %v397, 4294901760
        %3709 = vmatmul.mubr.f32.gmra.mrb[0].mxu0 %v3708
        %v3710 = vpop.f32.mrb[0].mxu0
        %v3711 = vadd.f32 %v3326, %v3710
        %v3712 = vpop.f32.mrb[0].mxu0
        %v3713 = vadd.f32 %v3328, %v3712
        %v3714 = vand.u32 %v402, 4294901760
        %3715 = vmatprep.mubr.f32.mxu0 %v3714
        %v3716 = vand.u32 %v401, 4294901760
        %3717 = vmatmul.mubr.f32.gmra.mrb[0].mxu0 %v3716
        %v3718 = vpop.f32.mrb[0].mxu0
        %v3719 = vadd.f32 %v3334, %v3718
        %v3720 = vpop.f32.mrb[0].mxu0
        %v3721 = vadd.f32 %v3336, %v3720
        %v3722 = vand.u32 %v406, 4294901760
        %3723 = vmatprep.mubr.f32.mxu0 %v3722
        %v3724 = vand.u32 %v405, 4294901760
        %3725 = vmatmul.mubr.f32.gmra.mrb[0].mxu0 %v3724
        %v3726 = vpop.f32.mrb[0].mxu0
        %v3727 = vadd.f32 %v3342, %v3726
        %v3728 = vpop.f32.mrb[0].mxu0
        %v3729 = vadd.f32 %v3344, %v3728
        %v3730 = vand.u32 %v410, 4294901760
        %3731 = vmatprep.mubr.f32.mxu0 %v3730
        %v3732 = vand.u32 %v409, 4294901760
        %3733 = vmatmul.mubr.f32.gmra.mrb[0].mxu0 %v3732
        %v3734 = vpop.f32.mrb[0].mxu0
        %v3735 = vadd.f32 %v3350, %v3734
        %v3736 = vpop.f32.mrb[0].mxu0
        %v3737 = vadd.f32 %v3352, %v3736
        %v3738 = vand.u32 %v414, 4294901760
        %3739 = vmatprep.mubr.f32.mxu0 %v3738
        %v3740 = vand.u32 %v413, 4294901760
        %3741 = vmatmul.mubr.f32.gmra.mrb[0].mxu0 %v3740
        %v3742 = vpop.f32.mrb[0].mxu0
        %v3743 = vadd.f32 %v3358, %v3742
        %v3744 = vpop.f32.mrb[0].mxu0
        %v3745 = vadd.f32 %v3360, %v3744
        %v3746 = vand.u32 %v418, 4294901760
        %3747 = vmatprep.mubr.f32.mxu0 %v3746
        %v3748 = vand.u32 %v417, 4294901760
        %3749 = vmatmul.mubr.f32.gmra.mrb[0].mxu0 %v3748
        %v3750 = vpop.f32.mrb[0].mxu0
        %v3751 = vadd.f32 %v3366, %v3750
        %v3752 = vpop.f32.mrb[0].mxu0
        %v3753 = vadd.f32 %v3368, %v3752
        %3754 = vdwg.mxu0
        %v3755 = vand.u32 %v486, 4294901760
        %3756 = vmatprep.subr.mxu0 %v3755
        %v3757 = vand.u32 %v485, 4294901760
        %3758 = vmatpush1.msra.mxu0 %v3757
        %v3759 = vand.u32 %v488, 4294901760
        %3760 = vmatprep.subr.mxu0 %v3759
        %v3761 = vand.u32 %v487, 4294901760
        %3762 = vmatpush1.msra.mxu0 %v3761
        %v3763 = vand.u32 %v490, 4294901760
        %3764 = vmatprep.subr.mxu0 %v3763
        %v3765 = vand.u32 %v489, 4294901760
        %3766 = vmatpush1.msra.mxu0 %v3765
        %v3767 = vand.u32 %v492, 4294901760
        %3768 = vmatprep.subr.mxu0 %v3767
        %v3769 = vand.u32 %v491, 4294901760
        %3770 = vmatpush1.msra.mxu0 %v3769
        %v3771 = vand.u32 %v494, 4294901760
        %3772 = vmatprep.subr.mxu0 %v3771
        %v3773 = vand.u32 %v493, 4294901760
        %3774 = vmatpush1.msra.mxu0 %v3773
        %v3775 = vand.u32 %v496, 4294901760
        %3776 = vmatprep.subr.mxu0 %v3775
        %v3777 = vand.u32 %v495, 4294901760
        %3778 = vmatpush1.msra.mxu0 %v3777
        %v3779 = vand.u32 %v498, 4294901760
        %3780 = vmatprep.subr.mxu0 %v3779
        %v3781 = vand.u32 %v497, 4294901760
        %3782 = vmatpush1.msra.mxu0 %v3781
        %v3783 = vand.u32 %v500, 4294901760
        %3784 = vmatprep.subr.mxu0 %v3783
        %v3785 = vand.u32 %v499, 4294901760
        %3786 = vmatpush1.msra.mxu0 %v3785
        %v3787 = vand.u32 %v502, 4294901760
        %3788 = vmatprep.subr.mxu0 %v3787
        %v3789 = vand.u32 %v501, 4294901760
        %3790 = vmatpush1.msra.mxu0 %v3789
        %v3791 = vand.u32 %v504, 4294901760
        %3792 = vmatprep.subr.mxu0 %v3791
        %v3793 = vand.u32 %v503, 4294901760
        %3794 = vmatpush1.msra.mxu0 %v3793
        %v3795 = vand.u32 %v506, 4294901760
        %3796 = vmatprep.subr.mxu0 %v3795
        %v3797 = vand.u32 %v505, 4294901760
        %3798 = vmatpush1.msra.mxu0 %v3797
        %v3799 = vand.u32 %v508, 4294901760
        %3800 = vmatprep.subr.mxu0 %v3799
        %v3801 = vand.u32 %v507, 4294901760
        %3802 = vmatpush1.msra.mxu0 %v3801
        %v3803 = vand.u32 %v510, 4294901760
        %3804 = vmatprep.subr.mxu0 %v3803
        %v3805 = vand.u32 %v509, 4294901760
        %3806 = vmatpush1.msra.mxu0 %v3805
        %v3807 = vand.u32 %v512, 4294901760
        %3808 = vmatprep.subr.mxu0 %v3807
        %v3809 = vand.u32 %v511, 4294901760
        %3810 = vmatpush1.msra.mxu0 %v3809
        %v3811 = vand.u32 %v514, 4294901760
        %3812 = vmatprep.subr.mxu0 %v3811
        %v3813 = vand.u32 %v513, 4294901760
        %3814 = vmatpush1.msra.mxu0 %v3813
        %v3815 = vand.u32 %v516, 4294901760
        %3816 = vmatprep.subr.mxu0 %v3815
        %v3817 = vand.u32 %v515, 4294901760
        %3818 = vmatpush1.msra.mxu0 %v3817
        %v3819 = vand.u32 %v518, 4294901760
        %3820 = vmatprep.subr.mxu0 %v3819
        %v3821 = vand.u32 %v517, 4294901760
        %3822 = vmatpush1.msra.mxu0 %v3821
        %v3823 = vand.u32 %v520, 4294901760
        %3824 = vmatprep.subr.mxu0 %v3823
        %v3825 = vand.u32 %v519, 4294901760
        %3826 = vmatpush1.msra.mxu0 %v3825
        %v3827 = vand.u32 %v522, 4294901760
        %3828 = vmatprep.subr.mxu0 %v3827
        %v3829 = vand.u32 %v521, 4294901760
        %3830 = vmatpush1.msra.mxu0 %v3829
        %v3831 = vand.u32 %v524, 4294901760
        %3832 = vmatprep.subr.mxu0 %v3831
        %v3833 = vand.u32 %v523, 4294901760
        %3834 = vmatpush1.msra.mxu0 %v3833
        %v3835 = vand.u32 %v526, 4294901760
        %3836 = vmatprep.subr.mxu0 %v3835
        %v3837 = vand.u32 %v525, 4294901760
        %3838 = vmatpush1.msra.mxu0 %v3837
        %v3839 = vand.u32 %v528, 4294901760
        %3840 = vmatprep.subr.mxu0 %v3839
        %v3841 = vand.u32 %v527, 4294901760
        %3842 = vmatpush1.msra.mxu0 %v3841
        %v3843 = vand.u32 %v530, 4294901760
        %3844 = vmatprep.subr.mxu0 %v3843
        %v3845 = vand.u32 %v529, 4294901760
        %3846 = vmatpush1.msra.mxu0 %v3845
        %v3847 = vand.u32 %v532, 4294901760
        %3848 = vmatprep.subr.mxu0 %v3847
        %v3849 = vand.u32 %v531, 4294901760
        %3850 = vmatpush1.msra.mxu0 %v3849
        %v3851 = vand.u32 %v534, 4294901760
        %3852 = vmatprep.subr.mxu0 %v3851
        %v3853 = vand.u32 %v533, 4294901760
        %3854 = vmatpush1.msra.mxu0 %v3853
        %v3855 = vand.u32 %v536, 4294901760
        %3856 = vmatprep.subr.mxu0 %v3855
        %v3857 = vand.u32 %v535, 4294901760
        %3858 = vmatpush1.msra.mxu0 %v3857
        %v3859 = vand.u32 %v538, 4294901760
        %3860 = vmatprep.subr.mxu0 %v3859
        %v3861 = vand.u32 %v537, 4294901760
        %3862 = vmatpush1.msra.mxu0 %v3861
        %v3863 = vand.u32 %v540, 4294901760
        %3864 = vmatprep.subr.mxu0 %v3863
        %v3865 = vand.u32 %v539, 4294901760
        %3866 = vmatpush1.msra.mxu0 %v3865
        %v3867 = vand.u32 %v542, 4294901760
        %3868 = vmatprep.subr.mxu0 %v3867
        %v3869 = vand.u32 %v541, 4294901760
        %3870 = vmatpush1.msra.mxu0 %v3869
        %v3871 = vand.u32 %v544, 4294901760
        %3872 = vmatprep.subr.mxu0 %v3871
        %v3873 = vand.u32 %v543, 4294901760
        %3874 = vmatpush1.msra.mxu0 %v3873
        %v3875 = vand.u32 %v546, 4294901760
        %3876 = vmatprep.subr.mxu0 %v3875
        %v3877 = vand.u32 %v545, 4294901760
        %3878 = vmatpush1.msra.mxu0 %v3877
        %v3879 = vand.u32 %v548, 4294901760
        %3880 = vmatprep.subr.mxu0 %v3879
        %v3881 = vand.u32 %v547, 4294901760
        %3882 = vmatpush1.msra.mxu0 %v3881
        %v3883 = vand.u32 %v296, 4294901760
        %v3884 = vsub.f32 %v296, %v3883
        %v3885 = vand.u32 %v3884, 4294901760
        %v3886 = vsub.f32 %v3884, %v3885
        %v3887 = vand.u32 %v3886, 4294901760
        %3888 = vmatprep.mubr.f32.mxu0 %v3887
        %v3889 = vand.u32 %v295, 4294901760
        %v3890 = vsub.f32 %v295, %v3889
        %v3891 = vand.u32 %v3890, 4294901760
        %v3892 = vsub.f32 %v3890, %v3891
        %v3893 = vand.u32 %v3892, 4294901760
        %3894 = vmatmul.mubr.f32.gmra.mrb[0].mxu0 %v3893
        %v3895 = vpop.f32.mrb[0].mxu0
        %v3896 = vadd.f32 %v3503, %v3895
        %v3897 = vpop.f32.mrb[0].mxu0
        %v3898 = vadd.f32 %v3505, %v3897
        %v3899 = vand.u32 %v300, 4294901760
        %v3900 = vsub.f32 %v300, %v3899
        %v3901 = vand.u32 %v3900, 4294901760
        %v3902 = vsub.f32 %v3900, %v3901
        %v3903 = vand.u32 %v3902, 4294901760
        %3904 = vmatprep.mubr.f32.mxu0 %v3903
        %v3905 = vand.u32 %v299, 4294901760
        %v3906 = vsub.f32 %v299, %v3905
        %v3907 = vand.u32 %v3906, 4294901760
        %v3908 = vsub.f32 %v3906, %v3907
        %v3909 = vand.u32 %v3908, 4294901760
        %3910 = vmatmul.mubr.f32.gmra.mrb[0].mxu0 %v3909
        %v3911 = vpop.f32.mrb[0].mxu0
        %v3912 = vadd.f32 %v3511, %v3911
        %v3913 = vpop.f32.mrb[0].mxu0
        %v3914 = vadd.f32 %v3513, %v3913
        %v3915 = vand.u32 %v304, 4294901760
        %v3916 = vsub.f32 %v304, %v3915
        %v3917 = vand.u32 %v3916, 4294901760
        %v3918 = vsub.f32 %v3916, %v3917
        %v3919 = vand.u32 %v3918, 4294901760
        %3920 = vmatprep.mubr.f32.mxu0 %v3919
        %v3921 = vand.u32 %v303, 4294901760
        %v3922 = vsub.f32 %v303, %v3921
        %v3923 = vand.u32 %v3922, 4294901760
        %v3924 = vsub.f32 %v3922, %v3923
        %v3925 = vand.u32 %v3924, 4294901760
        %3926 = vmatmul.mubr.f32.gmra.mrb[0].mxu0 %v3925
        %v3927 = vpop.f32.mrb[0].mxu0
        %v3928 = vadd.f32 %v3519, %v3927
        %v3929 = vpop.f32.mrb[0].mxu0
        %v3930 = vadd.f32 %v3521, %v3929
        %v3931 = vand.u32 %v308, 4294901760
        %v3932 = vsub.f32 %v308, %v3931
        %v3933 = vand.u32 %v3932, 4294901760
        %v3934 = vsub.f32 %v3932, %v3933
        %v3935 = vand.u32 %v3934, 4294901760
        %3936 = vmatprep.mubr.f32.mxu0 %v3935
        %v3937 = vand.u32 %v307, 4294901760
        %v3938 = vsub.f32 %v307, %v3937
        %v3939 = vand.u32 %v3938, 4294901760
        %v3940 = vsub.f32 %v3938, %v3939
        %v3941 = vand.u32 %v3940, 4294901760
        %3942 = vmatmul.mubr.f32.gmra.mrb[0].mxu0 %v3941
        %v3943 = vpop.f32.mrb[0].mxu0
        %v3944 = vadd.f32 %v3527, %v3943
        %v3945 = vpop.f32.mrb[0].mxu0
        %v3946 = vadd.f32 %v3529, %v3945
        %v3947 = vand.u32 %v312, 4294901760
        %v3948 = vsub.f32 %v312, %v3947
        %v3949 = vand.u32 %v3948, 4294901760
        %v3950 = vsub.f32 %v3948, %v3949
        %v3951 = vand.u32 %v3950, 4294901760
        %3952 = vmatprep.mubr.f32.mxu0 %v3951
        %v3953 = vand.u32 %v311, 4294901760
        %v3954 = vsub.f32 %v311, %v3953
        %v3955 = vand.u32 %v3954, 4294901760
        %v3956 = vsub.f32 %v3954, %v3955
        %v3957 = vand.u32 %v3956, 4294901760
        %3958 = vmatmul.mubr.f32.gmra.mrb[0].mxu0 %v3957
        %v3959 = vpop.f32.mrb[0].mxu0
        %v3960 = vadd.f32 %v3535, %v3959
        %v3961 = vpop.f32.mrb[0].mxu0
        %v3962 = vadd.f32 %v3537, %v3961
        %v3963 = vand.u32 %v316, 4294901760
        %v3964 = vsub.f32 %v316, %v3963
        %v3965 = vand.u32 %v3964, 4294901760
        %v3966 = vsub.f32 %v3964, %v3965
        %v3967 = vand.u32 %v3966, 4294901760
        %3968 = vmatprep.mubr.f32.mxu0 %v3967
        %v3969 = vand.u32 %v315, 4294901760
        %v3970 = vsub.f32 %v315, %v3969
        %v3971 = vand.u32 %v3970, 4294901760
        %v3972 = vsub.f32 %v3970, %v3971
        %v3973 = vand.u32 %v3972, 4294901760
        %3974 = vmatmul.mubr.f32.gmra.mrb[0].mxu0 %v3973
        %v3975 = vpop.f32.mrb[0].mxu0
        %v3976 = vadd.f32 %v3543, %v3975
        %v3977 = vpop.f32.mrb[0].mxu0
        %v3978 = vadd.f32 %v3545, %v3977
        %v3979 = vand.u32 %v320, 4294901760
        %v3980 = vsub.f32 %v320, %v3979
        %v3981 = vand.u32 %v3980, 4294901760
        %v3982 = vsub.f32 %v3980, %v3981
        %v3983 = vand.u32 %v3982, 4294901760
        %3984 = vmatprep.mubr.f32.mxu0 %v3983
        %v3985 = vand.u32 %v319, 4294901760
        %v3986 = vsub.f32 %v319, %v3985
        %v3987 = vand.u32 %v3986, 4294901760
        %v3988 = vsub.f32 %v3986, %v3987
        %v3989 = vand.u32 %v3988, 4294901760
        %3990 = vmatmul.mubr.f32.gmra.mrb[0].mxu0 %v3989
        %v3991 = vpop.f32.mrb[0].mxu0
        %v3992 = vadd.f32 %v3551, %v3991
        %v3993 = vpop.f32.mrb[0].mxu0
        %v3994 = vadd.f32 %v3553, %v3993
        %v3995 = vand.u32 %v324, 4294901760
        %v3996 = vsub.f32 %v324, %v3995
        %v3997 = vand.u32 %v3996, 4294901760
        %v3998 = vsub.f32 %v3996, %v3997
        %v3999 = vand.u32 %v3998, 4294901760
        %4000 = vmatprep.mubr.f32.mxu0 %v3999
        %v4001 = vand.u32 %v323, 4294901760
        %v4002 = vsub.f32 %v323, %v4001
        %v4003 = vand.u32 %v4002, 4294901760
        %v4004 = vsub.f32 %v4002, %v4003
        %v4005 = vand.u32 %v4004, 4294901760
        %4006 = vmatmul.mubr.f32.gmra.mrb[0].mxu0 %v4005
        %v4007 = vpop.f32.mrb[0].mxu0
        %v4008 = vadd.f32 %v3559, %v4007
        %v4009 = vpop.f32.mrb[0].mxu0
        %v4010 = vadd.f32 %v3561, %v4009
        %v4011 = vand.u32 %v328, 4294901760
        %v4012 = vsub.f32 %v328, %v4011
        %v4013 = vand.u32 %v4012, 4294901760
        %v4014 = vsub.f32 %v4012, %v4013
        %v4015 = vand.u32 %v4014, 4294901760
        %4016 = vmatprep.mubr.f32.mxu0 %v4015
        %v4017 = vand.u32 %v327, 4294901760
        %v4018 = vsub.f32 %v327, %v4017
        %v4019 = vand.u32 %v4018, 4294901760
        %v4020 = vsub.f32 %v4018, %v4019
        %v4021 = vand.u32 %v4020, 4294901760
        %4022 = vmatmul.mubr.f32.gmra.mrb[0].mxu0 %v4021
        %v4023 = vpop.f32.mrb[0].mxu0
        %v4024 = vadd.f32 %v3567, %v4023
        %v4025 = vpop.f32.mrb[0].mxu0
        %v4026 = vadd.f32 %v3569, %v4025
        %v4027 = vand.u32 %v332, 4294901760
        %v4028 = vsub.f32 %v332, %v4027
        %v4029 = vand.u32 %v4028, 4294901760
        %v4030 = vsub.f32 %v4028, %v4029
        %v4031 = vand.u32 %v4030, 4294901760
        %4032 = vmatprep.mubr.f32.mxu0 %v4031
        %v4033 = vand.u32 %v331, 4294901760
        %v4034 = vsub.f32 %v331, %v4033
        %v4035 = vand.u32 %v4034, 4294901760
        %v4036 = vsub.f32 %v4034, %v4035
        %v4037 = vand.u32 %v4036, 4294901760
        %4038 = vmatmul.mubr.f32.gmra.mrb[0].mxu0 %v4037
        %v4039 = vpop.f32.mrb[0].mxu0
        %v4040 = vadd.f32 %v3575, %v4039
        %v4041 = vpop.f32.mrb[0].mxu0
        %v4042 = vadd.f32 %v3577, %v4041
        %v4043 = vand.u32 %v336, 4294901760
        %v4044 = vsub.f32 %v336, %v4043
        %v4045 = vand.u32 %v4044, 4294901760
        %v4046 = vsub.f32 %v4044, %v4045
        %v4047 = vand.u32 %v4046, 4294901760
        %4048 = vmatprep.mubr.f32.mxu0 %v4047
        %v4049 = vand.u32 %v335, 4294901760
        %v4050 = vsub.f32 %v335, %v4049
        %v4051 = vand.u32 %v4050, 4294901760
        %v4052 = vsub.f32 %v4050, %v4051
        %v4053 = vand.u32 %v4052, 4294901760
        %4054 = vmatmul.mubr.f32.gmra.mrb[0].mxu0 %v4053
        %v4055 = vpop.f32.mrb[0].mxu0
        %v4056 = vadd.f32 %v3583, %v4055
        %v4057 = vpop.f32.mrb[0].mxu0
        %v4058 = vadd.f32 %v3585, %v4057
        %v4059 = vand.u32 %v340, 4294901760
        %v4060 = vsub.f32 %v340, %v4059
        %v4061 = vand.u32 %v4060, 4294901760
        %v4062 = vsub.f32 %v4060, %v4061
        %v4063 = vand.u32 %v4062, 4294901760
        %4064 = vmatprep.mubr.f32.mxu0 %v4063
        %v4065 = vand.u32 %v339, 4294901760
        %v4066 = vsub.f32 %v339, %v4065
        %v4067 = vand.u32 %v4066, 4294901760
        %v4068 = vsub.f32 %v4066, %v4067
        %v4069 = vand.u32 %v4068, 4294901760
        %4070 = vmatmul.mubr.f32.gmra.mrb[0].mxu0 %v4069
        %v4071 = vpop.f32.mrb[0].mxu0
        %v4072 = vadd.f32 %v3591, %v4071
        %v4073 = vpop.f32.mrb[0].mxu0
        %v4074 = vadd.f32 %v3593, %v4073
        %v4075 = vand.u32 %v344, 4294901760
        %v4076 = vsub.f32 %v344, %v4075
        %v4077 = vand.u32 %v4076, 4294901760
        %v4078 = vsub.f32 %v4076, %v4077
        %v4079 = vand.u32 %v4078, 4294901760
        %4080 = vmatprep.mubr.f32.mxu0 %v4079
        %v4081 = vand.u32 %v343, 4294901760
        %v4082 = vsub.f32 %v343, %v4081
        %v4083 = vand.u32 %v4082, 4294901760
        %v4084 = vsub.f32 %v4082, %v4083
        %v4085 = vand.u32 %v4084, 4294901760
        %4086 = vmatmul.mubr.f32.gmra.mrb[0].mxu0 %v4085
        %v4087 = vpop.f32.mrb[0].mxu0
        %v4088 = vadd.f32 %v3599, %v4087
        %v4089 = vpop.f32.mrb[0].mxu0
        %v4090 = vadd.f32 %v3601, %v4089
        %v4091 = vand.u32 %v348, 4294901760
        %v4092 = vsub.f32 %v348, %v4091
        %v4093 = vand.u32 %v4092, 4294901760
        %v4094 = vsub.f32 %v4092, %v4093
        %v4095 = vand.u32 %v4094, 4294901760
        %4096 = vmatprep.mubr.f32.mxu0 %v4095
        %v4097 = vand.u32 %v347, 4294901760
        %v4098 = vsub.f32 %v347, %v4097
        %v4099 = vand.u32 %v4098, 4294901760
        %v4100 = vsub.f32 %v4098, %v4099
        %v4101 = vand.u32 %v4100, 4294901760
        %4102 = vmatmul.mubr.f32.gmra.mrb[0].mxu0 %v4101
        %v4103 = vpop.f32.mrb[0].mxu0
        %v4104 = vadd.f32 %v3607, %v4103
        %v4105 = vpop.f32.mrb[0].mxu0
        %v4106 = vadd.f32 %v3609, %v4105
        %v4107 = vand.u32 %v352, 4294901760
        %v4108 = vsub.f32 %v352, %v4107
        %v4109 = vand.u32 %v4108, 4294901760
        %v4110 = vsub.f32 %v4108, %v4109
        %v4111 = vand.u32 %v4110, 4294901760
        %4112 = vmatprep.mubr.f32.mxu0 %v4111
        %v4113 = vand.u32 %v351, 4294901760
        %v4114 = vsub.f32 %v351, %v4113
        %v4115 = vand.u32 %v4114, 4294901760
        %v4116 = vsub.f32 %v4114, %v4115
        %v4117 = vand.u32 %v4116, 4294901760
        %4118 = vmatmul.mubr.f32.gmra.mrb[0].mxu0 %v4117
        %v4119 = vpop.f32.mrb[0].mxu0
        %v4120 = vadd.f32 %v3615, %v4119
        %v4121 = vpop.f32.mrb[0].mxu0
        %v4122 = vadd.f32 %v3617, %v4121
        %v4123 = vand.u32 %v356, 4294901760
        %v4124 = vsub.f32 %v356, %v4123
        %v4125 = vand.u32 %v4124, 4294901760
        %v4126 = vsub.f32 %v4124, %v4125
        %v4127 = vand.u32 %v4126, 4294901760
        %4128 = vmatprep.mubr.f32.mxu0 %v4127
        %v4129 = vand.u32 %v355, 4294901760
        %v4130 = vsub.f32 %v355, %v4129
        %v4131 = vand.u32 %v4130, 4294901760
        %v4132 = vsub.f32 %v4130, %v4131
        %v4133 = vand.u32 %v4132, 4294901760
        %4134 = vmatmul.mubr.f32.gmra.mrb[0].mxu0 %v4133
        %v4135 = vpop.f32.mrb[0].mxu0
        %v4136 = vadd.f32 %v3623, %v4135
        %v4137 = vpop.f32.mrb[0].mxu0
        %v4138 = vadd.f32 %v3625, %v4137
        %v4139 = vand.u32 %v360, 4294901760
        %v4140 = vsub.f32 %v360, %v4139
        %v4141 = vand.u32 %v4140, 4294901760
        %v4142 = vsub.f32 %v4140, %v4141
        %v4143 = vand.u32 %v4142, 4294901760
        %4144 = vmatprep.mubr.f32.mxu0 %v4143
        %v4145 = vand.u32 %v359, 4294901760
        %v4146 = vsub.f32 %v359, %v4145
        %v4147 = vand.u32 %v4146, 4294901760
        %v4148 = vsub.f32 %v4146, %v4147
        %v4149 = vand.u32 %v4148, 4294901760
        %4150 = vmatmul.mubr.f32.gmra.mrb[0].mxu0 %v4149
        %v4151 = vpop.f32.mrb[0].mxu0
        %v4152 = vadd.f32 %v3631, %v4151
        %v4153 = vpop.f32.mrb[0].mxu0
        %v4154 = vadd.f32 %v3633, %v4153
        %v4155 = vand.u32 %v364, 4294901760
        %v4156 = vsub.f32 %v364, %v4155
        %v4157 = vand.u32 %v4156, 4294901760
        %v4158 = vsub.f32 %v4156, %v4157
        %v4159 = vand.u32 %v4158, 4294901760
        %4160 = vmatprep.mubr.f32.mxu0 %v4159
        %v4161 = vand.u32 %v363, 4294901760
        %v4162 = vsub.f32 %v363, %v4161
        %v4163 = vand.u32 %v4162, 4294901760
        %v4164 = vsub.f32 %v4162, %v4163
        %v4165 = vand.u32 %v4164, 4294901760
        %4166 = vmatmul.mubr.f32.gmra.mrb[0].mxu0 %v4165
        %v4167 = vpop.f32.mrb[0].mxu0
        %v4168 = vadd.f32 %v3639, %v4167
        %v4169 = vpop.f32.mrb[0].mxu0
        %v4170 = vadd.f32 %v3641, %v4169
        %v4171 = vand.u32 %v368, 4294901760
        %v4172 = vsub.f32 %v368, %v4171
        %v4173 = vand.u32 %v4172, 4294901760
        %v4174 = vsub.f32 %v4172, %v4173
        %v4175 = vand.u32 %v4174, 4294901760
        %4176 = vmatprep.mubr.f32.mxu0 %v4175
        %v4177 = vand.u32 %v367, 4294901760
        %v4178 = vsub.f32 %v367, %v4177
        %v4179 = vand.u32 %v4178, 4294901760
        %v4180 = vsub.f32 %v4178, %v4179
        %v4181 = vand.u32 %v4180, 4294901760
        %4182 = vmatmul.mubr.f32.gmra.mrb[0].mxu0 %v4181
        %v4183 = vpop.f32.mrb[0].mxu0
        %v4184 = vadd.f32 %v3647, %v4183
        %v4185 = vpop.f32.mrb[0].mxu0
        %v4186 = vadd.f32 %v3649, %v4185
        %v4187 = vand.u32 %v372, 4294901760
        %v4188 = vsub.f32 %v372, %v4187
        %v4189 = vand.u32 %v4188, 4294901760
        %v4190 = vsub.f32 %v4188, %v4189
        %v4191 = vand.u32 %v4190, 4294901760
        %4192 = vmatprep.mubr.f32.mxu0 %v4191
        %v4193 = vand.u32 %v371, 4294901760
        %v4194 = vsub.f32 %v371, %v4193
        %v4195 = vand.u32 %v4194, 4294901760
        %v4196 = vsub.f32 %v4194, %v4195
        %v4197 = vand.u32 %v4196, 4294901760
        %4198 = vmatmul.mubr.f32.gmra.mrb[0].mxu0 %v4197
        %v4199 = vpop.f32.mrb[0].mxu0
        %v4200 = vadd.f32 %v3655, %v4199
        %v4201 = vpop.f32.mrb[0].mxu0
        %v4202 = vadd.f32 %v3657, %v4201
        %v4203 = vand.u32 %v376, 4294901760
        %v4204 = vsub.f32 %v376, %v4203
        %v4205 = vand.u32 %v4204, 4294901760
        %v4206 = vsub.f32 %v4204, %v4205
        %v4207 = vand.u32 %v4206, 4294901760
        %4208 = vmatprep.mubr.f32.mxu0 %v4207
        %v4209 = vand.u32 %v375, 4294901760
        %v4210 = vsub.f32 %v375, %v4209
        %v4211 = vand.u32 %v4210, 4294901760
        %v4212 = vsub.f32 %v4210, %v4211
        %v4213 = vand.u32 %v4212, 4294901760
        %4214 = vmatmul.mubr.f32.gmra.mrb[0].mxu0 %v4213
        %v4215 = vpop.f32.mrb[0].mxu0
        %v4216 = vadd.f32 %v3663, %v4215
        %v4217 = vpop.f32.mrb[0].mxu0
        %v4218 = vadd.f32 %v3665, %v4217
        %v4219 = vand.u32 %v380, 4294901760
        %v4220 = vsub.f32 %v380, %v4219
        %v4221 = vand.u32 %v4220, 4294901760
        %v4222 = vsub.f32 %v4220, %v4221
        %v4223 = vand.u32 %v4222, 4294901760
        %4224 = vmatprep.mubr.f32.mxu0 %v4223
        %v4225 = vand.u32 %v379, 4294901760
        %v4226 = vsub.f32 %v379, %v4225
        %v4227 = vand.u32 %v4226, 4294901760
        %v4228 = vsub.f32 %v4226, %v4227
        %v4229 = vand.u32 %v4228, 4294901760
        %4230 = vmatmul.mubr.f32.gmra.mrb[0].mxu0 %v4229
        %v4231 = vpop.f32.mrb[0].mxu0
        %v4232 = vadd.f32 %v3671, %v4231
        %v4233 = vpop.f32.mrb[0].mxu0
        %v4234 = vadd.f32 %v3673, %v4233
        %v4235 = vand.u32 %v384, 4294901760
        %v4236 = vsub.f32 %v384, %v4235
        %v4237 = vand.u32 %v4236, 4294901760
        %v4238 = vsub.f32 %v4236, %v4237
        %v4239 = vand.u32 %v4238, 4294901760
        %4240 = vmatprep.mubr.f32.mxu0 %v4239
        %v4241 = vand.u32 %v383, 4294901760
        %v4242 = vsub.f32 %v383, %v4241
        %v4243 = vand.u32 %v4242, 4294901760
        %v4244 = vsub.f32 %v4242, %v4243
        %v4245 = vand.u32 %v4244, 4294901760
        %4246 = vmatmul.mubr.f32.gmra.mrb[0].mxu0 %v4245
        %v4247 = vpop.f32.mrb[0].mxu0
        %v4248 = vadd.f32 %v3679, %v4247
        %v4249 = vpop.f32.mrb[0].mxu0
        %v4250 = vadd.f32 %v3681, %v4249
        %v4251 = vand.u32 %v388, 4294901760
        %v4252 = vsub.f32 %v388, %v4251
        %v4253 = vand.u32 %v4252, 4294901760
        %v4254 = vsub.f32 %v4252, %v4253
        %v4255 = vand.u32 %v4254, 4294901760
        %4256 = vmatprep.mubr.f32.mxu0 %v4255
        %v4257 = vand.u32 %v387, 4294901760
        %v4258 = vsub.f32 %v387, %v4257
        %v4259 = vand.u32 %v4258, 4294901760
        %v4260 = vsub.f32 %v4258, %v4259
        %v4261 = vand.u32 %v4260, 4294901760
        %4262 = vmatmul.mubr.f32.gmra.mrb[0].mxu0 %v4261
        %v4263 = vpop.f32.mrb[0].mxu0
        %v4264 = vadd.f32 %v3687, %v4263
        %v4265 = vpop.f32.mrb[0].mxu0
        %v4266 = vadd.f32 %v3689, %v4265
        %v4267 = vand.u32 %v392, 4294901760
        %v4268 = vsub.f32 %v392, %v4267
        %v4269 = vand.u32 %v4268, 4294901760
        %v4270 = vsub.f32 %v4268, %v4269
        %v4271 = vand.u32 %v4270, 4294901760
        %4272 = vmatprep.mubr.f32.mxu0 %v4271
        %v4273 = vand.u32 %v391, 4294901760
        %v4274 = vsub.f32 %v391, %v4273
        %v4275 = vand.u32 %v4274, 4294901760
        %v4276 = vsub.f32 %v4274, %v4275
        %v4277 = vand.u32 %v4276, 4294901760
        %4278 = vmatmul.mubr.f32.gmra.mrb[0].mxu0 %v4277
        %v4279 = vpop.f32.mrb[0].mxu0
        %v4280 = vadd.f32 %v3695, %v4279
        %v4281 = vpop.f32.mrb[0].mxu0
        %v4282 = vadd.f32 %v3697, %v4281
        %v4283 = vand.u32 %v396, 4294901760
        %v4284 = vsub.f32 %v396, %v4283
        %v4285 = vand.u32 %v4284, 4294901760
        %v4286 = vsub.f32 %v4284, %v4285
        %v4287 = vand.u32 %v4286, 4294901760
        %4288 = vmatprep.mubr.f32.mxu0 %v4287
        %v4289 = vand.u32 %v395, 4294901760
        %v4290 = vsub.f32 %v395, %v4289
        %v4291 = vand.u32 %v4290, 4294901760
        %v4292 = vsub.f32 %v4290, %v4291
        %v4293 = vand.u32 %v4292, 4294901760
        %4294 = vmatmul.mubr.f32.gmra.mrb[0].mxu0 %v4293
        %v4295 = vpop.f32.mrb[0].mxu0
        %v4296 = vadd.f32 %v3703, %v4295
        %v4297 = vpop.f32.mrb[0].mxu0
        %v4298 = vadd.f32 %v3705, %v4297
        %v4299 = vand.u32 %v400, 4294901760
        %v4300 = vsub.f32 %v400, %v4299
        %v4301 = vand.u32 %v4300, 4294901760
        %v4302 = vsub.f32 %v4300, %v4301
        %v4303 = vand.u32 %v4302, 4294901760
        %4304 = vmatprep.mubr.f32.mxu0 %v4303
        %v4305 = vand.u32 %v399, 4294901760
        %v4306 = vsub.f32 %v399, %v4305
        %v4307 = vand.u32 %v4306, 4294901760
        %v4308 = vsub.f32 %v4306, %v4307
        %v4309 = vand.u32 %v4308, 4294901760
        %4310 = vmatmul.mubr.f32.gmra.mrb[0].mxu0 %v4309
        %v4311 = vpop.f32.mrb[0].mxu0
        %v4312 = vadd.f32 %v3711, %v4311
        %v4313 = vpop.f32.mrb[0].mxu0
        %v4314 = vadd.f32 %v3713, %v4313
        %v4315 = vand.u32 %v404, 4294901760
        %v4316 = vsub.f32 %v404, %v4315
        %v4317 = vand.u32 %v4316, 4294901760
        %v4318 = vsub.f32 %v4316, %v4317
        %v4319 = vand.u32 %v4318, 4294901760
        %4320 = vmatprep.mubr.f32.mxu0 %v4319
        %v4321 = vand.u32 %v403, 4294901760
        %v4322 = vsub.f32 %v403, %v4321
        %v4323 = vand.u32 %v4322, 4294901760
        %v4324 = vsub.f32 %v4322, %v4323
        %v4325 = vand.u32 %v4324, 4294901760
        %4326 = vmatmul.mubr.f32.gmra.mrb[0].mxu0 %v4325
        %v4327 = vpop.f32.mrb[0].mxu0
        %v4328 = vadd.f32 %v3719, %v4327
        %v4329 = vpop.f32.mrb[0].mxu0
        %v4330 = vadd.f32 %v3721, %v4329
        %v4331 = vand.u32 %v408, 4294901760
        %v4332 = vsub.f32 %v408, %v4331
        %v4333 = vand.u32 %v4332, 4294901760
        %v4334 = vsub.f32 %v4332, %v4333
        %v4335 = vand.u32 %v4334, 4294901760
        %4336 = vmatprep.mubr.f32.mxu0 %v4335
        %v4337 = vand.u32 %v407, 4294901760
        %v4338 = vsub.f32 %v407, %v4337
        %v4339 = vand.u32 %v4338, 4294901760
        %v4340 = vsub.f32 %v4338, %v4339
        %v4341 = vand.u32 %v4340, 4294901760
        %4342 = vmatmul.mubr.f32.gmra.mrb[0].mxu0 %v4341
        %v4343 = vpop.f32.mrb[0].mxu0
        %v4344 = vadd.f32 %v3727, %v4343
        %v4345 = vpop.f32.mrb[0].mxu0
        %v4346 = vadd.f32 %v3729, %v4345
        %v4347 = vand.u32 %v412, 4294901760
        %v4348 = vsub.f32 %v412, %v4347
        %v4349 = vand.u32 %v4348, 4294901760
        %v4350 = vsub.f32 %v4348, %v4349
        %v4351 = vand.u32 %v4350, 4294901760
        %4352 = vmatprep.mubr.f32.mxu0 %v4351
        %v4353 = vand.u32 %v411, 4294901760
        %v4354 = vsub.f32 %v411, %v4353
        %v4355 = vand.u32 %v4354, 4294901760
        %v4356 = vsub.f32 %v4354, %v4355
        %v4357 = vand.u32 %v4356, 4294901760
        %4358 = vmatmul.mubr.f32.gmra.mrb[0].mxu0 %v4357
        %v4359 = vpop.f32.mrb[0].mxu0
        %v4360 = vadd.f32 %v3735, %v4359
        %v4361 = vpop.f32.mrb[0].mxu0
        %v4362 = vadd.f32 %v3737, %v4361
        %v4363 = vand.u32 %v416, 4294901760
        %v4364 = vsub.f32 %v416, %v4363
        %v4365 = vand.u32 %v4364, 4294901760
        %v4366 = vsub.f32 %v4364, %v4365
        %v4367 = vand.u32 %v4366, 4294901760
        %4368 = vmatprep.mubr.f32.mxu0 %v4367
        %v4369 = vand.u32 %v415, 4294901760
        %v4370 = vsub.f32 %v415, %v4369
        %v4371 = vand.u32 %v4370, 4294901760
        %v4372 = vsub.f32 %v4370, %v4371
        %v4373 = vand.u32 %v4372, 4294901760
        %4374 = vmatmul.mubr.f32.gmra.mrb[0].mxu0 %v4373
        %v4375 = vpop.f32.mrb[0].mxu0
        %v4376 = vadd.f32 %v3743, %v4375
        %v4377 = vpop.f32.mrb[0].mxu0
        %v4378 = vadd.f32 %v3745, %v4377
        %v4379 = vand.u32 %v420, 4294901760
        %v4380 = vsub.f32 %v420, %v4379
        %v4381 = vand.u32 %v4380, 4294901760
        %v4382 = vsub.f32 %v4380, %v4381
        %v4383 = vand.u32 %v4382, 4294901760
        %4384 = vmatprep.mubr.f32.mxu0 %v4383
        %v4385 = vand.u32 %v419, 4294901760
        %v4386 = vsub.f32 %v419, %v4385
        %v4387 = vand.u32 %v4386, 4294901760
        %v4388 = vsub.f32 %v4386, %v4387
        %v4389 = vand.u32 %v4388, 4294901760
        %4390 = vmatmul.mubr.f32.gmra.mrb[0].mxu0 %v4389
        %v4391 = vpop.f32.mrb[0].mxu0
        %v4392 = vadd.f32 %v3751, %v4391
        %v4393 = vpop.f32.mrb[0].mxu0
        %v4394 = vadd.f32 %v3753, %v4393
        %4395 = vdwg.mxu0
        %v4396 = vand.u32 %v486, 4294901760
        %v4397 = vsub.f32 %v486, %v4396
        %v4398 = vand.u32 %v4397, 4294901760
        %v4399 = vsub.f32 %v4397, %v4398
        %v4400 = vand.u32 %v4399, 4294901760
        %4401 = vmatprep.subr.mxu0 %v4400
        %v4402 = vand.u32 %v485, 4294901760
        %v4403 = vsub.f32 %v485, %v4402
        %v4404 = vand.u32 %v4403, 4294901760
        %v4405 = vsub.f32 %v4403, %v4404
        %v4406 = vand.u32 %v4405, 4294901760
        %4407 = vmatpush1.msra.mxu0 %v4406
        %v4408 = vand.u32 %v488, 4294901760
        %v4409 = vsub.f32 %v488, %v4408
        %v4410 = vand.u32 %v4409, 4294901760
        %v4411 = vsub.f32 %v4409, %v4410
        %v4412 = vand.u32 %v4411, 4294901760
        %4413 = vmatprep.subr.mxu0 %v4412
        %v4414 = vand.u32 %v487, 4294901760
        %v4415 = vsub.f32 %v487, %v4414
        %v4416 = vand.u32 %v4415, 4294901760
        %v4417 = vsub.f32 %v4415, %v4416
        %v4418 = vand.u32 %v4417, 4294901760
        %4419 = vmatpush1.msra.mxu0 %v4418
        %v4420 = vand.u32 %v490, 4294901760
        %v4421 = vsub.f32 %v490, %v4420
        %v4422 = vand.u32 %v4421, 4294901760
        %v4423 = vsub.f32 %v4421, %v4422
        %v4424 = vand.u32 %v4423, 4294901760
        %4425 = vmatprep.subr.mxu0 %v4424
        %v4426 = vand.u32 %v489, 4294901760
        %v4427 = vsub.f32 %v489, %v4426
        %v4428 = vand.u32 %v4427, 4294901760
        %v4429 = vsub.f32 %v4427, %v4428
        %v4430 = vand.u32 %v4429, 4294901760
        %4431 = vmatpush1.msra.mxu0 %v4430
        %v4432 = vand.u32 %v492, 4294901760
        %v4433 = vsub.f32 %v492, %v4432
        %v4434 = vand.u32 %v4433, 4294901760
        %v4435 = vsub.f32 %v4433, %v4434
        %v4436 = vand.u32 %v4435, 4294901760
        %4437 = vmatprep.subr.mxu0 %v4436
        %v4438 = vand.u32 %v491, 4294901760
        %v4439 = vsub.f32 %v491, %v4438
        %v4440 = vand.u32 %v4439, 4294901760
        %v4441 = vsub.f32 %v4439, %v4440
        %v4442 = vand.u32 %v4441, 4294901760
        %4443 = vmatpush1.msra.mxu0 %v4442
        %v4444 = vand.u32 %v494, 4294901760
        %v4445 = vsub.f32 %v494, %v4444
        %v4446 = vand.u32 %v4445, 4294901760
        %v4447 = vsub.f32 %v4445, %v4446
        %v4448 = vand.u32 %v4447, 4294901760
        %4449 = vmatprep.subr.mxu0 %v4448
        %v4450 = vand.u32 %v493, 4294901760
        %v4451 = vsub.f32 %v493, %v4450
        %v4452 = vand.u32 %v4451, 4294901760
        %v4453 = vsub.f32 %v4451, %v4452
        %v4454 = vand.u32 %v4453, 4294901760
        %4455 = vmatpush1.msra.mxu0 %v4454
        %v4456 = vand.u32 %v496, 4294901760
        %v4457 = vsub.f32 %v496, %v4456
        %v4458 = vand.u32 %v4457, 4294901760
        %v4459 = vsub.f32 %v4457, %v4458
        %v4460 = vand.u32 %v4459, 4294901760
        %4461 = vmatprep.subr.mxu0 %v4460
        %v4462 = vand.u32 %v495, 4294901760
        %v4463 = vsub.f32 %v495, %v4462
        %v4464 = vand.u32 %v4463, 4294901760
        %v4465 = vsub.f32 %v4463, %v4464
        %v4466 = vand.u32 %v4465, 4294901760
        %4467 = vmatpush1.msra.mxu0 %v4466
        %v4468 = vand.u32 %v498, 4294901760
        %v4469 = vsub.f32 %v498, %v4468
        %v4470 = vand.u32 %v4469, 4294901760
        %v4471 = vsub.f32 %v4469, %v4470
        %v4472 = vand.u32 %v4471, 4294901760
        %4473 = vmatprep.subr.mxu0 %v4472
        %v4474 = vand.u32 %v497, 4294901760
        %v4475 = vsub.f32 %v497, %v4474
        %v4476 = vand.u32 %v4475, 4294901760
        %v4477 = vsub.f32 %v4475, %v4476
        %v4478 = vand.u32 %v4477, 4294901760
        %4479 = vmatpush1.msra.mxu0 %v4478
        %v4480 = vand.u32 %v500, 4294901760
        %v4481 = vsub.f32 %v500, %v4480
        %v4482 = vand.u32 %v4481, 4294901760
        %v4483 = vsub.f32 %v4481, %v4482
        %v4484 = vand.u32 %v4483, 4294901760
        %4485 = vmatprep.subr.mxu0 %v4484
        %v4486 = vand.u32 %v499, 4294901760
        %v4487 = vsub.f32 %v499, %v4486
        %v4488 = vand.u32 %v4487, 4294901760
        %v4489 = vsub.f32 %v4487, %v4488
        %v4490 = vand.u32 %v4489, 4294901760
        %4491 = vmatpush1.msra.mxu0 %v4490
        %v4492 = vand.u32 %v502, 4294901760
        %v4493 = vsub.f32 %v502, %v4492
        %v4494 = vand.u32 %v4493, 4294901760
        %v4495 = vsub.f32 %v4493, %v4494
        %v4496 = vand.u32 %v4495, 4294901760
        %4497 = vmatprep.subr.mxu0 %v4496
        %v4498 = vand.u32 %v501, 4294901760
        %v4499 = vsub.f32 %v501, %v4498
        %v4500 = vand.u32 %v4499, 4294901760
        %v4501 = vsub.f32 %v4499, %v4500
        %v4502 = vand.u32 %v4501, 4294901760
        %4503 = vmatpush1.msra.mxu0 %v4502
        %v4504 = vand.u32 %v504, 4294901760
        %v4505 = vsub.f32 %v504, %v4504
        %v4506 = vand.u32 %v4505, 4294901760
        %v4507 = vsub.f32 %v4505, %v4506
        %v4508 = vand.u32 %v4507, 4294901760
        %4509 = vmatprep.subr.mxu0 %v4508
        %v4510 = vand.u32 %v503, 4294901760
        %v4511 = vsub.f32 %v503, %v4510
        %v4512 = vand.u32 %v4511, 4294901760
        %v4513 = vsub.f32 %v4511, %v4512
        %v4514 = vand.u32 %v4513, 4294901760
        %4515 = vmatpush1.msra.mxu0 %v4514
        %v4516 = vand.u32 %v506, 4294901760
        %v4517 = vsub.f32 %v506, %v4516
        %v4518 = vand.u32 %v4517, 4294901760
        %v4519 = vsub.f32 %v4517, %v4518
        %v4520 = vand.u32 %v4519, 4294901760
        %4521 = vmatprep.subr.mxu0 %v4520
        %v4522 = vand.u32 %v505, 4294901760
        %v4523 = vsub.f32 %v505, %v4522
        %v4524 = vand.u32 %v4523, 4294901760
        %v4525 = vsub.f32 %v4523, %v4524
        %v4526 = vand.u32 %v4525, 4294901760
        %4527 = vmatpush1.msra.mxu0 %v4526
        %v4528 = vand.u32 %v508, 4294901760
        %v4529 = vsub.f32 %v508, %v4528
        %v4530 = vand.u32 %v4529, 4294901760
        %v4531 = vsub.f32 %v4529, %v4530
        %v4532 = vand.u32 %v4531, 4294901760
        %4533 = vmatprep.subr.mxu0 %v4532
        %v4534 = vand.u32 %v507, 4294901760
        %v4535 = vsub.f32 %v507, %v4534
        %v4536 = vand.u32 %v4535, 4294901760
        %v4537 = vsub.f32 %v4535, %v4536
        %v4538 = vand.u32 %v4537, 4294901760
        %4539 = vmatpush1.msra.mxu0 %v4538
        %v4540 = vand.u32 %v510, 4294901760
        %v4541 = vsub.f32 %v510, %v4540
        %v4542 = vand.u32 %v4541, 4294901760
        %v4543 = vsub.f32 %v4541, %v4542
        %v4544 = vand.u32 %v4543, 4294901760
        %4545 = vmatprep.subr.mxu0 %v4544
        %v4546 = vand.u32 %v509, 4294901760
        %v4547 = vsub.f32 %v509, %v4546
        %v4548 = vand.u32 %v4547, 4294901760
        %v4549 = vsub.f32 %v4547, %v4548
        %v4550 = vand.u32 %v4549, 4294901760
        %4551 = vmatpush1.msra.mxu0 %v4550
        %v4552 = vand.u32 %v512, 4294901760
        %v4553 = vsub.f32 %v512, %v4552
        %v4554 = vand.u32 %v4553, 4294901760
        %v4555 = vsub.f32 %v4553, %v4554
        %v4556 = vand.u32 %v4555, 4294901760
        %4557 = vmatprep.subr.mxu0 %v4556
        %v4558 = vand.u32 %v511, 4294901760
        %v4559 = vsub.f32 %v511, %v4558
        %v4560 = vand.u32 %v4559, 4294901760
        %v4561 = vsub.f32 %v4559, %v4560
        %v4562 = vand.u32 %v4561, 4294901760
        %4563 = vmatpush1.msra.mxu0 %v4562
        %v4564 = vand.u32 %v514, 4294901760
        %v4565 = vsub.f32 %v514, %v4564
        %v4566 = vand.u32 %v4565, 4294901760
        %v4567 = vsub.f32 %v4565, %v4566
        %v4568 = vand.u32 %v4567, 4294901760
        %4569 = vmatprep.subr.mxu0 %v4568
        %v4570 = vand.u32 %v513, 4294901760
        %v4571 = vsub.f32 %v513, %v4570
        %v4572 = vand.u32 %v4571, 4294901760
        %v4573 = vsub.f32 %v4571, %v4572
        %v4574 = vand.u32 %v4573, 4294901760
        %4575 = vmatpush1.msra.mxu0 %v4574
        %v4576 = vand.u32 %v516, 4294901760
        %v4577 = vsub.f32 %v516, %v4576
        %v4578 = vand.u32 %v4577, 4294901760
        %v4579 = vsub.f32 %v4577, %v4578
        %v4580 = vand.u32 %v4579, 4294901760
        %4581 = vmatprep.subr.mxu0 %v4580
        %v4582 = vand.u32 %v515, 4294901760
        %v4583 = vsub.f32 %v515, %v4582
        %v4584 = vand.u32 %v4583, 4294901760
        %v4585 = vsub.f32 %v4583, %v4584
        %v4586 = vand.u32 %v4585, 4294901760
        %4587 = vmatpush1.msra.mxu0 %v4586
        %v4588 = vand.u32 %v518, 4294901760
        %v4589 = vsub.f32 %v518, %v4588
        %v4590 = vand.u32 %v4589, 4294901760
        %v4591 = vsub.f32 %v4589, %v4590
        %v4592 = vand.u32 %v4591, 4294901760
        %4593 = vmatprep.subr.mxu0 %v4592
        %v4594 = vand.u32 %v517, 4294901760
        %v4595 = vsub.f32 %v517, %v4594
        %v4596 = vand.u32 %v4595, 4294901760
        %v4597 = vsub.f32 %v4595, %v4596
        %v4598 = vand.u32 %v4597, 4294901760
        %4599 = vmatpush1.msra.mxu0 %v4598
        %v4600 = vand.u32 %v520, 4294901760
        %v4601 = vsub.f32 %v520, %v4600
        %v4602 = vand.u32 %v4601, 4294901760
        %v4603 = vsub.f32 %v4601, %v4602
        %v4604 = vand.u32 %v4603, 4294901760
        %4605 = vmatprep.subr.mxu0 %v4604
        %v4606 = vand.u32 %v519, 4294901760
        %v4607 = vsub.f32 %v519, %v4606
        %v4608 = vand.u32 %v4607, 4294901760
        %v4609 = vsub.f32 %v4607, %v4608
        %v4610 = vand.u32 %v4609, 4294901760
        %4611 = vmatpush1.msra.mxu0 %v4610
        %v4612 = vand.u32 %v522, 4294901760
        %v4613 = vsub.f32 %v522, %v4612
        %v4614 = vand.u32 %v4613, 4294901760
        %v4615 = vsub.f32 %v4613, %v4614
        %v4616 = vand.u32 %v4615, 4294901760
        %4617 = vmatprep.subr.mxu0 %v4616
        %v4618 = vand.u32 %v521, 4294901760
        %v4619 = vsub.f32 %v521, %v4618
        %v4620 = vand.u32 %v4619, 4294901760
        %v4621 = vsub.f32 %v4619, %v4620
        %v4622 = vand.u32 %v4621, 4294901760
        %4623 = vmatpush1.msra.mxu0 %v4622
        %v4624 = vand.u32 %v524, 4294901760
        %v4625 = vsub.f32 %v524, %v4624
        %v4626 = vand.u32 %v4625, 4294901760
        %v4627 = vsub.f32 %v4625, %v4626
        %v4628 = vand.u32 %v4627, 4294901760
        %4629 = vmatprep.subr.mxu0 %v4628
        %v4630 = vand.u32 %v523, 4294901760
        %v4631 = vsub.f32 %v523, %v4630
        %v4632 = vand.u32 %v4631, 4294901760
        %v4633 = vsub.f32 %v4631, %v4632
        %v4634 = vand.u32 %v4633, 4294901760
        %4635 = vmatpush1.msra.mxu0 %v4634
        %v4636 = vand.u32 %v526, 4294901760
        %v4637 = vsub.f32 %v526, %v4636
        %v4638 = vand.u32 %v4637, 4294901760
        %v4639 = vsub.f32 %v4637, %v4638
        %v4640 = vand.u32 %v4639, 4294901760
        %4641 = vmatprep.subr.mxu0 %v4640
        %v4642 = vand.u32 %v525, 4294901760
        %v4643 = vsub.f32 %v525, %v4642
        %v4644 = vand.u32 %v4643, 4294901760
        %v4645 = vsub.f32 %v4643, %v4644
        %v4646 = vand.u32 %v4645, 4294901760
        %4647 = vmatpush1.msra.mxu0 %v4646
        %v4648 = vand.u32 %v528, 4294901760
        %v4649 = vsub.f32 %v528, %v4648
        %v4650 = vand.u32 %v4649, 4294901760
        %v4651 = vsub.f32 %v4649, %v4650
        %v4652 = vand.u32 %v4651, 4294901760
        %4653 = vmatprep.subr.mxu0 %v4652
        %v4654 = vand.u32 %v527, 4294901760
        %v4655 = vsub.f32 %v527, %v4654
        %v4656 = vand.u32 %v4655, 4294901760
        %v4657 = vsub.f32 %v4655, %v4656
        %v4658 = vand.u32 %v4657, 4294901760
        %4659 = vmatpush1.msra.mxu0 %v4658
        %v4660 = vand.u32 %v530, 4294901760
        %v4661 = vsub.f32 %v530, %v4660
        %v4662 = vand.u32 %v4661, 4294901760
        %v4663 = vsub.f32 %v4661, %v4662
        %v4664 = vand.u32 %v4663, 4294901760
        %4665 = vmatprep.subr.mxu0 %v4664
        %v4666 = vand.u32 %v529, 4294901760
        %v4667 = vsub.f32 %v529, %v4666
        %v4668 = vand.u32 %v4667, 4294901760
        %v4669 = vsub.f32 %v4667, %v4668
        %v4670 = vand.u32 %v4669, 4294901760
        %4671 = vmatpush1.msra.mxu0 %v4670
        %v4672 = vand.u32 %v532, 4294901760
        %v4673 = vsub.f32 %v532, %v4672
        %v4674 = vand.u32 %v4673, 4294901760
        %v4675 = vsub.f32 %v4673, %v4674
        %v4676 = vand.u32 %v4675, 4294901760
        %4677 = vmatprep.subr.mxu0 %v4676
        %v4678 = vand.u32 %v531, 4294901760
        %v4679 = vsub.f32 %v531, %v4678
        %v4680 = vand.u32 %v4679, 4294901760
        %v4681 = vsub.f32 %v4679, %v4680
        %v4682 = vand.u32 %v4681, 4294901760
        %4683 = vmatpush1.msra.mxu0 %v4682
        %v4684 = vand.u32 %v534, 4294901760
        %v4685 = vsub.f32 %v534, %v4684
        %v4686 = vand.u32 %v4685, 4294901760
        %v4687 = vsub.f32 %v4685, %v4686
        %v4688 = vand.u32 %v4687, 4294901760
        %4689 = vmatprep.subr.mxu0 %v4688
        %v4690 = vand.u32 %v533, 4294901760
        %v4691 = vsub.f32 %v533, %v4690
        %v4692 = vand.u32 %v4691, 4294901760
        %v4693 = vsub.f32 %v4691, %v4692
        %v4694 = vand.u32 %v4693, 4294901760
        %4695 = vmatpush1.msra.mxu0 %v4694
        %v4696 = vand.u32 %v536, 4294901760
        %v4697 = vsub.f32 %v536, %v4696
        %v4698 = vand.u32 %v4697, 4294901760
        %v4699 = vsub.f32 %v4697, %v4698
        %v4700 = vand.u32 %v4699, 4294901760
        %4701 = vmatprep.subr.mxu0 %v4700
        %v4702 = vand.u32 %v535, 4294901760
        %v4703 = vsub.f32 %v535, %v4702
        %v4704 = vand.u32 %v4703, 4294901760
        %v4705 = vsub.f32 %v4703, %v4704
        %v4706 = vand.u32 %v4705, 4294901760
        %4707 = vmatpush1.msra.mxu0 %v4706
        %v4708 = vand.u32 %v538, 4294901760
        %v4709 = vsub.f32 %v538, %v4708
        %v4710 = vand.u32 %v4709, 4294901760
        %v4711 = vsub.f32 %v4709, %v4710
        %v4712 = vand.u32 %v4711, 4294901760
        %4713 = vmatprep.subr.mxu0 %v4712
        %v4714 = vand.u32 %v537, 4294901760
        %v4715 = vsub.f32 %v537, %v4714
        %v4716 = vand.u32 %v4715, 4294901760
        %v4717 = vsub.f32 %v4715, %v4716
        %v4718 = vand.u32 %v4717, 4294901760
        %4719 = vmatpush1.msra.mxu0 %v4718
        %v4720 = vand.u32 %v540, 4294901760
        %v4721 = vsub.f32 %v540, %v4720
        %v4722 = vand.u32 %v4721, 4294901760
        %v4723 = vsub.f32 %v4721, %v4722
        %v4724 = vand.u32 %v4723, 4294901760
        %4725 = vmatprep.subr.mxu0 %v4724
        %v4726 = vand.u32 %v539, 4294901760
        %v4727 = vsub.f32 %v539, %v4726
        %v4728 = vand.u32 %v4727, 4294901760
        %v4729 = vsub.f32 %v4727, %v4728
        %v4730 = vand.u32 %v4729, 4294901760
        %4731 = vmatpush1.msra.mxu0 %v4730
        %v4732 = vand.u32 %v542, 4294901760
        %v4733 = vsub.f32 %v542, %v4732
        %v4734 = vand.u32 %v4733, 4294901760
        %v4735 = vsub.f32 %v4733, %v4734
        %v4736 = vand.u32 %v4735, 4294901760
        %4737 = vmatprep.subr.mxu0 %v4736
        %v4738 = vand.u32 %v541, 4294901760
        %v4739 = vsub.f32 %v541, %v4738
        %v4740 = vand.u32 %v4739, 4294901760
        %v4741 = vsub.f32 %v4739, %v4740
        %v4742 = vand.u32 %v4741, 4294901760
        %4743 = vmatpush1.msra.mxu0 %v4742
        %v4744 = vand.u32 %v544, 4294901760
        %v4745 = vsub.f32 %v544, %v4744
        %v4746 = vand.u32 %v4745, 4294901760
        %v4747 = vsub.f32 %v4745, %v4746
        %v4748 = vand.u32 %v4747, 4294901760
        %4749 = vmatprep.subr.mxu0 %v4748
        %v4750 = vand.u32 %v543, 4294901760
        %v4751 = vsub.f32 %v543, %v4750
        %v4752 = vand.u32 %v4751, 4294901760
        %v4753 = vsub.f32 %v4751, %v4752
        %v4754 = vand.u32 %v4753, 4294901760
        %4755 = vmatpush1.msra.mxu0 %v4754
        %v4756 = vand.u32 %v546, 4294901760
        %v4757 = vsub.f32 %v546, %v4756
        %v4758 = vand.u32 %v4757, 4294901760
        %v4759 = vsub.f32 %v4757, %v4758
        %v4760 = vand.u32 %v4759, 4294901760
        %4761 = vmatprep.subr.mxu0 %v4760
        %v4762 = vand.u32 %v545, 4294901760
        %v4763 = vsub.f32 %v545, %v4762
        %v4764 = vand.u32 %v4763, 4294901760
        %v4765 = vsub.f32 %v4763, %v4764
        %v4766 = vand.u32 %v4765, 4294901760
        %4767 = vmatpush1.msra.mxu0 %v4766
        %v4768 = vand.u32 %v548, 4294901760
        %v4769 = vsub.f32 %v548, %v4768
        %v4770 = vand.u32 %v4769, 4294901760
        %v4771 = vsub.f32 %v4769, %v4770
        %v4772 = vand.u32 %v4771, 4294901760
        %4773 = vmatprep.subr.mxu0 %v4772
        %v4774 = vand.u32 %v547, 4294901760
        %v4775 = vsub.f32 %v547, %v4774
        %v4776 = vand.u32 %v4775, 4294901760
        %v4777 = vsub.f32 %v4775, %v4776
        %v4778 = vand.u32 %v4777, 4294901760
        %4779 = vmatpush1.msra.mxu0 %v4778
        %v4780 = vand.u32 %v296, 4294901760
        %4781 = vmatprep.mubr.f32.mxu0 %v4780
        %v4782 = vand.u32 %v295, 4294901760
        %4783 = vmatmul.mubr.f32.gmra.mrb[0].mxu0 %v4782
        %v4784 = vpop.f32.mrb[0].mxu0
        %v4785 = vadd.f32 %v3896, %v4784
        %v4786 = vpop.f32.mrb[0].mxu0
        %v4787 = vadd.f32 %v3898, %v4786
        %v4788 = vand.u32 %v300, 4294901760
        %4789 = vmatprep.mubr.f32.mxu0 %v4788
        %v4790 = vand.u32 %v299, 4294901760
        %4791 = vmatmul.mubr.f32.gmra.mrb[0].mxu0 %v4790
        %v4792 = vpop.f32.mrb[0].mxu0
        %v4793 = vadd.f32 %v3912, %v4792
        %v4794 = vpop.f32.mrb[0].mxu0
        %v4795 = vadd.f32 %v3914, %v4794
        %v4796 = vand.u32 %v304, 4294901760
        %4797 = vmatprep.mubr.f32.mxu0 %v4796
        %v4798 = vand.u32 %v303, 4294901760
        %4799 = vmatmul.mubr.f32.gmra.mrb[0].mxu0 %v4798
        %v4800 = vpop.f32.mrb[0].mxu0
        %v4801 = vadd.f32 %v3928, %v4800
        %v4802 = vpop.f32.mrb[0].mxu0
        %v4803 = vadd.f32 %v3930, %v4802
        %v4804 = vand.u32 %v308, 4294901760
        %4805 = vmatprep.mubr.f32.mxu0 %v4804
        %v4806 = vand.u32 %v307, 4294901760
        %4807 = vmatmul.mubr.f32.gmra.mrb[0].mxu0 %v4806
        %v4808 = vpop.f32.mrb[0].mxu0
        %v4809 = vadd.f32 %v3944, %v4808
        %v4810 = vpop.f32.mrb[0].mxu0
        %v4811 = vadd.f32 %v3946, %v4810
        %v4812 = vand.u32 %v312, 4294901760
        %4813 = vmatprep.mubr.f32.mxu0 %v4812
        %v4814 = vand.u32 %v311, 4294901760
        %4815 = vmatmul.mubr.f32.gmra.mrb[0].mxu0 %v4814
        %v4816 = vpop.f32.mrb[0].mxu0
        %v4817 = vadd.f32 %v3960, %v4816
        %v4818 = vpop.f32.mrb[0].mxu0
        %v4819 = vadd.f32 %v3962, %v4818
        %v4820 = vand.u32 %v316, 4294901760
        %4821 = vmatprep.mubr.f32.mxu0 %v4820
        %v4822 = vand.u32 %v315, 4294901760
        %4823 = vmatmul.mubr.f32.gmra.mrb[0].mxu0 %v4822
        %v4824 = vpop.f32.mrb[0].mxu0
        %v4825 = vadd.f32 %v3976, %v4824
        %v4826 = vpop.f32.mrb[0].mxu0
        %v4827 = vadd.f32 %v3978, %v4826
        %v4828 = vand.u32 %v320, 4294901760
        %4829 = vmatprep.mubr.f32.mxu0 %v4828
        %v4830 = vand.u32 %v319, 4294901760
        %4831 = vmatmul.mubr.f32.gmra.mrb[0].mxu0 %v4830
        %v4832 = vpop.f32.mrb[0].mxu0
        %v4833 = vadd.f32 %v3992, %v4832
        %v4834 = vpop.f32.mrb[0].mxu0
        %v4835 = vadd.f32 %v3994, %v4834
        %v4836 = vand.u32 %v324, 4294901760
        %4837 = vmatprep.mubr.f32.mxu0 %v4836
        %v4838 = vand.u32 %v323, 4294901760
        %4839 = vmatmul.mubr.f32.gmra.mrb[0].mxu0 %v4838
        %v4840 = vpop.f32.mrb[0].mxu0
        %v4841 = vadd.f32 %v4008, %v4840
        %v4842 = vpop.f32.mrb[0].mxu0
        %v4843 = vadd.f32 %v4010, %v4842
        %v4844 = vand.u32 %v328, 4294901760
        %4845 = vmatprep.mubr.f32.mxu0 %v4844
        %v4846 = vand.u32 %v327, 4294901760
        %4847 = vmatmul.mubr.f32.gmra.mrb[0].mxu0 %v4846
        %v4848 = vpop.f32.mrb[0].mxu0
        %v4849 = vadd.f32 %v4024, %v4848
        %v4850 = vpop.f32.mrb[0].mxu0
        %v4851 = vadd.f32 %v4026, %v4850
        %v4852 = vand.u32 %v332, 4294901760
        %4853 = vmatprep.mubr.f32.mxu0 %v4852
        %v4854 = vand.u32 %v331, 4294901760
        %4855 = vmatmul.mubr.f32.gmra.mrb[0].mxu0 %v4854
        %v4856 = vpop.f32.mrb[0].mxu0
        %v4857 = vadd.f32 %v4040, %v4856
        %v4858 = vpop.f32.mrb[0].mxu0
        %v4859 = vadd.f32 %v4042, %v4858
        %v4860 = vand.u32 %v336, 4294901760
        %4861 = vmatprep.mubr.f32.mxu0 %v4860
        %v4862 = vand.u32 %v335, 4294901760
        %4863 = vmatmul.mubr.f32.gmra.mrb[0].mxu0 %v4862
        %v4864 = vpop.f32.mrb[0].mxu0
        %v4865 = vadd.f32 %v4056, %v4864
        %v4866 = vpop.f32.mrb[0].mxu0
        %v4867 = vadd.f32 %v4058, %v4866
        %v4868 = vand.u32 %v340, 4294901760
        %4869 = vmatprep.mubr.f32.mxu0 %v4868
        %v4870 = vand.u32 %v339, 4294901760
        %4871 = vmatmul.mubr.f32.gmra.mrb[0].mxu0 %v4870
        %v4872 = vpop.f32.mrb[0].mxu0
        %v4873 = vadd.f32 %v4072, %v4872
        %v4874 = vpop.f32.mrb[0].mxu0
        %v4875 = vadd.f32 %v4074, %v4874
        %v4876 = vand.u32 %v344, 4294901760
        %4877 = vmatprep.mubr.f32.mxu0 %v4876
        %v4878 = vand.u32 %v343, 4294901760
        %4879 = vmatmul.mubr.f32.gmra.mrb[0].mxu0 %v4878
        %v4880 = vpop.f32.mrb[0].mxu0
        %v4881 = vadd.f32 %v4088, %v4880
        %v4882 = vpop.f32.mrb[0].mxu0
        %v4883 = vadd.f32 %v4090, %v4882
        %v4884 = vand.u32 %v348, 4294901760
        %4885 = vmatprep.mubr.f32.mxu0 %v4884
        %v4886 = vand.u32 %v347, 4294901760
        %4887 = vmatmul.mubr.f32.gmra.mrb[0].mxu0 %v4886
        %v4888 = vpop.f32.mrb[0].mxu0
        %v4889 = vadd.f32 %v4104, %v4888
        %v4890 = vpop.f32.mrb[0].mxu0
        %v4891 = vadd.f32 %v4106, %v4890
        %v4892 = vand.u32 %v352, 4294901760
        %4893 = vmatprep.mubr.f32.mxu0 %v4892
        %v4894 = vand.u32 %v351, 4294901760
        %4895 = vmatmul.mubr.f32.gmra.mrb[0].mxu0 %v4894
        %v4896 = vpop.f32.mrb[0].mxu0
        %v4897 = vadd.f32 %v4120, %v4896
        %v4898 = vpop.f32.mrb[0].mxu0
        %v4899 = vadd.f32 %v4122, %v4898
        %v4900 = vand.u32 %v356, 4294901760
        %4901 = vmatprep.mubr.f32.mxu0 %v4900
        %v4902 = vand.u32 %v355, 4294901760
        %4903 = vmatmul.mubr.f32.gmra.mrb[0].mxu0 %v4902
        %v4904 = vpop.f32.mrb[0].mxu0
        %v4905 = vadd.f32 %v4136, %v4904
        %v4906 = vpop.f32.mrb[0].mxu0
        %v4907 = vadd.f32 %v4138, %v4906
        %v4908 = vand.u32 %v360, 4294901760
        %4909 = vmatprep.mubr.f32.mxu0 %v4908
        %v4910 = vand.u32 %v359, 4294901760
        %4911 = vmatmul.mubr.f32.gmra.mrb[0].mxu0 %v4910
        %v4912 = vpop.f32.mrb[0].mxu0
        %v4913 = vadd.f32 %v4152, %v4912
        %v4914 = vpop.f32.mrb[0].mxu0
        %v4915 = vadd.f32 %v4154, %v4914
        %v4916 = vand.u32 %v364, 4294901760
        %4917 = vmatprep.mubr.f32.mxu0 %v4916
        %v4918 = vand.u32 %v363, 4294901760
        %4919 = vmatmul.mubr.f32.gmra.mrb[0].mxu0 %v4918
        %v4920 = vpop.f32.mrb[0].mxu0
        %v4921 = vadd.f32 %v4168, %v4920
        %v4922 = vpop.f32.mrb[0].mxu0
        %v4923 = vadd.f32 %v4170, %v4922
        %v4924 = vand.u32 %v368, 4294901760
        %4925 = vmatprep.mubr.f32.mxu0 %v4924
        %v4926 = vand.u32 %v367, 4294901760
        %4927 = vmatmul.mubr.f32.gmra.mrb[0].mxu0 %v4926
        %v4928 = vpop.f32.mrb[0].mxu0
        %v4929 = vadd.f32 %v4184, %v4928
        %v4930 = vpop.f32.mrb[0].mxu0
        %v4931 = vadd.f32 %v4186, %v4930
        %v4932 = vand.u32 %v372, 4294901760
        %4933 = vmatprep.mubr.f32.mxu0 %v4932
        %v4934 = vand.u32 %v371, 4294901760
        %4935 = vmatmul.mubr.f32.gmra.mrb[0].mxu0 %v4934
        %v4936 = vpop.f32.mrb[0].mxu0
        %v4937 = vadd.f32 %v4200, %v4936
        %v4938 = vpop.f32.mrb[0].mxu0
        %v4939 = vadd.f32 %v4202, %v4938
        %v4940 = vand.u32 %v376, 4294901760
        %4941 = vmatprep.mubr.f32.mxu0 %v4940
        %v4942 = vand.u32 %v375, 4294901760
        %4943 = vmatmul.mubr.f32.gmra.mrb[0].mxu0 %v4942
        %v4944 = vpop.f32.mrb[0].mxu0
        %v4945 = vadd.f32 %v4216, %v4944
        %v4946 = vpop.f32.mrb[0].mxu0
        %v4947 = vadd.f32 %v4218, %v4946
        %v4948 = vand.u32 %v380, 4294901760
        %4949 = vmatprep.mubr.f32.mxu0 %v4948
        %v4950 = vand.u32 %v379, 4294901760
        %4951 = vmatmul.mubr.f32.gmra.mrb[0].mxu0 %v4950
        %v4952 = vpop.f32.mrb[0].mxu0
        %v4953 = vadd.f32 %v4232, %v4952
        %v4954 = vpop.f32.mrb[0].mxu0
        %v4955 = vadd.f32 %v4234, %v4954
        %v4956 = vand.u32 %v384, 4294901760
        %4957 = vmatprep.mubr.f32.mxu0 %v4956
        %v4958 = vand.u32 %v383, 4294901760
        %4959 = vmatmul.mubr.f32.gmra.mrb[0].mxu0 %v4958
        %v4960 = vpop.f32.mrb[0].mxu0
        %v4961 = vadd.f32 %v4248, %v4960
        %v4962 = vpop.f32.mrb[0].mxu0
        %v4963 = vadd.f32 %v4250, %v4962
        %v4964 = vand.u32 %v388, 4294901760
        %4965 = vmatprep.mubr.f32.mxu0 %v4964
        %v4966 = vand.u32 %v387, 4294901760
        %4967 = vmatmul.mubr.f32.gmra.mrb[0].mxu0 %v4966
        %v4968 = vpop.f32.mrb[0].mxu0
        %v4969 = vadd.f32 %v4264, %v4968
        %v4970 = vpop.f32.mrb[0].mxu0
        %v4971 = vadd.f32 %v4266, %v4970
        %v4972 = vand.u32 %v392, 4294901760
        %4973 = vmatprep.mubr.f32.mxu0 %v4972
        %v4974 = vand.u32 %v391, 4294901760
        %4975 = vmatmul.mubr.f32.gmra.mrb[0].mxu0 %v4974
        %v4976 = vpop.f32.mrb[0].mxu0
        %v4977 = vadd.f32 %v4280, %v4976
        %v4978 = vpop.f32.mrb[0].mxu0
        %v4979 = vadd.f32 %v4282, %v4978
        %v4980 = vand.u32 %v396, 4294901760
        %4981 = vmatprep.mubr.f32.mxu0 %v4980
        %v4982 = vand.u32 %v395, 4294901760
        %4983 = vmatmul.mubr.f32.gmra.mrb[0].mxu0 %v4982
        %v4984 = vpop.f32.mrb[0].mxu0
        %v4985 = vadd.f32 %v4296, %v4984
        %v4986 = vpop.f32.mrb[0].mxu0
        %v4987 = vadd.f32 %v4298, %v4986
        %v4988 = vand.u32 %v400, 4294901760
        %4989 = vmatprep.mubr.f32.mxu0 %v4988
        %v4990 = vand.u32 %v399, 4294901760
        %4991 = vmatmul.mubr.f32.gmra.mrb[0].mxu0 %v4990
        %v4992 = vpop.f32.mrb[0].mxu0
        %v4993 = vadd.f32 %v4312, %v4992
        %v4994 = vpop.f32.mrb[0].mxu0
        %v4995 = vadd.f32 %v4314, %v4994
        %v4996 = vand.u32 %v404, 4294901760
        %4997 = vmatprep.mubr.f32.mxu0 %v4996
        %v4998 = vand.u32 %v403, 4294901760
        %4999 = vmatmul.mubr.f32.gmra.mrb[0].mxu0 %v4998
        %v5000 = vpop.f32.mrb[0].mxu0
        %v5001 = vadd.f32 %v4328, %v5000
        %v5002 = vpop.f32.mrb[0].mxu0
        %v5003 = vadd.f32 %v4330, %v5002
        %v5004 = vand.u32 %v408, 4294901760
        %5005 = vmatprep.mubr.f32.mxu0 %v5004
        %v5006 = vand.u32 %v407, 4294901760
        %5007 = vmatmul.mubr.f32.gmra.mrb[0].mxu0 %v5006
        %v5008 = vpop.f32.mrb[0].mxu0
        %v5009 = vadd.f32 %v4344, %v5008
        %v5010 = vpop.f32.mrb[0].mxu0
        %v5011 = vadd.f32 %v4346, %v5010
        %v5012 = vand.u32 %v412, 4294901760
        %5013 = vmatprep.mubr.f32.mxu0 %v5012
        %v5014 = vand.u32 %v411, 4294901760
        %5015 = vmatmul.mubr.f32.gmra.mrb[0].mxu0 %v5014
        %v5016 = vpop.f32.mrb[0].mxu0
        %v5017 = vadd.f32 %v4360, %v5016
        %v5018 = vpop.f32.mrb[0].mxu0
        %v5019 = vadd.f32 %v4362, %v5018
        %v5020 = vand.u32 %v416, 4294901760
        %5021 = vmatprep.mubr.f32.mxu0 %v5020
        %v5022 = vand.u32 %v415, 4294901760
        %5023 = vmatmul.mubr.f32.gmra.mrb[0].mxu0 %v5022
        %v5024 = vpop.f32.mrb[0].mxu0
        %v5025 = vadd.f32 %v4376, %v5024
        %v5026 = vpop.f32.mrb[0].mxu0
        %v5027 = vadd.f32 %v4378, %v5026
        %v5028 = vand.u32 %v420, 4294901760
        %5029 = vmatprep.mubr.f32.mxu0 %v5028
        %v5030 = vand.u32 %v419, 4294901760
        %5031 = vmatmul.mubr.f32.gmra.mrb[0].mxu0 %v5030
        %v5032 = vpop.f32.mrb[0].mxu0
        %v5033 = vadd.f32 %v4392, %v5032
        %v5034 = vpop.f32.mrb[0].mxu0
        %v5035 = vadd.f32 %v4394, %v5034
        %5036 = vdwg.mxu0
        %v5037 = vand.u32 %v486, 4294901760
        %v5038 = vsub.f32 %v486, %v5037
        %5039 = vmatprep.subr.mxu0 %v5038
        %v5040 = vand.u32 %v485, 4294901760
        %v5041 = vsub.f32 %v485, %v5040
        %5042 = vmatpush1.msra.mxu0 %v5041
        %v5043 = vand.u32 %v488, 4294901760
        %v5044 = vsub.f32 %v488, %v5043
        %5045 = vmatprep.subr.mxu0 %v5044
        %v5046 = vand.u32 %v487, 4294901760
        %v5047 = vsub.f32 %v487, %v5046
        %5048 = vmatpush1.msra.mxu0 %v5047
        %v5049 = vand.u32 %v490, 4294901760
        %v5050 = vsub.f32 %v490, %v5049
        %5051 = vmatprep.subr.mxu0 %v5050
        %v5052 = vand.u32 %v489, 4294901760
        %v5053 = vsub.f32 %v489, %v5052
        %5054 = vmatpush1.msra.mxu0 %v5053
        %v5055 = vand.u32 %v492, 4294901760
        %v5056 = vsub.f32 %v492, %v5055
        %5057 = vmatprep.subr.mxu0 %v5056
        %v5058 = vand.u32 %v491, 4294901760
        %v5059 = vsub.f32 %v491, %v5058
        %5060 = vmatpush1.msra.mxu0 %v5059
        %v5061 = vand.u32 %v494, 4294901760
        %v5062 = vsub.f32 %v494, %v5061
        %5063 = vmatprep.subr.mxu0 %v5062
        %v5064 = vand.u32 %v493, 4294901760
        %v5065 = vsub.f32 %v493, %v5064
        %5066 = vmatpush1.msra.mxu0 %v5065
        %v5067 = vand.u32 %v496, 4294901760
        %v5068 = vsub.f32 %v496, %v5067
        %5069 = vmatprep.subr.mxu0 %v5068
        %v5070 = vand.u32 %v495, 4294901760
        %v5071 = vsub.f32 %v495, %v5070
        %5072 = vmatpush1.msra.mxu0 %v5071
        %v5073 = vand.u32 %v498, 4294901760
        %v5074 = vsub.f32 %v498, %v5073
        %5075 = vmatprep.subr.mxu0 %v5074
        %v5076 = vand.u32 %v497, 4294901760
        %v5077 = vsub.f32 %v497, %v5076
        %5078 = vmatpush1.msra.mxu0 %v5077
        %v5079 = vand.u32 %v500, 4294901760
        %v5080 = vsub.f32 %v500, %v5079
        %5081 = vmatprep.subr.mxu0 %v5080
        %v5082 = vand.u32 %v499, 4294901760
        %v5083 = vsub.f32 %v499, %v5082
        %5084 = vmatpush1.msra.mxu0 %v5083
        %v5085 = vand.u32 %v502, 4294901760
        %v5086 = vsub.f32 %v502, %v5085
        %5087 = vmatprep.subr.mxu0 %v5086
        %v5088 = vand.u32 %v501, 4294901760
        %v5089 = vsub.f32 %v501, %v5088
        %5090 = vmatpush1.msra.mxu0 %v5089
        %v5091 = vand.u32 %v504, 4294901760
        %v5092 = vsub.f32 %v504, %v5091
        %5093 = vmatprep.subr.mxu0 %v5092
        %v5094 = vand.u32 %v503, 4294901760
        %v5095 = vsub.f32 %v503, %v5094
        %5096 = vmatpush1.msra.mxu0 %v5095
        %v5097 = vand.u32 %v506, 4294901760
        %v5098 = vsub.f32 %v506, %v5097
        %5099 = vmatprep.subr.mxu0 %v5098
        %v5100 = vand.u32 %v505, 4294901760
        %v5101 = vsub.f32 %v505, %v5100
        %5102 = vmatpush1.msra.mxu0 %v5101
        %v5103 = vand.u32 %v508, 4294901760
        %v5104 = vsub.f32 %v508, %v5103
        %5105 = vmatprep.subr.mxu0 %v5104
        %v5106 = vand.u32 %v507, 4294901760
        %v5107 = vsub.f32 %v507, %v5106
        %5108 = vmatpush1.msra.mxu0 %v5107
        %v5109 = vand.u32 %v510, 4294901760
        %v5110 = vsub.f32 %v510, %v5109
        %5111 = vmatprep.subr.mxu0 %v5110
        %v5112 = vand.u32 %v509, 4294901760
        %v5113 = vsub.f32 %v509, %v5112
        %5114 = vmatpush1.msra.mxu0 %v5113
        %v5115 = vand.u32 %v512, 4294901760
        %v5116 = vsub.f32 %v512, %v5115
        %5117 = vmatprep.subr.mxu0 %v5116
        %v5118 = vand.u32 %v511, 4294901760
        %v5119 = vsub.f32 %v511, %v5118
        %5120 = vmatpush1.msra.mxu0 %v5119
        %v5121 = vand.u32 %v514, 4294901760
        %v5122 = vsub.f32 %v514, %v5121
        %5123 = vmatprep.subr.mxu0 %v5122
        %v5124 = vand.u32 %v513, 4294901760
        %v5125 = vsub.f32 %v513, %v5124
        %5126 = vmatpush1.msra.mxu0 %v5125
        %v5127 = vand.u32 %v516, 4294901760
        %v5128 = vsub.f32 %v516, %v5127
        %5129 = vmatprep.subr.mxu0 %v5128
        %v5130 = vand.u32 %v515, 4294901760
        %v5131 = vsub.f32 %v515, %v5130
        %5132 = vmatpush1.msra.mxu0 %v5131
        %v5133 = vand.u32 %v518, 4294901760
        %v5134 = vsub.f32 %v518, %v5133
        %5135 = vmatprep.subr.mxu0 %v5134
        %v5136 = vand.u32 %v517, 4294901760
        %v5137 = vsub.f32 %v517, %v5136
        %5138 = vmatpush1.msra.mxu0 %v5137
        %v5139 = vand.u32 %v520, 4294901760
        %v5140 = vsub.f32 %v520, %v5139
        %5141 = vmatprep.subr.mxu0 %v5140
        %v5142 = vand.u32 %v519, 4294901760
        %v5143 = vsub.f32 %v519, %v5142
        %5144 = vmatpush1.msra.mxu0 %v5143
        %v5145 = vand.u32 %v522, 4294901760
        %v5146 = vsub.f32 %v522, %v5145
        %5147 = vmatprep.subr.mxu0 %v5146
        %v5148 = vand.u32 %v521, 4294901760
        %v5149 = vsub.f32 %v521, %v5148
        %5150 = vmatpush1.msra.mxu0 %v5149
        %v5151 = vand.u32 %v524, 4294901760
        %v5152 = vsub.f32 %v524, %v5151
        %5153 = vmatprep.subr.mxu0 %v5152
        %v5154 = vand.u32 %v523, 4294901760
        %v5155 = vsub.f32 %v523, %v5154
        %5156 = vmatpush1.msra.mxu0 %v5155
        %v5157 = vand.u32 %v526, 4294901760
        %v5158 = vsub.f32 %v526, %v5157
        %5159 = vmatprep.subr.mxu0 %v5158
        %v5160 = vand.u32 %v525, 4294901760
        %v5161 = vsub.f32 %v525, %v5160
        %5162 = vmatpush1.msra.mxu0 %v5161
        %v5163 = vand.u32 %v528, 4294901760
        %v5164 = vsub.f32 %v528, %v5163
        %5165 = vmatprep.subr.mxu0 %v5164
        %v5166 = vand.u32 %v527, 4294901760
        %v5167 = vsub.f32 %v527, %v5166
        %5168 = vmatpush1.msra.mxu0 %v5167
        %v5169 = vand.u32 %v530, 4294901760
        %v5170 = vsub.f32 %v530, %v5169
        %5171 = vmatprep.subr.mxu0 %v5170
        %v5172 = vand.u32 %v529, 4294901760
        %v5173 = vsub.f32 %v529, %v5172
        %5174 = vmatpush1.msra.mxu0 %v5173
        %v5175 = vand.u32 %v532, 4294901760
        %v5176 = vsub.f32 %v532, %v5175
        %5177 = vmatprep.subr.mxu0 %v5176
        %v5178 = vand.u32 %v531, 4294901760
        %v5179 = vsub.f32 %v531, %v5178
        %5180 = vmatpush1.msra.mxu0 %v5179
        %v5181 = vand.u32 %v534, 4294901760
        %v5182 = vsub.f32 %v534, %v5181
        %5183 = vmatprep.subr.mxu0 %v5182
        %v5184 = vand.u32 %v533, 4294901760
        %v5185 = vsub.f32 %v533, %v5184
        %5186 = vmatpush1.msra.mxu0 %v5185
        %v5187 = vand.u32 %v536, 4294901760
        %v5188 = vsub.f32 %v536, %v5187
        %5189 = vmatprep.subr.mxu0 %v5188
        %v5190 = vand.u32 %v535, 4294901760
        %v5191 = vsub.f32 %v535, %v5190
        %5192 = vmatpush1.msra.mxu0 %v5191
        %v5193 = vand.u32 %v538, 4294901760
        %v5194 = vsub.f32 %v538, %v5193
        %5195 = vmatprep.subr.mxu0 %v5194
        %v5196 = vand.u32 %v537, 4294901760
        %v5197 = vsub.f32 %v537, %v5196
        %5198 = vmatpush1.msra.mxu0 %v5197
        %v5199 = vand.u32 %v540, 4294901760
        %v5200 = vsub.f32 %v540, %v5199
        %5201 = vmatprep.subr.mxu0 %v5200
        %v5202 = vand.u32 %v539, 4294901760
        %v5203 = vsub.f32 %v539, %v5202
        %5204 = vmatpush1.msra.mxu0 %v5203
        %v5205 = vand.u32 %v542, 4294901760
        %v5206 = vsub.f32 %v542, %v5205
        %5207 = vmatprep.subr.mxu0 %v5206
        %v5208 = vand.u32 %v541, 4294901760
        %v5209 = vsub.f32 %v541, %v5208
        %5210 = vmatpush1.msra.mxu0 %v5209
        %v5211 = vand.u32 %v544, 4294901760
        %v5212 = vsub.f32 %v544, %v5211
        %5213 = vmatprep.subr.mxu0 %v5212
        %v5214 = vand.u32 %v543, 4294901760
        %v5215 = vsub.f32 %v543, %v5214
        %5216 = vmatpush1.msra.mxu0 %v5215
        %v5217 = vand.u32 %v546, 4294901760
        %v5218 = vsub.f32 %v546, %v5217
        %5219 = vmatprep.subr.mxu0 %v5218
        %v5220 = vand.u32 %v545, 4294901760
        %v5221 = vsub.f32 %v545, %v5220
        %5222 = vmatpush1.msra.mxu0 %v5221
        %v5223 = vand.u32 %v548, 4294901760
        %v5224 = vsub.f32 %v548, %v5223
        %5225 = vmatprep.subr.mxu0 %v5224
        %v5226 = vand.u32 %v547, 4294901760
        %v5227 = vsub.f32 %v547, %v5226
        %5228 = vmatpush1.msra.mxu0 %v5227
        %v5229 = vand.u32 %v296, 4294901760
        %v5230 = vsub.f32 %v296, %v5229
        %5231 = vmatprep.mubr.f32.mxu0 %v5230
        %v5232 = vand.u32 %v295, 4294901760
        %v5233 = vsub.f32 %v295, %v5232
        %5234 = vmatmul.mubr.f32.gmra.mrb[0].mxu0 %v5233
        %v5235 = vpop.f32.mrb[0].mxu0
        %v5236 = vadd.f32 %v4785, %v5235
        %v5237 = vpop.f32.mrb[0].mxu0
        %v5238 = vadd.f32 %v4787, %v5237
        %v5239 = vand.u32 %v300, 4294901760
        %v5240 = vsub.f32 %v300, %v5239
        %5241 = vmatprep.mubr.f32.mxu0 %v5240
        %v5242 = vand.u32 %v299, 4294901760
        %v5243 = vsub.f32 %v299, %v5242
        %5244 = vmatmul.mubr.f32.gmra.mrb[0].mxu0 %v5243
        %v5245 = vpop.f32.mrb[0].mxu0
        %v5246 = vadd.f32 %v4793, %v5245
        %v5247 = vpop.f32.mrb[0].mxu0
        %v5248 = vadd.f32 %v4795, %v5247
        %v5249 = vand.u32 %v304, 4294901760
        %v5250 = vsub.f32 %v304, %v5249
        %5251 = vmatprep.mubr.f32.mxu0 %v5250
        %v5252 = vand.u32 %v303, 4294901760
        %v5253 = vsub.f32 %v303, %v5252
        %5254 = vmatmul.mubr.f32.gmra.mrb[0].mxu0 %v5253
        %v5255 = vpop.f32.mrb[0].mxu0
        %v5256 = vadd.f32 %v4801, %v5255
        %v5257 = vpop.f32.mrb[0].mxu0
        %v5258 = vadd.f32 %v4803, %v5257
        %v5259 = vand.u32 %v308, 4294901760
        %v5260 = vsub.f32 %v308, %v5259
        %5261 = vmatprep.mubr.f32.mxu0 %v5260
        %v5262 = vand.u32 %v307, 4294901760
        %v5263 = vsub.f32 %v307, %v5262
        %5264 = vmatmul.mubr.f32.gmra.mrb[0].mxu0 %v5263
        %v5265 = vpop.f32.mrb[0].mxu0
        %v5266 = vadd.f32 %v4809, %v5265
        %v5267 = vpop.f32.mrb[0].mxu0
        %v5268 = vadd.f32 %v4811, %v5267
        %v5269 = vand.u32 %v312, 4294901760
        %v5270 = vsub.f32 %v312, %v5269
        %5271 = vmatprep.mubr.f32.mxu0 %v5270
        %v5272 = vand.u32 %v311, 4294901760
        %v5273 = vsub.f32 %v311, %v5272
        %5274 = vmatmul.mubr.f32.gmra.mrb[0].mxu0 %v5273
        %v5275 = vpop.f32.mrb[0].mxu0
        %v5276 = vadd.f32 %v4817, %v5275
        %v5277 = vpop.f32.mrb[0].mxu0
        %v5278 = vadd.f32 %v4819, %v5277
        %v5279 = vand.u32 %v316, 4294901760
        %v5280 = vsub.f32 %v316, %v5279
        %5281 = vmatprep.mubr.f32.mxu0 %v5280
        %v5282 = vand.u32 %v315, 4294901760
        %v5283 = vsub.f32 %v315, %v5282
        %5284 = vmatmul.mubr.f32.gmra.mrb[0].mxu0 %v5283
        %v5285 = vpop.f32.mrb[0].mxu0
        %v5286 = vadd.f32 %v4825, %v5285
        %v5287 = vpop.f32.mrb[0].mxu0
        %v5288 = vadd.f32 %v4827, %v5287
        %v5289 = vand.u32 %v320, 4294901760
        %v5290 = vsub.f32 %v320, %v5289
        %5291 = vmatprep.mubr.f32.mxu0 %v5290
        %v5292 = vand.u32 %v319, 4294901760
        %v5293 = vsub.f32 %v319, %v5292
        %5294 = vmatmul.mubr.f32.gmra.mrb[0].mxu0 %v5293
        %v5295 = vpop.f32.mrb[0].mxu0
        %v5296 = vadd.f32 %v4833, %v5295
        %v5297 = vpop.f32.mrb[0].mxu0
        %v5298 = vadd.f32 %v4835, %v5297
        %v5299 = vand.u32 %v324, 4294901760
        %v5300 = vsub.f32 %v324, %v5299
        %5301 = vmatprep.mubr.f32.mxu0 %v5300
        %v5302 = vand.u32 %v323, 4294901760
        %v5303 = vsub.f32 %v323, %v5302
        %5304 = vmatmul.mubr.f32.gmra.mrb[0].mxu0 %v5303
        %v5305 = vpop.f32.mrb[0].mxu0
        %v5306 = vadd.f32 %v4841, %v5305
        %v5307 = vpop.f32.mrb[0].mxu0
        %v5308 = vadd.f32 %v4843, %v5307
        %v5309 = vand.u32 %v328, 4294901760
        %v5310 = vsub.f32 %v328, %v5309
        %5311 = vmatprep.mubr.f32.mxu0 %v5310
        %v5312 = vand.u32 %v327, 4294901760
        %v5313 = vsub.f32 %v327, %v5312
        %5314 = vmatmul.mubr.f32.gmra.mrb[0].mxu0 %v5313
        %v5315 = vpop.f32.mrb[0].mxu0
        %v5316 = vadd.f32 %v4849, %v5315
        %v5317 = vpop.f32.mrb[0].mxu0
        %v5318 = vadd.f32 %v4851, %v5317
        %v5319 = vand.u32 %v332, 4294901760
        %v5320 = vsub.f32 %v332, %v5319
        %5321 = vmatprep.mubr.f32.mxu0 %v5320
        %v5322 = vand.u32 %v331, 4294901760
        %v5323 = vsub.f32 %v331, %v5322
        %5324 = vmatmul.mubr.f32.gmra.mrb[0].mxu0 %v5323
        %v5325 = vpop.f32.mrb[0].mxu0
        %v5326 = vadd.f32 %v4857, %v5325
        %v5327 = vpop.f32.mrb[0].mxu0
        %v5328 = vadd.f32 %v4859, %v5327
        %v5329 = vand.u32 %v336, 4294901760
        %v5330 = vsub.f32 %v336, %v5329
        %5331 = vmatprep.mubr.f32.mxu0 %v5330
        %v5332 = vand.u32 %v335, 4294901760
        %v5333 = vsub.f32 %v335, %v5332
        %5334 = vmatmul.mubr.f32.gmra.mrb[0].mxu0 %v5333
        %v5335 = vpop.f32.mrb[0].mxu0
        %v5336 = vadd.f32 %v4865, %v5335
        %v5337 = vpop.f32.mrb[0].mxu0
        %v5338 = vadd.f32 %v4867, %v5337
        %v5339 = vand.u32 %v340, 4294901760
        %v5340 = vsub.f32 %v340, %v5339
        %5341 = vmatprep.mubr.f32.mxu0 %v5340
        %v5342 = vand.u32 %v339, 4294901760
        %v5343 = vsub.f32 %v339, %v5342
        %5344 = vmatmul.mubr.f32.gmra.mrb[0].mxu0 %v5343
        %v5345 = vpop.f32.mrb[0].mxu0
        %v5346 = vadd.f32 %v4873, %v5345
        %v5347 = vpop.f32.mrb[0].mxu0
        %v5348 = vadd.f32 %v4875, %v5347
        %v5349 = vand.u32 %v344, 4294901760
        %v5350 = vsub.f32 %v344, %v5349
        %5351 = vmatprep.mubr.f32.mxu0 %v5350
        %v5352 = vand.u32 %v343, 4294901760
        %v5353 = vsub.f32 %v343, %v5352
        %5354 = vmatmul.mubr.f32.gmra.mrb[0].mxu0 %v5353
        %v5355 = vpop.f32.mrb[0].mxu0
        %v5356 = vadd.f32 %v4881, %v5355
        %v5357 = vpop.f32.mrb[0].mxu0
        %v5358 = vadd.f32 %v4883, %v5357
        %v5359 = vand.u32 %v348, 4294901760
        %v5360 = vsub.f32 %v348, %v5359
        %5361 = vmatprep.mubr.f32.mxu0 %v5360
        %v5362 = vand.u32 %v347, 4294901760
        %v5363 = vsub.f32 %v347, %v5362
        %5364 = vmatmul.mubr.f32.gmra.mrb[0].mxu0 %v5363
        %v5365 = vpop.f32.mrb[0].mxu0
        %v5366 = vadd.f32 %v4889, %v5365
        %v5367 = vpop.f32.mrb[0].mxu0
        %v5368 = vadd.f32 %v4891, %v5367
        %v5369 = vand.u32 %v352, 4294901760
        %v5370 = vsub.f32 %v352, %v5369
        %5371 = vmatprep.mubr.f32.mxu0 %v5370
        %v5372 = vand.u32 %v351, 4294901760
        %v5373 = vsub.f32 %v351, %v5372
        %5374 = vmatmul.mubr.f32.gmra.mrb[0].mxu0 %v5373
        %v5375 = vpop.f32.mrb[0].mxu0
        %v5376 = vadd.f32 %v4897, %v5375
        %v5377 = vpop.f32.mrb[0].mxu0
        %v5378 = vadd.f32 %v4899, %v5377
        %v5379 = vand.u32 %v356, 4294901760
        %v5380 = vsub.f32 %v356, %v5379
        %5381 = vmatprep.mubr.f32.mxu0 %v5380
        %v5382 = vand.u32 %v355, 4294901760
        %v5383 = vsub.f32 %v355, %v5382
        %5384 = vmatmul.mubr.f32.gmra.mrb[0].mxu0 %v5383
        %v5385 = vpop.f32.mrb[0].mxu0
        %v5386 = vadd.f32 %v4905, %v5385
        %v5387 = vpop.f32.mrb[0].mxu0
        %v5388 = vadd.f32 %v4907, %v5387
        %v5389 = vand.u32 %v360, 4294901760
        %v5390 = vsub.f32 %v360, %v5389
        %5391 = vmatprep.mubr.f32.mxu0 %v5390
        %v5392 = vand.u32 %v359, 4294901760
        %v5393 = vsub.f32 %v359, %v5392
        %5394 = vmatmul.mubr.f32.gmra.mrb[0].mxu0 %v5393
        %v5395 = vpop.f32.mrb[0].mxu0
        %v5396 = vadd.f32 %v4913, %v5395
        %v5397 = vpop.f32.mrb[0].mxu0
        %v5398 = vadd.f32 %v4915, %v5397
        %v5399 = vand.u32 %v364, 4294901760
        %v5400 = vsub.f32 %v364, %v5399
        %5401 = vmatprep.mubr.f32.mxu0 %v5400
        %v5402 = vand.u32 %v363, 4294901760
        %v5403 = vsub.f32 %v363, %v5402
        %5404 = vmatmul.mubr.f32.gmra.mrb[0].mxu0 %v5403
        %v5405 = vpop.f32.mrb[0].mxu0
        %v5406 = vadd.f32 %v4921, %v5405
        %v5407 = vpop.f32.mrb[0].mxu0
        %v5408 = vadd.f32 %v4923, %v5407
        %v5409 = vand.u32 %v368, 4294901760
        %v5410 = vsub.f32 %v368, %v5409
        %5411 = vmatprep.mubr.f32.mxu0 %v5410
        %v5412 = vand.u32 %v367, 4294901760
        %v5413 = vsub.f32 %v367, %v5412
        %5414 = vmatmul.mubr.f32.gmra.mrb[0].mxu0 %v5413
        %v5415 = vpop.f32.mrb[0].mxu0
        %v5416 = vadd.f32 %v4929, %v5415
        %v5417 = vpop.f32.mrb[0].mxu0
        %v5418 = vadd.f32 %v4931, %v5417
        %v5419 = vand.u32 %v372, 4294901760
        %v5420 = vsub.f32 %v372, %v5419
        %5421 = vmatprep.mubr.f32.mxu0 %v5420
        %v5422 = vand.u32 %v371, 4294901760
        %v5423 = vsub.f32 %v371, %v5422
        %5424 = vmatmul.mubr.f32.gmra.mrb[0].mxu0 %v5423
        %v5425 = vpop.f32.mrb[0].mxu0
        %v5426 = vadd.f32 %v4937, %v5425
        %v5427 = vpop.f32.mrb[0].mxu0
        %v5428 = vadd.f32 %v4939, %v5427
        %v5429 = vand.u32 %v376, 4294901760
        %v5430 = vsub.f32 %v376, %v5429
        %5431 = vmatprep.mubr.f32.mxu0 %v5430
        %v5432 = vand.u32 %v375, 4294901760
        %v5433 = vsub.f32 %v375, %v5432
        %5434 = vmatmul.mubr.f32.gmra.mrb[0].mxu0 %v5433
        %v5435 = vpop.f32.mrb[0].mxu0
        %v5436 = vadd.f32 %v4945, %v5435
        %v5437 = vpop.f32.mrb[0].mxu0
        %v5438 = vadd.f32 %v4947, %v5437
        %v5439 = vand.u32 %v380, 4294901760
        %v5440 = vsub.f32 %v380, %v5439
        %5441 = vmatprep.mubr.f32.mxu0 %v5440
        %v5442 = vand.u32 %v379, 4294901760
        %v5443 = vsub.f32 %v379, %v5442
        %5444 = vmatmul.mubr.f32.gmra.mrb[0].mxu0 %v5443
        %v5445 = vpop.f32.mrb[0].mxu0
        %v5446 = vadd.f32 %v4953, %v5445
        %v5447 = vpop.f32.mrb[0].mxu0
        %v5448 = vadd.f32 %v4955, %v5447
        %v5449 = vand.u32 %v384, 4294901760
        %v5450 = vsub.f32 %v384, %v5449
        %5451 = vmatprep.mubr.f32.mxu0 %v5450
        %v5452 = vand.u32 %v383, 4294901760
        %v5453 = vsub.f32 %v383, %v5452
        %5454 = vmatmul.mubr.f32.gmra.mrb[0].mxu0 %v5453
        %v5455 = vpop.f32.mrb[0].mxu0
        %v5456 = vadd.f32 %v4961, %v5455
        %v5457 = vpop.f32.mrb[0].mxu0
        %v5458 = vadd.f32 %v4963, %v5457
        %v5459 = vand.u32 %v388, 4294901760
        %v5460 = vsub.f32 %v388, %v5459
        %5461 = vmatprep.mubr.f32.mxu0 %v5460
        %v5462 = vand.u32 %v387, 4294901760
        %v5463 = vsub.f32 %v387, %v5462
        %5464 = vmatmul.mubr.f32.gmra.mrb[0].mxu0 %v5463
        %v5465 = vpop.f32.mrb[0].mxu0
        %v5466 = vadd.f32 %v4969, %v5465
        %v5467 = vpop.f32.mrb[0].mxu0
        %v5468 = vadd.f32 %v4971, %v5467
        %v5469 = vand.u32 %v392, 4294901760
        %v5470 = vsub.f32 %v392, %v5469
        %5471 = vmatprep.mubr.f32.mxu0 %v5470
        %v5472 = vand.u32 %v391, 4294901760
        %v5473 = vsub.f32 %v391, %v5472
        %5474 = vmatmul.mubr.f32.gmra.mrb[0].mxu0 %v5473
        %v5475 = vpop.f32.mrb[0].mxu0
        %v5476 = vadd.f32 %v4977, %v5475
        %v5477 = vpop.f32.mrb[0].mxu0
        %v5478 = vadd.f32 %v4979, %v5477
        %v5479 = vand.u32 %v396, 4294901760
        %v5480 = vsub.f32 %v396, %v5479
        %5481 = vmatprep.mubr.f32.mxu0 %v5480
        %v5482 = vand.u32 %v395, 4294901760
        %v5483 = vsub.f32 %v395, %v5482
        %5484 = vmatmul.mubr.f32.gmra.mrb[0].mxu0 %v5483
        %v5485 = vpop.f32.mrb[0].mxu0
        %v5486 = vadd.f32 %v4985, %v5485
        %v5487 = vpop.f32.mrb[0].mxu0
        %v5488 = vadd.f32 %v4987, %v5487
        %v5489 = vand.u32 %v400, 4294901760
        %v5490 = vsub.f32 %v400, %v5489
        %5491 = vmatprep.mubr.f32.mxu0 %v5490
        %v5492 = vand.u32 %v399, 4294901760
        %v5493 = vsub.f32 %v399, %v5492
        %5494 = vmatmul.mubr.f32.gmra.mrb[0].mxu0 %v5493
        %v5495 = vpop.f32.mrb[0].mxu0
        %v5496 = vadd.f32 %v4993, %v5495
        %v5497 = vpop.f32.mrb[0].mxu0
        %v5498 = vadd.f32 %v4995, %v5497
        %v5499 = vand.u32 %v404, 4294901760
        %v5500 = vsub.f32 %v404, %v5499
        %5501 = vmatprep.mubr.f32.mxu0 %v5500
        %v5502 = vand.u32 %v403, 4294901760
        %v5503 = vsub.f32 %v403, %v5502
        %5504 = vmatmul.mubr.f32.gmra.mrb[0].mxu0 %v5503
        %v5505 = vpop.f32.mrb[0].mxu0
        %v5506 = vadd.f32 %v5001, %v5505
        %v5507 = vpop.f32.mrb[0].mxu0
        %v5508 = vadd.f32 %v5003, %v5507
        %v5509 = vand.u32 %v408, 4294901760
        %v5510 = vsub.f32 %v408, %v5509
        %5511 = vmatprep.mubr.f32.mxu0 %v5510
        %v5512 = vand.u32 %v407, 4294901760
        %v5513 = vsub.f32 %v407, %v5512
        %5514 = vmatmul.mubr.f32.gmra.mrb[0].mxu0 %v5513
        %v5515 = vpop.f32.mrb[0].mxu0
        %v5516 = vadd.f32 %v5009, %v5515
        %v5517 = vpop.f32.mrb[0].mxu0
        %v5518 = vadd.f32 %v5011, %v5517
        %v5519 = vand.u32 %v412, 4294901760
        %v5520 = vsub.f32 %v412, %v5519
        %5521 = vmatprep.mubr.f32.mxu0 %v5520
        %v5522 = vand.u32 %v411, 4294901760
        %v5523 = vsub.f32 %v411, %v5522
        %5524 = vmatmul.mubr.f32.gmra.mrb[0].mxu0 %v5523
        %v5525 = vpop.f32.mrb[0].mxu0
        %v5526 = vadd.f32 %v5017, %v5525
        %v5527 = vpop.f32.mrb[0].mxu0
        %v5528 = vadd.f32 %v5019, %v5527
        %v5529 = vand.u32 %v416, 4294901760
        %v5530 = vsub.f32 %v416, %v5529
        %5531 = vmatprep.mubr.f32.mxu0 %v5530
        %v5532 = vand.u32 %v415, 4294901760
        %v5533 = vsub.f32 %v415, %v5532
        %5534 = vmatmul.mubr.f32.gmra.mrb[0].mxu0 %v5533
        %v5535 = vpop.f32.mrb[0].mxu0
        %v5536 = vadd.f32 %v5025, %v5535
        %v5537 = vpop.f32.mrb[0].mxu0
        %v5538 = vadd.f32 %v5027, %v5537
        %v5539 = vand.u32 %v420, 4294901760
        %v5540 = vsub.f32 %v420, %v5539
        %5541 = vmatprep.mubr.f32.mxu0 %v5540
        %v5542 = vand.u32 %v419, 4294901760
        %v5543 = vsub.f32 %v419, %v5542
        %5544 = vmatmul.mubr.f32.gmra.mrb[0].mxu0 %v5543
        %v5545 = vpop.f32.mrb[0].mxu0
        %v5546 = vadd.f32 %v5033, %v5545
        %v5547 = vpop.f32.mrb[0].mxu0
        %v5548 = vadd.f32 %v5035, %v5547
        %5549 = vdwg.mxu0
        %v5550 = vand.u32 %v486, 4294901760
        %5551 = vmatprep.subr.mxu0 %v5550
        %v5552 = vand.u32 %v485, 4294901760
        %5553 = vmatpush1.msra.mxu0 %v5552
        %v5554 = vand.u32 %v488, 4294901760
        %5555 = vmatprep.subr.mxu0 %v5554
        %v5556 = vand.u32 %v487, 4294901760
        %5557 = vmatpush1.msra.mxu0 %v5556
        %v5558 = vand.u32 %v490, 4294901760
        %5559 = vmatprep.subr.mxu0 %v5558
        %v5560 = vand.u32 %v489, 4294901760
        %5561 = vmatpush1.msra.mxu0 %v5560
        %v5562 = vand.u32 %v492, 4294901760
        %5563 = vmatprep.subr.mxu0 %v5562
        %v5564 = vand.u32 %v491, 4294901760
        %5565 = vmatpush1.msra.mxu0 %v5564
        %v5566 = vand.u32 %v494, 4294901760
        %5567 = vmatprep.subr.mxu0 %v5566
        %v5568 = vand.u32 %v493, 4294901760
        %5569 = vmatpush1.msra.mxu0 %v5568
        %v5570 = vand.u32 %v496, 4294901760
        %5571 = vmatprep.subr.mxu0 %v5570
        %v5572 = vand.u32 %v495, 4294901760
        %5573 = vmatpush1.msra.mxu0 %v5572
        %v5574 = vand.u32 %v498, 4294901760
        %5575 = vmatprep.subr.mxu0 %v5574
        %v5576 = vand.u32 %v497, 4294901760
        %5577 = vmatpush1.msra.mxu0 %v5576
        %v5578 = vand.u32 %v500, 4294901760
        %5579 = vmatprep.subr.mxu0 %v5578
        %v5580 = vand.u32 %v499, 4294901760
        %5581 = vmatpush1.msra.mxu0 %v5580
        %v5582 = vand.u32 %v502, 4294901760
        %5583 = vmatprep.subr.mxu0 %v5582
        %v5584 = vand.u32 %v501, 4294901760
        %5585 = vmatpush1.msra.mxu0 %v5584
        %v5586 = vand.u32 %v504, 4294901760
        %5587 = vmatprep.subr.mxu0 %v5586
        %v5588 = vand.u32 %v503, 4294901760
        %5589 = vmatpush1.msra.mxu0 %v5588
        %v5590 = vand.u32 %v506, 4294901760
        %5591 = vmatprep.subr.mxu0 %v5590
        %v5592 = vand.u32 %v505, 4294901760
        %5593 = vmatpush1.msra.mxu0 %v5592
        %v5594 = vand.u32 %v508, 4294901760
        %5595 = vmatprep.subr.mxu0 %v5594
        %v5596 = vand.u32 %v507, 4294901760
        %5597 = vmatpush1.msra.mxu0 %v5596
        %v5598 = vand.u32 %v510, 4294901760
        %5599 = vmatprep.subr.mxu0 %v5598
        %v5600 = vand.u32 %v509, 4294901760
        %5601 = vmatpush1.msra.mxu0 %v5600
        %v5602 = vand.u32 %v512, 4294901760
        %5603 = vmatprep.subr.mxu0 %v5602
        %v5604 = vand.u32 %v511, 4294901760
        %5605 = vmatpush1.msra.mxu0 %v5604
        %v5606 = vand.u32 %v514, 4294901760
        %5607 = vmatprep.subr.mxu0 %v5606
        %v5608 = vand.u32 %v513, 4294901760
        %5609 = vmatpush1.msra.mxu0 %v5608
        %v5610 = vand.u32 %v516, 4294901760
        %5611 = vmatprep.subr.mxu0 %v5610
        %v5612 = vand.u32 %v515, 4294901760
        %5613 = vmatpush1.msra.mxu0 %v5612
        %v5614 = vand.u32 %v518, 4294901760
        %5615 = vmatprep.subr.mxu0 %v5614
        %v5616 = vand.u32 %v517, 4294901760
        %5617 = vmatpush1.msra.mxu0 %v5616
        %v5618 = vand.u32 %v520, 4294901760
        %5619 = vmatprep.subr.mxu0 %v5618
        %v5620 = vand.u32 %v519, 4294901760
        %5621 = vmatpush1.msra.mxu0 %v5620
        %v5622 = vand.u32 %v522, 4294901760
        %5623 = vmatprep.subr.mxu0 %v5622
        %v5624 = vand.u32 %v521, 4294901760
        %5625 = vmatpush1.msra.mxu0 %v5624
        %v5626 = vand.u32 %v524, 4294901760
        %5627 = vmatprep.subr.mxu0 %v5626
        %v5628 = vand.u32 %v523, 4294901760
        %5629 = vmatpush1.msra.mxu0 %v5628
        %v5630 = vand.u32 %v526, 4294901760
        %5631 = vmatprep.subr.mxu0 %v5630
        %v5632 = vand.u32 %v525, 4294901760
        %5633 = vmatpush1.msra.mxu0 %v5632
        %v5634 = vand.u32 %v528, 4294901760
        %5635 = vmatprep.subr.mxu0 %v5634
        %v5636 = vand.u32 %v527, 4294901760
        %5637 = vmatpush1.msra.mxu0 %v5636
        %v5638 = vand.u32 %v530, 4294901760
        %5639 = vmatprep.subr.mxu0 %v5638
        %v5640 = vand.u32 %v529, 4294901760
        %5641 = vmatpush1.msra.mxu0 %v5640
        %v5642 = vand.u32 %v532, 4294901760
        %5643 = vmatprep.subr.mxu0 %v5642
        %v5644 = vand.u32 %v531, 4294901760
        %5645 = vmatpush1.msra.mxu0 %v5644
        %v5646 = vand.u32 %v534, 4294901760
        %5647 = vmatprep.subr.mxu0 %v5646
        %v5648 = vand.u32 %v533, 4294901760
        %5649 = vmatpush1.msra.mxu0 %v5648
        %v5650 = vand.u32 %v536, 4294901760
        %5651 = vmatprep.subr.mxu0 %v5650
        %v5652 = vand.u32 %v535, 4294901760
        %5653 = vmatpush1.msra.mxu0 %v5652
        %v5654 = vand.u32 %v538, 4294901760
        %5655 = vmatprep.subr.mxu0 %v5654
        %v5656 = vand.u32 %v537, 4294901760
        %5657 = vmatpush1.msra.mxu0 %v5656
        %v5658 = vand.u32 %v540, 4294901760
        %5659 = vmatprep.subr.mxu0 %v5658
        %v5660 = vand.u32 %v539, 4294901760
        %5661 = vmatpush1.msra.mxu0 %v5660
        %v5662 = vand.u32 %v542, 4294901760
        %5663 = vmatprep.subr.mxu0 %v5662
        %v5664 = vand.u32 %v541, 4294901760
        %5665 = vmatpush1.msra.mxu0 %v5664
        %v5666 = vand.u32 %v544, 4294901760
        %5667 = vmatprep.subr.mxu0 %v5666
        %v5668 = vand.u32 %v543, 4294901760
        %5669 = vmatpush1.msra.mxu0 %v5668
        %v5670 = vand.u32 %v546, 4294901760
        %5671 = vmatprep.subr.mxu0 %v5670
        %v5672 = vand.u32 %v545, 4294901760
        %5673 = vmatpush1.msra.mxu0 %v5672
        %v5674 = vand.u32 %v548, 4294901760
        %5675 = vmatprep.subr.mxu0 %v5674
        %v5676 = vand.u32 %v547, 4294901760
        %5677 = vmatpush1.msra.mxu0 %v5676
        %v5678 = vand.u32 %v296, 4294901760
        %v5679 = vsub.f32 %v296, %v5678
        %v5680 = vand.u32 %v5679, 4294901760
        %5681 = vmatprep.mubr.f32.mxu0 %v5680
        %v5682 = vand.u32 %v295, 4294901760
        %v5683 = vsub.f32 %v295, %v5682
        %v5684 = vand.u32 %v5683, 4294901760
        %5685 = vmatmul.mubr.f32.gmra.mrb[0].mxu0 %v5684
        %v5686 = vpop.f32.mrb[0].mxu0
        %v5687 = vadd.f32 %v5236, %v5686
        %v5688 = vpop.f32.mrb[0].mxu0
        %v5689 = vadd.f32 %v5238, %v5688
        %v5690 = vand.u32 %v300, 4294901760
        %v5691 = vsub.f32 %v300, %v5690
        %v5692 = vand.u32 %v5691, 4294901760
        %5693 = vmatprep.mubr.f32.mxu0 %v5692
        %v5694 = vand.u32 %v299, 4294901760
        %v5695 = vsub.f32 %v299, %v5694
        %v5696 = vand.u32 %v5695, 4294901760
        %5697 = vmatmul.mubr.f32.gmra.mrb[0].mxu0 %v5696
        %v5698 = vpop.f32.mrb[0].mxu0
        %v5699 = vadd.f32 %v5246, %v5698
        %v5700 = vpop.f32.mrb[0].mxu0
        %v5701 = vadd.f32 %v5248, %v5700
        %v5702 = vand.u32 %v304, 4294901760
        %v5703 = vsub.f32 %v304, %v5702
        %v5704 = vand.u32 %v5703, 4294901760
        %5705 = vmatprep.mubr.f32.mxu0 %v5704
        %v5706 = vand.u32 %v303, 4294901760
        %v5707 = vsub.f32 %v303, %v5706
        %v5708 = vand.u32 %v5707, 4294901760
        %5709 = vmatmul.mubr.f32.gmra.mrb[0].mxu0 %v5708
        %v5710 = vpop.f32.mrb[0].mxu0
        %v5711 = vadd.f32 %v5256, %v5710
        %v5712 = vpop.f32.mrb[0].mxu0
        %v5713 = vadd.f32 %v5258, %v5712
        %v5714 = vand.u32 %v308, 4294901760
        %v5715 = vsub.f32 %v308, %v5714
        %v5716 = vand.u32 %v5715, 4294901760
        %5717 = vmatprep.mubr.f32.mxu0 %v5716
        %v5718 = vand.u32 %v307, 4294901760
        %v5719 = vsub.f32 %v307, %v5718
        %v5720 = vand.u32 %v5719, 4294901760
        %5721 = vmatmul.mubr.f32.gmra.mrb[0].mxu0 %v5720
        %v5722 = vpop.f32.mrb[0].mxu0
        %v5723 = vadd.f32 %v5266, %v5722
        %v5724 = vpop.f32.mrb[0].mxu0
        %v5725 = vadd.f32 %v5268, %v5724
        %v5726 = vand.u32 %v312, 4294901760
        %v5727 = vsub.f32 %v312, %v5726
        %v5728 = vand.u32 %v5727, 4294901760
        %5729 = vmatprep.mubr.f32.mxu0 %v5728
        %v5730 = vand.u32 %v311, 4294901760
        %v5731 = vsub.f32 %v311, %v5730
        %v5732 = vand.u32 %v5731, 4294901760
        %5733 = vmatmul.mubr.f32.gmra.mrb[0].mxu0 %v5732
        %v5734 = vpop.f32.mrb[0].mxu0
        %v5735 = vadd.f32 %v5276, %v5734
        %v5736 = vpop.f32.mrb[0].mxu0
        %v5737 = vadd.f32 %v5278, %v5736
        %v5738 = vand.u32 %v316, 4294901760
        %v5739 = vsub.f32 %v316, %v5738
        %v5740 = vand.u32 %v5739, 4294901760
        %5741 = vmatprep.mubr.f32.mxu0 %v5740
        %v5742 = vand.u32 %v315, 4294901760
        %v5743 = vsub.f32 %v315, %v5742
        %v5744 = vand.u32 %v5743, 4294901760
        %5745 = vmatmul.mubr.f32.gmra.mrb[0].mxu0 %v5744
        %v5746 = vpop.f32.mrb[0].mxu0
        %v5747 = vadd.f32 %v5286, %v5746
        %v5748 = vpop.f32.mrb[0].mxu0
        %v5749 = vadd.f32 %v5288, %v5748
        %v5750 = vand.u32 %v320, 4294901760
        %v5751 = vsub.f32 %v320, %v5750
        %v5752 = vand.u32 %v5751, 4294901760
        %5753 = vmatprep.mubr.f32.mxu0 %v5752
        %v5754 = vand.u32 %v319, 4294901760
        %v5755 = vsub.f32 %v319, %v5754
        %v5756 = vand.u32 %v5755, 4294901760
        %5757 = vmatmul.mubr.f32.gmra.mrb[0].mxu0 %v5756
        %v5758 = vpop.f32.mrb[0].mxu0
        %v5759 = vadd.f32 %v5296, %v5758
        %v5760 = vpop.f32.mrb[0].mxu0
        %v5761 = vadd.f32 %v5298, %v5760
        %v5762 = vand.u32 %v324, 4294901760
        %v5763 = vsub.f32 %v324, %v5762
        %v5764 = vand.u32 %v5763, 4294901760
        %5765 = vmatprep.mubr.f32.mxu0 %v5764
        %v5766 = vand.u32 %v323, 4294901760
        %v5767 = vsub.f32 %v323, %v5766
        %v5768 = vand.u32 %v5767, 4294901760
        %5769 = vmatmul.mubr.f32.gmra.mrb[0].mxu0 %v5768
        %v5770 = vpop.f32.mrb[0].mxu0
        %v5771 = vadd.f32 %v5306, %v5770
        %v5772 = vpop.f32.mrb[0].mxu0
        %v5773 = vadd.f32 %v5308, %v5772
        %v5774 = vand.u32 %v328, 4294901760
        %v5775 = vsub.f32 %v328, %v5774
        %v5776 = vand.u32 %v5775, 4294901760
        %5777 = vmatprep.mubr.f32.mxu0 %v5776
        %v5778 = vand.u32 %v327, 4294901760
        %v5779 = vsub.f32 %v327, %v5778
        %v5780 = vand.u32 %v5779, 4294901760
        %5781 = vmatmul.mubr.f32.gmra.mrb[0].mxu0 %v5780
        %v5782 = vpop.f32.mrb[0].mxu0
        %v5783 = vadd.f32 %v5316, %v5782
        %v5784 = vpop.f32.mrb[0].mxu0
        %v5785 = vadd.f32 %v5318, %v5784
        %v5786 = vand.u32 %v332, 4294901760
        %v5787 = vsub.f32 %v332, %v5786
        %v5788 = vand.u32 %v5787, 4294901760
        %5789 = vmatprep.mubr.f32.mxu0 %v5788
        %v5790 = vand.u32 %v331, 4294901760
        %v5791 = vsub.f32 %v331, %v5790
        %v5792 = vand.u32 %v5791, 4294901760
        %5793 = vmatmul.mubr.f32.gmra.mrb[0].mxu0 %v5792
        %v5794 = vpop.f32.mrb[0].mxu0
        %v5795 = vadd.f32 %v5326, %v5794
        %v5796 = vpop.f32.mrb[0].mxu0
        %v5797 = vadd.f32 %v5328, %v5796
        %v5798 = vand.u32 %v336, 4294901760
        %v5799 = vsub.f32 %v336, %v5798
        %v5800 = vand.u32 %v5799, 4294901760
        %5801 = vmatprep.mubr.f32.mxu0 %v5800
        %v5802 = vand.u32 %v335, 4294901760
        %v5803 = vsub.f32 %v335, %v5802
        %v5804 = vand.u32 %v5803, 4294901760
        %5805 = vmatmul.mubr.f32.gmra.mrb[0].mxu0 %v5804
        %v5806 = vpop.f32.mrb[0].mxu0
        %v5807 = vadd.f32 %v5336, %v5806
        %v5808 = vpop.f32.mrb[0].mxu0
        %v5809 = vadd.f32 %v5338, %v5808
        %v5810 = vand.u32 %v340, 4294901760
        %v5811 = vsub.f32 %v340, %v5810
        %v5812 = vand.u32 %v5811, 4294901760
        %5813 = vmatprep.mubr.f32.mxu0 %v5812
        %v5814 = vand.u32 %v339, 4294901760
        %v5815 = vsub.f32 %v339, %v5814
        %v5816 = vand.u32 %v5815, 4294901760
        %5817 = vmatmul.mubr.f32.gmra.mrb[0].mxu0 %v5816
        %v5818 = vpop.f32.mrb[0].mxu0
        %v5819 = vadd.f32 %v5346, %v5818
        %v5820 = vpop.f32.mrb[0].mxu0
        %v5821 = vadd.f32 %v5348, %v5820
        %v5822 = vand.u32 %v344, 4294901760
        %v5823 = vsub.f32 %v344, %v5822
        %v5824 = vand.u32 %v5823, 4294901760
        %5825 = vmatprep.mubr.f32.mxu0 %v5824
        %v5826 = vand.u32 %v343, 4294901760
        %v5827 = vsub.f32 %v343, %v5826
        %v5828 = vand.u32 %v5827, 4294901760
        %5829 = vmatmul.mubr.f32.gmra.mrb[0].mxu0 %v5828
        %v5830 = vpop.f32.mrb[0].mxu0
        %v5831 = vadd.f32 %v5356, %v5830
        %v5832 = vpop.f32.mrb[0].mxu0
        %v5833 = vadd.f32 %v5358, %v5832
        %v5834 = vand.u32 %v348, 4294901760
        %v5835 = vsub.f32 %v348, %v5834
        %v5836 = vand.u32 %v5835, 4294901760
        %5837 = vmatprep.mubr.f32.mxu0 %v5836
        %v5838 = vand.u32 %v347, 4294901760
        %v5839 = vsub.f32 %v347, %v5838
        %v5840 = vand.u32 %v5839, 4294901760
        %5841 = vmatmul.mubr.f32.gmra.mrb[0].mxu0 %v5840
        %v5842 = vpop.f32.mrb[0].mxu0
        %v5843 = vadd.f32 %v5366, %v5842
        %v5844 = vpop.f32.mrb[0].mxu0
        %v5845 = vadd.f32 %v5368, %v5844
        %v5846 = vand.u32 %v352, 4294901760
        %v5847 = vsub.f32 %v352, %v5846
        %v5848 = vand.u32 %v5847, 4294901760
        %5849 = vmatprep.mubr.f32.mxu0 %v5848
        %v5850 = vand.u32 %v351, 4294901760
        %v5851 = vsub.f32 %v351, %v5850
        %v5852 = vand.u32 %v5851, 4294901760
        %5853 = vmatmul.mubr.f32.gmra.mrb[0].mxu0 %v5852
        %v5854 = vpop.f32.mrb[0].mxu0
        %v5855 = vadd.f32 %v5376, %v5854
        %v5856 = vpop.f32.mrb[0].mxu0
        %v5857 = vadd.f32 %v5378, %v5856
        %v5858 = vand.u32 %v356, 4294901760
        %v5859 = vsub.f32 %v356, %v5858
        %v5860 = vand.u32 %v5859, 4294901760
        %5861 = vmatprep.mubr.f32.mxu0 %v5860
        %v5862 = vand.u32 %v355, 4294901760
        %v5863 = vsub.f32 %v355, %v5862
        %v5864 = vand.u32 %v5863, 4294901760
        %5865 = vmatmul.mubr.f32.gmra.mrb[0].mxu0 %v5864
        %v5866 = vpop.f32.mrb[0].mxu0
        %v5867 = vadd.f32 %v5386, %v5866
        %v5868 = vpop.f32.mrb[0].mxu0
        %v5869 = vadd.f32 %v5388, %v5868
        %v5870 = vand.u32 %v360, 4294901760
        %v5871 = vsub.f32 %v360, %v5870
        %v5872 = vand.u32 %v5871, 4294901760
        %5873 = vmatprep.mubr.f32.mxu0 %v5872
        %v5874 = vand.u32 %v359, 4294901760
        %v5875 = vsub.f32 %v359, %v5874
        %v5876 = vand.u32 %v5875, 4294901760
        %5877 = vmatmul.mubr.f32.gmra.mrb[0].mxu0 %v5876
        %v5878 = vpop.f32.mrb[0].mxu0
        %v5879 = vadd.f32 %v5396, %v5878
        %v5880 = vpop.f32.mrb[0].mxu0
        %v5881 = vadd.f32 %v5398, %v5880
        %v5882 = vand.u32 %v364, 4294901760
        %v5883 = vsub.f32 %v364, %v5882
        %v5884 = vand.u32 %v5883, 4294901760
        %5885 = vmatprep.mubr.f32.mxu0 %v5884
        %v5886 = vand.u32 %v363, 4294901760
        %v5887 = vsub.f32 %v363, %v5886
        %v5888 = vand.u32 %v5887, 4294901760
        %5889 = vmatmul.mubr.f32.gmra.mrb[0].mxu0 %v5888
        %v5890 = vpop.f32.mrb[0].mxu0
        %v5891 = vadd.f32 %v5406, %v5890
        %v5892 = vpop.f32.mrb[0].mxu0
        %v5893 = vadd.f32 %v5408, %v5892
        %v5894 = vand.u32 %v368, 4294901760
        %v5895 = vsub.f32 %v368, %v5894
        %v5896 = vand.u32 %v5895, 4294901760
        %5897 = vmatprep.mubr.f32.mxu0 %v5896
        %v5898 = vand.u32 %v367, 4294901760
        %v5899 = vsub.f32 %v367, %v5898
        %v5900 = vand.u32 %v5899, 4294901760
        %5901 = vmatmul.mubr.f32.gmra.mrb[0].mxu0 %v5900
        %v5902 = vpop.f32.mrb[0].mxu0
        %v5903 = vadd.f32 %v5416, %v5902
        %v5904 = vpop.f32.mrb[0].mxu0
        %v5905 = vadd.f32 %v5418, %v5904
        %v5906 = vand.u32 %v372, 4294901760
        %v5907 = vsub.f32 %v372, %v5906
        %v5908 = vand.u32 %v5907, 4294901760
        %5909 = vmatprep.mubr.f32.mxu0 %v5908
        %v5910 = vand.u32 %v371, 4294901760
        %v5911 = vsub.f32 %v371, %v5910
        %v5912 = vand.u32 %v5911, 4294901760
        %5913 = vmatmul.mubr.f32.gmra.mrb[0].mxu0 %v5912
        %v5914 = vpop.f32.mrb[0].mxu0
        %v5915 = vadd.f32 %v5426, %v5914
        %v5916 = vpop.f32.mrb[0].mxu0
        %v5917 = vadd.f32 %v5428, %v5916
        %v5918 = vand.u32 %v376, 4294901760
        %v5919 = vsub.f32 %v376, %v5918
        %v5920 = vand.u32 %v5919, 4294901760
        %5921 = vmatprep.mubr.f32.mxu0 %v5920
        %v5922 = vand.u32 %v375, 4294901760
        %v5923 = vsub.f32 %v375, %v5922
        %v5924 = vand.u32 %v5923, 4294901760
        %5925 = vmatmul.mubr.f32.gmra.mrb[0].mxu0 %v5924
        %v5926 = vpop.f32.mrb[0].mxu0
        %v5927 = vadd.f32 %v5436, %v5926
        %v5928 = vpop.f32.mrb[0].mxu0
        %v5929 = vadd.f32 %v5438, %v5928
        %v5930 = vand.u32 %v380, 4294901760
        %v5931 = vsub.f32 %v380, %v5930
        %v5932 = vand.u32 %v5931, 4294901760
        %5933 = vmatprep.mubr.f32.mxu0 %v5932
        %v5934 = vand.u32 %v379, 4294901760
        %v5935 = vsub.f32 %v379, %v5934
        %v5936 = vand.u32 %v5935, 4294901760
        %5937 = vmatmul.mubr.f32.gmra.mrb[0].mxu0 %v5936
        %v5938 = vpop.f32.mrb[0].mxu0
        %v5939 = vadd.f32 %v5446, %v5938
        %v5940 = vpop.f32.mrb[0].mxu0
        %v5941 = vadd.f32 %v5448, %v5940
        %v5942 = vand.u32 %v384, 4294901760
        %v5943 = vsub.f32 %v384, %v5942
        %v5944 = vand.u32 %v5943, 4294901760
        %5945 = vmatprep.mubr.f32.mxu0 %v5944
        %v5946 = vand.u32 %v383, 4294901760
        %v5947 = vsub.f32 %v383, %v5946
        %v5948 = vand.u32 %v5947, 4294901760
        %5949 = vmatmul.mubr.f32.gmra.mrb[0].mxu0 %v5948
        %v5950 = vpop.f32.mrb[0].mxu0
        %v5951 = vadd.f32 %v5456, %v5950
        %v5952 = vpop.f32.mrb[0].mxu0
        %v5953 = vadd.f32 %v5458, %v5952
        %v5954 = vand.u32 %v388, 4294901760
        %v5955 = vsub.f32 %v388, %v5954
        %v5956 = vand.u32 %v5955, 4294901760
        %5957 = vmatprep.mubr.f32.mxu0 %v5956
        %v5958 = vand.u32 %v387, 4294901760
        %v5959 = vsub.f32 %v387, %v5958
        %v5960 = vand.u32 %v5959, 4294901760
        %5961 = vmatmul.mubr.f32.gmra.mrb[0].mxu0 %v5960
        %v5962 = vpop.f32.mrb[0].mxu0
        %v5963 = vadd.f32 %v5466, %v5962
        %v5964 = vpop.f32.mrb[0].mxu0
        %v5965 = vadd.f32 %v5468, %v5964
        %v5966 = vand.u32 %v392, 4294901760
        %v5967 = vsub.f32 %v392, %v5966
        %v5968 = vand.u32 %v5967, 4294901760
        %5969 = vmatprep.mubr.f32.mxu0 %v5968
        %v5970 = vand.u32 %v391, 4294901760
        %v5971 = vsub.f32 %v391, %v5970
        %v5972 = vand.u32 %v5971, 4294901760
        %5973 = vmatmul.mubr.f32.gmra.mrb[0].mxu0 %v5972
        %v5974 = vpop.f32.mrb[0].mxu0
        %v5975 = vadd.f32 %v5476, %v5974
        %v5976 = vpop.f32.mrb[0].mxu0
        %v5977 = vadd.f32 %v5478, %v5976
        %v5978 = vand.u32 %v396, 4294901760
        %v5979 = vsub.f32 %v396, %v5978
        %v5980 = vand.u32 %v5979, 4294901760
        %5981 = vmatprep.mubr.f32.mxu0 %v5980
        %v5982 = vand.u32 %v395, 4294901760
        %v5983 = vsub.f32 %v395, %v5982
        %v5984 = vand.u32 %v5983, 4294901760
        %5985 = vmatmul.mubr.f32.gmra.mrb[0].mxu0 %v5984
        %v5986 = vpop.f32.mrb[0].mxu0
        %v5987 = vadd.f32 %v5486, %v5986
        %v5988 = vpop.f32.mrb[0].mxu0
        %v5989 = vadd.f32 %v5488, %v5988
        %v5990 = vand.u32 %v400, 4294901760
        %v5991 = vsub.f32 %v400, %v5990
        %v5992 = vand.u32 %v5991, 4294901760
        %5993 = vmatprep.mubr.f32.mxu0 %v5992
        %v5994 = vand.u32 %v399, 4294901760
        %v5995 = vsub.f32 %v399, %v5994
        %v5996 = vand.u32 %v5995, 4294901760
        %5997 = vmatmul.mubr.f32.gmra.mrb[0].mxu0 %v5996
        %v5998 = vpop.f32.mrb[0].mxu0
        %v5999 = vadd.f32 %v5496, %v5998
        %v6000 = vpop.f32.mrb[0].mxu0
        %v6001 = vadd.f32 %v5498, %v6000
        %v6002 = vand.u32 %v404, 4294901760
        %v6003 = vsub.f32 %v404, %v6002
        %v6004 = vand.u32 %v6003, 4294901760
        %6005 = vmatprep.mubr.f32.mxu0 %v6004
        %v6006 = vand.u32 %v403, 4294901760
        %v6007 = vsub.f32 %v403, %v6006
        %v6008 = vand.u32 %v6007, 4294901760
        %6009 = vmatmul.mubr.f32.gmra.mrb[0].mxu0 %v6008
        %v6010 = vpop.f32.mrb[0].mxu0
        %v6011 = vadd.f32 %v5506, %v6010
        %v6012 = vpop.f32.mrb[0].mxu0
        %v6013 = vadd.f32 %v5508, %v6012
        %v6014 = vand.u32 %v408, 4294901760
        %v6015 = vsub.f32 %v408, %v6014
        %v6016 = vand.u32 %v6015, 4294901760
        %6017 = vmatprep.mubr.f32.mxu0 %v6016
        %v6018 = vand.u32 %v407, 4294901760
        %v6019 = vsub.f32 %v407, %v6018
        %v6020 = vand.u32 %v6019, 4294901760
        %6021 = vmatmul.mubr.f32.gmra.mrb[0].mxu0 %v6020
        %v6022 = vpop.f32.mrb[0].mxu0
        %v6023 = vadd.f32 %v5516, %v6022
        %v6024 = vpop.f32.mrb[0].mxu0
        %v6025 = vadd.f32 %v5518, %v6024
        %v6026 = vand.u32 %v412, 4294901760
        %v6027 = vsub.f32 %v412, %v6026
        %v6028 = vand.u32 %v6027, 4294901760
        %6029 = vmatprep.mubr.f32.mxu0 %v6028
        %v6030 = vand.u32 %v411, 4294901760
        %v6031 = vsub.f32 %v411, %v6030
        %v6032 = vand.u32 %v6031, 4294901760
        %6033 = vmatmul.mubr.f32.gmra.mrb[0].mxu0 %v6032
        %v6034 = vpop.f32.mrb[0].mxu0
        %v6035 = vadd.f32 %v5526, %v6034
        %v6036 = vpop.f32.mrb[0].mxu0
        %v6037 = vadd.f32 %v5528, %v6036
        %v6038 = vand.u32 %v416, 4294901760
        %v6039 = vsub.f32 %v416, %v6038
        %v6040 = vand.u32 %v6039, 4294901760
        %6041 = vmatprep.mubr.f32.mxu0 %v6040
        %v6042 = vand.u32 %v415, 4294901760
        %v6043 = vsub.f32 %v415, %v6042
        %v6044 = vand.u32 %v6043, 4294901760
        %6045 = vmatmul.mubr.f32.gmra.mrb[0].mxu0 %v6044
        %v6046 = vpop.f32.mrb[0].mxu0
        %v6047 = vadd.f32 %v5536, %v6046
        %v6048 = vpop.f32.mrb[0].mxu0
        %v6049 = vadd.f32 %v5538, %v6048
        %v6050 = vand.u32 %v420, 4294901760
        %v6051 = vsub.f32 %v420, %v6050
        %v6052 = vand.u32 %v6051, 4294901760
        %6053 = vmatprep.mubr.f32.mxu0 %v6052
        %v6054 = vand.u32 %v419, 4294901760
        %v6055 = vsub.f32 %v419, %v6054
        %v6056 = vand.u32 %v6055, 4294901760
        %6057 = vmatmul.mubr.f32.gmra.mrb[0].mxu0 %v6056
        %v6058 = vpop.f32.mrb[0].mxu0
        %v6059 = vadd.f32 %v5546, %v6058
        %v6060 = vpop.f32.mrb[0].mxu0
        %v6061 = vadd.f32 %v5548, %v6060
        %6062 = vdwg.mxu0
        %v6063 = vand.u32 %v486, 4294901760
        %v6064 = vsub.f32 %v486, %v6063
        %v6065 = vand.u32 %v6064, 4294901760
        %6066 = vmatprep.subr.mxu0 %v6065
        %v6067 = vand.u32 %v485, 4294901760
        %v6068 = vsub.f32 %v485, %v6067
        %v6069 = vand.u32 %v6068, 4294901760
        %6070 = vmatpush1.msra.mxu0 %v6069
        %v6071 = vand.u32 %v488, 4294901760
        %v6072 = vsub.f32 %v488, %v6071
        %v6073 = vand.u32 %v6072, 4294901760
        %6074 = vmatprep.subr.mxu0 %v6073
        %v6075 = vand.u32 %v487, 4294901760
        %v6076 = vsub.f32 %v487, %v6075
        %v6077 = vand.u32 %v6076, 4294901760
        %6078 = vmatpush1.msra.mxu0 %v6077
        %v6079 = vand.u32 %v490, 4294901760
        %v6080 = vsub.f32 %v490, %v6079
        %v6081 = vand.u32 %v6080, 4294901760
        %6082 = vmatprep.subr.mxu0 %v6081
        %v6083 = vand.u32 %v489, 4294901760
        %v6084 = vsub.f32 %v489, %v6083
        %v6085 = vand.u32 %v6084, 4294901760
        %6086 = vmatpush1.msra.mxu0 %v6085
        %v6087 = vand.u32 %v492, 4294901760
        %v6088 = vsub.f32 %v492, %v6087
        %v6089 = vand.u32 %v6088, 4294901760
        %6090 = vmatprep.subr.mxu0 %v6089
        %v6091 = vand.u32 %v491, 4294901760
        %v6092 = vsub.f32 %v491, %v6091
        %v6093 = vand.u32 %v6092, 4294901760
        %6094 = vmatpush1.msra.mxu0 %v6093
        %v6095 = vand.u32 %v494, 4294901760
        %v6096 = vsub.f32 %v494, %v6095
        %v6097 = vand.u32 %v6096, 4294901760
        %6098 = vmatprep.subr.mxu0 %v6097
        %v6099 = vand.u32 %v493, 4294901760
        %v6100 = vsub.f32 %v493, %v6099
        %v6101 = vand.u32 %v6100, 4294901760
        %6102 = vmatpush1.msra.mxu0 %v6101
        %v6103 = vand.u32 %v496, 4294901760
        %v6104 = vsub.f32 %v496, %v6103
        %v6105 = vand.u32 %v6104, 4294901760
        %6106 = vmatprep.subr.mxu0 %v6105
        %v6107 = vand.u32 %v495, 4294901760
        %v6108 = vsub.f32 %v495, %v6107
        %v6109 = vand.u32 %v6108, 4294901760
        %6110 = vmatpush1.msra.mxu0 %v6109
        %v6111 = vand.u32 %v498, 4294901760
        %v6112 = vsub.f32 %v498, %v6111
        %v6113 = vand.u32 %v6112, 4294901760
        %6114 = vmatprep.subr.mxu0 %v6113
        %v6115 = vand.u32 %v497, 4294901760
        %v6116 = vsub.f32 %v497, %v6115
        %v6117 = vand.u32 %v6116, 4294901760
        %6118 = vmatpush1.msra.mxu0 %v6117
        %v6119 = vand.u32 %v500, 4294901760
        %v6120 = vsub.f32 %v500, %v6119
        %v6121 = vand.u32 %v6120, 4294901760
        %6122 = vmatprep.subr.mxu0 %v6121
        %v6123 = vand.u32 %v499, 4294901760
        %v6124 = vsub.f32 %v499, %v6123
        %v6125 = vand.u32 %v6124, 4294901760
        %6126 = vmatpush1.msra.mxu0 %v6125
        %v6127 = vand.u32 %v502, 4294901760
        %v6128 = vsub.f32 %v502, %v6127
        %v6129 = vand.u32 %v6128, 4294901760
        %6130 = vmatprep.subr.mxu0 %v6129
        %v6131 = vand.u32 %v501, 4294901760
        %v6132 = vsub.f32 %v501, %v6131
        %v6133 = vand.u32 %v6132, 4294901760
        %6134 = vmatpush1.msra.mxu0 %v6133
        %v6135 = vand.u32 %v504, 4294901760
        %v6136 = vsub.f32 %v504, %v6135
        %v6137 = vand.u32 %v6136, 4294901760
        %6138 = vmatprep.subr.mxu0 %v6137
        %v6139 = vand.u32 %v503, 4294901760
        %v6140 = vsub.f32 %v503, %v6139
        %v6141 = vand.u32 %v6140, 4294901760
        %6142 = vmatpush1.msra.mxu0 %v6141
        %v6143 = vand.u32 %v506, 4294901760
        %v6144 = vsub.f32 %v506, %v6143
        %v6145 = vand.u32 %v6144, 4294901760
        %6146 = vmatprep.subr.mxu0 %v6145
        %v6147 = vand.u32 %v505, 4294901760
        %v6148 = vsub.f32 %v505, %v6147
        %v6149 = vand.u32 %v6148, 4294901760
        %6150 = vmatpush1.msra.mxu0 %v6149
        %v6151 = vand.u32 %v508, 4294901760
        %v6152 = vsub.f32 %v508, %v6151
        %v6153 = vand.u32 %v6152, 4294901760
        %6154 = vmatprep.subr.mxu0 %v6153
        %v6155 = vand.u32 %v507, 4294901760
        %v6156 = vsub.f32 %v507, %v6155
        %v6157 = vand.u32 %v6156, 4294901760
        %6158 = vmatpush1.msra.mxu0 %v6157
        %v6159 = vand.u32 %v510, 4294901760
        %v6160 = vsub.f32 %v510, %v6159
        %v6161 = vand.u32 %v6160, 4294901760
        %6162 = vmatprep.subr.mxu0 %v6161
        %v6163 = vand.u32 %v509, 4294901760
        %v6164 = vsub.f32 %v509, %v6163
        %v6165 = vand.u32 %v6164, 4294901760
        %6166 = vmatpush1.msra.mxu0 %v6165
        %v6167 = vand.u32 %v512, 4294901760
        %v6168 = vsub.f32 %v512, %v6167
        %v6169 = vand.u32 %v6168, 4294901760
        %6170 = vmatprep.subr.mxu0 %v6169
        %v6171 = vand.u32 %v511, 4294901760
        %v6172 = vsub.f32 %v511, %v6171
        %v6173 = vand.u32 %v6172, 4294901760
        %6174 = vmatpush1.msra.mxu0 %v6173
        %v6175 = vand.u32 %v514, 4294901760
        %v6176 = vsub.f32 %v514, %v6175
        %v6177 = vand.u32 %v6176, 4294901760
        %6178 = vmatprep.subr.mxu0 %v6177
        %v6179 = vand.u32 %v513, 4294901760
        %v6180 = vsub.f32 %v513, %v6179
        %v6181 = vand.u32 %v6180, 4294901760
        %6182 = vmatpush1.msra.mxu0 %v6181
        %v6183 = vand.u32 %v516, 4294901760
        %v6184 = vsub.f32 %v516, %v6183
        %v6185 = vand.u32 %v6184, 4294901760
        %6186 = vmatprep.subr.mxu0 %v6185
        %v6187 = vand.u32 %v515, 4294901760
        %v6188 = vsub.f32 %v515, %v6187
        %v6189 = vand.u32 %v6188, 4294901760
        %6190 = vmatpush1.msra.mxu0 %v6189
        %v6191 = vand.u32 %v518, 4294901760
        %v6192 = vsub.f32 %v518, %v6191
        %v6193 = vand.u32 %v6192, 4294901760
        %6194 = vmatprep.subr.mxu0 %v6193
        %v6195 = vand.u32 %v517, 4294901760
        %v6196 = vsub.f32 %v517, %v6195
        %v6197 = vand.u32 %v6196, 4294901760
        %6198 = vmatpush1.msra.mxu0 %v6197
        %v6199 = vand.u32 %v520, 4294901760
        %v6200 = vsub.f32 %v520, %v6199
        %v6201 = vand.u32 %v6200, 4294901760
        %6202 = vmatprep.subr.mxu0 %v6201
        %v6203 = vand.u32 %v519, 4294901760
        %v6204 = vsub.f32 %v519, %v6203
        %v6205 = vand.u32 %v6204, 4294901760
        %6206 = vmatpush1.msra.mxu0 %v6205
        %v6207 = vand.u32 %v522, 4294901760
        %v6208 = vsub.f32 %v522, %v6207
        %v6209 = vand.u32 %v6208, 4294901760
        %6210 = vmatprep.subr.mxu0 %v6209
        %v6211 = vand.u32 %v521, 4294901760
        %v6212 = vsub.f32 %v521, %v6211
        %v6213 = vand.u32 %v6212, 4294901760
        %6214 = vmatpush1.msra.mxu0 %v6213
        %v6215 = vand.u32 %v524, 4294901760
        %v6216 = vsub.f32 %v524, %v6215
        %v6217 = vand.u32 %v6216, 4294901760
        %6218 = vmatprep.subr.mxu0 %v6217
        %v6219 = vand.u32 %v523, 4294901760
        %v6220 = vsub.f32 %v523, %v6219
        %v6221 = vand.u32 %v6220, 4294901760
        %6222 = vmatpush1.msra.mxu0 %v6221
        %v6223 = vand.u32 %v526, 4294901760
        %v6224 = vsub.f32 %v526, %v6223
        %v6225 = vand.u32 %v6224, 4294901760
        %6226 = vmatprep.subr.mxu0 %v6225
        %v6227 = vand.u32 %v525, 4294901760
        %v6228 = vsub.f32 %v525, %v6227
        %v6229 = vand.u32 %v6228, 4294901760
        %6230 = vmatpush1.msra.mxu0 %v6229
        %v6231 = vand.u32 %v528, 4294901760
        %v6232 = vsub.f32 %v528, %v6231
        %v6233 = vand.u32 %v6232, 4294901760
        %6234 = vmatprep.subr.mxu0 %v6233
        %v6235 = vand.u32 %v527, 4294901760
        %v6236 = vsub.f32 %v527, %v6235
        %v6237 = vand.u32 %v6236, 4294901760
        %6238 = vmatpush1.msra.mxu0 %v6237
        %v6239 = vand.u32 %v530, 4294901760
        %v6240 = vsub.f32 %v530, %v6239
        %v6241 = vand.u32 %v6240, 4294901760
        %6242 = vmatprep.subr.mxu0 %v6241
        %v6243 = vand.u32 %v529, 4294901760
        %v6244 = vsub.f32 %v529, %v6243
        %v6245 = vand.u32 %v6244, 4294901760
        %6246 = vmatpush1.msra.mxu0 %v6245
        %v6247 = vand.u32 %v532, 4294901760
        %v6248 = vsub.f32 %v532, %v6247
        %v6249 = vand.u32 %v6248, 4294901760
        %6250 = vmatprep.subr.mxu0 %v6249
        %v6251 = vand.u32 %v531, 4294901760
        %v6252 = vsub.f32 %v531, %v6251
        %v6253 = vand.u32 %v6252, 4294901760
        %6254 = vmatpush1.msra.mxu0 %v6253
        %v6255 = vand.u32 %v534, 4294901760
        %v6256 = vsub.f32 %v534, %v6255
        %v6257 = vand.u32 %v6256, 4294901760
        %6258 = vmatprep.subr.mxu0 %v6257
        %v6259 = vand.u32 %v533, 4294901760
        %v6260 = vsub.f32 %v533, %v6259
        %v6261 = vand.u32 %v6260, 4294901760
        %6262 = vmatpush1.msra.mxu0 %v6261
        %v6263 = vand.u32 %v536, 4294901760
        %v6264 = vsub.f32 %v536, %v6263
        %v6265 = vand.u32 %v6264, 4294901760
        %6266 = vmatprep.subr.mxu0 %v6265
        %v6267 = vand.u32 %v535, 4294901760
        %v6268 = vsub.f32 %v535, %v6267
        %v6269 = vand.u32 %v6268, 4294901760
        %6270 = vmatpush1.msra.mxu0 %v6269
        %v6271 = vand.u32 %v538, 4294901760
        %v6272 = vsub.f32 %v538, %v6271
        %v6273 = vand.u32 %v6272, 4294901760
        %6274 = vmatprep.subr.mxu0 %v6273
        %v6275 = vand.u32 %v537, 4294901760
        %v6276 = vsub.f32 %v537, %v6275
        %v6277 = vand.u32 %v6276, 4294901760
        %6278 = vmatpush1.msra.mxu0 %v6277
        %v6279 = vand.u32 %v540, 4294901760
        %v6280 = vsub.f32 %v540, %v6279
        %v6281 = vand.u32 %v6280, 4294901760
        %6282 = vmatprep.subr.mxu0 %v6281
        %v6283 = vand.u32 %v539, 4294901760
        %v6284 = vsub.f32 %v539, %v6283
        %v6285 = vand.u32 %v6284, 4294901760
        %6286 = vmatpush1.msra.mxu0 %v6285
        %v6287 = vand.u32 %v542, 4294901760
        %v6288 = vsub.f32 %v542, %v6287
        %v6289 = vand.u32 %v6288, 4294901760
        %6290 = vmatprep.subr.mxu0 %v6289
        %v6291 = vand.u32 %v541, 4294901760
        %v6292 = vsub.f32 %v541, %v6291
        %v6293 = vand.u32 %v6292, 4294901760
        %6294 = vmatpush1.msra.mxu0 %v6293
        %v6295 = vand.u32 %v544, 4294901760
        %v6296 = vsub.f32 %v544, %v6295
        %v6297 = vand.u32 %v6296, 4294901760
        %6298 = vmatprep.subr.mxu0 %v6297
        %v6299 = vand.u32 %v543, 4294901760
        %v6300 = vsub.f32 %v543, %v6299
        %v6301 = vand.u32 %v6300, 4294901760
        %6302 = vmatpush1.msra.mxu0 %v6301
        %v6303 = vand.u32 %v546, 4294901760
        %v6304 = vsub.f32 %v546, %v6303
        %v6305 = vand.u32 %v6304, 4294901760
        %6306 = vmatprep.subr.mxu0 %v6305
        %v6307 = vand.u32 %v545, 4294901760
        %v6308 = vsub.f32 %v545, %v6307
        %v6309 = vand.u32 %v6308, 4294901760
        %6310 = vmatpush1.msra.mxu0 %v6309
        %v6311 = vand.u32 %v548, 4294901760
        %v6312 = vsub.f32 %v548, %v6311
        %v6313 = vand.u32 %v6312, 4294901760
        %6314 = vmatprep.subr.mxu0 %v6313
        %v6315 = vand.u32 %v547, 4294901760
        %v6316 = vsub.f32 %v547, %v6315
        %v6317 = vand.u32 %v6316, 4294901760
        %6318 = vmatpush1.msra.mxu0 %v6317
        %v6319 = vand.u32 %v296, 4294901760
        %6320 = vmatprep.mubr.f32.mxu0 %v6319
        %v6321 = vand.u32 %v295, 4294901760
        %6322 = vmatmul.mubr.f32.gmra.mrb[0].mxu0 %v6321
        %v6323 = vpop.f32.mrb[0].mxu0
        %v6324 = vadd.f32 %v5687, %v6323
        %v6325 = vpop.f32.mrb[0].mxu0
        %v6326 = vadd.f32 %v5689, %v6325
        %v6327 = vand.u32 %v300, 4294901760
        %6328 = vmatprep.mubr.f32.mxu0 %v6327
        %v6329 = vand.u32 %v299, 4294901760
        %6330 = vmatmul.mubr.f32.gmra.mrb[0].mxu0 %v6329
        %v6331 = vpop.f32.mrb[0].mxu0
        %v6332 = vadd.f32 %v5699, %v6331
        %v6333 = vpop.f32.mrb[0].mxu0
        %v6334 = vadd.f32 %v5701, %v6333
        %v6335 = vand.u32 %v304, 4294901760
        %6336 = vmatprep.mubr.f32.mxu0 %v6335
        %v6337 = vand.u32 %v303, 4294901760
        %6338 = vmatmul.mubr.f32.gmra.mrb[0].mxu0 %v6337
        %v6339 = vpop.f32.mrb[0].mxu0
        %v6340 = vadd.f32 %v5711, %v6339
        %v6341 = vpop.f32.mrb[0].mxu0
        %v6342 = vadd.f32 %v5713, %v6341
        %v6343 = vand.u32 %v308, 4294901760
        %6344 = vmatprep.mubr.f32.mxu0 %v6343
        %v6345 = vand.u32 %v307, 4294901760
        %6346 = vmatmul.mubr.f32.gmra.mrb[0].mxu0 %v6345
        %v6347 = vpop.f32.mrb[0].mxu0
        %v6348 = vadd.f32 %v5723, %v6347
        %v6349 = vpop.f32.mrb[0].mxu0
        %v6350 = vadd.f32 %v5725, %v6349
        %v6351 = vand.u32 %v312, 4294901760
        %6352 = vmatprep.mubr.f32.mxu0 %v6351
        %v6353 = vand.u32 %v311, 4294901760
        %6354 = vmatmul.mubr.f32.gmra.mrb[0].mxu0 %v6353
        %v6355 = vpop.f32.mrb[0].mxu0
        %v6356 = vadd.f32 %v5735, %v6355
        %v6357 = vpop.f32.mrb[0].mxu0
        %v6358 = vadd.f32 %v5737, %v6357
        %v6359 = vand.u32 %v316, 4294901760
        %6360 = vmatprep.mubr.f32.mxu0 %v6359
        %v6361 = vand.u32 %v315, 4294901760
        %6362 = vmatmul.mubr.f32.gmra.mrb[0].mxu0 %v6361
        %v6363 = vpop.f32.mrb[0].mxu0
        %v6364 = vadd.f32 %v5747, %v6363
        %v6365 = vpop.f32.mrb[0].mxu0
        %v6366 = vadd.f32 %v5749, %v6365
        %v6367 = vand.u32 %v320, 4294901760
        %6368 = vmatprep.mubr.f32.mxu0 %v6367
        %v6369 = vand.u32 %v319, 4294901760
        %6370 = vmatmul.mubr.f32.gmra.mrb[0].mxu0 %v6369
        %v6371 = vpop.f32.mrb[0].mxu0
        %v6372 = vadd.f32 %v5759, %v6371
        %v6373 = vpop.f32.mrb[0].mxu0
        %v6374 = vadd.f32 %v5761, %v6373
        %v6375 = vand.u32 %v324, 4294901760
        %6376 = vmatprep.mubr.f32.mxu0 %v6375
        %v6377 = vand.u32 %v323, 4294901760
        %6378 = vmatmul.mubr.f32.gmra.mrb[0].mxu0 %v6377
        %v6379 = vpop.f32.mrb[0].mxu0
        %v6380 = vadd.f32 %v5771, %v6379
        %v6381 = vpop.f32.mrb[0].mxu0
        %v6382 = vadd.f32 %v5773, %v6381
        %v6383 = vand.u32 %v328, 4294901760
        %6384 = vmatprep.mubr.f32.mxu0 %v6383
        %v6385 = vand.u32 %v327, 4294901760
        %6386 = vmatmul.mubr.f32.gmra.mrb[0].mxu0 %v6385
        %v6387 = vpop.f32.mrb[0].mxu0
        %v6388 = vadd.f32 %v5783, %v6387
        %v6389 = vpop.f32.mrb[0].mxu0
        %v6390 = vadd.f32 %v5785, %v6389
        %v6391 = vand.u32 %v332, 4294901760
        %6392 = vmatprep.mubr.f32.mxu0 %v6391
        %v6393 = vand.u32 %v331, 4294901760
        %6394 = vmatmul.mubr.f32.gmra.mrb[0].mxu0 %v6393
        %v6395 = vpop.f32.mrb[0].mxu0
        %v6396 = vadd.f32 %v5795, %v6395
        %v6397 = vpop.f32.mrb[0].mxu0
        %v6398 = vadd.f32 %v5797, %v6397
        %v6399 = vand.u32 %v336, 4294901760
        %6400 = vmatprep.mubr.f32.mxu0 %v6399
        %v6401 = vand.u32 %v335, 4294901760
        %6402 = vmatmul.mubr.f32.gmra.mrb[0].mxu0 %v6401
        %v6403 = vpop.f32.mrb[0].mxu0
        %v6404 = vadd.f32 %v5807, %v6403
        %v6405 = vpop.f32.mrb[0].mxu0
        %v6406 = vadd.f32 %v5809, %v6405
        %v6407 = vand.u32 %v340, 4294901760
        %6408 = vmatprep.mubr.f32.mxu0 %v6407
        %v6409 = vand.u32 %v339, 4294901760
        %6410 = vmatmul.mubr.f32.gmra.mrb[0].mxu0 %v6409
        %v6411 = vpop.f32.mrb[0].mxu0
        %v6412 = vadd.f32 %v5819, %v6411
        %v6413 = vpop.f32.mrb[0].mxu0
        %v6414 = vadd.f32 %v5821, %v6413
        %v6415 = vand.u32 %v344, 4294901760
        %6416 = vmatprep.mubr.f32.mxu0 %v6415
        %v6417 = vand.u32 %v343, 4294901760
        %6418 = vmatmul.mubr.f32.gmra.mrb[0].mxu0 %v6417
        %v6419 = vpop.f32.mrb[0].mxu0
        %v6420 = vadd.f32 %v5831, %v6419
        %v6421 = vpop.f32.mrb[0].mxu0
        %v6422 = vadd.f32 %v5833, %v6421
        %v6423 = vand.u32 %v348, 4294901760
        %6424 = vmatprep.mubr.f32.mxu0 %v6423
        %v6425 = vand.u32 %v347, 4294901760
        %6426 = vmatmul.mubr.f32.gmra.mrb[0].mxu0 %v6425
        %v6427 = vpop.f32.mrb[0].mxu0
        %v6428 = vadd.f32 %v5843, %v6427
        %v6429 = vpop.f32.mrb[0].mxu0
        %v6430 = vadd.f32 %v5845, %v6429
        %v6431 = vand.u32 %v352, 4294901760
        %6432 = vmatprep.mubr.f32.mxu0 %v6431
        %v6433 = vand.u32 %v351, 4294901760
        %6434 = vmatmul.mubr.f32.gmra.mrb[0].mxu0 %v6433
        %v6435 = vpop.f32.mrb[0].mxu0
        %v6436 = vadd.f32 %v5855, %v6435
        %v6437 = vpop.f32.mrb[0].mxu0
        %v6438 = vadd.f32 %v5857, %v6437
        %v6439 = vand.u32 %v356, 4294901760
        %6440 = vmatprep.mubr.f32.mxu0 %v6439
        %v6441 = vand.u32 %v355, 4294901760
        %6442 = vmatmul.mubr.f32.gmra.mrb[0].mxu0 %v6441
        %v6443 = vpop.f32.mrb[0].mxu0
        %v6444 = vadd.f32 %v5867, %v6443
        %v6445 = vpop.f32.mrb[0].mxu0
        %v6446 = vadd.f32 %v5869, %v6445
        %v6447 = vand.u32 %v360, 4294901760
        %6448 = vmatprep.mubr.f32.mxu0 %v6447
        %v6449 = vand.u32 %v359, 4294901760
        %6450 = vmatmul.mubr.f32.gmra.mrb[0].mxu0 %v6449
        %v6451 = vpop.f32.mrb[0].mxu0
        %v6452 = vadd.f32 %v5879, %v6451
        %v6453 = vpop.f32.mrb[0].mxu0
        %v6454 = vadd.f32 %v5881, %v6453
        %v6455 = vand.u32 %v364, 4294901760
        %6456 = vmatprep.mubr.f32.mxu0 %v6455
        %v6457 = vand.u32 %v363, 4294901760
        %6458 = vmatmul.mubr.f32.gmra.mrb[0].mxu0 %v6457
        %v6459 = vpop.f32.mrb[0].mxu0
        %v6460 = vadd.f32 %v5891, %v6459
        %v6461 = vpop.f32.mrb[0].mxu0
        %v6462 = vadd.f32 %v5893, %v6461
        %v6463 = vand.u32 %v368, 4294901760
        %6464 = vmatprep.mubr.f32.mxu0 %v6463
        %v6465 = vand.u32 %v367, 4294901760
        %6466 = vmatmul.mubr.f32.gmra.mrb[0].mxu0 %v6465
        %v6467 = vpop.f32.mrb[0].mxu0
        %v6468 = vadd.f32 %v5903, %v6467
        %v6469 = vpop.f32.mrb[0].mxu0
        %v6470 = vadd.f32 %v5905, %v6469
        %v6471 = vand.u32 %v372, 4294901760
        %6472 = vmatprep.mubr.f32.mxu0 %v6471
        %v6473 = vand.u32 %v371, 4294901760
        %6474 = vmatmul.mubr.f32.gmra.mrb[0].mxu0 %v6473
        %v6475 = vpop.f32.mrb[0].mxu0
        %v6476 = vadd.f32 %v5915, %v6475
        %v6477 = vpop.f32.mrb[0].mxu0
        %v6478 = vadd.f32 %v5917, %v6477
        %v6479 = vand.u32 %v376, 4294901760
        %6480 = vmatprep.mubr.f32.mxu0 %v6479
        %v6481 = vand.u32 %v375, 4294901760
        %6482 = vmatmul.mubr.f32.gmra.mrb[0].mxu0 %v6481
        %v6483 = vpop.f32.mrb[0].mxu0
        %v6484 = vadd.f32 %v5927, %v6483
        %v6485 = vpop.f32.mrb[0].mxu0
        %v6486 = vadd.f32 %v5929, %v6485
        %v6487 = vand.u32 %v380, 4294901760
        %6488 = vmatprep.mubr.f32.mxu0 %v6487
        %v6489 = vand.u32 %v379, 4294901760
        %6490 = vmatmul.mubr.f32.gmra.mrb[0].mxu0 %v6489
        %v6491 = vpop.f32.mrb[0].mxu0
        %v6492 = vadd.f32 %v5939, %v6491
        %v6493 = vpop.f32.mrb[0].mxu0
        %v6494 = vadd.f32 %v5941, %v6493
        %v6495 = vand.u32 %v384, 4294901760
        %6496 = vmatprep.mubr.f32.mxu0 %v6495
        %v6497 = vand.u32 %v383, 4294901760
        %6498 = vmatmul.mubr.f32.gmra.mrb[0].mxu0 %v6497
        %v6499 = vpop.f32.mrb[0].mxu0
        %v6500 = vadd.f32 %v5951, %v6499
        %v6501 = vpop.f32.mrb[0].mxu0
        %v6502 = vadd.f32 %v5953, %v6501
        %v6503 = vand.u32 %v388, 4294901760
        %6504 = vmatprep.mubr.f32.mxu0 %v6503
        %v6505 = vand.u32 %v387, 4294901760
        %6506 = vmatmul.mubr.f32.gmra.mrb[0].mxu0 %v6505
        %v6507 = vpop.f32.mrb[0].mxu0
        %v6508 = vadd.f32 %v5963, %v6507
        %v6509 = vpop.f32.mrb[0].mxu0
        %v6510 = vadd.f32 %v5965, %v6509
        %v6511 = vand.u32 %v392, 4294901760
        %6512 = vmatprep.mubr.f32.mxu0 %v6511
        %v6513 = vand.u32 %v391, 4294901760
        %6514 = vmatmul.mubr.f32.gmra.mrb[0].mxu0 %v6513
        %v6515 = vpop.f32.mrb[0].mxu0
        %v6516 = vadd.f32 %v5975, %v6515
        %v6517 = vpop.f32.mrb[0].mxu0
        %v6518 = vadd.f32 %v5977, %v6517
        %v6519 = vand.u32 %v396, 4294901760
        %6520 = vmatprep.mubr.f32.mxu0 %v6519
        %v6521 = vand.u32 %v395, 4294901760
        %6522 = vmatmul.mubr.f32.gmra.mrb[0].mxu0 %v6521
        %v6523 = vpop.f32.mrb[0].mxu0
        %v6524 = vadd.f32 %v5987, %v6523
        %v6525 = vpop.f32.mrb[0].mxu0
        %v6526 = vadd.f32 %v5989, %v6525
        %v6527 = vand.u32 %v400, 4294901760
        %6528 = vmatprep.mubr.f32.mxu0 %v6527
        %v6529 = vand.u32 %v399, 4294901760
        %6530 = vmatmul.mubr.f32.gmra.mrb[0].mxu0 %v6529
        %v6531 = vpop.f32.mrb[0].mxu0
        %v6532 = vadd.f32 %v5999, %v6531
        %v6533 = vpop.f32.mrb[0].mxu0
        %v6534 = vadd.f32 %v6001, %v6533
        %v6535 = vand.u32 %v404, 4294901760
        %6536 = vmatprep.mubr.f32.mxu0 %v6535
        %v6537 = vand.u32 %v403, 4294901760
        %6538 = vmatmul.mubr.f32.gmra.mrb[0].mxu0 %v6537
        %v6539 = vpop.f32.mrb[0].mxu0
        %v6540 = vadd.f32 %v6011, %v6539
        %v6541 = vpop.f32.mrb[0].mxu0
        %v6542 = vadd.f32 %v6013, %v6541
        %v6543 = vand.u32 %v408, 4294901760
        %6544 = vmatprep.mubr.f32.mxu0 %v6543
        %v6545 = vand.u32 %v407, 4294901760
        %6546 = vmatmul.mubr.f32.gmra.mrb[0].mxu0 %v6545
        %v6547 = vpop.f32.mrb[0].mxu0
        %v6548 = vadd.f32 %v6023, %v6547
        %v6549 = vpop.f32.mrb[0].mxu0
        %v6550 = vadd.f32 %v6025, %v6549
        %v6551 = vand.u32 %v412, 4294901760
        %6552 = vmatprep.mubr.f32.mxu0 %v6551
        %v6553 = vand.u32 %v411, 4294901760
        %6554 = vmatmul.mubr.f32.gmra.mrb[0].mxu0 %v6553
        %v6555 = vpop.f32.mrb[0].mxu0
        %v6556 = vadd.f32 %v6035, %v6555
        %v6557 = vpop.f32.mrb[0].mxu0
        %v6558 = vadd.f32 %v6037, %v6557
        %v6559 = vand.u32 %v416, 4294901760
        %6560 = vmatprep.mubr.f32.mxu0 %v6559
        %v6561 = vand.u32 %v415, 4294901760
        %6562 = vmatmul.mubr.f32.gmra.mrb[0].mxu0 %v6561
        %v6563 = vpop.f32.mrb[0].mxu0
        %v6564 = vadd.f32 %v6047, %v6563
        %v6565 = vpop.f32.mrb[0].mxu0
        %v6566 = vadd.f32 %v6049, %v6565
        %v6567 = vand.u32 %v420, 4294901760
        %6568 = vmatprep.mubr.f32.mxu0 %v6567
        %v6569 = vand.u32 %v419, 4294901760
        %6570 = vmatmul.mubr.f32.gmra.mrb[0].mxu0 %v6569
        %v6571 = vpop.f32.mrb[0].mxu0
        %v6572 = vadd.f32 %v6059, %v6571
        %v6573 = vpop.f32.mrb[0].mxu0
        %v6574 = vadd.f32 %v6061, %v6573
        %6575 = vdwg.mxu0
        %v6576 = vand.u32 %v486, 4294901760
        %6577 = vmatprep.subr.mxu0 %v6576
        %v6578 = vand.u32 %v485, 4294901760
        %6579 = vmatpush1.msra.mxu0 %v6578
        %v6580 = vand.u32 %v488, 4294901760
        %6581 = vmatprep.subr.mxu0 %v6580
        %v6582 = vand.u32 %v487, 4294901760
        %6583 = vmatpush1.msra.mxu0 %v6582
        %v6584 = vand.u32 %v490, 4294901760
        %6585 = vmatprep.subr.mxu0 %v6584
        %v6586 = vand.u32 %v489, 4294901760
        %6587 = vmatpush1.msra.mxu0 %v6586
        %v6588 = vand.u32 %v492, 4294901760
        %6589 = vmatprep.subr.mxu0 %v6588
        %v6590 = vand.u32 %v491, 4294901760
        %6591 = vmatpush1.msra.mxu0 %v6590
        %v6592 = vand.u32 %v494, 4294901760
        %6593 = vmatprep.subr.mxu0 %v6592
        %v6594 = vand.u32 %v493, 4294901760
        %6595 = vmatpush1.msra.mxu0 %v6594
        %v6596 = vand.u32 %v496, 4294901760
        %6597 = vmatprep.subr.mxu0 %v6596
        %v6598 = vand.u32 %v495, 4294901760
        %6599 = vmatpush1.msra.mxu0 %v6598
        %v6600 = vand.u32 %v498, 4294901760
        %6601 = vmatprep.subr.mxu0 %v6600
        %v6602 = vand.u32 %v497, 4294901760
        %6603 = vmatpush1.msra.mxu0 %v6602
        %v6604 = vand.u32 %v500, 4294901760
        %6605 = vmatprep.subr.mxu0 %v6604
        %v6606 = vand.u32 %v499, 4294901760
        %6607 = vmatpush1.msra.mxu0 %v6606
        %v6608 = vand.u32 %v502, 4294901760
        %6609 = vmatprep.subr.mxu0 %v6608
        %v6610 = vand.u32 %v501, 4294901760
        %6611 = vmatpush1.msra.mxu0 %v6610
        %v6612 = vand.u32 %v504, 4294901760
        %6613 = vmatprep.subr.mxu0 %v6612
        %v6614 = vand.u32 %v503, 4294901760
        %6615 = vmatpush1.msra.mxu0 %v6614
        %v6616 = vand.u32 %v506, 4294901760
        %6617 = vmatprep.subr.mxu0 %v6616
        %v6618 = vand.u32 %v505, 4294901760
        %6619 = vmatpush1.msra.mxu0 %v6618
        %v6620 = vand.u32 %v508, 4294901760
        %6621 = vmatprep.subr.mxu0 %v6620
        %v6622 = vand.u32 %v507, 4294901760
        %6623 = vmatpush1.msra.mxu0 %v6622
        %v6624 = vand.u32 %v510, 4294901760
        %6625 = vmatprep.subr.mxu0 %v6624
        %v6626 = vand.u32 %v509, 4294901760
        %6627 = vmatpush1.msra.mxu0 %v6626
        %v6628 = vand.u32 %v512, 4294901760
        %6629 = vmatprep.subr.mxu0 %v6628
        %v6630 = vand.u32 %v511, 4294901760
        %6631 = vmatpush1.msra.mxu0 %v6630
        %v6632 = vand.u32 %v514, 4294901760
        %6633 = vmatprep.subr.mxu0 %v6632
        %v6634 = vand.u32 %v513, 4294901760
        %6635 = vmatpush1.msra.mxu0 %v6634
        %v6636 = vand.u32 %v516, 4294901760
        %6637 = vmatprep.subr.mxu0 %v6636
        %v6638 = vand.u32 %v515, 4294901760
        %6639 = vmatpush1.msra.mxu0 %v6638
        %v6640 = vand.u32 %v518, 4294901760
        %6641 = vmatprep.subr.mxu0 %v6640
        %v6642 = vand.u32 %v517, 4294901760
        %6643 = vmatpush1.msra.mxu0 %v6642
        %v6644 = vand.u32 %v520, 4294901760
        %6645 = vmatprep.subr.mxu0 %v6644
        %v6646 = vand.u32 %v519, 4294901760
        %6647 = vmatpush1.msra.mxu0 %v6646
        %v6648 = vand.u32 %v522, 4294901760
        %6649 = vmatprep.subr.mxu0 %v6648
        %v6650 = vand.u32 %v521, 4294901760
        %6651 = vmatpush1.msra.mxu0 %v6650
        %v6652 = vand.u32 %v524, 4294901760
        %6653 = vmatprep.subr.mxu0 %v6652
        %v6654 = vand.u32 %v523, 4294901760
        %6655 = vmatpush1.msra.mxu0 %v6654
        %v6656 = vand.u32 %v526, 4294901760
        %6657 = vmatprep.subr.mxu0 %v6656
        %v6658 = vand.u32 %v525, 4294901760
        %6659 = vmatpush1.msra.mxu0 %v6658
        %v6660 = vand.u32 %v528, 4294901760
        %6661 = vmatprep.subr.mxu0 %v6660
        %v6662 = vand.u32 %v527, 4294901760
        %6663 = vmatpush1.msra.mxu0 %v6662
        %v6664 = vand.u32 %v530, 4294901760
        %6665 = vmatprep.subr.mxu0 %v6664
        %v6666 = vand.u32 %v529, 4294901760
        %6667 = vmatpush1.msra.mxu0 %v6666
        %v6668 = vand.u32 %v532, 4294901760
        %6669 = vmatprep.subr.mxu0 %v6668
        %v6670 = vand.u32 %v531, 4294901760
        %6671 = vmatpush1.msra.mxu0 %v6670
        %v6672 = vand.u32 %v534, 4294901760
        %6673 = vmatprep.subr.mxu0 %v6672
        %v6674 = vand.u32 %v533, 4294901760
        %6675 = vmatpush1.msra.mxu0 %v6674
        %v6676 = vand.u32 %v536, 4294901760
        %6677 = vmatprep.subr.mxu0 %v6676
        %v6678 = vand.u32 %v535, 4294901760
        %6679 = vmatpush1.msra.mxu0 %v6678
        %v6680 = vand.u32 %v538, 4294901760
        %6681 = vmatprep.subr.mxu0 %v6680
        %v6682 = vand.u32 %v537, 4294901760
        %6683 = vmatpush1.msra.mxu0 %v6682
        %v6684 = vand.u32 %v540, 4294901760
        %6685 = vmatprep.subr.mxu0 %v6684
        %v6686 = vand.u32 %v539, 4294901760
        %6687 = vmatpush1.msra.mxu0 %v6686
        %v6688 = vand.u32 %v542, 4294901760
        %6689 = vmatprep.subr.mxu0 %v6688
        %v6690 = vand.u32 %v541, 4294901760
        %6691 = vmatpush1.msra.mxu0 %v6690
        %v6692 = vand.u32 %v544, 4294901760
        %6693 = vmatprep.subr.mxu0 %v6692
        %v6694 = vand.u32 %v543, 4294901760
        %6695 = vmatpush1.msra.mxu0 %v6694
        %v6696 = vand.u32 %v546, 4294901760
        %6697 = vmatprep.subr.mxu0 %v6696
        %v6698 = vand.u32 %v545, 4294901760
        %6699 = vmatpush1.msra.mxu0 %v6698
        %v6700 = vand.u32 %v548, 4294901760
        %6701 = vmatprep.subr.mxu0 %v6700
        %v6702 = vand.u32 %v547, 4294901760
        %6703 = vmatpush1.msra.mxu0 %v6702
        %v6704 = vand.u32 %v296, 4294901760
        %6705 = vmatprep.mubr.f32.mxu0 %v6704
        %v6706 = vand.u32 %v295, 4294901760
        %6707 = vmatmul.mubr.f32.gmra.mrb[0].mxu0 %v6706
        %v6708 = vpop.f32.mrb[0].mxu0
        %v6709 = vadd.f32 %v6324, %v6708
        %v6710 = vpop.f32.mrb[0].mxu0
        %v6711 = vadd.f32 %v6326, %v6710
        %v6712 = vand.u32 %v300, 4294901760
        %6713 = vmatprep.mubr.f32.mxu0 %v6712
        %v6714 = vand.u32 %v299, 4294901760
        %6715 = vmatmul.mubr.f32.gmra.mrb[0].mxu0 %v6714
        %v6716 = vpop.f32.mrb[0].mxu0
        %v6717 = vadd.f32 %v6332, %v6716
        %v6718 = vpop.f32.mrb[0].mxu0
        %v6719 = vadd.f32 %v6334, %v6718
        %v6720 = vand.u32 %v304, 4294901760
        %6721 = vmatprep.mubr.f32.mxu0 %v6720
        %v6722 = vand.u32 %v303, 4294901760
        %6723 = vmatmul.mubr.f32.gmra.mrb[0].mxu0 %v6722
        %v6724 = vpop.f32.mrb[0].mxu0
        %v6725 = vadd.f32 %v6340, %v6724
        %v6726 = vpop.f32.mrb[0].mxu0
        %v6727 = vadd.f32 %v6342, %v6726
        %v6728 = vand.u32 %v308, 4294901760
        %6729 = vmatprep.mubr.f32.mxu0 %v6728
        %v6730 = vand.u32 %v307, 4294901760
        %6731 = vmatmul.mubr.f32.gmra.mrb[0].mxu0 %v6730
        %v6732 = vpop.f32.mrb[0].mxu0
        %v6733 = vadd.f32 %v6348, %v6732
        %v6734 = vpop.f32.mrb[0].mxu0
        %v6735 = vadd.f32 %v6350, %v6734
        %v6736 = vand.u32 %v312, 4294901760
        %6737 = vmatprep.mubr.f32.mxu0 %v6736
        %v6738 = vand.u32 %v311, 4294901760
        %6739 = vmatmul.mubr.f32.gmra.mrb[0].mxu0 %v6738
        %v6740 = vpop.f32.mrb[0].mxu0
        %v6741 = vadd.f32 %v6356, %v6740
        %v6742 = vpop.f32.mrb[0].mxu0
        %v6743 = vadd.f32 %v6358, %v6742
        %v6744 = vand.u32 %v316, 4294901760
        %6745 = vmatprep.mubr.f32.mxu0 %v6744
        %v6746 = vand.u32 %v315, 4294901760
        %6747 = vmatmul.mubr.f32.gmra.mrb[0].mxu0 %v6746
        %v6748 = vpop.f32.mrb[0].mxu0
        %v6749 = vadd.f32 %v6364, %v6748
        %v6750 = vpop.f32.mrb[0].mxu0
        %v6751 = vadd.f32 %v6366, %v6750
        %v6752 = vand.u32 %v320, 4294901760
        %6753 = vmatprep.mubr.f32.mxu0 %v6752
        %v6754 = vand.u32 %v319, 4294901760
        %6755 = vmatmul.mubr.f32.gmra.mrb[0].mxu0 %v6754
        %v6756 = vpop.f32.mrb[0].mxu0
        %v6757 = vadd.f32 %v6372, %v6756
        %v6758 = vpop.f32.mrb[0].mxu0
        %v6759 = vadd.f32 %v6374, %v6758
        %v6760 = vand.u32 %v324, 4294901760
        %6761 = vmatprep.mubr.f32.mxu0 %v6760
        %v6762 = vand.u32 %v323, 4294901760
        %6763 = vmatmul.mubr.f32.gmra.mrb[0].mxu0 %v6762
        %v6764 = vpop.f32.mrb[0].mxu0
        %v6765 = vadd.f32 %v6380, %v6764
        %v6766 = vpop.f32.mrb[0].mxu0
        %v6767 = vadd.f32 %v6382, %v6766
        %v6768 = vand.u32 %v328, 4294901760
        %6769 = vmatprep.mubr.f32.mxu0 %v6768
        %v6770 = vand.u32 %v327, 4294901760
        %6771 = vmatmul.mubr.f32.gmra.mrb[0].mxu0 %v6770
        %v6772 = vpop.f32.mrb[0].mxu0
        %v6773 = vadd.f32 %v6388, %v6772
        %v6774 = vpop.f32.mrb[0].mxu0
        %v6775 = vadd.f32 %v6390, %v6774
        %v6776 = vand.u32 %v332, 4294901760
        %6777 = vmatprep.mubr.f32.mxu0 %v6776
        %v6778 = vand.u32 %v331, 4294901760
        %6779 = vmatmul.mubr.f32.gmra.mrb[0].mxu0 %v6778
        %v6780 = vpop.f32.mrb[0].mxu0
        %v6781 = vadd.f32 %v6396, %v6780
        %v6782 = vpop.f32.mrb[0].mxu0
        %v6783 = vadd.f32 %v6398, %v6782
        %v6784 = vand.u32 %v336, 4294901760
        %6785 = vmatprep.mubr.f32.mxu0 %v6784
        %v6786 = vand.u32 %v335, 4294901760
        %6787 = vmatmul.mubr.f32.gmra.mrb[0].mxu0 %v6786
        %v6788 = vpop.f32.mrb[0].mxu0
        %v6789 = vadd.f32 %v6404, %v6788
        %v6790 = vpop.f32.mrb[0].mxu0
        %v6791 = vadd.f32 %v6406, %v6790
        %v6792 = vand.u32 %v340, 4294901760
        %6793 = vmatprep.mubr.f32.mxu0 %v6792
        %v6794 = vand.u32 %v339, 4294901760
        %6795 = vmatmul.mubr.f32.gmra.mrb[0].mxu0 %v6794
        %v6796 = vpop.f32.mrb[0].mxu0
        %v6797 = vadd.f32 %v6412, %v6796
        %v6798 = vpop.f32.mrb[0].mxu0
        %v6799 = vadd.f32 %v6414, %v6798
        %v6800 = vand.u32 %v344, 4294901760
        %6801 = vmatprep.mubr.f32.mxu0 %v6800
        %v6802 = vand.u32 %v343, 4294901760
        %6803 = vmatmul.mubr.f32.gmra.mrb[0].mxu0 %v6802
        %v6804 = vpop.f32.mrb[0].mxu0
        %v6805 = vadd.f32 %v6420, %v6804
        %v6806 = vpop.f32.mrb[0].mxu0
        %v6807 = vadd.f32 %v6422, %v6806
        %v6808 = vand.u32 %v348, 4294901760
        %6809 = vmatprep.mubr.f32.mxu0 %v6808
        %v6810 = vand.u32 %v347, 4294901760
        %6811 = vmatmul.mubr.f32.gmra.mrb[0].mxu0 %v6810
        %v6812 = vpop.f32.mrb[0].mxu0
        %v6813 = vadd.f32 %v6428, %v6812
        %v6814 = vpop.f32.mrb[0].mxu0
        %v6815 = vadd.f32 %v6430, %v6814
        %v6816 = vand.u32 %v352, 4294901760
        %6817 = vmatprep.mubr.f32.mxu0 %v6816
        %v6818 = vand.u32 %v351, 4294901760
        %6819 = vmatmul.mubr.f32.gmra.mrb[0].mxu0 %v6818
        %v6820 = vpop.f32.mrb[0].mxu0
        %v6821 = vadd.f32 %v6436, %v6820
        %v6822 = vpop.f32.mrb[0].mxu0
        %v6823 = vadd.f32 %v6438, %v6822
        %v6824 = vand.u32 %v356, 4294901760
        %6825 = vmatprep.mubr.f32.mxu0 %v6824
        %v6826 = vand.u32 %v355, 4294901760
        %6827 = vmatmul.mubr.f32.gmra.mrb[0].mxu0 %v6826
        %v6828 = vpop.f32.mrb[0].mxu0
        %v6829 = vadd.f32 %v6444, %v6828
        %v6830 = vpop.f32.mrb[0].mxu0
        %v6831 = vadd.f32 %v6446, %v6830
        %v6832 = vand.u32 %v360, 4294901760
        %6833 = vmatprep.mubr.f32.mxu0 %v6832
        %v6834 = vand.u32 %v359, 4294901760
        %6835 = vmatmul.mubr.f32.gmra.mrb[0].mxu0 %v6834
        %v6836 = vpop.f32.mrb[0].mxu0
        %v6837 = vadd.f32 %v6452, %v6836
        %v6838 = vpop.f32.mrb[0].mxu0
        %v6839 = vadd.f32 %v6454, %v6838
        %v6840 = vand.u32 %v364, 4294901760
        %6841 = vmatprep.mubr.f32.mxu0 %v6840
        %v6842 = vand.u32 %v363, 4294901760
        %6843 = vmatmul.mubr.f32.gmra.mrb[0].mxu0 %v6842
        %v6844 = vpop.f32.mrb[0].mxu0
        %v6845 = vadd.f32 %v6460, %v6844
        %v6846 = vpop.f32.mrb[0].mxu0
        %v6847 = vadd.f32 %v6462, %v6846
        %v6848 = vand.u32 %v368, 4294901760
        %6849 = vmatprep.mubr.f32.mxu0 %v6848
        %v6850 = vand.u32 %v367, 4294901760
        %6851 = vmatmul.mubr.f32.gmra.mrb[0].mxu0 %v6850
        %v6852 = vpop.f32.mrb[0].mxu0
        %v6853 = vadd.f32 %v6468, %v6852
        %v6854 = vpop.f32.mrb[0].mxu0
        %v6855 = vadd.f32 %v6470, %v6854
        %v6856 = vand.u32 %v372, 4294901760
        %6857 = vmatprep.mubr.f32.mxu0 %v6856
        %v6858 = vand.u32 %v371, 4294901760
        %6859 = vmatmul.mubr.f32.gmra.mrb[0].mxu0 %v6858
        %v6860 = vpop.f32.mrb[0].mxu0
        %v6861 = vadd.f32 %v6476, %v6860
        %v6862 = vpop.f32.mrb[0].mxu0
        %v6863 = vadd.f32 %v6478, %v6862
        %v6864 = vand.u32 %v376, 4294901760
        %6865 = vmatprep.mubr.f32.mxu0 %v6864
        %v6866 = vand.u32 %v375, 4294901760
        %6867 = vmatmul.mubr.f32.gmra.mrb[0].mxu0 %v6866
        %v6868 = vpop.f32.mrb[0].mxu0
        %v6869 = vadd.f32 %v6484, %v6868
        %v6870 = vpop.f32.mrb[0].mxu0
        %v6871 = vadd.f32 %v6486, %v6870
        %v6872 = vand.u32 %v380, 4294901760
        %6873 = vmatprep.mubr.f32.mxu0 %v6872
        %v6874 = vand.u32 %v379, 4294901760
        %6875 = vmatmul.mubr.f32.gmra.mrb[0].mxu0 %v6874
        %v6876 = vpop.f32.mrb[0].mxu0
        %v6877 = vadd.f32 %v6492, %v6876
        %v6878 = vpop.f32.mrb[0].mxu0
        %v6879 = vadd.f32 %v6494, %v6878
        %v6880 = vand.u32 %v384, 4294901760
        %6881 = vmatprep.mubr.f32.mxu0 %v6880
        %v6882 = vand.u32 %v383, 4294901760
        %6883 = vmatmul.mubr.f32.gmra.mrb[0].mxu0 %v6882
        %v6884 = vpop.f32.mrb[0].mxu0
        %v6885 = vadd.f32 %v6500, %v6884
        %v6886 = vpop.f32.mrb[0].mxu0
        %v6887 = vadd.f32 %v6502, %v6886
        %v6888 = vand.u32 %v388, 4294901760
        %6889 = vmatprep.mubr.f32.mxu0 %v6888
        %v6890 = vand.u32 %v387, 4294901760
        %6891 = vmatmul.mubr.f32.gmra.mrb[0].mxu0 %v6890
        %v6892 = vpop.f32.mrb[0].mxu0
        %v6893 = vadd.f32 %v6508, %v6892
        %v6894 = vpop.f32.mrb[0].mxu0
        %v6895 = vadd.f32 %v6510, %v6894
        %v6896 = vand.u32 %v392, 4294901760
        %6897 = vmatprep.mubr.f32.mxu0 %v6896
        %v6898 = vand.u32 %v391, 4294901760
        %6899 = vmatmul.mubr.f32.gmra.mrb[0].mxu0 %v6898
        %v6900 = vpop.f32.mrb[0].mxu0
        %v6901 = vadd.f32 %v6516, %v6900
        %v6902 = vpop.f32.mrb[0].mxu0
        %v6903 = vadd.f32 %v6518, %v6902
        %v6904 = vand.u32 %v396, 4294901760
        %6905 = vmatprep.mubr.f32.mxu0 %v6904
        %v6906 = vand.u32 %v395, 4294901760
        %6907 = vmatmul.mubr.f32.gmra.mrb[0].mxu0 %v6906
        %v6908 = vpop.f32.mrb[0].mxu0
        %v6909 = vadd.f32 %v6524, %v6908
        %v6910 = vpop.f32.mrb[0].mxu0
        %v6911 = vadd.f32 %v6526, %v6910
        %v6912 = vand.u32 %v400, 4294901760
        %6913 = vmatprep.mubr.f32.mxu0 %v6912
        %v6914 = vand.u32 %v399, 4294901760
        %6915 = vmatmul.mubr.f32.gmra.mrb[0].mxu0 %v6914
        %v6916 = vpop.f32.mrb[0].mxu0
        %v6917 = vadd.f32 %v6532, %v6916
        %v6918 = vpop.f32.mrb[0].mxu0
        %v6919 = vadd.f32 %v6534, %v6918
        %v6920 = vand.u32 %v404, 4294901760
        %6921 = vmatprep.mubr.f32.mxu0 %v6920
        %v6922 = vand.u32 %v403, 4294901760
        %6923 = vmatmul.mubr.f32.gmra.mrb[0].mxu0 %v6922
        %v6924 = vpop.f32.mrb[0].mxu0
        %v6925 = vadd.f32 %v6540, %v6924
        %v6926 = vpop.f32.mrb[0].mxu0
        %v6927 = vadd.f32 %v6542, %v6926
        %v6928 = vand.u32 %v408, 4294901760
        %6929 = vmatprep.mubr.f32.mxu0 %v6928
        %v6930 = vand.u32 %v407, 4294901760
        %6931 = vmatmul.mubr.f32.gmra.mrb[0].mxu0 %v6930
        %v6932 = vpop.f32.mrb[0].mxu0
        %v6933 = vadd.f32 %v6548, %v6932
        %v6934 = vpop.f32.mrb[0].mxu0
        %v6935 = vadd.f32 %v6550, %v6934
        %v6936 = vand.u32 %v412, 4294901760
        %6937 = vmatprep.mubr.f32.mxu0 %v6936
        %v6938 = vand.u32 %v411, 4294901760
        %6939 = vmatmul.mubr.f32.gmra.mrb[0].mxu0 %v6938
        %v6940 = vpop.f32.mrb[0].mxu0
        %v6941 = vadd.f32 %v6556, %v6940
        %v6942 = vpop.f32.mrb[0].mxu0
        %v6943 = vadd.f32 %v6558, %v6942
        %v6944 = vand.u32 %v416, 4294901760
        %6945 = vmatprep.mubr.f32.mxu0 %v6944
        %v6946 = vand.u32 %v415, 4294901760
        %6947 = vmatmul.mubr.f32.gmra.mrb[0].mxu0 %v6946
        %v6948 = vpop.f32.mrb[0].mxu0
        %v6949 = vadd.f32 %v6564, %v6948
        %v6950 = vpop.f32.mrb[0].mxu0
        %v6951 = vadd.f32 %v6566, %v6950
        %v6952 = vand.u32 %v420, 4294901760
        %6953 = vmatprep.mubr.f32.mxu0 %v6952
        %v6954 = vand.u32 %v419, 4294901760
        %6955 = vmatmul.mubr.f32.gmra.mrb[0].mxu0 %v6954
        %v6956 = vpop.f32.mrb[0].mxu0
        %v6957 = vadd.f32 %v6572, %v6956
        %v6958 = vpop.f32.mrb[0].mxu0
        %v6959 = vadd.f32 %v6574, %v6958
        %6960 = vdwg.mxu0
        %p6961 = scmp.eq.s32.totalorder %s28, 0
        // Predicated region
        $region45: #{mm_add.1} parent=31 // pred_check
          %p6962 = pneg %p6961
        $region46: #{mm_add.1} parent=31 // pred_check_branch
          %6964 = sbr.rel (%p6962) target = $region48
        $region47: #{mm_add.1} parent=31 // pred_region
          %v6965 = vld [vmem:[%s257] sm:$0xff]
          %v6966 = vld [vmem:[%s257 + $0x8] sm:$0xff]
          %v6967 = vld [vmem:[%s257 + $0x10] sm:$0xff]
          %v6968 = vld [vmem:[%s257 + $0x18] sm:$0xff]
          %v6969 = vld [vmem:[%s257 + $0x20] sm:$0xff]
          %v6970 = vld [vmem:[%s257 + $0x28] sm:$0xff]
          %v6971 = vld [vmem:[%s257 + $0x30] sm:$0xff]
          %v6972 = vld [vmem:[%s257 + $0x38] sm:$0xff]
          %v6973 = vld [vmem:[%s257 + $0x40] sm:$0xff]
          %v6974 = vld [vmem:[%s257 + $0x48] sm:$0xff]
          %v6975 = vld [vmem:[%s257 + $0x50] sm:$0xff]
          %v6976 = vld [vmem:[%s257 + $0x58] sm:$0xff]
          %v6977 = vld [vmem:[%s257 + $0x60] sm:$0xff]
          %v6978 = vld [vmem:[%s257 + $0x68] sm:$0xff]
          %v6979 = vld [vmem:[%s257 + $0x70] sm:$0xff]
          %v6980 = vld [vmem:[%s257 + $0x78] sm:$0xff]
          %v6981 = vld [vmem:[%s257 + $0x80] sm:$0xff]
          %v6982 = vld [vmem:[%s257 + $0x88] sm:$0xff]
          %v6983 = vld [vmem:[%s257 + $0x90] sm:$0xff]
          %v6984 = vld [vmem:[%s257 + $0x98] sm:$0xff]
          %v6985 = vld [vmem:[%s257 + $0xa0] sm:$0xff]
          %v6986 = vld [vmem:[%s257 + $0xa8] sm:$0xff]
          %v6987 = vld [vmem:[%s257 + $0xb0] sm:$0xff]
          %v6988 = vld [vmem:[%s257 + $0xb8] sm:$0xff]
          %v6989 = vld [vmem:[%s257 + $0xc0] sm:$0xff]
          %v6990 = vld [vmem:[%s257 + $0xc8] sm:$0xff]
          %v6991 = vld [vmem:[%s257 + $0xd0] sm:$0xff]
          %v6992 = vld [vmem:[%s257 + $0xd8] sm:$0xff]
          %v6993 = vld [vmem:[%s257 + $0xe0] sm:$0xff]
          %v6994 = vld [vmem:[%s257 + $0xe8] sm:$0xff]
          %v6995 = vld [vmem:[%s257 + $0xf0] sm:$0xff]
          %v6996 = vld [vmem:[%s257 + $0xf8] sm:$0xff]
          %v6997 = vld [vmem:[%s257 + $0x100] sm:$0xff]
          %v6998 = vld [vmem:[%s257 + $0x108] sm:$0xff]
          %v6999 = vld [vmem:[%s257 + $0x110] sm:$0xff]
          %v7000 = vld [vmem:[%s257 + $0x118] sm:$0xff]
          %v7001 = vld [vmem:[%s257 + $0x120] sm:$0xff]
          %v7002 = vld [vmem:[%s257 + $0x128] sm:$0xff]
          %v7003 = vld [vmem:[%s257 + $0x130] sm:$0xff]
          %v7004 = vld [vmem:[%s257 + $0x138] sm:$0xff]
          %v7005 = vld [vmem:[%s257 + $0x140] sm:$0xff]
          %v7006 = vld [vmem:[%s257 + $0x148] sm:$0xff]
          %v7007 = vld [vmem:[%s257 + $0x150] sm:$0xff]
          %v7008 = vld [vmem:[%s257 + $0x158] sm:$0xff]
          %v7009 = vld [vmem:[%s257 + $0x160] sm:$0xff]
          %v7010 = vld [vmem:[%s257 + $0x168] sm:$0xff]
          %v7011 = vld [vmem:[%s257 + $0x170] sm:$0xff]
          %v7012 = vld [vmem:[%s257 + $0x178] sm:$0xff]
          %v7013 = vld [vmem:[%s257 + $0x180] sm:$0xff]
          %v7014 = vld [vmem:[%s257 + $0x188] sm:$0xff]
          %v7015 = vld [vmem:[%s257 + $0x190] sm:$0xff]
          %v7016 = vld [vmem:[%s257 + $0x198] sm:$0xff]
          %v7017 = vld [vmem:[%s257 + $0x1a0] sm:$0xff]
          %v7018 = vld [vmem:[%s257 + $0x1a8] sm:$0xff]
          %v7019 = vld [vmem:[%s257 + $0x1b0] sm:$0xff]
          %v7020 = vld [vmem:[%s257 + $0x1b8] sm:$0xff]
          %v7021 = vld [vmem:[%s257 + $0x1c0] sm:$0xff]
          %v7022 = vld [vmem:[%s257 + $0x1c8] sm:$0xff]
          %v7023 = vld [vmem:[%s257 + $0x1d0] sm:$0xff]
          %v7024 = vld [vmem:[%s257 + $0x1d8] sm:$0xff]
          %v7025 = vld [vmem:[%s257 + $0x1e0] sm:$0xff]
          %v7026 = vld [vmem:[%s257 + $0x1e8] sm:$0xff]
          %v7027 = vld [vmem:[%s257 + $0x1f0] sm:$0xff]
          %v7028 = vld [vmem:[%s257 + $0x1f8] sm:$0xff]
          %v7029 = vadd.f32 %v6965, %v6709
          %v7030 = vadd.f32 %v6966, %v6711
          %v7031 = vadd.f32 %v6967, %v6717
          %v7032 = vadd.f32 %v6968, %v6719
          %v7033 = vadd.f32 %v6969, %v6725
          %v7034 = vadd.f32 %v6970, %v6727
          %v7035 = vadd.f32 %v6971, %v6733
          %v7036 = vadd.f32 %v6972, %v6735
          %v7037 = vadd.f32 %v6973, %v6741
          %v7038 = vadd.f32 %v6974, %v6743
          %v7039 = vadd.f32 %v6975, %v6749
          %v7040 = vadd.f32 %v6976, %v6751
          %v7041 = vadd.f32 %v6977, %v6757
          %v7042 = vadd.f32 %v6978, %v6759
          %v7043 = vadd.f32 %v6979, %v6765
          %v7044 = vadd.f32 %v6980, %v6767
          %v7045 = vadd.f32 %v6981, %v6773
          %v7046 = vadd.f32 %v6982, %v6775
          %v7047 = vadd.f32 %v6983, %v6781
          %v7048 = vadd.f32 %v6984, %v6783
          %v7049 = vadd.f32 %v6985, %v6789
          %v7050 = vadd.f32 %v6986, %v6791
          %v7051 = vadd.f32 %v6987, %v6797
          %v7052 = vadd.f32 %v6988, %v6799
          %v7053 = vadd.f32 %v6989, %v6805
          %v7054 = vadd.f32 %v6990, %v6807
          %v7055 = vadd.f32 %v6991, %v6813
          %v7056 = vadd.f32 %v6992, %v6815
          %v7057 = vadd.f32 %v6993, %v6821
          %v7058 = vadd.f32 %v6994, %v6823
          %v7059 = vadd.f32 %v6995, %v6829
          %v7060 = vadd.f32 %v6996, %v6831
          %v7061 = vadd.f32 %v6997, %v6837
          %v7062 = vadd.f32 %v6998, %v6839
          %v7063 = vadd.f32 %v6999, %v6845
          %v7064 = vadd.f32 %v7000, %v6847
          %v7065 = vadd.f32 %v7001, %v6853
          %v7066 = vadd.f32 %v7002, %v6855
          %v7067 = vadd.f32 %v7003, %v6861
          %v7068 = vadd.f32 %v7004, %v6863
          %v7069 = vadd.f32 %v7005, %v6869
          %v7070 = vadd.f32 %v7006, %v6871
          %v7071 = vadd.f32 %v7007, %v6877
          %v7072 = vadd.f32 %v7008, %v6879
          %v7073 = vadd.f32 %v7009, %v6885
          %v7074 = vadd.f32 %v7010, %v6887
          %v7075 = vadd.f32 %v7011, %v6893
          %v7076 = vadd.f32 %v7012, %v6895
          %v7077 = vadd.f32 %v7013, %v6901
          %v7078 = vadd.f32 %v7014, %v6903
          %v7079 = vadd.f32 %v7015, %v6909
          %v7080 = vadd.f32 %v7016, %v6911
          %v7081 = vadd.f32 %v7017, %v6917
          %v7082 = vadd.f32 %v7018, %v6919
          %v7083 = vadd.f32 %v7019, %v6925
          %v7084 = vadd.f32 %v7020, %v6927
          %v7085 = vadd.f32 %v7021, %v6933
          %v7086 = vadd.f32 %v7022, %v6935
          %v7087 = vadd.f32 %v7023, %v6941
          %v7088 = vadd.f32 %v7024, %v6943
          %v7089 = vadd.f32 %v7025, %v6949
          %v7090 = vadd.f32 %v7026, %v6951
          %v7091 = vadd.f32 %v7027, %v6957
          %v7092 = vadd.f32 %v7028, %v6959
          %7093 = vst [vmem:[%s284] sm:$0xff] %v7029
          %7094 = vst [vmem:[%s284 + $0x8] sm:$0xff] %v7030
          %7095 = vst [vmem:[%s284 + $0x10] sm:$0xff] %v7031
          %7096 = vst [vmem:[%s284 + $0x18] sm:$0xff] %v7032
          %7097 = vst [vmem:[%s284 + $0x20] sm:$0xff] %v7033
          %7098 = vst [vmem:[%s284 + $0x28] sm:$0xff] %v7034
          %7099 = vst [vmem:[%s284 + $0x30] sm:$0xff] %v7035
          %7100 = vst [vmem:[%s284 + $0x38] sm:$0xff] %v7036
          %7101 = vst [vmem:[%s284 + $0x40] sm:$0xff] %v7037
          %7102 = vst [vmem:[%s284 + $0x48] sm:$0xff] %v7038
          %7103 = vst [vmem:[%s284 + $0x50] sm:$0xff] %v7039
          %7104 = vst [vmem:[%s284 + $0x58] sm:$0xff] %v7040
          %7105 = vst [vmem:[%s284 + $0x60] sm:$0xff] %v7041
          %7106 = vst [vmem:[%s284 + $0x68] sm:$0xff] %v7042
          %7107 = vst [vmem:[%s284 + $0x70] sm:$0xff] %v7043
          %7108 = vst [vmem:[%s284 + $0x78] sm:$0xff] %v7044
          %7109 = vst [vmem:[%s284 + $0x80] sm:$0xff] %v7045
          %7110 = vst [vmem:[%s284 + $0x88] sm:$0xff] %v7046
          %7111 = vst [vmem:[%s284 + $0x90] sm:$0xff] %v7047
          %7112 = vst [vmem:[%s284 + $0x98] sm:$0xff] %v7048
          %7113 = vst [vmem:[%s284 + $0xa0] sm:$0xff] %v7049
          %7114 = vst [vmem:[%s284 + $0xa8] sm:$0xff] %v7050
          %7115 = vst [vmem:[%s284 + $0xb0] sm:$0xff] %v7051
          %7116 = vst [vmem:[%s284 + $0xb8] sm:$0xff] %v7052
          %7117 = vst [vmem:[%s284 + $0xc0] sm:$0xff] %v7053
          %7118 = vst [vmem:[%s284 + $0xc8] sm:$0xff] %v7054
          %7119 = vst [vmem:[%s284 + $0xd0] sm:$0xff] %v7055
          %7120 = vst [vmem:[%s284 + $0xd8] sm:$0xff] %v7056
          %7121 = vst [vmem:[%s284 + $0xe0] sm:$0xff] %v7057
          %7122 = vst [vmem:[%s284 + $0xe8] sm:$0xff] %v7058
          %7123 = vst [vmem:[%s284 + $0xf0] sm:$0xff] %v7059
          %7124 = vst [vmem:[%s284 + $0xf8] sm:$0xff] %v7060
          %7125 = vst [vmem:[%s284 + $0x100] sm:$0xff] %v7061
          %7126 = vst [vmem:[%s284 + $0x108] sm:$0xff] %v7062
          %7127 = vst [vmem:[%s284 + $0x110] sm:$0xff] %v7063
          %7128 = vst [vmem:[%s284 + $0x118] sm:$0xff] %v7064
          %7129 = vst [vmem:[%s284 + $0x120] sm:$0xff] %v7065
          %7130 = vst [vmem:[%s284 + $0x128] sm:$0xff] %v7066
          %7131 = vst [vmem:[%s284 + $0x130] sm:$0xff] %v7067
          %7132 = vst [vmem:[%s284 + $0x138] sm:$0xff] %v7068
          %7133 = vst [vmem:[%s284 + $0x140] sm:$0xff] %v7069
          %7134 = vst [vmem:[%s284 + $0x148] sm:$0xff] %v7070
          %7135 = vst [vmem:[%s284 + $0x150] sm:$0xff] %v7071
          %7136 = vst [vmem:[%s284 + $0x158] sm:$0xff] %v7072
          %7137 = vst [vmem:[%s284 + $0x160] sm:$0xff] %v7073
          %7138 = vst [vmem:[%s284 + $0x168] sm:$0xff] %v7074
          %7139 = vst [vmem:[%s284 + $0x170] sm:$0xff] %v7075
          %7140 = vst [vmem:[%s284 + $0x178] sm:$0xff] %v7076
          %7141 = vst [vmem:[%s284 + $0x180] sm:$0xff] %v7077
          %7142 = vst [vmem:[%s284 + $0x188] sm:$0xff] %v7078
          %7143 = vst [vmem:[%s284 + $0x190] sm:$0xff] %v7079
          %7144 = vst [vmem:[%s284 + $0x198] sm:$0xff] %v7080
          %7145 = vst [vmem:[%s284 + $0x1a0] sm:$0xff] %v7081
          %7146 = vst [vmem:[%s284 + $0x1a8] sm:$0xff] %v7082
          %7147 = vst [vmem:[%s284 + $0x1b0] sm:$0xff] %v7083
          %7148 = vst [vmem:[%s284 + $0x1b8] sm:$0xff] %v7084
          %7149 = vst [vmem:[%s284 + $0x1c0] sm:$0xff] %v7085
          %7150 = vst [vmem:[%s284 + $0x1c8] sm:$0xff] %v7086
          %7151 = vst [vmem:[%s284 + $0x1d0] sm:$0xff] %v7087
          %7152 = vst [vmem:[%s284 + $0x1d8] sm:$0xff] %v7088
          %7153 = vst [vmem:[%s284 + $0x1e0] sm:$0xff] %v7089
          %7154 = vst [vmem:[%s284 + $0x1e8] sm:$0xff] %v7090
          %7155 = vst [vmem:[%s284 + $0x1f0] sm:$0xff] %v7091
          %7156 = vst [vmem:[%s284 + $0x1f8] sm:$0xff] %v7092
        $region48: #{mm_add.1} parent=31 // pred_fallthru
          _
        %p7157 = scmp.ne.s32.totalorder %s28, 0
        // Predicated region
        $region49: #{mm_add.1} parent=31 // pred_check
          %p7158 = pneg %p7157
        $region50: #{mm_add.1} parent=31 // pred_check_branch
          %7160 = sbr.rel (%p7158) target = $region52
        $region51: #{mm_add.1} parent=31 // pred_region
          %v7161 = vld [vmem:[%s284] sm:$0xff]
          %v7162 = vld [vmem:[%s284 + $0x8] sm:$0xff]
          %v7163 = vld [vmem:[%s284 + $0x10] sm:$0xff]
          %v7164 = vld [vmem:[%s284 + $0x18] sm:$0xff]
          %v7165 = vld [vmem:[%s284 + $0x20] sm:$0xff]
          %v7166 = vld [vmem:[%s284 + $0x28] sm:$0xff]
          %v7167 = vld [vmem:[%s284 + $0x30] sm:$0xff]
          %v7168 = vld [vmem:[%s284 + $0x38] sm:$0xff]
          %v7169 = vld [vmem:[%s284 + $0x40] sm:$0xff]
          %v7170 = vld [vmem:[%s284 + $0x48] sm:$0xff]
          %v7171 = vld [vmem:[%s284 + $0x50] sm:$0xff]
          %v7172 = vld [vmem:[%s284 + $0x58] sm:$0xff]
          %v7173 = vld [vmem:[%s284 + $0x60] sm:$0xff]
          %v7174 = vld [vmem:[%s284 + $0x68] sm:$0xff]
          %v7175 = vld [vmem:[%s284 + $0x70] sm:$0xff]
          %v7176 = vld [vmem:[%s284 + $0x78] sm:$0xff]
          %v7177 = vld [vmem:[%s284 + $0x80] sm:$0xff]
          %v7178 = vld [vmem:[%s284 + $0x88] sm:$0xff]
          %v7179 = vld [vmem:[%s284 + $0x90] sm:$0xff]
          %v7180 = vld [vmem:[%s284 + $0x98] sm:$0xff]
          %v7181 = vld [vmem:[%s284 + $0xa0] sm:$0xff]
          %v7182 = vld [vmem:[%s284 + $0xa8] sm:$0xff]
          %v7183 = vld [vmem:[%s284 + $0xb0] sm:$0xff]
          %v7184 = vld [vmem:[%s284 + $0xb8] sm:$0xff]
          %v7185 = vld [vmem:[%s284 + $0xc0] sm:$0xff]
          %v7186 = vld [vmem:[%s284 + $0xc8] sm:$0xff]
          %v7187 = vld [vmem:[%s284 + $0xd0] sm:$0xff]
          %v7188 = vld [vmem:[%s284 + $0xd8] sm:$0xff]
          %v7189 = vld [vmem:[%s284 + $0xe0] sm:$0xff]
          %v7190 = vld [vmem:[%s284 + $0xe8] sm:$0xff]
          %v7191 = vld [vmem:[%s284 + $0xf0] sm:$0xff]
          %v7192 = vld [vmem:[%s284 + $0xf8] sm:$0xff]
          %v7193 = vld [vmem:[%s284 + $0x100] sm:$0xff]
          %v7194 = vld [vmem:[%s284 + $0x108] sm:$0xff]
          %v7195 = vld [vmem:[%s284 + $0x110] sm:$0xff]
          %v7196 = vld [vmem:[%s284 + $0x118] sm:$0xff]
          %v7197 = vld [vmem:[%s284 + $0x120] sm:$0xff]
          %v7198 = vld [vmem:[%s284 + $0x128] sm:$0xff]
          %v7199 = vld [vmem:[%s284 + $0x130] sm:$0xff]
          %v7200 = vld [vmem:[%s284 + $0x138] sm:$0xff]
          %v7201 = vld [vmem:[%s284 + $0x140] sm:$0xff]
          %v7202 = vld [vmem:[%s284 + $0x148] sm:$0xff]
          %v7203 = vld [vmem:[%s284 + $0x150] sm:$0xff]
          %v7204 = vld [vmem:[%s284 + $0x158] sm:$0xff]
          %v7205 = vld [vmem:[%s284 + $0x160] sm:$0xff]
          %v7206 = vld [vmem:[%s284 + $0x168] sm:$0xff]
          %v7207 = vld [vmem:[%s284 + $0x170] sm:$0xff]
          %v7208 = vld [vmem:[%s284 + $0x178] sm:$0xff]
          %v7209 = vld [vmem:[%s284 + $0x180] sm:$0xff]
          %v7210 = vld [vmem:[%s284 + $0x188] sm:$0xff]
          %v7211 = vld [vmem:[%s284 + $0x190] sm:$0xff]
          %v7212 = vld [vmem:[%s284 + $0x198] sm:$0xff]
          %v7213 = vld [vmem:[%s284 + $0x1a0] sm:$0xff]
          %v7214 = vld [vmem:[%s284 + $0x1a8] sm:$0xff]
          %v7215 = vld [vmem:[%s284 + $0x1b0] sm:$0xff]
          %v7216 = vld [vmem:[%s284 + $0x1b8] sm:$0xff]
          %v7217 = vld [vmem:[%s284 + $0x1c0] sm:$0xff]
          %v7218 = vld [vmem:[%s284 + $0x1c8] sm:$0xff]
          %v7219 = vld [vmem:[%s284 + $0x1d0] sm:$0xff]
          %v7220 = vld [vmem:[%s284 + $0x1d8] sm:$0xff]
          %v7221 = vld [vmem:[%s284 + $0x1e0] sm:$0xff]
          %v7222 = vld [vmem:[%s284 + $0x1e8] sm:$0xff]
          %v7223 = vld [vmem:[%s284 + $0x1f0] sm:$0xff]
          %v7224 = vld [vmem:[%s284 + $0x1f8] sm:$0xff]
          %v7225 = vadd.f32 %v7161, %v6709
          %v7226 = vadd.f32 %v7162, %v6711
          %v7227 = vadd.f32 %v7163, %v6717
          %v7228 = vadd.f32 %v7164, %v6719
          %v7229 = vadd.f32 %v7165, %v6725
          %v7230 = vadd.f32 %v7166, %v6727
          %v7231 = vadd.f32 %v7167, %v6733
          %v7232 = vadd.f32 %v7168, %v6735
          %v7233 = vadd.f32 %v7169, %v6741
          %v7234 = vadd.f32 %v7170, %v6743
          %v7235 = vadd.f32 %v7171, %v6749
          %v7236 = vadd.f32 %v7172, %v6751
          %v7237 = vadd.f32 %v7173, %v6757
          %v7238 = vadd.f32 %v7174, %v6759
          %v7239 = vadd.f32 %v7175, %v6765
          %v7240 = vadd.f32 %v7176, %v6767
          %v7241 = vadd.f32 %v7177, %v6773
          %v7242 = vadd.f32 %v7178, %v6775
          %v7243 = vadd.f32 %v7179, %v6781
          %v7244 = vadd.f32 %v7180, %v6783
          %v7245 = vadd.f32 %v7181, %v6789
          %v7246 = vadd.f32 %v7182, %v6791
          %v7247 = vadd.f32 %v7183, %v6797
          %v7248 = vadd.f32 %v7184, %v6799
          %v7249 = vadd.f32 %v7185, %v6805
          %v7250 = vadd.f32 %v7186, %v6807
          %v7251 = vadd.f32 %v7187, %v6813
          %v7252 = vadd.f32 %v7188, %v6815
          %v7253 = vadd.f32 %v7189, %v6821
          %v7254 = vadd.f32 %v7190, %v6823
          %v7255 = vadd.f32 %v7191, %v6829
          %v7256 = vadd.f32 %v7192, %v6831
          %v7257 = vadd.f32 %v7193, %v6837
          %v7258 = vadd.f32 %v7194, %v6839
          %v7259 = vadd.f32 %v7195, %v6845
          %v7260 = vadd.f32 %v7196, %v6847
          %v7261 = vadd.f32 %v7197, %v6853
          %v7262 = vadd.f32 %v7198, %v6855
          %v7263 = vadd.f32 %v7199, %v6861
          %v7264 = vadd.f32 %v7200, %v6863
          %v7265 = vadd.f32 %v7201, %v6869
          %v7266 = vadd.f32 %v7202, %v6871
          %v7267 = vadd.f32 %v7203, %v6877
          %v7268 = vadd.f32 %v7204, %v6879
          %v7269 = vadd.f32 %v7205, %v6885
          %v7270 = vadd.f32 %v7206, %v6887
          %v7271 = vadd.f32 %v7207, %v6893
          %v7272 = vadd.f32 %v7208, %v6895
          %v7273 = vadd.f32 %v7209, %v6901
          %v7274 = vadd.f32 %v7210, %v6903
          %v7275 = vadd.f32 %v7211, %v6909
          %v7276 = vadd.f32 %v7212, %v6911
          %v7277 = vadd.f32 %v7213, %v6917
          %v7278 = vadd.f32 %v7214, %v6919
          %v7279 = vadd.f32 %v7215, %v6925
          %v7280 = vadd.f32 %v7216, %v6927
          %v7281 = vadd.f32 %v7217, %v6933
          %v7282 = vadd.f32 %v7218, %v6935
          %v7283 = vadd.f32 %v7219, %v6941
          %v7284 = vadd.f32 %v7220, %v6943
          %v7285 = vadd.f32 %v7221, %v6949
          %v7286 = vadd.f32 %v7222, %v6951
          %v7287 = vadd.f32 %v7223, %v6957
          %v7288 = vadd.f32 %v7224, %v6959
          %7289 = vst [vmem:[%s284] sm:$0xff] %v7225
          %7290 = vst [vmem:[%s284 + $0x8] sm:$0xff] %v7226
          %7291 = vst [vmem:[%s284 + $0x10] sm:$0xff] %v7227
          %7292 = vst [vmem:[%s284 + $0x18] sm:$0xff] %v7228
          %7293 = vst [vmem:[%s284 + $0x20] sm:$0xff] %v7229
          %7294 = vst [vmem:[%s284 + $0x28] sm:$0xff] %v7230
          %7295 = vst [vmem:[%s284 + $0x30] sm:$0xff] %v7231
          %7296 = vst [vmem:[%s284 + $0x38] sm:$0xff] %v7232
          %7297 = vst [vmem:[%s284 + $0x40] sm:$0xff] %v7233
          %7298 = vst [vmem:[%s284 + $0x48] sm:$0xff] %v7234
          %7299 = vst [vmem:[%s284 + $0x50] sm:$0xff] %v7235
          %7300 = vst [vmem:[%s284 + $0x58] sm:$0xff] %v7236
          %7301 = vst [vmem:[%s284 + $0x60] sm:$0xff] %v7237
          %7302 = vst [vmem:[%s284 + $0x68] sm:$0xff] %v7238
          %7303 = vst [vmem:[%s284 + $0x70] sm:$0xff] %v7239
          %7304 = vst [vmem:[%s284 + $0x78] sm:$0xff] %v7240
          %7305 = vst [vmem:[%s284 + $0x80] sm:$0xff] %v7241
          %7306 = vst [vmem:[%s284 + $0x88] sm:$0xff] %v7242
          %7307 = vst [vmem:[%s284 + $0x90] sm:$0xff] %v7243
          %7308 = vst [vmem:[%s284 + $0x98] sm:$0xff] %v7244
          %7309 = vst [vmem:[%s284 + $0xa0] sm:$0xff] %v7245
          %7310 = vst [vmem:[%s284 + $0xa8] sm:$0xff] %v7246
          %7311 = vst [vmem:[%s284 + $0xb0] sm:$0xff] %v7247
          %7312 = vst [vmem:[%s284 + $0xb8] sm:$0xff] %v7248
          %7313 = vst [vmem:[%s284 + $0xc0] sm:$0xff] %v7249
          %7314 = vst [vmem:[%s284 + $0xc8] sm:$0xff] %v7250
          %7315 = vst [vmem:[%s284 + $0xd0] sm:$0xff] %v7251
          %7316 = vst [vmem:[%s284 + $0xd8] sm:$0xff] %v7252
          %7317 = vst [vmem:[%s284 + $0xe0] sm:$0xff] %v7253
          %7318 = vst [vmem:[%s284 + $0xe8] sm:$0xff] %v7254
          %7319 = vst [vmem:[%s284 + $0xf0] sm:$0xff] %v7255
          %7320 = vst [vmem:[%s284 + $0xf8] sm:$0xff] %v7256
          %7321 = vst [vmem:[%s284 + $0x100] sm:$0xff] %v7257
          %7322 = vst [vmem:[%s284 + $0x108] sm:$0xff] %v7258
          %7323 = vst [vmem:[%s284 + $0x110] sm:$0xff] %v7259
          %7324 = vst [vmem:[%s284 + $0x118] sm:$0xff] %v7260
          %7325 = vst [vmem:[%s284 + $0x120] sm:$0xff] %v7261
          %7326 = vst [vmem:[%s284 + $0x128] sm:$0xff] %v7262
          %7327 = vst [vmem:[%s284 + $0x130] sm:$0xff] %v7263
          %7328 = vst [vmem:[%s284 + $0x138] sm:$0xff] %v7264
          %7329 = vst [vmem:[%s284 + $0x140] sm:$0xff] %v7265
          %7330 = vst [vmem:[%s284 + $0x148] sm:$0xff] %v7266
          %7331 = vst [vmem:[%s284 + $0x150] sm:$0xff] %v7267
          %7332 = vst [vmem:[%s284 + $0x158] sm:$0xff] %v7268
          %7333 = vst [vmem:[%s284 + $0x160] sm:$0xff] %v7269
          %7334 = vst [vmem:[%s284 + $0x168] sm:$0xff] %v7270
          %7335 = vst [vmem:[%s284 + $0x170] sm:$0xff] %v7271
          %7336 = vst [vmem:[%s284 + $0x178] sm:$0xff] %v7272
          %7337 = vst [vmem:[%s284 + $0x180] sm:$0xff] %v7273
          %7338 = vst [vmem:[%s284 + $0x188] sm:$0xff] %v7274
          %7339 = vst [vmem:[%s284 + $0x190] sm:$0xff] %v7275
          %7340 = vst [vmem:[%s284 + $0x198] sm:$0xff] %v7276
          %7341 = vst [vmem:[%s284 + $0x1a0] sm:$0xff] %v7277
          %7342 = vst [vmem:[%s284 + $0x1a8] sm:$0xff] %v7278
          %7343 = vst [vmem:[%s284 + $0x1b0] sm:$0xff] %v7279
          %7344 = vst [vmem:[%s284 + $0x1b8] sm:$0xff] %v7280
          %7345 = vst [vmem:[%s284 + $0x1c0] sm:$0xff] %v7281
          %7346 = vst [vmem:[%s284 + $0x1c8] sm:$0xff] %v7282
          %7347 = vst [vmem:[%s284 + $0x1d0] sm:$0xff] %v7283
          %7348 = vst [vmem:[%s284 + $0x1d8] sm:$0xff] %v7284
          %7349 = vst [vmem:[%s284 + $0x1e0] sm:$0xff] %v7285
          %7350 = vst [vmem:[%s284 + $0x1e8] sm:$0xff] %v7286
          %7351 = vst [vmem:[%s284 + $0x1f0] sm:$0xff] %v7287
          %7352 = vst [vmem:[%s284 + $0x1f8] sm:$0xff] %v7288
        $region52: #{mm_add.1} parent=31 // pred_fallthru
          _
        %s7353 = sand.u32 %s134, 1
        %s7354 = scalar_lea.sflag [#allocation4], %s7353
        %s7355 = sand.u32 %s134, 1
        %s7356 = smul.addr %s7355, 512
        %s7357 = scalar_lea.vmem [#allocation8], %s7356
        // Predicated region
        $region53: #{mm_add.1} parent=31 // pred_check
          %p7358 = pneg %p144
        $region54: #{mm_add.1} parent=31 // pred_check_branch
          %7360 = sbr.rel (%p7358) target = $region56
        $region55: #{mm_add.1} parent=31 // pred_region
          %s7361 = smul.u32 32, %s26
          %s7362 = smul.u32 2, %s27
          %s7364 = ssub.s32 8192, 8192
          %7365 = vsyncadd %s7354, %s7364
          %s7366 = smul.addr %s7361, 4
          %s7367 = sadd.s32 %s7362, %s7366
          %s7368 = smul.addr %s7367, 128
          %s7369 = scalar_lea.hbm %s3, %s7368
          %s7370 = sshll.u32 %s7357, 4
          %s7371 = int_to_ptr.vmem [resolvable:$true] %s7370
          %7376 = dma.vmem_to_hbm [thread:$0]  %s7371, 8192, %s7369, %s7354, 256, 512, 16
        $region56: #{mm_add.1} parent=31 // pred_fallthru
          _
      $region32: #{mm_add.1} parent=5 // pred_fallthru
        _
      %p7377 = scmp.le.s32.totalorder 2, %s16
      // Predicated region
      $region57: #{mm_add.1} parent=5 // pred_check
        %p7378 = pneg %p7377
      $region58: #{mm_add.1} parent=5 // pred_check_branch
        %7380 = sbr.rel (%p7378) target = $region60
      $region59: #{mm_add.1} parent=5 // pred_region
        %s7381 = ssub.s32 %s16, 2
        // Predicated region
        $region61: #{mm_add.1} parent=59 // pred_check
          %p7382 = pneg %p150
        $region62: #{mm_add.1} parent=59 // pred_check_branch
          %7384 = sbr.rel (%p7382) target = $region64
        $region63: #{mm_add.1} parent=59 // pred_region
          %s7385 = sand.u32 %s135, 1
          %s7386 = scalar_lea.sflag [#allocation4], %s7385
          %s7387 = sand.u32 %s135, 1
          %s7388 = smul.addr %s7387, 512
          %s7389 = scalar_lea.vmem [#allocation8], %s7388
          %7390 = dma.done %s7386, 8192
        $region64: #{mm_add.1} parent=59 // pred_fallthru
          _
      $region60: #{mm_add.1} parent=5 // pred_fallthru
        _
    $region6: #{mm_add.1} parent=1 // loop_footer
      %s20 = sadd.s32 1, %s16
    $region7: #{mm_add.1} parent=1 // loop_footer_branch
      %15 = sbr.rel target = $region3
    $region8: #{mm_add.1} parent=1 // loop_exit
      _
    %7391 = vsyncpa [#allocation3], 1
    %s7392 = scalar_lea.sflag [#allocation3], 1
    %7393 = vsyncpa %s7392, 1
    %7394 = vsyncpa [#allocation6], 1
    %s7395 = scalar_lea.sflag [#allocation6], 1
    %7396 = vsyncpa %s7395, 1
    %7397 = vsyncpa [#allocation4], 1
    %s7398 = scalar_lea.sflag [#allocation4], 1
    %7399 = vsyncpa %s7398, 1

</llo_original>
